<compile_context>
chip_gen: v7x
topology: tpu7x:2x2x1
jax: 0.10.0
libtpu: 0.0.40
codegen_flags: <defaults>
</compile_context>

<pallas_src>
import functools

import jax
import jax.numpy as jnp
from jax.experimental import pallas as pl
from jax.experimental.pallas import tpu as pltpu

EPS = 1e-7
LANE = 128
CONV_DTYPE = jnp.bfloat16


# ----------------------------------------------------------------------------
# small helpers
# ----------------------------------------------------------------------------
def _round_up(n, m):
    return ((n + m - 1) // m) * m


def _largest_divisor(n, cap, step):
    """Largest multiple of `step` that divides `n` and is <= cap.

    Falls back to `n` itself (a single full-extent block, always legal) when no
    such divisor exists; callers keep per-call vmem_limit_bytes as a backstop.
    """
    c = (min(n, cap) // step) * step
    while c >= step:
        if n % c == 0:
            return c
        c -= step
    return n


@functools.lru_cache(maxsize=None)
def _vmem_limit():
    """Generation-aware scoped-VMEM limit (large on v5e/v6e, safe on v7x)."""
    try:
        cap = int(pltpu.get_tpu_info().vmem_capacity_bytes)
    except Exception:
        cap = 64 * 1024 * 1024
    return min((cap * 4) // 5, 100 * 1024 * 1024)


def _compiler_params(dim_sem):
    return pltpu.CompilerParams(dimension_semantics=dim_sem,
                                vmem_limit_bytes=_vmem_limit())


# ----------------------------------------------------------------------------
# Kernel 1: grouped 1x1 conv == tiled matmul + bias (gamma|beta fused)
# ----------------------------------------------------------------------------
def _matmul_bias_kernel(a_ref, w_ref, b_ref, o_ref):
    # Full K resident: one MXU matmul + bias, written straight to the output.
    o_ref[...] = (jnp.dot(a_ref[...], w_ref[0],
                          preferred_element_type=jnp.float32)
                  + b_ref[0]).astype(o_ref.dtype)


def _matmul_bias_acc_kernel(a_ref, w_ref, b_ref, o_ref, acc_ref):
    # Fallback for very large K: init folded into the first K step.
    k = pl.program_id(3)
    part = jnp.dot(a_ref[...], w_ref[0], preferred_element_type=jnp.float32)

    @pl.when(k == 0)
    def _():
        acc_ref[...] = part

    @pl.when(k > 0)
    def _():
        acc_ref[...] += part

    @pl.when(k == pl.num_programs(3) - 1)
    def _():
        o_ref[...] = (acc_ref[...] + b_ref[0]).astype(o_ref.dtype)


def conv1x1_grouped(a, w, b, *, shared_input, out_dtype):
    """Fused two-branch 1x1 conv as a tiled matmul.

    a: (M, K) if shared_input else (M, 2*K); w: (2, K, N); b: (2, 1, N) f32.
    Returns (M, 2*N): [gamma-branch channels | beta-branch channels].
    """
    n_groups, K, N = w.shape
    M = a.shape[0]
    tm = _largest_divisor(M, 1024, 16)
    tn = _largest_divisor(N, 512, LANE)
    tk = _largest_divisor(K, 1024, LANE)
    npg, kpg = N // tn, K // tk

    flops = 2 * M * K * N * n_groups
    bytes_accessed = (a.size * a.dtype.itemsize + w.size * w.dtype.itemsize
                      + b.size * b.dtype.itemsize
                      + M * n_groups * N * jnp.dtype(out_dtype).itemsize)
    out_shape = jax.ShapeDtypeStruct((M, n_groups * N), out_dtype)
    cost = pl.CostEstimate(flops=flops, transcendentals=0,
                           bytes_accessed=bytes_accessed)

    if kpg == 1:
        # Common case: no K axis, no accumulator, A stripe DMA'd once per row
        # tile (its block index is constant across the g / j axes).
        a_map = ((lambda i, g, j: (i, 0)) if shared_input
                 else (lambda i, g, j: (i, g)))
        return pl.pallas_call(
            _matmul_bias_kernel,
            out_shape=out_shape,
            grid=(M // tm, n_groups, npg),
            in_specs=[
                pl.BlockSpec((tm, tk), a_map),
                pl.BlockSpec((1, tk, tn), lambda i, g, j: (g, 0, j)),
                pl.BlockSpec((1, 1, tn), lambda i, g, j: (g, 0, j)),
            ],
            out_specs=pl.BlockSpec((tm, tn), lambda i, g, j: (i, g * npg + j)),
            compiler_params=_compiler_params(("parallel",) * 3),
            cost_estimate=cost,
        )(a, w, b)

    a_map = ((lambda i, g, j, k: (i, k)) if shared_input
             else (lambda i, g, j, k: (i, g * kpg + k)))
    return pl.pallas_call(
        _matmul_bias_acc_kernel,
        out_shape=out_shape,
        grid=(M // tm, n_groups, npg, kpg),
        in_specs=[
            pl.BlockSpec((tm, tk), a_map),
            pl.BlockSpec((1, tk, tn), lambda i, g, j, k: (g, k, j)),
            pl.BlockSpec((1, 1, tn), lambda i, g, j, k: (g, 0, j)),
        ],
        out_specs=pl.BlockSpec((tm, tn), lambda i, g, j, k: (i, g * npg + j)),
        scratch_shapes=[pltpu.VMEM((tm, tn), jnp.float32)],
        compiler_params=_compiler_params(
            ("parallel", "parallel", "parallel", "arbitrary")),
        cost_estimate=cost,
    )(a, w, b)


# ----------------------------------------------------------------------------
# Kernel 2: grouped 3x3 conv, row-block tiled, dx-im2col + 3 matmuls per step
# ----------------------------------------------------------------------------
def _conv3x3_kernel(xm_ref, xu_ref, xd_ref, w_ref, b_ref, o_ref):
    # xm_ref: (1, Ht, W, Cin)   row block of the (unpadded) NHWC activation
    # xu_ref: (1, 1,  W, Cin)   row just above the block (clamped at hi == 0)
    # xd_ref: (1, 1,  W, Cin)   row just below the block (clamped at last hi)
    # w_ref : (1, 3, 3*Cin, tn) weights: dy-major, dx-major within 3*Cin
    # b_ref : (1, 1, tn)        bias (f32)
    # o_ref : (1, Ht, W, tn)
    hi = pl.program_id(3)
    nh = pl.num_programs(3)
    _, ht, w_sz, tn = o_ref.shape
    cin = xm_ref.shape[-1]

    up = xu_ref[0]
    dn = xd_ref[0]
    up = jnp.where(hi == 0, jnp.zeros_like(up), up)        # top image border
    dn = jnp.where(hi == nh - 1, jnp.zeros_like(dn), dn)   # bottom image border
    slab = jnp.concatenate([up, xm_ref[0], dn], axis=0)    # (Ht+2, W, Cin)

    # dx-only im2col built once: [col x-1 | col x | col x+1] along channels.
    zcol = jnp.zeros((ht + 2, 1, cin), slab.dtype)
    left = jnp.concatenate([zcol, slab[:, :w_sz - 1, :]], axis=1)   # tap dx=0
    right = jnp.concatenate([slab[:, 1:, :], zcol], axis=1)         # tap dx=2
    cols = jnp.concatenate([left, slab, right], axis=-1)   # (Ht+2, W, 3*Cin)
    cols = cols.reshape((ht + 2) * w_sz, 3 * cin)

    # Three matmuls (one per dy), accumulated as chained SSA values so the MXU
    # result path (MRB on v7x) accumulates in place -- no VMEM scratch RMW.
    acc = None
    for dy in range(3):
        a = cols[dy * w_sz:dy * w_sz + ht * w_sz]           # (Ht*W, 3*Cin)
        part = jnp.dot(a, w_ref[0, dy], preferred_element_type=jnp.float32)
        acc = part if acc is None else acc + part
    out = acc + b_ref[0]
    o_ref[...] = out.reshape(1, ht, w_sz, tn).astype(o_ref.dtype)


def conv3x3_grouped(x, w, b, *, out_dtype):
    """Fused two-branch 3x3 conv (stride 1, pad 1), NHWC activations.

    x: (B, H, W, 2*Cin); w: (2, 3, 3*Cin, Cout); b: (2, 1, Cout) f32
    -> (B, H, W, 2*Cout) with [gamma-branch | beta-branch] channels.
    """
    Bsz, H, W, _ = x.shape
    n_groups, _, cin3, Cout = w.shape
    Cin = cin3 // 3
    tn = _largest_divisor(Cout, 512, LANE)
    npg = Cout // tn
    # Spatial row-block tiling: bounds VMEM, lengthens the grid for pipelining
    # and megacore sharding, and needs no halo-padded copy of x in HBM.
    ht = _largest_divisor(H, max(1, min(H // 2, 2048 // max(W, 1))), 1)
    nh = H // ht

    flops = 2 * Bsz * H * W * 9 * Cin * Cout * n_groups
    bytes_accessed = (x.size * x.dtype.itemsize + w.size * w.dtype.itemsize
                      + b.size * b.dtype.itemsize
                      + Bsz * H * W * n_groups * Cout
                      * jnp.dtype(out_dtype).itemsize)

    return pl.pallas_call(
        _conv3x3_kernel,
        out_shape=jax.ShapeDtypeStruct((Bsz, H, W, n_groups * Cout), out_dtype),
        grid=(Bsz, n_groups, npg, nh),
        in_specs=[
            pl.BlockSpec((1, ht, W, Cin), lambda bi, g, j, hi: (bi, hi, 0, g)),
            pl.BlockSpec((1, 1, W, Cin),
                         lambda bi, g, j, hi: (bi, jnp.maximum(hi * ht - 1, 0),
                                               0, g)),
            pl.BlockSpec((1, 1, W, Cin),
                         lambda bi, g, j, hi: (bi,
                                               jnp.minimum(hi * ht + ht, H - 1),
                                               0, g)),
            pl.BlockSpec((1, 3, 3 * Cin, tn), lambda bi, g, j, hi: (g, 0, 0, j)),
            pl.BlockSpec((1, 1, tn), lambda bi, g, j, hi: (g, 0, j)),
        ],
        out_specs=pl.BlockSpec((1, ht, W, tn),
                               lambda bi, g, j, hi: (bi, hi, 0, g * npg + j)),
        compiler_params=_compiler_params(("parallel",) * 4),
        cost_estimate=pl.CostEstimate(flops=flops, transcendentals=0,
                                      bytes_accessed=bytes_accessed),
    )(x, x, x, w, b)


# ----------------------------------------------------------------------------
# Kernel 3a: instance-norm statistics (HW-tiled reduction -> mean, rstd)
# ----------------------------------------------------------------------------
def srm_instance_stats(content_r):
    """content_r: (B, Cp, HW) f32 -> (mean, rstd) each (B, Cp, 1) f32.

    Uses torch.var's unbiased (N-1) estimator; eps added to the variance.
    """
    Bsz, Cp, HW = content_r.shape
    ct = _largest_divisor(Cp, 256, LANE)
    cg = Cp // ct
    hwt = _largest_divisor(HW, max(LANE, min(HW // 2, 4096)), LANE)
    nhw = HW // hwt
    inv_n = 1.0 / HW
    # TODO(synk): HW == 1 makes the unbiased variance degenerate; clamp to keep
    # the kernel finite (torch itself would emit NaN there).
    inv_nm1 = 1.0 / max(HW - 1, 1)

    def kernel(x_ref, mean_ref, rstd_ref, sum_sc, sq_sc):
        hw_i = pl.program_id(2)
        x = x_ref[0]                                        # (ct, hwt) f32
        s = jnp.sum(x, axis=1, keepdims=True)
        s2 = jnp.sum(x * x, axis=1, keepdims=True)

        @pl.when(hw_i == 0)
        def _():
            sum_sc[...] = s
            sq_sc[...] = s2

        @pl.when(hw_i > 0)
        def _():
            sum_sc[...] += s
            sq_sc[...] += s2

        @pl.when(hw_i == pl.num_programs(2) - 1)
        def _():
            mean = sum_sc[...] * inv_n
            var = (sq_sc[...] - sum_sc[...] * mean) * inv_nm1
            mean_ref[0] = mean
            rstd_ref[0] = jax.lax.rsqrt(var + EPS)          # rsqrt -> EUP slot

    return pl.pallas_call(
        kernel,
        out_shape=(jax.ShapeDtypeStruct((Bsz, Cp, 1), jnp.float32),
                   jax.ShapeDtypeStruct((Bsz, Cp, 1), jnp.float32)),
        grid=(Bsz, cg, nhw),
        in_specs=[pl.BlockSpec((1, ct, hwt), lambda b, c, hw: (b, c, hw))],
        out_specs=(pl.BlockSpec((1, ct, 1), lambda b, c, hw: (b, c, 0)),
                   pl.BlockSpec((1, ct, 1), lambda b, c, hw: (b, c, 0))),
        scratch_shapes=[pltpu.VMEM((ct, 1), jnp.float32),
                        pltpu.VMEM((ct, 1), jnp.float32)],
        compiler_params=_compiler_params(("parallel", "parallel", "arbitrary")),
        cost_estimate=pl.CostEstimate(
            flops=3 * Bsz * Cp * HW, transcendentals=Bsz * Cp,
            bytes_accessed=content_r.size * 4 + 2 * Bsz * Cp * 4),
    )(content_r)


# ----------------------------------------------------------------------------
# Kernel 3b: apply modulation  out = (x - mean) * rstd * gamma + beta
# ----------------------------------------------------------------------------
def srm_apply_modulation(content_r, mean, rstd, gb_r):
    """content_r: (B, Cp, HW) f32; mean/rstd: (B, Cp, 1) f32;
    gb_r: (B, HW, 2*Cp) bf16 (NHWC view, gamma then beta).  -> (B, Cp, HW) f32.
    """
    Bsz, Cp, HW = content_r.shape
    ct = _largest_divisor(Cp, 256, LANE)
    cg = Cp // ct
    hwt = _largest_divisor(HW, max(LANE, min(HW // 2, 4096)), LANE)
    nhw = HW // hwt

    def kernel(x_ref, m_ref, r_ref, g_ref, b_ref, o_ref):
        norm = (x_ref[0] - m_ref[0]) * r_ref[0]             # (ct, hwt) f32
        # gamma/beta arrive in the conv's NHWC layout; transpose on-chip (XLU),
        # in bf16 (half the bytes through the XLU), then upcast.
        gamma = jnp.transpose(g_ref[0], (1, 0)).astype(jnp.float32)
        beta = jnp.transpose(b_ref[0], (1, 0)).astype(jnp.float32)
        o_ref[0] = norm * gamma + beta

    gb_bytes = gb_r.size * gb_r.dtype.itemsize
    return pl.pallas_call(
        kernel,
        out_shape=jax.ShapeDtypeStruct((Bsz, Cp, HW), jnp.float32),
        grid=(Bsz, cg, nhw),
        in_specs=[
            pl.BlockSpec((1, ct, hwt), lambda b, c, hw: (b, c, hw)),
            pl.BlockSpec((1, ct, 1), lambda b, c, hw: (b, c, 0)),
            pl.BlockSpec((1, ct, 1), lambda b, c, hw: (b, c, 0)),
            pl.BlockSpec((1, hwt, ct), lambda b, c, hw: (b, hw, c)),        # gamma
            pl.BlockSpec((1, hwt, ct), lambda b, c, hw: (b, hw, c + cg)),   # beta
        ],
        out_specs=pl.BlockSpec((1, ct, hwt), lambda b, c, hw: (b, c, hw)),
        compiler_params=_compiler_params(("parallel",) * 3),
        cost_estimate=pl.CostEstimate(
            flops=4 * Bsz * Cp * HW, transcendentals=0,
            bytes_accessed=2 * content_r.size * 4 + gb_bytes + 2 * Bsz * Cp * 4),
    )(content_r, mean, rstd, gb_r, gb_r)


# ----------------------------------------------------------------------------
# Parameter preparation (PyTorch layouts -> fused, channel-padded, stacked)
# ----------------------------------------------------------------------------
def init_branch_params(key, C):
    """Deterministic synthetic weights for one branch, PyTorch Conv2d layouts."""
    shapes = [(C, C, 1, 1), (C // 2, C, 3, 3), (C, C // 2, 3, 3), (C, C, 1, 1)]
    params = []
    for shp in shapes:
        key, kw, kb = jax.random.split(key, 3)
        w = 0.1 * jax.random.normal(kw, shp, dtype=jnp.float32)
        b = 0.05 * jax.random.normal(kb, (shp[0],), dtype=jnp.float32)
        params.append((w, b))
    return params


def _pad_bias(b, cout_p):
    return jnp.zeros((1, cout_p), jnp.float32).at[0, :b.shape[0]].set(b)


def _fuse_1x1(gamma_wb, beta_wb, cin_p, cout_p):
    ws, bs = [], []
    for w, b in (gamma_wb, beta_wb):
        cout, cin = w.shape[0], w.shape[1]
        wm = w.reshape(cout, cin).T                              # (Cin, Cout)
        ws.append(jnp.zeros((cin_p, cout_p), jnp.float32)
                  .at[:cin, :cout].set(wm))
        bs.append(_pad_bias(b, cout_p))
    return jnp.stack(ws).astype(CONV_DTYPE), jnp.stack(bs)


def _fuse_3x3(gamma_wb, beta_wb, cin_p, cout_p):
    ws, bs = [], []
    for w, b in (gamma_wb, beta_wb):
        cout, cin = w.shape[0], w.shape[1]
        wt = jnp.transpose(w, (2, 3, 1, 0))                      # (ky, kx, Cin, Cout)
        wp = (jnp.zeros((3, 3, cin_p, cout_p), jnp.float32)
              .at[:, :, :cin, :cout].set(wt))
        ws.append(wp.reshape(3, 3 * cin_p, cout_p))              # dx-major in 3*Cin
        bs.append(_pad_bias(b, cout_p))
    return jnp.stack(ws).astype(CONV_DTYPE), jnp.stack(bs)


def prepare_fused_params(gamma_params, beta_params, C):
    """Zero-pad channels to multiples of 128 and stack gamma/beta branches."""
    cp = _round_up(C, LANE)
    ch = _round_up(max(C // 2, 1), LANE)
    return (
        _fuse_1x1(gamma_params[0], beta_params[0], cp, cp),
        _fuse_3x3(gamma_params[1], beta_params[1], cp, ch),
        _fuse_3x3(gamma_params[2], beta_params[2], ch, cp),
        _fuse_1x1(gamma_params[3], beta_params[3], cp, cp),
    )


# ----------------------------------------------------------------------------
# Full module forward
# ----------------------------------------------------------------------------
@jax.jit
def srm_fl_forward(content_feats_orig, style_feats, fused_params):
    """content/style: NCHW f32.  Returns NCHW f32 (SRM_FL.forward semantics)."""
    (W0, B0), (W1, B1), (W2, B2), (W3, B3) = fused_params
    Bsz, C, H, W = content_feats_orig.shape
    Cp = W0.shape[1]

    # style NCHW -> NHWC (one layout transform feeding the conv matmuls);
    # zero-pad channels to a lane-dense multiple of 128 (no-op when C % 128 == 0).
    style_nhwc = jnp.transpose(style_feats, (0, 2, 3, 1)).astype(CONV_DTYPE)
    style_p = jnp.pad(style_nhwc, ((0, 0), (0, 0), (0, 0), (0, Cp - C)))

    # Fused gamma|beta branch net; activations stay concatenated along channels.
    h = conv1x1_grouped(style_p.reshape(Bsz * H * W, Cp), W0, B0,
                        shared_input=True, out_dtype=CONV_DTYPE)
    h = h.reshape(Bsz, H, W, 2 * Cp)
    h = conv3x3_grouped(h, W1, B1, out_dtype=CONV_DTYPE)      # (B,H,W,2*Ch)
    h = conv3x3_grouped(h, W2, B2, out_dtype=CONV_DTYPE)      # (B,H,W,2*Cp)
    gb = conv1x1_grouped(h.reshape(Bsz * H * W, 2 * Cp), W3, B3,
                         shared_input=False, out_dtype=CONV_DTYPE)  # bf16 gamma|beta
    gb_r = gb.reshape(Bsz, H * W, 2 * Cp)          # NHWC view — no HBM transpose

    # Content stays in native NCHW layout; the (B, Cp, H*W) reshape is free.
    content_p = jnp.pad(content_feats_orig, ((0, 0), (0, Cp - C), (0, 0), (0, 0)))
    content_r = content_p.reshape(Bsz, Cp, H * W)

    mean, rstd = srm_instance_stats(content_r)
    out_r = srm_apply_modulation(content_r, mean, rstd, gb_r)
    return out_r.reshape(Bsz, Cp, H, W)[:, :C]


# ----------------------------------------------------------------------------
# Pure-JAX (XLA, f32) reference mirroring the PyTorch module — for self-check.
# ----------------------------------------------------------------------------
def _reference_forward(content, style, gamma_params, beta_params):
    def conv(x, w, b, pad):
        y = jax.lax.conv_general_dilated(
            x, w, window_strides=(1, 1), padding=[(pad, pad), (pad, pad)],
            dimension_numbers=("NCHW", "OIHW", "NCHW"))
        return y + b.reshape(1, -1, 1, 1)

    def branch(x, params):
        (w0, b0), (w1, b1), (w2, b2), (w3, b3) = params
        h = conv(x, w0, b0, 0)
        h = conv(h, w1, b1, 1)
        h = conv(h, w2, b2, 1)
        return conv(h, w3, b3, 0)

    gamma = branch(style, gamma_params)
    beta = branch(style, beta_params)
    mean = jnp.mean(content, axis=(2, 3), keepdims=True)
    var = jnp.var(content, axis=(2, 3), keepdims=True, ddof=1)   # torch.var: unbiased
    return (content - mean) / jnp.sqrt(var + EPS) * gamma + beta


if __name__ == "__main__":
    B, C, H, W = 2, 4, 16, 16

    key = jax.random.PRNGKey(0)
    k_content, k_style, k_gamma, k_beta = jax.random.split(key, 4)
    content = jax.random.normal(k_content, (B, C, H, W), dtype=jnp.float32)
    style = jax.random.normal(k_style, (B, C, H, W), dtype=jnp.float32)

    gamma_params = init_branch_params(k_gamma, C)
    beta_params = init_branch_params(k_beta, C)
    fused_params = prepare_fused_params(gamma_params, beta_params, C)

    out = srm_fl_forward(content, style, fused_params)
    out = jax.block_until_ready(out)

    assert out.shape == (B, C, H, W)
    assert out.dtype == jnp.float32
    assert bool(jnp.all(jnp.isfinite(out)))

    # numerical sanity vs the f32 XLA reference (bf16 convs + bf16 gamma/beta)
    ref = _reference_forward(content, style, gamma_params, beta_params)
    err = float(jnp.max(jnp.abs(out - ref)))
    scale = float(jnp.max(jnp.abs(ref)))
    assert err <= 0.05 * (1.0 + scale), f"mismatch vs reference: max abs err {err}"

    print("KERNEL_OK")
</pallas_src>

<mosaic_0001>
module attributes {stable_mosaic.version = 11 : i64} {
  func.func @_matmul_bias_kernel(%arg0: i32, %arg1: i32, %arg2: i32, %arg3: memref<512x128xbf16, #tpu.memory_space<vmem>>, %arg4: memref<1x128x128xbf16, #tpu.memory_space<vmem>>, %arg5: memref<1x1x128xf32, #tpu.memory_space<vmem>>, %arg6: memref<512x128xbf16, #tpu.memory_space<vmem>>) attributes {dimension_semantics = [#tpu.dimension_semantics<parallel>, #tpu.dimension_semantics<parallel>, #tpu.dimension_semantics<parallel>], iteration_bounds = array<i64: 1, 2, 1>, scalar_prefetch = 0 : i64, scratch_operands = 0 : i64, tpu.core_type = #tpu.core_type<tc>, window_params = [{transform_indices = @transform_0, window_bounds = array<i64: 512, 128>}, {transform_indices = @transform_1, window_bounds = array<i64: 1, 128, 128>}, {transform_indices = @transform_2, window_bounds = array<i64: 1, 1, 128>}, {transform_indices = @transform_3, window_bounds = array<i64: 512, 128>}]} {
    %c0 = arith.constant 0 : index
    %c0_0 = arith.constant 0 : index
    %0 = vector.load %arg3[%c0, %c0_0] : memref<512x128xbf16, #tpu.memory_space<vmem>>, vector<512x128xbf16>
    %c0_1 = arith.constant 0 : index
    %c0_2 = arith.constant 0 : index
    %c0_3 = arith.constant 0 : index
    %1 = vector.load %arg4[%c0_1, %c0_2, %c0_3] : memref<1x128x128xbf16, #tpu.memory_space<vmem>>, vector<1x128x128xbf16>
    %2 = vector.shape_cast %1 : vector<1x128x128xbf16> to vector<128x128xbf16>
    %cst = arith.constant dense<0.000000e+00> : vector<512x128xf32>
    %3 = tpu.matmul %0, %2, %cst {dimension_numbers = #tpu.dot_dimension_numbers<[1], [0], [0], [1], [0, 0, 1, 1], [], []>} : vector<512x128xbf16>, vector<128x128xbf16>, vector<512x128xf32> -> vector<512x128xf32>
    %c0_4 = arith.constant 0 : index
    %c0_5 = arith.constant 0 : index
    %c0_6 = arith.constant 0 : index
    %4 = vector.load %arg5[%c0_4, %c0_5, %c0_6] : memref<1x1x128xf32, #tpu.memory_space<vmem>>, vector<1x1x128xf32>
    %5 = vector.shape_cast %4 : vector<1x1x128xf32> to vector<1x128xf32>
    %6 = vector.broadcast %5 : vector<1x128xf32> to vector<512x128xf32>
    %7 = arith.addf %3, %6 : vector<512x128xf32>
    %8 = arith.truncf %7 : vector<512x128xf32> to vector<512x128xbf16>
    %c0_7 = arith.constant 0 : index
    %c0_8 = arith.constant 0 : index
    %9 = vector.load %arg6[%c0_7, %c0_8] : memref<512x128xbf16, #tpu.memory_space<vmem>>, vector<512x128xbf16>
    tpu.vector_store %arg6[%c0_7, %c0_8], %8 {strides = array<i32>} : memref<512x128xbf16, #tpu.memory_space<vmem>>, vector<512x128xbf16>,
    return
  }
  func.func @transform_0(%arg0: i32, %arg1: i32, %arg2: i32) -> (i32, i32) {
    %c0_i32 = arith.constant 0 : i32
    %c0_i32_0 = arith.constant 0 : i32
    return %arg0, %c0_i32 : i32, i32
  }
  func.func @transform_1(%arg0: i32, %arg1: i32, %arg2: i32) -> (i32, i32, i32) {
    %c0_i32 = arith.constant 0 : i32
    %c0_i32_0 = arith.constant 0 : i32
    return %arg1, %c0_i32, %arg2 : i32, i32, i32
  }
  func.func @transform_2(%arg0: i32, %arg1: i32, %arg2: i32) -> (i32, i32, i32) {
    %c0_i32 = arith.constant 0 : i32
    %c0_i32_0 = arith.constant 0 : i32
    return %arg1, %c0_i32, %arg2 : i32, i32, i32
  }
  func.func @transform_3(%arg0: i32, %arg1: i32, %arg2: i32) -> (i32, i32) {
    %c1_i32 = arith.constant 1 : i32
    %0 = arith.muli %arg1, %c1_i32 : i32
    %1 = arith.addi %0, %arg2 : i32
    %c0_i32 = arith.constant 0 : i32
    return %arg0, %1 : i32, i32
  }
}

module attributes {stable_mosaic.version = 11 : i64} {
  func.func @_conv3x3_kernel(%arg0: i32, %arg1: i32, %arg2: i32, %arg3: i32, %arg4: memref<1x8x16x128xbf16, #tpu.memory_space<vmem>>, %arg5: memref<1x1x16x128xbf16, #tpu.memory_space<vmem>>, %arg6: memref<1x1x16x128xbf16, #tpu.memory_space<vmem>>, %arg7: memref<1x3x384x128xbf16, #tpu.memory_space<vmem>>, %arg8: memref<1x1x128xf32, #tpu.memory_space<vmem>>, %arg9: memref<1x8x16x128xbf16, #tpu.memory_space<vmem>>) attributes {dimension_semantics = [#tpu.dimension_semantics<parallel>, #tpu.dimension_semantics<parallel>, #tpu.dimension_semantics<parallel>, #tpu.dimension_semantics<parallel>], iteration_bounds = array<i64: 2, 2, 1, 2>, scalar_prefetch = 0 : i64, scratch_operands = 0 : i64, tpu.core_type = #tpu.core_type<tc>, window_params = [{transform_indices = @transform_0, window_bounds = array<i64: 1, 8, 16, 128>}, {transform_indices = @transform_1, window_bounds = array<i64: 1, 1, 16, 128>}, {transform_indices = @transform_2, window_bounds = array<i64: 1, 1, 16, 128>}, {transform_indices = @transform_3, window_bounds = array<i64: 1, 3, 384, 128>}, {transform_indices = @transform_4, window_bounds = array<i64: 1, 1, 128>}, {transform_indices = @transform_5, window_bounds = array<i64: 1, 8, 16, 128>}]} {
    %c0 = arith.constant 0 : index
    %c0_0 = arith.constant 0 : index
    %c0_1 = arith.constant 0 : index
    %c0_2 = arith.constant 0 : index
    %0 = vector.load %arg5[%c0, %c0_0, %c0_1, %c0_2] : memref<1x1x16x128xbf16, #tpu.memory_space<vmem>>, vector<1x1x16x128xbf16>
    %1 = vector.shape_cast %0 : vector<1x1x16x128xbf16> to vector<1x16x128xbf16>
    %c0_3 = arith.constant 0 : index
    %c0_4 = arith.constant 0 : index
    %c0_5 = arith.constant 0 : index
    %c0_6 = arith.constant 0 : index
    %2 = vector.load %arg6[%c0_3, %c0_4, %c0_5, %c0_6] : memref<1x1x16x128xbf16, #tpu.memory_space<vmem>>, vector<1x1x16x128xbf16>
    %3 = vector.shape_cast %2 : vector<1x1x16x128xbf16> to vector<1x16x128xbf16>
    %c0_i32 = arith.constant 0 : i32
    %4 = arith.cmpi eq, %arg3, %c0_i32 : i32
    %cst = arith.constant 0.000000e+00 : bf16
    %5 = vector.broadcast %cst : bf16 to vector<1x16x128xbf16>
    %6 = arith.select %4, %5, %1 : vector<1x16x128xbf16>
    %c1_i32 = arith.constant 1 : i32
    %7 = arith.cmpi eq, %arg3, %c1_i32 : i32
    %cst_7 = arith.constant 0.000000e+00 : bf16
    %8 = vector.broadcast %cst_7 : bf16 to vector<1x16x128xbf16>
    %9 = arith.select %7, %8, %3 : vector<1x16x128xbf16>
    %c0_8 = arith.constant 0 : index
    %c0_9 = arith.constant 0 : index
    %c0_10 = arith.constant 0 : index
    %c0_11 = arith.constant 0 : index
    %10 = vector.load %arg4[%c0_8, %c0_9, %c0_10, %c0_11] : memref<1x8x16x128xbf16, #tpu.memory_space<vmem>>, vector<1x8x16x128xbf16>
    %11 = vector.shape_cast %10 : vector<1x8x16x128xbf16> to vector<8x16x128xbf16>
    %12 = tpu.concatenate %6, %11, %9 in 0 : vector<1x16x128xbf16>, vector<8x16x128xbf16>, vector<1x16x128xbf16> -> vector<10x16x128xbf16>
    %cst_12 = arith.constant 0.000000e+00 : bf16
    %13 = vector.broadcast %cst_12 : bf16 to vector<10x1x128xbf16>
    %14 = vector.extract_strided_slice %12 {offsets = [0, 0, 0], sizes = [10, 15, 128], strides = [1, 1, 1]} : vector<10x16x128xbf16> to vector<10x15x128xbf16>
    %15 = tpu.concatenate %13, %14 in 1 : vector<10x1x128xbf16>, vector<10x15x128xbf16> -> vector<10x16x128xbf16>
    %16 = vector.extract_strided_slice %12 {offsets = [0, 1, 0], sizes = [10, 15, 128], strides = [1, 1, 1]} : vector<10x16x128xbf16> to vector<10x15x128xbf16>
    %17 = tpu.concatenate %16, %13 in 1 : vector<10x15x128xbf16>, vector<10x1x128xbf16> -> vector<10x16x128xbf16>
    %18 = tpu.concatenate %15, %12, %17 in 2 : vector<10x16x128xbf16>, vector<10x16x128xbf16>, vector<10x16x128xbf16> -> vector<10x16x384xbf16>
    %19 = vector.shape_cast %18 : vector<10x16x384xbf16> to vector<160x384xbf16>
    %20 = vector.extract_strided_slice %19 {offsets = [0, 0], sizes = [128, 384], strides = [1, 1]} : vector<160x384xbf16> to vector<128x384xbf16>
    %c0_13 = arith.constant 0 : index
    %c0_14 = arith.constant 0 : index
    %c0_15 = arith.constant 0 : index
    %c0_16 = arith.constant 0 : index
    %21 = vector.load %arg7[%c0_13, %c0_14, %c0_15, %c0_16] : memref<1x3x384x128xbf16, #tpu.memory_space<vmem>>, vector<1x1x384x128xbf16>
    %22 = vector.shape_cast %21 : vector<1x1x384x128xbf16> to vector<384x128xbf16>
    %cst_17 = arith.constant dense<0.000000e+00> : vector<128x128xf32>
    %23 = tpu.matmul %20, %22, %cst_17 {dimension_numbers = #tpu.dot_dimension_numbers<[1], [0], [0], [1], [0, 0, 1, 1], [], []>} : vector<128x384xbf16>, vector<384x128xbf16>, vector<128x128xf32> -> vector<128x128xf32>
    %24 = vector.extract_strided_slice %19 {offsets = [16, 0], sizes = [128, 384], strides = [1, 1]} : vector<160x384xbf16> to vector<128x384xbf16>
    %c0_18 = arith.constant 0 : index
    %c1 = arith.constant 1 : index
    %c0_19 = arith.constant 0 : index
    %c0_20 = arith.constant 0 : index
    %25 = vector.load %arg7[%c0_18, %c1, %c0_19, %c0_20] : memref<1x3x384x128xbf16, #tpu.memory_space<vmem>>, vector<1x1x384x128xbf16>
    %26 = vector.shape_cast %25 : vector<1x1x384x128xbf16> to vector<384x128xbf16>
    %cst_21 = arith.constant dense<0.000000e+00> : vector<128x128xf32>
    %27 = tpu.matmul %24, %26, %cst_21 {dimension_numbers = #tpu.dot_dimension_numbers<[1], [0], [0], [1], [0, 0, 1, 1], [], []>} : vector<128x384xbf16>, vector<384x128xbf16>, vector<128x128xf32> -> vector<128x128xf32>
    %28 = arith.addf %23, %27 : vector<128x128xf32>
    %29 = vector.extract_strided_slice %19 {offsets = [32, 0], sizes = [128, 384], strides = [1, 1]} : vector<160x384xbf16> to vector<128x384xbf16>
    %c0_22 = arith.constant 0 : index
    %c2 = arith.constant 2 : index
    %c0_23 = arith.constant 0 : index
    %c0_24 = arith.constant 0 : index
    %30 = vector.load %arg7[%c0_22, %c2, %c0_23, %c0_24] : memref<1x3x384x128xbf16, #tpu.memory_space<vmem>>, vector<1x1x384x128xbf16>
    %31 = vector.shape_cast %30 : vector<1x1x384x128xbf16> to vector<384x128xbf16>
    %cst_25 = arith.constant dense<0.000000e+00> : vector<128x128xf32>
    %32 = tpu.matmul %29, %31, %cst_25 {dimension_numbers = #tpu.dot_dimension_numbers<[1], [0], [0], [1], [0, 0, 1, 1], [], []>} : vector<128x384xbf16>, vector<384x128xbf16>, vector<128x128xf32> -> vector<128x128xf32>
    %33 = arith.addf %28, %32 : vector<128x128xf32>
    %c0_26 = arith.constant 0 : index
    %c0_27 = arith.constant 0 : index
    %c0_28 = arith.constant 0 : index
    %34 = vector.load %arg8[%c0_26, %c0_27, %c0_28] : memref<1x1x128xf32, #tpu.memory_space<vmem>>, vector<1x1x128xf32>
    %35 = vector.shape_cast %34 : vector<1x1x128xf32> to vector<1x128xf32>
    %36 = vector.broadcast %35 : vector<1x128xf32> to vector<128x128xf32>
    %37 = arith.addf %33, %36 : vector<128x128xf32>
    %38 = vector.shape_cast %37 : vector<128x128xf32> to vector<1x8x16x128xf32>
    %39 = arith.truncf %38 : vector<1x8x16x128xf32> to vector<1x8x16x128xbf16>
    %c0_29 = arith.constant 0 : index
    %c0_30 = arith.constant 0 : index
    %c0_31 = arith.constant 0 : index
    %c0_32 = arith.constant 0 : index
    %40 = vector.load %arg9[%c0_29, %c0_30, %c0_31, %c0_32] : memref<1x8x16x128xbf16, #tpu.memory_space<vmem>>, vector<1x8x16x128xbf16>
    tpu.vector_store %arg9[%c0_29, %c0_30, %c0_31, %c0_32], %39 {strides = array<i32>} : memref<1x8x16x128xbf16, #tpu.memory_space<vmem>>, vector<1x8x16x128xbf16>,
    return
  }
  func.func @transform_0(%arg0: i32, %arg1: i32, %arg2: i32, %arg3: i32) -> (i32, i32, i32, i32) {
    %c0_i32 = arith.constant 0 : i32
    %c0_i32_0 = arith.constant 0 : i32
    return %arg0, %arg3, %c0_i32, %arg1 : i32, i32, i32, i32
  }
  func.func @transform_1(%arg0: i32, %arg1: i32, %arg2: i32, %arg3: i32) -> (i32, i32, i32, i32) {
    %c8_i32 = arith.constant 8 : i32
    %0 = arith.muli %arg3, %c8_i32 : i32
    %c1_i32 = arith.constant 1 : i32
    %1 = arith.subi %0, %c1_i32 : i32
    %c0_i32 = arith.constant 0 : i32
    %2 = arith.maxsi %1, %c0_i32 : i32
    %c0_i32_0 = arith.constant 0 : i32
    %c0_i32_1 = arith.constant 0 : i32
    return %arg0, %2, %c0_i32_0, %arg1 : i32, i32, i32, i32
  }
  func.func @transform_2(%arg0: i32, %arg1: i32, %arg2: i32, %arg3: i32) -> (i32, i32, i32, i32) {
    %c8_i32 = arith.constant 8 : i32
    %0 = arith.muli %arg3, %c8_i32 : i32
    %c8_i32_0 = arith.constant 8 : i32
    %1 = arith.addi %0, %c8_i32_0 : i32
    %c15_i32 = arith.constant 15 : i32
    %2 = arith.minsi %1, %c15_i32 : i32
    %c0_i32 = arith.constant 0 : i32
    %c0_i32_1 = arith.constant 0 : i32
    return %arg0, %2, %c0_i32, %arg1 : i32, i32, i32, i32
  }
  func.func @transform_3(%arg0: i32, %arg1: i32, %arg2: i32, %arg3: i32) -> (i32, i32, i32, i32) {
    %c0_i32 = arith.constant 0 : i32
    %c0_i32_0 = arith.constant 0 : i32
    %c0_i32_1 = arith.constant 0 : i32
    return %arg1, %c0_i32, %c0_i32_0, %arg2 : i32, i32, i32, i32
  }
  func.func @transform_4(%arg0: i32, %arg1: i32, %arg2: i32, %arg3: i32) -> (i32, i32, i32) {
    %c0_i32 = arith.constant 0 : i32
    %c0_i32_0 = arith.constant 0 : i32
    return %arg1, %c0_i32, %arg2 : i32, i32, i32
  }
  func.func @transform_5(%arg0: i32, %arg1: i32, %arg2: i32, %arg3: i32) -> (i32, i32, i32, i32) {
    %c1_i32 = arith.constant 1 : i32
    %0 = arith.muli %arg1, %c1_i32 : i32
    %1 = arith.addi %0, %arg2 : i32
    %c0_i32 = arith.constant 0 : i32
    %c0_i32_0 = arith.constant 0 : i32
    return %arg0, %arg3, %c0_i32, %1 : i32, i32, i32, i32
  }
}

module attributes {stable_mosaic.version = 11 : i64} {
  func.func @_matmul_bias_kernel(%arg0: i32, %arg1: i32, %arg2: i32, %arg3: memref<512x128xbf16, #tpu.memory_space<vmem>>, %arg4: memref<1x128x128xbf16, #tpu.memory_space<vmem>>, %arg5: memref<1x1x128xf32, #tpu.memory_space<vmem>>, %arg6: memref<512x128xbf16, #tpu.memory_space<vmem>>) attributes {dimension_semantics = [#tpu.dimension_semantics<parallel>, #tpu.dimension_semantics<parallel>, #tpu.dimension_semantics<parallel>], iteration_bounds = array<i64: 1, 2, 1>, scalar_prefetch = 0 : i64, scratch_operands = 0 : i64, tpu.core_type = #tpu.core_type<tc>, window_params = [{transform_indices = @transform_0, window_bounds = array<i64: 512, 128>}, {transform_indices = @transform_1, window_bounds = array<i64: 1, 128, 128>}, {transform_indices = @transform_2, window_bounds = array<i64: 1, 1, 128>}, {transform_indices = @transform_3, window_bounds = array<i64: 512, 128>}]} {
    %c0 = arith.constant 0 : index
    %c0_0 = arith.constant 0 : index
    %0 = vector.load %arg3[%c0, %c0_0] : memref<512x128xbf16, #tpu.memory_space<vmem>>, vector<512x128xbf16>
    %c0_1 = arith.constant 0 : index
    %c0_2 = arith.constant 0 : index
    %c0_3 = arith.constant 0 : index
    %1 = vector.load %arg4[%c0_1, %c0_2, %c0_3] : memref<1x128x128xbf16, #tpu.memory_space<vmem>>, vector<1x128x128xbf16>
    %2 = vector.shape_cast %1 : vector<1x128x128xbf16> to vector<128x128xbf16>
    %cst = arith.constant dense<0.000000e+00> : vector<512x128xf32>
    %3 = tpu.matmul %0, %2, %cst {dimension_numbers = #tpu.dot_dimension_numbers<[1], [0], [0], [1], [0, 0, 1, 1], [], []>} : vector<512x128xbf16>, vector<128x128xbf16>, vector<512x128xf32> -> vector<512x128xf32>
    %c0_4 = arith.constant 0 : index
    %c0_5 = arith.constant 0 : index
    %c0_6 = arith.constant 0 : index
    %4 = vector.load %arg5[%c0_4, %c0_5, %c0_6] : memref<1x1x128xf32, #tpu.memory_space<vmem>>, vector<1x1x128xf32>
    %5 = vector.shape_cast %4 : vector<1x1x128xf32> to vector<1x128xf32>
    %6 = vector.broadcast %5 : vector<1x128xf32> to vector<512x128xf32>
    %7 = arith.addf %3, %6 : vector<512x128xf32>
    %8 = arith.truncf %7 : vector<512x128xf32> to vector<512x128xbf16>
    %c0_7 = arith.constant 0 : index
    %c0_8 = arith.constant 0 : index
    %9 = vector.load %arg6[%c0_7, %c0_8] : memref<512x128xbf16, #tpu.memory_space<vmem>>, vector<512x128xbf16>
    tpu.vector_store %arg6[%c0_7, %c0_8], %8 {strides = array<i32>} : memref<512x128xbf16, #tpu.memory_space<vmem>>, vector<512x128xbf16>,
    return
  }
  func.func @transform_0(%arg0: i32, %arg1: i32, %arg2: i32) -> (i32, i32) {
    %c0_i32 = arith.constant 0 : i32
    return %arg0, %arg1 : i32, i32
  }
  func.func @transform_1(%arg0: i32, %arg1: i32, %arg2: i32) -> (i32, i32, i32) {
    %c0_i32 = arith.constant 0 : i32
    %c0_i32_0 = arith.constant 0 : i32
    return %arg1, %c0_i32, %arg2 : i32, i32, i32
  }
  func.func @transform_2(%arg0: i32, %arg1: i32, %arg2: i32) -> (i32, i32, i32) {
    %c0_i32 = arith.constant 0 : i32
    %c0_i32_0 = arith.constant 0 : i32
    return %arg1, %c0_i32, %arg2 : i32, i32, i32
  }
  func.func @transform_3(%arg0: i32, %arg1: i32, %arg2: i32) -> (i32, i32) {
    %c1_i32 = arith.constant 1 : i32
    %0 = arith.muli %arg1, %c1_i32 : i32
    %1 = arith.addi %0, %arg2 : i32
    %c0_i32 = arith.constant 0 : i32
    return %arg0, %1 : i32, i32
  }
}

module attributes {stable_mosaic.version = 11 : i64} {
  func.func @kernel(%arg0: i32, %arg1: i32, %arg2: i32, %arg3: memref<1x128x128xf32, #tpu.memory_space<vmem>>, %arg4: memref<1x128x1xf32, #tpu.memory_space<vmem>>, %arg5: memref<1x128x1xf32, #tpu.memory_space<vmem>>, %arg6: memref<1x128x128xbf16, #tpu.memory_space<vmem>>, %arg7: memref<1x128x128xbf16, #tpu.memory_space<vmem>>, %arg8: memref<1x128x128xf32, #tpu.memory_space<vmem>>) attributes {dimension_semantics = [#tpu.dimension_semantics<parallel>, #tpu.dimension_semantics<parallel>, #tpu.dimension_semantics<parallel>], iteration_bounds = array<i64: 2, 1, 2>, scalar_prefetch = 0 : i64, scratch_operands = 0 : i64, tpu.core_type = #tpu.core_type<tc>, window_params = [{transform_indices = @transform_0, window_bounds = array<i64: 1, 128, 128>}, {transform_indices = @transform_1, window_bounds = array<i64: 1, 128, 1>}, {transform_indices = @transform_2, window_bounds = array<i64: 1, 128, 1>}, {transform_indices = @transform_3, window_bounds = array<i64: 1, 128, 128>}, {transform_indices = @transform_4, window_bounds = array<i64: 1, 128, 128>}, {transform_indices = @transform_5, window_bounds = array<i64: 1, 128, 128>}]} {
    %c0 = arith.constant 0 : index
    %c0_0 = arith.constant 0 : index
    %c0_1 = arith.constant 0 : index
    %0 = vector.load %arg3[%c0, %c0_0, %c0_1] : memref<1x128x128xf32, #tpu.memory_space<vmem>>, vector<1x128x128xf32>
    %1 = vector.shape_cast %0 : vector<1x128x128xf32> to vector<128x128xf32>
    %c0_2 = arith.constant 0 : index
    %c0_3 = arith.constant 0 : index
    %c0_4 = arith.constant 0 : index
    %2 = vector.load %arg4[%c0_2, %c0_3, %c0_4] : memref<1x128x1xf32, #tpu.memory_space<vmem>>, vector<1x128x1xf32>
    %3 = vector.shape_cast %2 : vector<1x128x1xf32> to vector<128x1xf32>
    %4 = vector.broadcast %3 : vector<128x1xf32> to vector<128x128xf32>
    %5 = arith.subf %1, %4 : vector<128x128xf32>
    %c0_5 = arith.constant 0 : index
    %c0_6 = arith.constant 0 : index
    %c0_7 = arith.constant 0 : index
    %6 = vector.load %arg5[%c0_5, %c0_6, %c0_7] : memref<1x128x1xf32, #tpu.memory_space<vmem>>, vector<1x128x1xf32>
    %7 = vector.shape_cast %6 : vector<1x128x1xf32> to vector<128x1xf32>
    %8 = vector.broadcast %7 : vector<128x1xf32> to vector<128x128xf32>
    %9 = arith.mulf %5, %8 : vector<128x128xf32>
    %c0_8 = arith.constant 0 : index
    %c0_9 = arith.constant 0 : index
    %c0_10 = arith.constant 0 : index
    %10 = vector.load %arg6[%c0_8, %c0_9, %c0_10] : memref<1x128x128xbf16, #tpu.memory_space<vmem>>, vector<1x128x128xbf16>
    %11 = vector.shape_cast %10 : vector<1x128x128xbf16> to vector<128x128xbf16>
    %12 = tpu.transpose %11, [1, 0] : vector<128x128xbf16> -> vector<128x128xbf16>
    %13 = arith.extf %12 : vector<128x128xbf16> to vector<128x128xf32>
    %c0_11 = arith.constant 0 : index
    %c0_12 = arith.constant 0 : index
    %c0_13 = arith.constant 0 : index
    %14 = vector.load %arg7[%c0_11, %c0_12, %c0_13] : memref<1x128x128xbf16, #tpu.memory_space<vmem>>, vector<1x128x128xbf16>
    %15 = vector.shape_cast %14 : vector<1x128x128xbf16> to vector<128x128xbf16>
    %16 = tpu.transpose %15, [1, 0] : vector<128x128xbf16> -> vector<128x128xbf16>
    %17 = arith.extf %16 : vector<128x128xbf16> to vector<128x128xf32>
    %18 = arith.mulf %9, %13 : vector<128x128xf32>
    %19 = arith.addf %18, %17 : vector<128x128xf32>
    %c0_14 = arith.constant 0 : index
    %c0_15 = arith.constant 0 : index
    %c0_16 = arith.constant 0 : index
    %20 = vector.load %arg8[%c0_14, %c0_15, %c0_16] : memref<1x128x128xf32, #tpu.memory_space<vmem>>, vector<1x128x128xf32>
    %21 = vector.shape_cast %20 : vector<1x128x128xf32> to vector<128x128xf32>
    %22 = vector.shape_cast %19 : vector<128x128xf32> to vector<1x128x128xf32>
    tpu.vector_store %arg8[%c0_14, %c0_15, %c0_16], %22 {strides = array<i32>} : memref<1x128x128xf32, #tpu.memory_space<vmem>>, vector<1x128x128xf32>,
    return
  }
  func.func @transform_0(%arg0: i32, %arg1: i32, %arg2: i32) -> (i32, i32, i32) {
    %c0_i32 = arith.constant 0 : i32
    return %arg0, %arg1, %arg2 : i32, i32, i32
  }
  func.func @transform_1(%arg0: i32, %arg1: i32, %arg2: i32) -> (i32, i32, i32) {
    %c0_i32 = arith.constant 0 : i32
    %c0_i32_0 = arith.constant 0 : i32
    return %arg0, %arg1, %c0_i32 : i32, i32, i32
  }
  func.func @transform_2(%arg0: i32, %arg1: i32, %arg2: i32) -> (i32, i32, i32) {
    %c0_i32 = arith.constant 0 : i32
    %c0_i32_0 = arith.constant 0 : i32
    return %arg0, %arg1, %c0_i32 : i32, i32, i32
  }
  func.func @transform_3(%arg0: i32, %arg1: i32, %arg2: i32) -> (i32, i32, i32) {
    %c0_i32 = arith.constant 0 : i32
    return %arg0, %arg2, %arg1 : i32, i32, i32
  }
  func.func @transform_4(%arg0: i32, %arg1: i32, %arg2: i32) -> (i32, i32, i32) {
    %c1_i32 = arith.constant 1 : i32
    %0 = arith.addi %arg1, %c1_i32 : i32
    %c0_i32 = arith.constant 0 : i32
    return %arg0, %arg2, %0 : i32, i32, i32
  }
  func.func @transform_5(%arg0: i32, %arg1: i32, %arg2: i32) -> (i32, i32, i32) {
    %c0_i32 = arith.constant 0 : i32
    return %arg0, %arg1, %arg2 : i32, i32, i32
  }
}

module attributes {stable_mosaic.version = 11 : i64} {
  func.func @kernel(%arg0: i32, %arg1: i32, %arg2: i32, %arg3: memref<1x128x128xf32, #tpu.memory_space<vmem>>, %arg4: memref<1x128x1xf32, #tpu.memory_space<vmem>>, %arg5: memref<1x128x1xf32, #tpu.memory_space<vmem>>, %arg6: memref<128x1xf32, #tpu.memory_space<vmem>>, %arg7: memref<128x1xf32, #tpu.memory_space<vmem>>) attributes {dimension_semantics = [#tpu.dimension_semantics<parallel>, #tpu.dimension_semantics<parallel>, #tpu.dimension_semantics<arbitrary>], iteration_bounds = array<i64: 2, 1, 2>, scalar_prefetch = 0 : i64, scratch_operands = 2 : i64, tpu.core_type = #tpu.core_type<tc>, window_params = [{transform_indices = @transform_0, window_bounds = array<i64: 1, 128, 128>}, {transform_indices = @transform_1, window_bounds = array<i64: 1, 128, 1>}, {transform_indices = @transform_2, window_bounds = array<i64: 1, 128, 1>}]} {
    %c0 = arith.constant 0 : index
    %c0_0 = arith.constant 0 : index
    %c0_1 = arith.constant 0 : index
    %0 = vector.load %arg3[%c0, %c0_0, %c0_1] : memref<1x128x128xf32, #tpu.memory_space<vmem>>, vector<1x128x128xf32>
    %1 = vector.shape_cast %0 : vector<1x128x128xf32> to vector<128x128xf32>
    %cst = arith.constant dense<0.000000e+00> : vector<128xf32>
    %2 = vector.multi_reduction <add>, %1, %cst [1] : vector<128x128xf32> to vector<128xf32>
    %3 = vector.shape_cast %2 : vector<128xf32> to vector<128x1xf32>
    %4 = arith.mulf %1, %1 : vector<128x128xf32>
    %cst_2 = arith.constant dense<0.000000e+00> : vector<128xf32>
    %5 = vector.multi_reduction <add>, %4, %cst_2 [1] : vector<128x128xf32> to vector<128xf32>
    %6 = vector.shape_cast %5 : vector<128xf32> to vector<128x1xf32>
    %c0_i32 = arith.constant 0 : i32
    %7 = arith.cmpi eq, %arg2, %c0_i32 : i32
    %8 = arith.extui %7 : i1 to i32
    %c0_i32_3 = arith.constant 0 : i32
    %9 = arith.cmpi ne, %8, %c0_i32_3 : i32
    scf.if %9 {
      %c0_7 = arith.constant 0 : index
      %c0_8 = arith.constant 0 : index
      %16 = vector.load %arg6[%c0_7, %c0_8] : memref<128x1xf32, #tpu.memory_space<vmem>>, vector<128x1xf32>
      tpu.vector_store %arg6[%c0_7, %c0_8], %3 {strides = array<i32>} : memref<128x1xf32, #tpu.memory_space<vmem>>, vector<128x1xf32>,
      %c0_9 = arith.constant 0 : index
      %c0_10 = arith.constant 0 : index
      %17 = vector.load %arg7[%c0_9, %c0_10] : memref<128x1xf32, #tpu.memory_space<vmem>>, vector<128x1xf32>
      tpu.vector_store %arg7[%c0_9, %c0_10], %6 {strides = array<i32>} : memref<128x1xf32, #tpu.memory_space<vmem>>, vector<128x1xf32>,
    } else {
    }
    %c0_i32_4 = arith.constant 0 : i32
    %10 = arith.cmpi sgt, %arg2, %c0_i32_4 : i32
    %11 = arith.extui %10 : i1 to i32
    %c0_i32_5 = arith.constant 0 : i32
    %12 = arith.cmpi ne, %11, %c0_i32_5 : i32
    scf.if %12 {
      %c0_7 = arith.constant 0 : index
      %c0_8 = arith.constant 0 : index
      %16 = vector.load %arg6[%c0_7, %c0_8] : memref<128x1xf32, #tpu.memory_space<vmem>>, vector<128x1xf32>
      %17 = arith.addf %16, %3 : vector<128x1xf32>
      %c0_9 = arith.constant 0 : index
      %c0_10 = arith.constant 0 : index
      %18 = vector.load %arg6[%c0_9, %c0_10] : memref<128x1xf32, #tpu.memory_space<vmem>>, vector<128x1xf32>
      tpu.vector_store %arg6[%c0_9, %c0_10], %17 {strides = array<i32>} : memref<128x1xf32, #tpu.memory_space<vmem>>, vector<128x1xf32>,
      %c0_11 = arith.constant 0 : index
      %c0_12 = arith.constant 0 : index
      %19 = vector.load %arg7[%c0_11, %c0_12] : memref<128x1xf32, #tpu.memory_space<vmem>>, vector<128x1xf32>
      %20 = arith.addf %19, %6 : vector<128x1xf32>
      %c0_13 = arith.constant 0 : index
      %c0_14 = arith.constant 0 : index
      %21 = vector.load %arg7[%c0_13, %c0_14] : memref<128x1xf32, #tpu.memory_space<vmem>>, vector<128x1xf32>
      tpu.vector_store %arg7[%c0_13, %c0_14], %20 {strides = array<i32>} : memref<128x1xf32, #tpu.memory_space<vmem>>, vector<128x1xf32>,
    } else {
    }
    %c1_i32 = arith.constant 1 : i32
    %13 = arith.cmpi eq, %arg2, %c1_i32 : i32
    %14 = arith.extui %13 : i1 to i32
    %c0_i32_6 = arith.constant 0 : i32
    %15 = arith.cmpi ne, %14, %c0_i32_6 : i32
    scf.if %15 {
      %c0_7 = arith.constant 0 : index
      %c0_8 = arith.constant 0 : index
      %16 = vector.load %arg6[%c0_7, %c0_8] : memref<128x1xf32, #tpu.memory_space<vmem>>, vector<128x1xf32>
      %cst_9 = arith.constant 3.906250e-03 : f32
      %17 = vector.broadcast %cst_9 : f32 to vector<128x1xf32>
      %18 = arith.mulf %16, %17 : vector<128x1xf32>
      %c0_10 = arith.constant 0 : index
      %c0_11 = arith.constant 0 : index
      %19 = vector.load %arg7[%c0_10, %c0_11] : memref<128x1xf32, #tpu.memory_space<vmem>>, vector<128x1xf32>
      %c0_12 = arith.constant 0 : index
      %c0_13 = arith.constant 0 : index
      %20 = vector.load %arg6[%c0_12, %c0_13] : memref<128x1xf32, #tpu.memory_space<vmem>>, vector<128x1xf32>
      %21 = arith.mulf %20, %18 : vector<128x1xf32>
      %22 = arith.subf %19, %21 : vector<128x1xf32>
      %cst_14 = arith.constant 0.00392156886 : f32
      %23 = vector.broadcast %cst_14 : f32 to vector<128x1xf32>
      %24 = arith.mulf %22, %23 : vector<128x1xf32>
      %c0_15 = arith.constant 0 : index
      %c0_16 = arith.constant 0 : index
      %c0_17 = arith.constant 0 : index
      %25 = vector.load %arg4[%c0_15, %c0_16, %c0_17] : memref<1x128x1xf32, #tpu.memory_space<vmem>>, vector<1x128x1xf32>
      %26 = vector.shape_cast %25 : vector<1x128x1xf32> to vector<128x1xf32>
      %27 = vector.shape_cast %18 : vector<128x1xf32> to vector<1x128x1xf32>
      tpu.vector_store %arg4[%c0_15, %c0_16, %c0_17], %27 {strides = array<i32>} : memref<1x128x1xf32, #tpu.memory_space<vmem>>, vector<1x128x1xf32>,
      %cst_18 = arith.constant 1.000000e-07 : f32
      %28 = vector.broadcast %cst_18 : f32 to vector<128x1xf32>
      %29 = arith.addf %24, %28 : vector<128x1xf32>
      %30 = math.rsqrt %29 : vector<128x1xf32>
      %c0_19 = arith.constant 0 : index
      %c0_20 = arith.constant 0 : index
      %c0_21 = arith.constant 0 : index
      %31 = vector.load %arg5[%c0_19, %c0_20, %c0_21] : memref<1x128x1xf32, #tpu.memory_space<vmem>>, vector<1x128x1xf32>
      %32 = vector.shape_cast %31 : vector<1x128x1xf32> to vector<128x1xf32>
      %33 = vector.shape_cast %30 : vector<128x1xf32> to vector<1x128x1xf32>
      tpu.vector_store %arg5[%c0_19, %c0_20, %c0_21], %33 {strides = array<i32>} : memref<1x128x1xf32, #tpu.memory_space<vmem>>, vector<1x128x1xf32>,
    } else {
    }
    return
  }
  func.func @transform_0(%arg0: i32, %arg1: i32, %arg2: i32) -> (i32, i32, i32) {
    %c0_i32 = arith.constant 0 : i32
    return %arg0, %arg1, %arg2 : i32, i32, i32
  }
  func.func @transform_1(%arg0: i32, %arg1: i32, %arg2: i32) -> (i32, i32, i32) {
    %c0_i32 = arith.constant 0 : i32
    %c0_i32_0 = arith.constant 0 : i32
    return %arg0, %arg1, %c0_i32 : i32, i32, i32
  }
  func.func @transform_2(%arg0: i32, %arg1: i32, %arg2: i32) -> (i32, i32, i32) {
    %c0_i32 = arith.constant 0 : i32
    %c0_i32_0 = arith.constant 0 : i32
    return %arg0, %arg1, %c0_i32 : i32, i32, i32
  }
}

</mosaic_0001>

<llo_original>
// kernel: srm_fl_forward.6
$region0: #{srm_fl_forward.6}
  #allocation0 [shape = 'u32[]', space=smem, size = 0x4, offset = 0x4, fixed_abs, tag = 'smem constant byte address 0x4 - core index']
  #allocation1 [shape = 'u32[144,128]{1,0:T(1,128)}', space=vmem, size = 0x12000, scoped, tag = 'internal scratch']
  %s0 = inlined_call_operand.vmem [shape: bf16[512,128], index: 0, kind: input, shape index: {}]
  %s1 = inlined_call_operand.hbm [shape: bf16[2,128,128], index: 1, kind: input, shape index: {}]
  %s2 = inlined_call_operand.hbm [shape: f32[2,1,128], index: 2, kind: input, shape index: {}]
  %s3 = inlined_call_operand.vmem [shape: bf16[512,256], index: 3, kind: output, shape index: {}]
  %s4 = sld [smem:[#allocation0]]
  $region90: #{srm_fl_forward.6} parent=0
    _
  %s6 = ssub.s32 1, %s4
  %s7 = scalar_select 0, %s6, %s4
  $region1: #{srm_fl_forward.6} parent=0
    #allocation2 [shape = 'u8[65536]{0}', space=vmem, size = 0x10000, scoped, tag = 'input window, operand 1']
    #allocation3 [shape = 's32[2]{0}', space=sflag, size = 0x8, scoped, tag = 'scoped memory for srm_fl_forward.6']
    #allocation4 [shape = 'u8[1024]{0}', space=vmem, size = 0x400, scoped, tag = 'input window, operand 2']
    #allocation5 [shape = 's32[2]{0}', space=sflag, size = 0x8, scoped, tag = 'scoped memory for srm_fl_forward.6']
    #allocation6 [shape = 'u8[262144]{0}', space=vmem, size = 0x40000, scoped, tag = 'output window, operand 0']
    %8 = vsyncpa [#allocation3], 0
    %s9 = scalar_lea.sflag [#allocation3], 1
    %10 = vsyncpa %s9, 0
    %11 = vsyncpa [#allocation5], 0
    %s12 = scalar_lea.sflag [#allocation5], 1
    %13 = vsyncpa %s12, 0
    loop: start=0, step=1, limit=4
    $region2: #{srm_fl_forward.6} parent=1 // loop_pre_header
      _
    $region3: #{srm_fl_forward.6} parent=1 // loop_header
      %s15 = sphi 0, %s19
      %p16 = scmp.ge.s32.totalorder %s15, 4
      %s22 = sphi 0, %s41
      %s23 = sphi 0, %s37
      %s24 = sphi 0, %s33
      %s25 = sphi 0, %s22
      %s26 = sphi 0, %s23
      %s27 = sphi 0, %s24
      %s28 = sphi 0, %s25
      %s29 = sphi 0, %s26
      %s30 = sphi 0, %s27
      %s44 = sphi 0, %s46
      %s47 = sphi 0, %s44
      %s48 = sphi 0, %s47
      %s64 = sphi 0, %s48
      %s72 = sphi 0, %s74
      %s75 = sphi 0, %s72
      %s76 = sphi 0, %s75
      %s92 = sphi 0, %s76
      %s100 = sphi 0, %s102
      %s103 = sphi 0, %s100
      %s104 = sphi 0, %s103
      %s120 = sphi 0, %s104
      %s130 = sphi 0, %s132
      %s133 = sphi 0, %s130
      %s134 = sphi 0, %s133
      %s150 = sphi 0, %s134
    $region4: #{srm_fl_forward.6} parent=1 // loop_header_branch
      %18 = sbr.rel (%p16) target = $region8
    $region5: #{srm_fl_forward.6} parent=1 // loop_body
      %s20 = ssub.s32 %s15, 1
      %s21 = ssub.s32 %s15, 2
      %s31 = sadd.s32 1, %s24
      %p32 = scmp.ge.s32.totalorder %s31, 1
      %s33 = scalar_select %p32, 0, %s31
      %s34 = sadd.s32 1, %s23
      %s35 = scalar_select %p32, %s34, %s23
      %p36 = scmp.ge.s32.totalorder %s35, 2
      %s37 = scalar_select %p36, 0, %s35
      %s38 = sadd.s32 1, %s22
      %s39 = scalar_select %p36, %s38, %s22
      %p40 = scmp.ge.s32.totalorder %s39, 1
      %s41 = scalar_select %p40, 0, %s39
      %s42 = ssub.s32 %s22, %s41
      %p43 = scmp.eq.s32.totalorder %s42, 0
      %s45 = sadd.s32 %s44, 1
      %s46 = scalar_select %p43, %s44, %s45
      %p49 = pneg %p43
      %p50 = scmp.eq.s32.totalorder %s15, 1
      %p51 = por %p49, %p50
      %p52 = scmp.ne.s32.totalorder %s44, %s47
      %p53 = scmp.eq.s32.totalorder %s15, 0
      %p54 = por %p52, %p53
      %p55 = scmp.ne.s32.totalorder %s44, %s47
      %p56 = scmp.eq.s32.totalorder %s20, 1
      %p57 = por %p55, %p56
      %p58 = scmp.ne.s32.totalorder %s47, %s48
      %p59 = scmp.eq.s32.totalorder %s20, 0
      %p60 = por %p58, %p59
      %p61 = scmp.ne.s32.totalorder %s47, %s48
      %p62 = scmp.eq.s32.totalorder %s21, 1
      %p63 = por %p61, %p62
      %p65 = scmp.ne.s32.totalorder %s48, %s64
      %p66 = scmp.eq.s32.totalorder %s21, 0
      %p67 = por %p65, %p66
      %s68 = ssub.s32 %s23, %s37
      %s69 = ssub.s32 %s24, %s33
      %s70 = sor.u32 %s68, %s69
      %p71 = scmp.eq.s32.totalorder %s70, 0
      %s73 = sadd.s32 %s72, 1
      %s74 = scalar_select %p71, %s72, %s73
      %p77 = pneg %p71
      %p78 = scmp.eq.s32.totalorder %s15, 1
      %p79 = por %p77, %p78
      %p80 = scmp.ne.s32.totalorder %s72, %s75
      %p81 = scmp.eq.s32.totalorder %s15, 0
      %p82 = por %p80, %p81
      %p83 = scmp.ne.s32.totalorder %s72, %s75
      %p84 = scmp.eq.s32.totalorder %s20, 1
      %p85 = por %p83, %p84
      %p86 = scmp.ne.s32.totalorder %s75, %s76
      %p87 = scmp.eq.s32.totalorder %s20, 0
      %p88 = por %p86, %p87
      %p89 = scmp.ne.s32.totalorder %s75, %s76
      %p90 = scmp.eq.s32.totalorder %s21, 1
      %p91 = por %p89, %p90
      %p93 = scmp.ne.s32.totalorder %s76, %s92
      %p94 = scmp.eq.s32.totalorder %s21, 0
      %p95 = por %p93, %p94
      %s96 = ssub.s32 %s23, %s37
      %s97 = ssub.s32 %s24, %s33
      %s98 = sor.u32 %s96, %s97
      %p99 = scmp.eq.s32.totalorder %s98, 0
      %s101 = sadd.s32 %s100, 1
      %s102 = scalar_select %p99, %s100, %s101
      %p105 = pneg %p99
      %p106 = scmp.eq.s32.totalorder %s15, 1
      %p107 = por %p105, %p106
      %p108 = scmp.ne.s32.totalorder %s100, %s103
      %p109 = scmp.eq.s32.totalorder %s15, 0
      %p110 = por %p108, %p109
      %p111 = scmp.ne.s32.totalorder %s100, %s103
      %p112 = scmp.eq.s32.totalorder %s20, 1
      %p113 = por %p111, %p112
      %p114 = scmp.ne.s32.totalorder %s103, %s104
      %p115 = scmp.eq.s32.totalorder %s20, 0
      %p116 = por %p114, %p115
      %p117 = scmp.ne.s32.totalorder %s103, %s104
      %p118 = scmp.eq.s32.totalorder %s21, 1
      %p119 = por %p117, %p118
      %p121 = scmp.ne.s32.totalorder %s104, %s120
      %p122 = scmp.eq.s32.totalorder %s21, 0
      %p123 = por %p121, %p122
      %s124 = sadd.s32 %s23, %s24
      %s125 = sadd.s32 %s37, %s33
      %s126 = ssub.s32 %s22, %s41
      %s127 = ssub.s32 %s124, %s125
      %s128 = sor.u32 %s126, %s127
      %p129 = scmp.eq.s32.totalorder %s128, 0
      %s131 = sadd.s32 %s130, 1
      %s132 = scalar_select %p129, %s130, %s131
      %p135 = pneg %p129
      %p136 = scmp.eq.s32.totalorder %s15, 1
      %p137 = por %p135, %p136
      %p138 = scmp.ne.s32.totalorder %s130, %s133
      %p139 = scmp.eq.s32.totalorder %s15, 0
      %p140 = por %p138, %p139
      %p141 = scmp.ne.s32.totalorder %s130, %s133
      %p142 = scmp.eq.s32.totalorder %s20, 1
      %p143 = por %p141, %p142
      %p144 = scmp.ne.s32.totalorder %s133, %s134
      %p145 = scmp.eq.s32.totalorder %s20, 0
      %p146 = por %p144, %p145
      %p147 = scmp.ne.s32.totalorder %s133, %s134
      %p148 = scmp.eq.s32.totalorder %s21, 1
      %p149 = por %p147, %p148
      %p151 = scmp.ne.s32.totalorder %s134, %s150
      %p152 = scmp.eq.s32.totalorder %s21, 0
      %p153 = por %p151, %p152
      %p154 = scmp.le.s32.totalorder 1, %s15
      %p155 = scmp.lt.s32.totalorder %s15, 3
      %p156 = pnand %p154, %p155
      %p157 = pneg %p156
      // Predicated region
      $region9: #{srm_fl_forward.6} parent=5 // pred_check
        _
      $region10: #{srm_fl_forward.6} parent=5 // pred_check_branch
        %159 = sbr.rel (%p156) target = $region12
      $region11: #{srm_fl_forward.6} parent=5 // pred_region
        %s160 = ssub.s32 %s15, 1
        // Predicated region
        $region13: #{srm_fl_forward.6} parent=11 // pred_check
          %p161 = pneg %p60
        $region14: #{srm_fl_forward.6} parent=11 // pred_check_branch
          %163 = sbr.rel (%p161) target = $region16
        $region15: #{srm_fl_forward.6} parent=11 // pred_region
          %s164 = smul.u32 64, %s25
          %p165 = scmp.lt.s32.totalorder %s164, 63
          %s166 = scalar_select %p165, %s164, 63
          %s167 = smul.addr %s166, 4
          %s168 = scalar_lea.vmem %s0, %s167
          %s169 = smul.u32 64, %s25
        $region16: #{srm_fl_forward.6} parent=11 // pred_fallthru
          _
      $region12: #{srm_fl_forward.6} parent=5 // pred_fallthru
        _
      %p170 = scmp.lt.s32.totalorder %s15, 2
      // Predicated region
      $region17: #{srm_fl_forward.6} parent=5 // pred_check
        %p171 = pneg %p170
      $region18: #{srm_fl_forward.6} parent=5 // pred_check_branch
        %173 = sbr.rel (%p171) target = $region20
      $region19: #{srm_fl_forward.6} parent=5 // pred_region
        // Predicated region
        $region21: #{srm_fl_forward.6} parent=19 // pred_check
          %p174 = pneg %p82
        $region22: #{srm_fl_forward.6} parent=19 // pred_check_branch
          %176 = sbr.rel (%p174) target = $region24
        $region23: #{srm_fl_forward.6} parent=19 // pred_region
          %s177 = sand.u32 %s72, 1
          %s178 = scalar_lea.sflag [#allocation3], %s177
          %s179 = sand.u32 %s72, 1
          %s180 = smul.addr %s179, 64
          %s181 = scalar_lea.vmem [#allocation2], %s180
          %s183 = ssub.s32 1024, 1024
          %184 = vsyncadd %s178, %s183
          %s185 = smul.addr %s23, 16
          %s186 = sadd.s32 %s24, %s185
          %s187 = smul.addr %s186, 64
          %s188 = scalar_lea.hbm %s1, %s187
          %s189 = sshll.u32 %s181, 4
          %s190 = int_to_ptr.vmem [resolvable:$true] %s189
          %195 = dma.hbm_to_vmem [thread:$0]  %s188, 1024, %s190, %s178, 64, 64, 4
        $region24: #{srm_fl_forward.6} parent=19 // pred_fallthru
          _
        // Predicated region
        $region25: #{srm_fl_forward.6} parent=19 // pred_check
          %p196 = pneg %p110
        $region26: #{srm_fl_forward.6} parent=19 // pred_check_branch
          %198 = sbr.rel (%p196) target = $region28
        $region27: #{srm_fl_forward.6} parent=19 // pred_region
          %s199 = sand.u32 %s100, 1
          %s200 = scalar_lea.sflag [#allocation5], %s199
          %s201 = sand.u32 %s100, 1
          %s202 = scalar_lea.vmem [#allocation4], %s201
          %s204 = ssub.s32 16, 16
          %205 = vsyncadd %s200, %s204
          %s206 = sadd.s32 %s24, %s23
          %s207 = smul.addr %s206, 16
          %s208 = scalar_lea.hbm %s2, %s207
          %s210 = sshll.u32 %s202, 4
          %s211 = int_to_ptr.vmem [resolvable:$true] %s210
          %213 = dma.hbm_to_vmem [thread:$0]  %s208, 16, %s211, %s200
        $region28: #{srm_fl_forward.6} parent=19 // pred_fallthru
          _
      $region20: #{srm_fl_forward.6} parent=5 // pred_fallthru
        _
      %p214 = scmp.le.s32.totalorder 1, %s15
      %p215 = scmp.lt.s32.totalorder %s15, 3
      %p216 = pnand %p214, %p215
      %p217 = pneg %p216
      // Predicated region
      $region29: #{srm_fl_forward.6} parent=5 // pred_check
        _
      $region30: #{srm_fl_forward.6} parent=5 // pred_check_branch
        %219 = sbr.rel (%p216) target = $region32
      $region31: #{srm_fl_forward.6} parent=5 // pred_region
        %s220 = ssub.s32 %s15, 1
        %s221 = sand.u32 %s75, 1
        %s222 = scalar_lea.sflag [#allocation3], %s221
        %s223 = sand.u32 %s75, 1
        %s224 = smul.addr %s223, 64
        %s225 = scalar_lea.vmem [#allocation2], %s224
        // Predicated region
        $region33: #{srm_fl_forward.6} parent=31 // pred_check
          %p226 = pneg %p88
        $region34: #{srm_fl_forward.6} parent=31 // pred_check_branch
          %228 = sbr.rel (%p226) target = $region36
        $region35: #{srm_fl_forward.6} parent=31 // pred_region
          %229 = dma.done %s222, 1024
        $region36: #{srm_fl_forward.6} parent=31 // pred_fallthru
          _
        %s230 = sand.u32 %s103, 1
        %s231 = scalar_lea.sflag [#allocation5], %s230
        %s232 = sand.u32 %s103, 1
        %s233 = scalar_lea.vmem [#allocation4], %s232
        // Predicated region
        $region37: #{srm_fl_forward.6} parent=31 // pred_check
          %p234 = pneg %p116
        $region38: #{srm_fl_forward.6} parent=31 // pred_check_branch
          %236 = sbr.rel (%p234) target = $region40
        $region39: #{srm_fl_forward.6} parent=31 // pred_region
          %237 = dma.done %s231, 16
        $region40: #{srm_fl_forward.6} parent=31 // pred_fallthru
          _
        %s238 = smul.u32 64, %s25
        %p239 = scmp.lt.s32.totalorder %s238, 63
        %s240 = scalar_select %p239, %s238, 63
        %s241 = smul.addr %s240, 4
        %s242 = scalar_lea.vmem %s0, %s241
        %p243 = pneg %p60
        %p244 = pneg %p57
        %s245 = sand.u32 %s75, 1
        %s246 = scalar_lea.sflag [#allocation3], %s245
        %s247 = sand.u32 %s75, 1
        %s248 = smul.addr %s247, 64
        %s249 = scalar_lea.vmem [#allocation2], %s248
        %p250 = pneg %p88
        %p251 = pneg %p85
        %s252 = sand.u32 %s103, 1
        %s253 = scalar_lea.sflag [#allocation5], %s252
        %s254 = sand.u32 %s103, 1
        %s255 = scalar_lea.vmem [#allocation4], %s254
        %p256 = pneg %p116
        %p257 = pneg %p113
        %p258 = pneg %p146
        %p259 = pneg %p143
        %s260 = sand.u32 %s133, 1
        %s261 = sand.u32 %s133, 1
        %s262 = smul.addr %s261, 256
        %s263 = scalar_lea.vmem [#allocation6], %s262
        %s264 = smul.u32 64, %s25
        %p265 = scmp.lt.s32.totalorder %s264, 63
        %s266 = scalar_select %p265, %s264, 63
        %s267 = smul.addr %s266, 4
        %s268 = scalar_lea.vmem %s0, %s267
        %s269 = smul.u32 64, %s25
        %s270 = sadd.s32 %s26, %s27
        %s271 = smul.u32 64, %s25
        %v273 = vld [vmem:[%s268] sm:$0xf]
        %v274 = vld [vmem:[%s268 + $0x4] sm:$0xf]
        %v275 = vld [vmem:[%s268 + $0x8] sm:$0xf]
        %v276 = vld [vmem:[%s268 + $0xc] sm:$0xf]
        %v277 = vld [vmem:[%s268 + $0x10] sm:$0xf]
        %v278 = vld [vmem:[%s268 + $0x14] sm:$0xf]
        %v279 = vld [vmem:[%s268 + $0x18] sm:$0xf]
        %v280 = vld [vmem:[%s268 + $0x1c] sm:$0xf]
        %v281 = vld [vmem:[%s268 + $0x20] sm:$0xf]
        %v282 = vld [vmem:[%s268 + $0x24] sm:$0xf]
        %v283 = vld [vmem:[%s268 + $0x28] sm:$0xf]
        %v284 = vld [vmem:[%s268 + $0x2c] sm:$0xf]
        %v285 = vld [vmem:[%s268 + $0x30] sm:$0xf]
        %v286 = vld [vmem:[%s268 + $0x34] sm:$0xf]
        %v287 = vld [vmem:[%s268 + $0x38] sm:$0xf]
        %v288 = vld [vmem:[%s268 + $0x3c] sm:$0xf]
        %v289 = vld [vmem:[%s268 + $0x40] sm:$0xf]
        %v290 = vld [vmem:[%s268 + $0x44] sm:$0xf]
        %v291 = vld [vmem:[%s268 + $0x48] sm:$0xf]
        %v292 = vld [vmem:[%s268 + $0x4c] sm:$0xf]
        %v293 = vld [vmem:[%s268 + $0x50] sm:$0xf]
        %v294 = vld [vmem:[%s268 + $0x54] sm:$0xf]
        %v295 = vld [vmem:[%s268 + $0x58] sm:$0xf]
        %v296 = vld [vmem:[%s268 + $0x5c] sm:$0xf]
        %v297 = vld [vmem:[%s268 + $0x60] sm:$0xf]
        %v298 = vld [vmem:[%s268 + $0x64] sm:$0xf]
        %v299 = vld [vmem:[%s268 + $0x68] sm:$0xf]
        %v300 = vld [vmem:[%s268 + $0x6c] sm:$0xf]
        %v301 = vld [vmem:[%s268 + $0x70] sm:$0xf]
        %v302 = vld [vmem:[%s268 + $0x74] sm:$0xf]
        %v303 = vld [vmem:[%s268 + $0x78] sm:$0xf]
        %v304 = vld [vmem:[%s268 + $0x7c] sm:$0xf]
        %v305 = vld [vmem:[%s268 + $0x80] sm:$0xf]
        %v306 = vld [vmem:[%s268 + $0x84] sm:$0xf]
        %v307 = vld [vmem:[%s268 + $0x88] sm:$0xf]
        %v308 = vld [vmem:[%s268 + $0x8c] sm:$0xf]
        %v309 = vld [vmem:[%s268 + $0x90] sm:$0xf]
        %v310 = vld [vmem:[%s268 + $0x94] sm:$0xf]
        %v311 = vld [vmem:[%s268 + $0x98] sm:$0xf]
        %v312 = vld [vmem:[%s268 + $0x9c] sm:$0xf]
        %v313 = vld [vmem:[%s268 + $0xa0] sm:$0xf]
        %v314 = vld [vmem:[%s268 + $0xa4] sm:$0xf]
        %v315 = vld [vmem:[%s268 + $0xa8] sm:$0xf]
        %v316 = vld [vmem:[%s268 + $0xac] sm:$0xf]
        %v317 = vld [vmem:[%s268 + $0xb0] sm:$0xf]
        %v318 = vld [vmem:[%s268 + $0xb4] sm:$0xf]
        %v319 = vld [vmem:[%s268 + $0xb8] sm:$0xf]
        %v320 = vld [vmem:[%s268 + $0xbc] sm:$0xf]
        %v321 = vld [vmem:[%s268 + $0xc0] sm:$0xf]
        %v322 = vld [vmem:[%s268 + $0xc4] sm:$0xf]
        %v323 = vld [vmem:[%s268 + $0xc8] sm:$0xf]
        %v324 = vld [vmem:[%s268 + $0xcc] sm:$0xf]
        %v325 = vld [vmem:[%s268 + $0xd0] sm:$0xf]
        %v326 = vld [vmem:[%s268 + $0xd4] sm:$0xf]
        %v327 = vld [vmem:[%s268 + $0xd8] sm:$0xf]
        %v328 = vld [vmem:[%s268 + $0xdc] sm:$0xf]
        %v329 = vld [vmem:[%s268 + $0xe0] sm:$0xf]
        %v330 = vld [vmem:[%s268 + $0xe4] sm:$0xf]
        %v331 = vld [vmem:[%s268 + $0xe8] sm:$0xf]
        %v332 = vld [vmem:[%s268 + $0xec] sm:$0xf]
        %v333 = vld [vmem:[%s268 + $0xf0] sm:$0xf]
        %v334 = vld [vmem:[%s268 + $0xf4] sm:$0xf]
        %v335 = vld [vmem:[%s268 + $0xf8] sm:$0xf]
        %v336 = vld [vmem:[%s268 + $0xfc] sm:$0xf]
        %v337 = vld [vmem:[%s225] sm:$0xf]
        %v338 = vld [vmem:[%s225 + $0x4] sm:$0xf]
        %v339 = vld [vmem:[%s225 + $0x8] sm:$0xf]
        %v340 = vld [vmem:[%s225 + $0xc] sm:$0xf]
        %v341 = vld [vmem:[%s225 + $0x10] sm:$0xf]
        %v342 = vld [vmem:[%s225 + $0x14] sm:$0xf]
        %v343 = vld [vmem:[%s225 + $0x18] sm:$0xf]
        %v344 = vld [vmem:[%s225 + $0x1c] sm:$0xf]
        %v345 = vld [vmem:[%s225 + $0x20] sm:$0xf]
        %v346 = vld [vmem:[%s225 + $0x24] sm:$0xf]
        %v347 = vld [vmem:[%s225 + $0x28] sm:$0xf]
        %v348 = vld [vmem:[%s225 + $0x2c] sm:$0xf]
        %v349 = vld [vmem:[%s225 + $0x30] sm:$0xf]
        %v350 = vld [vmem:[%s225 + $0x34] sm:$0xf]
        %v351 = vld [vmem:[%s225 + $0x38] sm:$0xf]
        %v352 = vld [vmem:[%s225 + $0x3c] sm:$0xf]
        %v353 = vld [vmem:[%s233] sm:$0x1]
        %v355 = vlaneseq
        %v356 = vshrl.u32 %v355, 7
        %v357 = vsub.s32 0, %v356
        %v358 = vrot.slane %v353, %v357
        %v424 = vunpack.c.l.b16 %v273
        %v425 = vunpack.c.l.b16 %v274
        %v426 = vunpack.c.l.b16 %v275
        %v427 = vunpack.c.l.b16 %v276
        %v428 = vunpack.c.l.b16 %v277
        %v429 = vunpack.c.l.b16 %v278
        %v430 = vunpack.c.l.b16 %v279
        %v431 = vunpack.c.l.b16 %v280
        %v432 = vunpack.c.l.b16 %v281
        %v433 = vunpack.c.l.b16 %v282
        %v434 = vunpack.c.l.b16 %v283
        %v435 = vunpack.c.l.b16 %v284
        %v436 = vunpack.c.l.b16 %v285
        %v437 = vunpack.c.l.b16 %v286
        %v438 = vunpack.c.l.b16 %v287
        %v439 = vunpack.c.l.b16 %v288
        %v440 = vunpack.c.l.b16 %v289
        %v441 = vunpack.c.l.b16 %v290
        %v442 = vunpack.c.l.b16 %v291
        %v443 = vunpack.c.l.b16 %v292
        %v444 = vunpack.c.l.b16 %v293
        %v445 = vunpack.c.l.b16 %v294
        %v446 = vunpack.c.l.b16 %v295
        %v447 = vunpack.c.l.b16 %v296
        %v448 = vunpack.c.l.b16 %v297
        %v449 = vunpack.c.l.b16 %v298
        %v450 = vunpack.c.l.b16 %v299
        %v451 = vunpack.c.l.b16 %v300
        %v452 = vunpack.c.l.b16 %v301
        %v453 = vunpack.c.l.b16 %v302
        %v454 = vunpack.c.l.b16 %v303
        %v455 = vunpack.c.l.b16 %v304
        %v456 = vunpack.c.l.b16 %v305
        %v457 = vunpack.c.l.b16 %v306
        %v458 = vunpack.c.l.b16 %v307
        %v459 = vunpack.c.l.b16 %v308
        %v460 = vunpack.c.l.b16 %v309
        %v461 = vunpack.c.l.b16 %v310
        %v462 = vunpack.c.l.b16 %v311
        %v463 = vunpack.c.l.b16 %v312
        %v464 = vunpack.c.l.b16 %v313
        %v465 = vunpack.c.l.b16 %v314
        %v466 = vunpack.c.l.b16 %v315
        %v467 = vunpack.c.l.b16 %v316
        %v468 = vunpack.c.l.b16 %v317
        %v469 = vunpack.c.l.b16 %v318
        %v470 = vunpack.c.l.b16 %v319
        %v471 = vunpack.c.l.b16 %v320
        %v472 = vunpack.c.l.b16 %v321
        %v473 = vunpack.c.l.b16 %v322
        %v474 = vunpack.c.l.b16 %v323
        %v475 = vunpack.c.l.b16 %v324
        %v476 = vunpack.c.l.b16 %v325
        %v477 = vunpack.c.l.b16 %v326
        %v478 = vunpack.c.l.b16 %v327
        %v479 = vunpack.c.l.b16 %v328
        %v480 = vunpack.c.l.b16 %v329
        %v481 = vunpack.c.l.b16 %v330
        %v482 = vunpack.c.l.b16 %v331
        %v483 = vunpack.c.l.b16 %v332
        %v484 = vunpack.c.l.b16 %v333
        %v485 = vunpack.c.l.b16 %v334
        %v486 = vunpack.c.l.b16 %v335
        %v487 = vunpack.c.l.b16 %v336
        %v488 = vpack.c.b16 %v425, %v424
        %v489 = vpack.c.b16 %v427, %v426
        %v490 = vpack.c.b16 %v429, %v428
        %v491 = vpack.c.b16 %v431, %v430
        %v492 = vpack.c.b16 %v433, %v432
        %v493 = vpack.c.b16 %v435, %v434
        %v494 = vpack.c.b16 %v437, %v436
        %v495 = vpack.c.b16 %v439, %v438
        %v496 = vpack.c.b16 %v441, %v440
        %v497 = vpack.c.b16 %v443, %v442
        %v498 = vpack.c.b16 %v445, %v444
        %v499 = vpack.c.b16 %v447, %v446
        %v500 = vpack.c.b16 %v449, %v448
        %v501 = vpack.c.b16 %v451, %v450
        %v502 = vpack.c.b16 %v453, %v452
        %v503 = vpack.c.b16 %v455, %v454
        %v504 = vpack.c.b16 %v457, %v456
        %v505 = vpack.c.b16 %v459, %v458
        %v506 = vpack.c.b16 %v461, %v460
        %v507 = vpack.c.b16 %v463, %v462
        %v508 = vpack.c.b16 %v465, %v464
        %v509 = vpack.c.b16 %v467, %v466
        %v510 = vpack.c.b16 %v469, %v468
        %v511 = vpack.c.b16 %v471, %v470
        %v512 = vpack.c.b16 %v473, %v472
        %v513 = vpack.c.b16 %v475, %v474
        %v514 = vpack.c.b16 %v477, %v476
        %v515 = vpack.c.b16 %v479, %v478
        %v516 = vpack.c.b16 %v481, %v480
        %v517 = vpack.c.b16 %v483, %v482
        %v518 = vpack.c.b16 %v485, %v484
        %v519 = vpack.c.b16 %v487, %v486
        %v568 = vunpack.c.l.b16 %v337
        %v569 = vunpack.c.l.b16 %v338
        %v570 = vunpack.c.l.b16 %v339
        %v571 = vunpack.c.l.b16 %v340
        %v572 = vunpack.c.l.b16 %v341
        %v573 = vunpack.c.l.b16 %v342
        %v574 = vunpack.c.l.b16 %v343
        %v575 = vunpack.c.l.b16 %v344
        %v576 = vunpack.c.l.b16 %v345
        %v577 = vunpack.c.l.b16 %v346
        %v578 = vunpack.c.l.b16 %v347
        %v579 = vunpack.c.l.b16 %v348
        %v580 = vunpack.c.l.b16 %v349
        %v581 = vunpack.c.l.b16 %v350
        %v582 = vunpack.c.l.b16 %v351
        %v583 = vunpack.c.l.b16 %v352
        %v584 = vpack.c.b16 %v569, %v568
        %v585 = vpack.c.b16 %v571, %v570
        %v586 = vpack.c.b16 %v573, %v572
        %v587 = vpack.c.b16 %v575, %v574
        %v588 = vpack.c.b16 %v577, %v576
        %v589 = vpack.c.b16 %v579, %v578
        %v590 = vpack.c.b16 %v581, %v580
        %v591 = vpack.c.b16 %v583, %v582
        %600 = vmatprep.subr.bf16.mxu0 0
        %601 = vmatpush1.bf16.msra.mxu0 %v584
        %602 = vmatprep.subr.bf16.mxu0 0
        %603 = vmatpush1.bf16.msra.mxu0 %v585
        %604 = vmatprep.subr.bf16.mxu0 0
        %605 = vmatpush1.bf16.msra.mxu0 %v586
        %606 = vmatprep.subr.bf16.mxu0 0
        %607 = vmatpush1.bf16.msra.mxu0 %v587
        %608 = vmatprep.subr.bf16.mxu0 0
        %609 = vmatpush1.bf16.msra.mxu0 %v588
        %610 = vmatprep.subr.bf16.mxu0 0
        %611 = vmatpush1.bf16.msra.mxu0 %v589
        %612 = vmatprep.subr.bf16.mxu0 0
        %613 = vmatpush1.bf16.msra.mxu0 %v590
        %614 = vmatprep.subr.bf16.mxu0 0
        %615 = vmatpush1.bf16.msra.mxu0 %v591
        %616 = vmatprep.subr.bf16.mxu0 0
        %617 = vmatpush1.bf16.msra.mxu0 0
        %618 = vmatprep.subr.bf16.mxu0 0
        %619 = vmatpush1.bf16.msra.mxu0 0
        %620 = vmatprep.subr.bf16.mxu0 0
        %621 = vmatpush1.bf16.msra.mxu0 0
        %622 = vmatprep.subr.bf16.mxu0 0
        %623 = vmatpush1.bf16.msra.mxu0 0
        %624 = vmatprep.subr.bf16.mxu0 0
        %625 = vmatpush1.bf16.msra.mxu0 0
        %626 = vmatprep.subr.bf16.mxu0 0
        %627 = vmatpush1.bf16.msra.mxu0 0
        %628 = vmatprep.subr.bf16.mxu0 0
        %629 = vmatpush1.bf16.msra.mxu0 0
        %630 = vmatprep.subr.bf16.mxu0 0
        %631 = vmatpush1.bf16.msra.mxu0 0
        %632 = vmatprep.mubr.bf16.mxu0 0
        %633 = vmatmul.mubr.bf16.gmra.mrb[0].mxu0 %v488
        %v634 = vpop.f32.mrb[0].mxu0
        %v635 = vadd.f32 %v358, %v634
        %v636 = vpop.f32.mrb[0].mxu0
        %v637 = vpop.f32.mrb[0].mxu0
        %v638 = vadd.f32 %v358, %v637
        %v639 = vpop.f32.mrb[0].mxu0
        %640 = vmatprep.mubr.bf16.mxu0 0
        %641 = vmatmul.mubr.bf16.gmra.mrb[0].mxu0 %v489
        %v642 = vpop.f32.mrb[0].mxu0
        %v643 = vadd.f32 %v358, %v642
        %v644 = vpop.f32.mrb[0].mxu0
        %v645 = vpop.f32.mrb[0].mxu0
        %v646 = vadd.f32 %v358, %v645
        %v647 = vpop.f32.mrb[0].mxu0
        %648 = vmatprep.mubr.bf16.mxu0 0
        %649 = vmatmul.mubr.bf16.gmra.mrb[0].mxu0 %v490
        %v650 = vpop.f32.mrb[0].mxu0
        %v651 = vadd.f32 %v358, %v650
        %v652 = vpop.f32.mrb[0].mxu0
        %v653 = vpop.f32.mrb[0].mxu0
        %v654 = vadd.f32 %v358, %v653
        %v655 = vpop.f32.mrb[0].mxu0
        %656 = vmatprep.mubr.bf16.mxu0 0
        %657 = vmatmul.mubr.bf16.gmra.mrb[0].mxu0 %v491
        %v658 = vpop.f32.mrb[0].mxu0
        %v659 = vadd.f32 %v358, %v658
        %v660 = vpop.f32.mrb[0].mxu0
        %v661 = vpop.f32.mrb[0].mxu0
        %v662 = vadd.f32 %v358, %v661
        %v663 = vpop.f32.mrb[0].mxu0
        %664 = vmatprep.mubr.bf16.mxu0 0
        %665 = vmatmul.mubr.bf16.gmra.mrb[0].mxu0 %v492
        %v666 = vpop.f32.mrb[0].mxu0
        %v667 = vadd.f32 %v358, %v666
        %v668 = vpop.f32.mrb[0].mxu0
        %v669 = vpop.f32.mrb[0].mxu0
        %v670 = vadd.f32 %v358, %v669
        %v671 = vpop.f32.mrb[0].mxu0
        %672 = vmatprep.mubr.bf16.mxu0 0
        %673 = vmatmul.mubr.bf16.gmra.mrb[0].mxu0 %v493
        %v674 = vpop.f32.mrb[0].mxu0
        %v675 = vadd.f32 %v358, %v674
        %v676 = vpop.f32.mrb[0].mxu0
        %v677 = vpop.f32.mrb[0].mxu0
        %v678 = vadd.f32 %v358, %v677
        %v679 = vpop.f32.mrb[0].mxu0
        %680 = vmatprep.mubr.bf16.mxu0 0
        %681 = vmatmul.mubr.bf16.gmra.mrb[0].mxu0 %v494
        %v682 = vpop.f32.mrb[0].mxu0
        %v683 = vadd.f32 %v358, %v682
        %v684 = vpop.f32.mrb[0].mxu0
        %v685 = vpop.f32.mrb[0].mxu0
        %v686 = vadd.f32 %v358, %v685
        %v687 = vpop.f32.mrb[0].mxu0
        %688 = vmatprep.mubr.bf16.mxu0 0
        %689 = vmatmul.mubr.bf16.gmra.mrb[0].mxu0 %v495
        %v690 = vpop.f32.mrb[0].mxu0
        %v691 = vadd.f32 %v358, %v690
        %v692 = vpop.f32.mrb[0].mxu0
        %v693 = vpop.f32.mrb[0].mxu0
        %v694 = vadd.f32 %v358, %v693
        %v695 = vpop.f32.mrb[0].mxu0
        %696 = vmatprep.mubr.bf16.mxu0 0
        %697 = vmatmul.mubr.bf16.gmra.mrb[0].mxu0 %v496
        %v698 = vpop.f32.mrb[0].mxu0
        %v699 = vadd.f32 %v358, %v698
        %v700 = vpop.f32.mrb[0].mxu0
        %v701 = vpop.f32.mrb[0].mxu0
        %v702 = vadd.f32 %v358, %v701
        %v703 = vpop.f32.mrb[0].mxu0
        %704 = vmatprep.mubr.bf16.mxu0 0
        %705 = vmatmul.mubr.bf16.gmra.mrb[0].mxu0 %v497
        %v706 = vpop.f32.mrb[0].mxu0
        %v707 = vadd.f32 %v358, %v706
        %v708 = vpop.f32.mrb[0].mxu0
        %v709 = vpop.f32.mrb[0].mxu0
        %v710 = vadd.f32 %v358, %v709
        %v711 = vpop.f32.mrb[0].mxu0
        %712 = vmatprep.mubr.bf16.mxu0 0
        %713 = vmatmul.mubr.bf16.gmra.mrb[0].mxu0 %v498
        %v714 = vpop.f32.mrb[0].mxu0
        %v715 = vadd.f32 %v358, %v714
        %v716 = vpop.f32.mrb[0].mxu0
        %v717 = vpop.f32.mrb[0].mxu0
        %v718 = vadd.f32 %v358, %v717
        %v719 = vpop.f32.mrb[0].mxu0
        %720 = vmatprep.mubr.bf16.mxu0 0
        %721 = vmatmul.mubr.bf16.gmra.mrb[0].mxu0 %v499
        %v722 = vpop.f32.mrb[0].mxu0
        %v723 = vadd.f32 %v358, %v722
        %v724 = vpop.f32.mrb[0].mxu0
        %v725 = vpop.f32.mrb[0].mxu0
        %v726 = vadd.f32 %v358, %v725
        %v727 = vpop.f32.mrb[0].mxu0
        %728 = vmatprep.mubr.bf16.mxu0 0
        %729 = vmatmul.mubr.bf16.gmra.mrb[0].mxu0 %v500
        %v730 = vpop.f32.mrb[0].mxu0
        %v731 = vadd.f32 %v358, %v730
        %v732 = vpop.f32.mrb[0].mxu0
        %v733 = vpop.f32.mrb[0].mxu0
        %v734 = vadd.f32 %v358, %v733
        %v735 = vpop.f32.mrb[0].mxu0
        %736 = vmatprep.mubr.bf16.mxu0 0
        %737 = vmatmul.mubr.bf16.gmra.mrb[0].mxu0 %v501
        %v738 = vpop.f32.mrb[0].mxu0
        %v739 = vadd.f32 %v358, %v738
        %v740 = vpop.f32.mrb[0].mxu0
        %v741 = vpop.f32.mrb[0].mxu0
        %v742 = vadd.f32 %v358, %v741
        %v743 = vpop.f32.mrb[0].mxu0
        %744 = vmatprep.mubr.bf16.mxu0 0
        %745 = vmatmul.mubr.bf16.gmra.mrb[0].mxu0 %v502
        %v746 = vpop.f32.mrb[0].mxu0
        %v747 = vadd.f32 %v358, %v746
        %v748 = vpop.f32.mrb[0].mxu0
        %v749 = vpop.f32.mrb[0].mxu0
        %v750 = vadd.f32 %v358, %v749
        %v751 = vpop.f32.mrb[0].mxu0
        %752 = vmatprep.mubr.bf16.mxu0 0
        %753 = vmatmul.mubr.bf16.gmra.mrb[0].mxu0 %v503
        %v754 = vpop.f32.mrb[0].mxu0
        %v755 = vadd.f32 %v358, %v754
        %v756 = vpop.f32.mrb[0].mxu0
        %v757 = vpop.f32.mrb[0].mxu0
        %v758 = vadd.f32 %v358, %v757
        %v759 = vpop.f32.mrb[0].mxu0
        %760 = vmatprep.mubr.bf16.mxu0 0
        %761 = vmatmul.mubr.bf16.gmra.mrb[0].mxu0 %v504
        %v762 = vpop.f32.mrb[0].mxu0
        %v763 = vadd.f32 %v358, %v762
        %v764 = vpop.f32.mrb[0].mxu0
        %v765 = vpop.f32.mrb[0].mxu0
        %v766 = vadd.f32 %v358, %v765
        %v767 = vpop.f32.mrb[0].mxu0
        %768 = vmatprep.mubr.bf16.mxu0 0
        %769 = vmatmul.mubr.bf16.gmra.mrb[0].mxu0 %v505
        %v770 = vpop.f32.mrb[0].mxu0
        %v771 = vadd.f32 %v358, %v770
        %v772 = vpop.f32.mrb[0].mxu0
        %v773 = vpop.f32.mrb[0].mxu0
        %v774 = vadd.f32 %v358, %v773
        %v775 = vpop.f32.mrb[0].mxu0
        %776 = vmatprep.mubr.bf16.mxu0 0
        %777 = vmatmul.mubr.bf16.gmra.mrb[0].mxu0 %v506
        %v778 = vpop.f32.mrb[0].mxu0
        %v779 = vadd.f32 %v358, %v778
        %v780 = vpop.f32.mrb[0].mxu0
        %v781 = vpop.f32.mrb[0].mxu0
        %v782 = vadd.f32 %v358, %v781
        %v783 = vpop.f32.mrb[0].mxu0
        %784 = vmatprep.mubr.bf16.mxu0 0
        %785 = vmatmul.mubr.bf16.gmra.mrb[0].mxu0 %v507
        %v786 = vpop.f32.mrb[0].mxu0
        %v787 = vadd.f32 %v358, %v786
        %v788 = vpop.f32.mrb[0].mxu0
        %v789 = vpop.f32.mrb[0].mxu0
        %v790 = vadd.f32 %v358, %v789
        %v791 = vpop.f32.mrb[0].mxu0
        %792 = vmatprep.mubr.bf16.mxu0 0
        %793 = vmatmul.mubr.bf16.gmra.mrb[0].mxu0 %v508
        %v794 = vpop.f32.mrb[0].mxu0
        %v795 = vadd.f32 %v358, %v794
        %v796 = vpop.f32.mrb[0].mxu0
        %v797 = vpop.f32.mrb[0].mxu0
        %v798 = vadd.f32 %v358, %v797
        %v799 = vpop.f32.mrb[0].mxu0
        %800 = vmatprep.mubr.bf16.mxu0 0
        %801 = vmatmul.mubr.bf16.gmra.mrb[0].mxu0 %v509
        %v802 = vpop.f32.mrb[0].mxu0
        %v803 = vadd.f32 %v358, %v802
        %v804 = vpop.f32.mrb[0].mxu0
        %v805 = vpop.f32.mrb[0].mxu0
        %v806 = vadd.f32 %v358, %v805
        %v807 = vpop.f32.mrb[0].mxu0
        %808 = vmatprep.mubr.bf16.mxu0 0
        %809 = vmatmul.mubr.bf16.gmra.mrb[0].mxu0 %v510
        %v810 = vpop.f32.mrb[0].mxu0
        %v811 = vadd.f32 %v358, %v810
        %v812 = vpop.f32.mrb[0].mxu0
        %v813 = vpop.f32.mrb[0].mxu0
        %v814 = vadd.f32 %v358, %v813
        %v815 = vpop.f32.mrb[0].mxu0
        %816 = vmatprep.mubr.bf16.mxu0 0
        %817 = vmatmul.mubr.bf16.gmra.mrb[0].mxu0 %v511
        %v818 = vpop.f32.mrb[0].mxu0
        %v819 = vadd.f32 %v358, %v818
        %v820 = vpop.f32.mrb[0].mxu0
        %v821 = vpop.f32.mrb[0].mxu0
        %v822 = vadd.f32 %v358, %v821
        %v823 = vpop.f32.mrb[0].mxu0
        %824 = vmatprep.mubr.bf16.mxu0 0
        %825 = vmatmul.mubr.bf16.gmra.mrb[0].mxu0 %v512
        %v826 = vpop.f32.mrb[0].mxu0
        %v827 = vadd.f32 %v358, %v826
        %v828 = vpop.f32.mrb[0].mxu0
        %v829 = vpop.f32.mrb[0].mxu0
        %v830 = vadd.f32 %v358, %v829
        %v831 = vpop.f32.mrb[0].mxu0
        %832 = vmatprep.mubr.bf16.mxu0 0
        %833 = vmatmul.mubr.bf16.gmra.mrb[0].mxu0 %v513
        %v834 = vpop.f32.mrb[0].mxu0
        %v835 = vadd.f32 %v358, %v834
        %v836 = vpop.f32.mrb[0].mxu0
        %v837 = vpop.f32.mrb[0].mxu0
        %v838 = vadd.f32 %v358, %v837
        %v839 = vpop.f32.mrb[0].mxu0
        %840 = vmatprep.mubr.bf16.mxu0 0
        %841 = vmatmul.mubr.bf16.gmra.mrb[0].mxu0 %v514
        %v842 = vpop.f32.mrb[0].mxu0
        %v843 = vadd.f32 %v358, %v842
        %v844 = vpop.f32.mrb[0].mxu0
        %v845 = vpop.f32.mrb[0].mxu0
        %v846 = vadd.f32 %v358, %v845
        %v847 = vpop.f32.mrb[0].mxu0
        %848 = vmatprep.mubr.bf16.mxu0 0
        %849 = vmatmul.mubr.bf16.gmra.mrb[0].mxu0 %v515
        %v850 = vpop.f32.mrb[0].mxu0
        %v851 = vadd.f32 %v358, %v850
        %v852 = vpop.f32.mrb[0].mxu0
        %v853 = vpop.f32.mrb[0].mxu0
        %v854 = vadd.f32 %v358, %v853
        %v855 = vpop.f32.mrb[0].mxu0
        %856 = vmatprep.mubr.bf16.mxu0 0
        %857 = vmatmul.mubr.bf16.gmra.mrb[0].mxu0 %v516
        %v858 = vpop.f32.mrb[0].mxu0
        %v859 = vadd.f32 %v358, %v858
        %v860 = vpop.f32.mrb[0].mxu0
        %v861 = vpop.f32.mrb[0].mxu0
        %v862 = vadd.f32 %v358, %v861
        %v863 = vpop.f32.mrb[0].mxu0
        %864 = vmatprep.mubr.bf16.mxu0 0
        %865 = vmatmul.mubr.bf16.gmra.mrb[0].mxu0 %v517
        %v866 = vpop.f32.mrb[0].mxu0
        %v867 = vadd.f32 %v358, %v866
        %v868 = vpop.f32.mrb[0].mxu0
        %v869 = vpop.f32.mrb[0].mxu0
        %v870 = vadd.f32 %v358, %v869
        %v871 = vpop.f32.mrb[0].mxu0
        %872 = vmatprep.mubr.bf16.mxu0 0
        %873 = vmatmul.mubr.bf16.gmra.mrb[0].mxu0 %v518
        %v874 = vpop.f32.mrb[0].mxu0
        %v875 = vadd.f32 %v358, %v874
        %v876 = vpop.f32.mrb[0].mxu0
        %v877 = vpop.f32.mrb[0].mxu0
        %v878 = vadd.f32 %v358, %v877
        %v879 = vpop.f32.mrb[0].mxu0
        %880 = vmatprep.mubr.bf16.mxu0 0
        %881 = vmatmul.mubr.bf16.gmra.mrb[0].mxu0 %v519
        %v882 = vpop.f32.mrb[0].mxu0
        %v883 = vadd.f32 %v358, %v882
        %v884 = vpop.f32.mrb[0].mxu0
        %v885 = vpop.f32.mrb[0].mxu0
        %v886 = vadd.f32 %v358, %v885
        %v887 = vpop.f32.mrb[0].mxu0
        %888 = vdwg.mxu0
        %v889 = vpack.c.bf16 %v638, %v635
        %v890 = vpack.c.bf16 %v646, %v643
        %v891 = vpack.c.bf16 %v654, %v651
        %v892 = vpack.c.bf16 %v662, %v659
        %v893 = vpack.c.bf16 %v670, %v667
        %v894 = vpack.c.bf16 %v678, %v675
        %v895 = vpack.c.bf16 %v686, %v683
        %v896 = vpack.c.bf16 %v694, %v691
        %v897 = vpack.c.bf16 %v702, %v699
        %v898 = vpack.c.bf16 %v710, %v707
        %v899 = vpack.c.bf16 %v718, %v715
        %v900 = vpack.c.bf16 %v726, %v723
        %v901 = vpack.c.bf16 %v734, %v731
        %v902 = vpack.c.bf16 %v742, %v739
        %v903 = vpack.c.bf16 %v750, %v747
        %v904 = vpack.c.bf16 %v758, %v755
        %v905 = vpack.c.bf16 %v766, %v763
        %v906 = vpack.c.bf16 %v774, %v771
        %v907 = vpack.c.bf16 %v782, %v779
        %v908 = vpack.c.bf16 %v790, %v787
        %v909 = vpack.c.bf16 %v798, %v795
        %v910 = vpack.c.bf16 %v806, %v803
        %v911 = vpack.c.bf16 %v814, %v811
        %v912 = vpack.c.bf16 %v822, %v819
        %v913 = vpack.c.bf16 %v830, %v827
        %v914 = vpack.c.bf16 %v838, %v835
        %v915 = vpack.c.bf16 %v846, %v843
        %v916 = vpack.c.bf16 %v854, %v851
        %v917 = vpack.c.bf16 %v862, %v859
        %v918 = vpack.c.bf16 %v870, %v867
        %v919 = vpack.c.bf16 %v878, %v875
        %v920 = vpack.c.bf16 %v886, %v883
        %v953 = vunpack.c.l.b16 %v889
        %v954 = vunpack.c.h.b16 %v889
        %v955 = vunpack.c.l.b16 %v890
        %v956 = vunpack.c.h.b16 %v890
        %v957 = vunpack.c.l.b16 %v891
        %v958 = vunpack.c.h.b16 %v891
        %v959 = vunpack.c.l.b16 %v892
        %v960 = vunpack.c.h.b16 %v892
        %v961 = vunpack.c.l.b16 %v893
        %v962 = vunpack.c.h.b16 %v893
        %v963 = vunpack.c.l.b16 %v894
        %v964 = vunpack.c.h.b16 %v894
        %v965 = vunpack.c.l.b16 %v895
        %v966 = vunpack.c.h.b16 %v895
        %v967 = vunpack.c.l.b16 %v896
        %v968 = vunpack.c.h.b16 %v896
        %v969 = vunpack.c.l.b16 %v897
        %v970 = vunpack.c.h.b16 %v897
        %v971 = vunpack.c.l.b16 %v898
        %v972 = vunpack.c.h.b16 %v898
        %v973 = vunpack.c.l.b16 %v899
        %v974 = vunpack.c.h.b16 %v899
        %v975 = vunpack.c.l.b16 %v900
        %v976 = vunpack.c.h.b16 %v900
        %v977 = vunpack.c.l.b16 %v901
        %v978 = vunpack.c.h.b16 %v901
        %v979 = vunpack.c.l.b16 %v902
        %v980 = vunpack.c.h.b16 %v902
        %v981 = vunpack.c.l.b16 %v903
        %v982 = vunpack.c.h.b16 %v903
        %v983 = vunpack.c.l.b16 %v904
        %v984 = vunpack.c.h.b16 %v904
        %v985 = vunpack.c.l.b16 %v905
        %v986 = vunpack.c.h.b16 %v905
        %v987 = vunpack.c.l.b16 %v906
        %v988 = vunpack.c.h.b16 %v906
        %v989 = vunpack.c.l.b16 %v907
        %v990 = vunpack.c.h.b16 %v907
        %v991 = vunpack.c.l.b16 %v908
        %v992 = vunpack.c.h.b16 %v908
        %v993 = vunpack.c.l.b16 %v909
        %v994 = vunpack.c.h.b16 %v909
        %v995 = vunpack.c.l.b16 %v910
        %v996 = vunpack.c.h.b16 %v910
        %v997 = vunpack.c.l.b16 %v911
        %v998 = vunpack.c.h.b16 %v911
        %v999 = vunpack.c.l.b16 %v912
        %v1000 = vunpack.c.h.b16 %v912
        %v1001 = vunpack.c.l.b16 %v913
        %v1002 = vunpack.c.h.b16 %v913
        %v1003 = vunpack.c.l.b16 %v914
        %v1004 = vunpack.c.h.b16 %v914
        %v1005 = vunpack.c.l.b16 %v915
        %v1006 = vunpack.c.h.b16 %v915
        %v1007 = vunpack.c.l.b16 %v916
        %v1008 = vunpack.c.h.b16 %v916
        %v1009 = vunpack.c.l.b16 %v917
        %v1010 = vunpack.c.h.b16 %v917
        %v1011 = vunpack.c.l.b16 %v918
        %v1012 = vunpack.c.h.b16 %v918
        %v1013 = vunpack.c.l.b16 %v919
        %v1014 = vunpack.c.h.b16 %v919
        %v1015 = vunpack.c.l.b16 %v920
        %v1016 = vunpack.c.h.b16 %v920
        %v1017 = vpack.c.b16 %v953, %v953
        %v1018 = vpack.c.b16 %v954, %v954
        %v1019 = vpack.c.b16 %v955, %v955
        %v1020 = vpack.c.b16 %v956, %v956
        %v1021 = vpack.c.b16 %v957, %v957
        %v1022 = vpack.c.b16 %v958, %v958
        %v1023 = vpack.c.b16 %v959, %v959
        %v1024 = vpack.c.b16 %v960, %v960
        %v1025 = vpack.c.b16 %v961, %v961
        %v1026 = vpack.c.b16 %v962, %v962
        %v1027 = vpack.c.b16 %v963, %v963
        %v1028 = vpack.c.b16 %v964, %v964
        %v1029 = vpack.c.b16 %v965, %v965
        %v1030 = vpack.c.b16 %v966, %v966
        %v1031 = vpack.c.b16 %v967, %v967
        %v1032 = vpack.c.b16 %v968, %v968
        %v1033 = vpack.c.b16 %v969, %v969
        %v1034 = vpack.c.b16 %v970, %v970
        %v1035 = vpack.c.b16 %v971, %v971
        %v1036 = vpack.c.b16 %v972, %v972
        %v1037 = vpack.c.b16 %v973, %v973
        %v1038 = vpack.c.b16 %v974, %v974
        %v1039 = vpack.c.b16 %v975, %v975
        %v1040 = vpack.c.b16 %v976, %v976
        %v1041 = vpack.c.b16 %v977, %v977
        %v1042 = vpack.c.b16 %v978, %v978
        %v1043 = vpack.c.b16 %v979, %v979
        %v1044 = vpack.c.b16 %v980, %v980
        %v1045 = vpack.c.b16 %v981, %v981
        %v1046 = vpack.c.b16 %v982, %v982
        %v1047 = vpack.c.b16 %v983, %v983
        %v1048 = vpack.c.b16 %v984, %v984
        %v1049 = vpack.c.b16 %v985, %v985
        %v1050 = vpack.c.b16 %v986, %v986
        %v1051 = vpack.c.b16 %v987, %v987
        %v1052 = vpack.c.b16 %v988, %v988
        %v1053 = vpack.c.b16 %v989, %v989
        %v1054 = vpack.c.b16 %v990, %v990
        %v1055 = vpack.c.b16 %v991, %v991
        %v1056 = vpack.c.b16 %v992, %v992
        %v1057 = vpack.c.b16 %v993, %v993
        %v1058 = vpack.c.b16 %v994, %v994
        %v1059 = vpack.c.b16 %v995, %v995
        %v1060 = vpack.c.b16 %v996, %v996
        %v1061 = vpack.c.b16 %v997, %v997
        %v1062 = vpack.c.b16 %v998, %v998
        %v1063 = vpack.c.b16 %v999, %v999
        %v1064 = vpack.c.b16 %v1000, %v1000
        %v1065 = vpack.c.b16 %v1001, %v1001
        %v1066 = vpack.c.b16 %v1002, %v1002
        %v1067 = vpack.c.b16 %v1003, %v1003
        %v1068 = vpack.c.b16 %v1004, %v1004
        %v1069 = vpack.c.b16 %v1005, %v1005
        %v1070 = vpack.c.b16 %v1006, %v1006
        %v1071 = vpack.c.b16 %v1007, %v1007
        %v1072 = vpack.c.b16 %v1008, %v1008
        %v1073 = vpack.c.b16 %v1009, %v1009
        %v1074 = vpack.c.b16 %v1010, %v1010
        %v1075 = vpack.c.b16 %v1011, %v1011
        %v1076 = vpack.c.b16 %v1012, %v1012
        %v1077 = vpack.c.b16 %v1013, %v1013
        %v1078 = vpack.c.b16 %v1014, %v1014
        %v1079 = vpack.c.b16 %v1015, %v1015
        %v1080 = vpack.c.b16 %v1016, %v1016
        %1145 = vst [vmem:[%s263] sm:$0xf] %v1017
        %1146 = vst [vmem:[%s263 + $0x4] sm:$0xf] %v1018
        %1147 = vst [vmem:[%s263 + $0x8] sm:$0xf] %v1019
        %1148 = vst [vmem:[%s263 + $0xc] sm:$0xf] %v1020
        %1149 = vst [vmem:[%s263 + $0x10] sm:$0xf] %v1021
        %1150 = vst [vmem:[%s263 + $0x14] sm:$0xf] %v1022
        %1151 = vst [vmem:[%s263 + $0x18] sm:$0xf] %v1023
        %1152 = vst [vmem:[%s263 + $0x1c] sm:$0xf] %v1024
        %1153 = vst [vmem:[%s263 + $0x20] sm:$0xf] %v1025
        %1154 = vst [vmem:[%s263 + $0x24] sm:$0xf] %v1026
        %1155 = vst [vmem:[%s263 + $0x28] sm:$0xf] %v1027
        %1156 = vst [vmem:[%s263 + $0x2c] sm:$0xf] %v1028
        %1157 = vst [vmem:[%s263 + $0x30] sm:$0xf] %v1029
        %1158 = vst [vmem:[%s263 + $0x34] sm:$0xf] %v1030
        %1159 = vst [vmem:[%s263 + $0x38] sm:$0xf] %v1031
        %1160 = vst [vmem:[%s263 + $0x3c] sm:$0xf] %v1032
        %1161 = vst [vmem:[%s263 + $0x40] sm:$0xf] %v1033
        %1162 = vst [vmem:[%s263 + $0x44] sm:$0xf] %v1034
        %1163 = vst [vmem:[%s263 + $0x48] sm:$0xf] %v1035
        %1164 = vst [vmem:[%s263 + $0x4c] sm:$0xf] %v1036
        %1165 = vst [vmem:[%s263 + $0x50] sm:$0xf] %v1037
        %1166 = vst [vmem:[%s263 + $0x54] sm:$0xf] %v1038
        %1167 = vst [vmem:[%s263 + $0x58] sm:$0xf] %v1039
        %1168 = vst [vmem:[%s263 + $0x5c] sm:$0xf] %v1040
        %1169 = vst [vmem:[%s263 + $0x60] sm:$0xf] %v1041
        %1170 = vst [vmem:[%s263 + $0x64] sm:$0xf] %v1042
        %1171 = vst [vmem:[%s263 + $0x68] sm:$0xf] %v1043
        %1172 = vst [vmem:[%s263 + $0x6c] sm:$0xf] %v1044
        %1173 = vst [vmem:[%s263 + $0x70] sm:$0xf] %v1045
        %1174 = vst [vmem:[%s263 + $0x74] sm:$0xf] %v1046
        %1175 = vst [vmem:[%s263 + $0x78] sm:$0xf] %v1047
        %1176 = vst [vmem:[%s263 + $0x7c] sm:$0xf] %v1048
        %1177 = vst [vmem:[%s263 + $0x80] sm:$0xf] %v1049
        %1178 = vst [vmem:[%s263 + $0x84] sm:$0xf] %v1050
        %1179 = vst [vmem:[%s263 + $0x88] sm:$0xf] %v1051
        %1180 = vst [vmem:[%s263 + $0x8c] sm:$0xf] %v1052
        %1181 = vst [vmem:[%s263 + $0x90] sm:$0xf] %v1053
        %1182 = vst [vmem:[%s263 + $0x94] sm:$0xf] %v1054
        %1183 = vst [vmem:[%s263 + $0x98] sm:$0xf] %v1055
        %1184 = vst [vmem:[%s263 + $0x9c] sm:$0xf] %v1056
        %1185 = vst [vmem:[%s263 + $0xa0] sm:$0xf] %v1057
        %1186 = vst [vmem:[%s263 + $0xa4] sm:$0xf] %v1058
        %1187 = vst [vmem:[%s263 + $0xa8] sm:$0xf] %v1059
        %1188 = vst [vmem:[%s263 + $0xac] sm:$0xf] %v1060
        %1189 = vst [vmem:[%s263 + $0xb0] sm:$0xf] %v1061
        %1190 = vst [vmem:[%s263 + $0xb4] sm:$0xf] %v1062
        %1191 = vst [vmem:[%s263 + $0xb8] sm:$0xf] %v1063
        %1192 = vst [vmem:[%s263 + $0xbc] sm:$0xf] %v1064
        %1193 = vst [vmem:[%s263 + $0xc0] sm:$0xf] %v1065
        %1194 = vst [vmem:[%s263 + $0xc4] sm:$0xf] %v1066
        %1195 = vst [vmem:[%s263 + $0xc8] sm:$0xf] %v1067
        %1196 = vst [vmem:[%s263 + $0xcc] sm:$0xf] %v1068
        %1197 = vst [vmem:[%s263 + $0xd0] sm:$0xf] %v1069
        %1198 = vst [vmem:[%s263 + $0xd4] sm:$0xf] %v1070
        %1199 = vst [vmem:[%s263 + $0xd8] sm:$0xf] %v1071
        %1200 = vst [vmem:[%s263 + $0xdc] sm:$0xf] %v1072
        %1201 = vst [vmem:[%s263 + $0xe0] sm:$0xf] %v1073
        %1202 = vst [vmem:[%s263 + $0xe4] sm:$0xf] %v1074
        %1203 = vst [vmem:[%s263 + $0xe8] sm:$0xf] %v1075
        %1204 = vst [vmem:[%s263 + $0xec] sm:$0xf] %v1076
        %1205 = vst [vmem:[%s263 + $0xf0] sm:$0xf] %v1077
        %1206 = vst [vmem:[%s263 + $0xf4] sm:$0xf] %v1078
        %1207 = vst [vmem:[%s263 + $0xf8] sm:$0xf] %v1079
        %1208 = vst [vmem:[%s263 + $0xfc] sm:$0xf] %v1080
        %s1209 = sand.u32 %s133, 1
        %s1210 = sand.u32 %s133, 1
        %s1211 = smul.addr %s1210, 256
        %s1212 = scalar_lea.vmem [#allocation6], %s1211
        // Predicated region
        $region41: #{srm_fl_forward.6} parent=31 // pred_check
          %p1213 = pneg %p143
        $region42: #{srm_fl_forward.6} parent=31 // pred_check_branch
          %1215 = sbr.rel (%p1213) target = $region44
        $region43: #{srm_fl_forward.6} parent=31 // pred_region
          %s1216 = sadd.s32 %s26, %s27
          %s1217 = smul.u32 64, %s25
          %s1218 = smul.addr %s1217, 2
          %s1219 = sadd.s32 %s1216, %s1218
          %s1220 = smul.addr %s1219, 4
          %s1221 = scalar_lea.vmem %s3, %s1220
          // Predicated region
          $region45: #{srm_fl_forward.6} parent=43 // pred_check
            _
          $region46: #{srm_fl_forward.6} parent=43 // pred_check_branch
            %1223 = sbr.rel (0) target = $region48
          $region47: #{srm_fl_forward.6} parent=43 // pred_region
            // Predicated region
            $region49: #{srm_fl_forward.6} parent=47 // pred_check
              _
            $region50: #{srm_fl_forward.6} parent=47 // pred_check_branch
              %1225 = sbr.rel target = $region52
            $region51: #{srm_fl_forward.6} parent=47 // pred_region
              // Predicated region
              $region64: #{srm_fl_forward.6} parent=51 // pred_check
                _
              $region65: #{srm_fl_forward.6} parent=51 // pred_check_branch
                %1366 = sbr.rel (0) target = $region67
              $region66: #{srm_fl_forward.6} parent=51 // pred_region
                loop: start=0, step=1, limit=1
                $region68: #{srm_fl_forward.6} parent=66 // loop_pre_header
                  _
                $region69: #{srm_fl_forward.6} parent=66 // loop_header
                  %s1368 = sphi 0, %s1372
                  %p1369 = scmp.ge.s32.totalorder %s1368, 1
                  %s1373 = sphi %s1212, %s1212
                  %s1374 = sphi %s1221, %s1221
                $region70: #{srm_fl_forward.6} parent=66 // loop_header_branch
                  %1371 = sbr.rel (%p1369) target = $region74
                $region71: #{srm_fl_forward.6} parent=66 // loop_body
                  _
                $region72: #{srm_fl_forward.6} parent=66 // loop_footer
                  %s1372 = sadd.s32 1, %s1368
                $region73: #{srm_fl_forward.6} parent=66 // loop_footer_branch
                  %1367 = sbr.rel target = $region69
                $region74: #{srm_fl_forward.6} parent=66 // loop_exit
                  _
                loop: start=0, step=1, limit=1
                $region75: #{srm_fl_forward.6} parent=66 // loop_pre_header
                  _
                $region76: #{srm_fl_forward.6} parent=66 // loop_header
                  %s1377 = sphi 0, %s1381
                  %p1378 = scmp.ge.s32.totalorder %s1377, 1
                  %s1382 = sphi %s1212, %s1212
                  %s1383 = sphi %s1221, %s1221
                $region77: #{srm_fl_forward.6} parent=66 // loop_header_branch
                  %1380 = sbr.rel (%p1378) target = $region81
                $region78: #{srm_fl_forward.6} parent=66 // loop_body
                  %v1384 = vld [vmem:[%s1382] sm:$0xf]
                  %1385 = vst [vmem:[%s1383] sm:$0xf] %v1384
                  %v1386 = vld [vmem:[%s1382 + $0x4] sm:$0xf]
                  %1387 = vst [vmem:[%s1383 + $0x8] sm:$0xf] %v1386
                  %v1388 = vld [vmem:[%s1382 + $0x8] sm:$0xf]
                  %1389 = vst [vmem:[%s1383 + $0x10] sm:$0xf] %v1388
                  %v1390 = vld [vmem:[%s1382 + $0xc] sm:$0xf]
                  %1391 = vst [vmem:[%s1383 + $0x18] sm:$0xf] %v1390
                  %v1392 = vld [vmem:[%s1382 + $0x10] sm:$0xf]
                  %1393 = vst [vmem:[%s1383 + $0x20] sm:$0xf] %v1392
                  %v1394 = vld [vmem:[%s1382 + $0x14] sm:$0xf]
                  %1395 = vst [vmem:[%s1383 + $0x28] sm:$0xf] %v1394
                  %v1396 = vld [vmem:[%s1382 + $0x18] sm:$0xf]
                  %1397 = vst [vmem:[%s1383 + $0x30] sm:$0xf] %v1396
                  %v1398 = vld [vmem:[%s1382 + $0x1c] sm:$0xf]
                  %1399 = vst [vmem:[%s1383 + $0x38] sm:$0xf] %v1398
                  %v1400 = vld [vmem:[%s1382 + $0x20] sm:$0xf]
                  %1401 = vst [vmem:[%s1383 + $0x40] sm:$0xf] %v1400
                  %v1402 = vld [vmem:[%s1382 + $0x24] sm:$0xf]
                  %1403 = vst [vmem:[%s1383 + $0x48] sm:$0xf] %v1402
                  %v1404 = vld [vmem:[%s1382 + $0x28] sm:$0xf]
                  %1405 = vst [vmem:[%s1383 + $0x50] sm:$0xf] %v1404
                  %v1406 = vld [vmem:[%s1382 + $0x2c] sm:$0xf]
                  %1407 = vst [vmem:[%s1383 + $0x58] sm:$0xf] %v1406
                  %v1408 = vld [vmem:[%s1382 + $0x30] sm:$0xf]
                  %1409 = vst [vmem:[%s1383 + $0x60] sm:$0xf] %v1408
                  %v1410 = vld [vmem:[%s1382 + $0x34] sm:$0xf]
                  %1411 = vst [vmem:[%s1383 + $0x68] sm:$0xf] %v1410
                  %v1412 = vld [vmem:[%s1382 + $0x38] sm:$0xf]
                  %1413 = vst [vmem:[%s1383 + $0x70] sm:$0xf] %v1412
                  %v1414 = vld [vmem:[%s1382 + $0x3c] sm:$0xf]
                  %1415 = vst [vmem:[%s1383 + $0x78] sm:$0xf] %v1414
                  %v1416 = vld [vmem:[%s1382 + $0x40] sm:$0xf]
                  %1417 = vst [vmem:[%s1383 + $0x80] sm:$0xf] %v1416
                  %v1418 = vld [vmem:[%s1382 + $0x44] sm:$0xf]
                  %1419 = vst [vmem:[%s1383 + $0x88] sm:$0xf] %v1418
                  %v1420 = vld [vmem:[%s1382 + $0x48] sm:$0xf]
                  %1421 = vst [vmem:[%s1383 + $0x90] sm:$0xf] %v1420
                  %v1422 = vld [vmem:[%s1382 + $0x4c] sm:$0xf]
                  %1423 = vst [vmem:[%s1383 + $0x98] sm:$0xf] %v1422
                  %v1424 = vld [vmem:[%s1382 + $0x50] sm:$0xf]
                  %1425 = vst [vmem:[%s1383 + $0xa0] sm:$0xf] %v1424
                  %v1426 = vld [vmem:[%s1382 + $0x54] sm:$0xf]
                  %1427 = vst [vmem:[%s1383 + $0xa8] sm:$0xf] %v1426
                  %v1428 = vld [vmem:[%s1382 + $0x58] sm:$0xf]
                  %1429 = vst [vmem:[%s1383 + $0xb0] sm:$0xf] %v1428
                  %v1430 = vld [vmem:[%s1382 + $0x5c] sm:$0xf]
                  %1431 = vst [vmem:[%s1383 + $0xb8] sm:$0xf] %v1430
                  %v1432 = vld [vmem:[%s1382 + $0x60] sm:$0xf]
                  %1433 = vst [vmem:[%s1383 + $0xc0] sm:$0xf] %v1432
                  %v1434 = vld [vmem:[%s1382 + $0x64] sm:$0xf]
                  %1435 = vst [vmem:[%s1383 + $0xc8] sm:$0xf] %v1434
                  %v1436 = vld [vmem:[%s1382 + $0x68] sm:$0xf]
                  %1437 = vst [vmem:[%s1383 + $0xd0] sm:$0xf] %v1436
                  %v1438 = vld [vmem:[%s1382 + $0x6c] sm:$0xf]
                  %1439 = vst [vmem:[%s1383 + $0xd8] sm:$0xf] %v1438
                  %v1440 = vld [vmem:[%s1382 + $0x70] sm:$0xf]
                  %1441 = vst [vmem:[%s1383 + $0xe0] sm:$0xf] %v1440
                  %v1442 = vld [vmem:[%s1382 + $0x74] sm:$0xf]
                  %1443 = vst [vmem:[%s1383 + $0xe8] sm:$0xf] %v1442
                  %v1444 = vld [vmem:[%s1382 + $0x78] sm:$0xf]
                  %1445 = vst [vmem:[%s1383 + $0xf0] sm:$0xf] %v1444
                  %v1446 = vld [vmem:[%s1382 + $0x7c] sm:$0xf]
                  %1447 = vst [vmem:[%s1383 + $0xf8] sm:$0xf] %v1446
                  %v1448 = vld [vmem:[%s1382 + $0x80] sm:$0xf]
                  %1449 = vst [vmem:[%s1383 + $0x100] sm:$0xf] %v1448
                  %v1450 = vld [vmem:[%s1382 + $0x84] sm:$0xf]
                  %1451 = vst [vmem:[%s1383 + $0x108] sm:$0xf] %v1450
                  %v1452 = vld [vmem:[%s1382 + $0x88] sm:$0xf]
                  %1453 = vst [vmem:[%s1383 + $0x110] sm:$0xf] %v1452
                  %v1454 = vld [vmem:[%s1382 + $0x8c] sm:$0xf]
                  %1455 = vst [vmem:[%s1383 + $0x118] sm:$0xf] %v1454
                  %v1456 = vld [vmem:[%s1382 + $0x90] sm:$0xf]
                  %1457 = vst [vmem:[%s1383 + $0x120] sm:$0xf] %v1456
                  %v1458 = vld [vmem:[%s1382 + $0x94] sm:$0xf]
                  %1459 = vst [vmem:[%s1383 + $0x128] sm:$0xf] %v1458
                  %v1460 = vld [vmem:[%s1382 + $0x98] sm:$0xf]
                  %1461 = vst [vmem:[%s1383 + $0x130] sm:$0xf] %v1460
                  %v1462 = vld [vmem:[%s1382 + $0x9c] sm:$0xf]
                  %1463 = vst [vmem:[%s1383 + $0x138] sm:$0xf] %v1462
                  %v1464 = vld [vmem:[%s1382 + $0xa0] sm:$0xf]
                  %1465 = vst [vmem:[%s1383 + $0x140] sm:$0xf] %v1464
                  %v1466 = vld [vmem:[%s1382 + $0xa4] sm:$0xf]
                  %1467 = vst [vmem:[%s1383 + $0x148] sm:$0xf] %v1466
                  %v1468 = vld [vmem:[%s1382 + $0xa8] sm:$0xf]
                  %1469 = vst [vmem:[%s1383 + $0x150] sm:$0xf] %v1468
                  %v1470 = vld [vmem:[%s1382 + $0xac] sm:$0xf]
                  %1471 = vst [vmem:[%s1383 + $0x158] sm:$0xf] %v1470
                  %v1472 = vld [vmem:[%s1382 + $0xb0] sm:$0xf]
                  %1473 = vst [vmem:[%s1383 + $0x160] sm:$0xf] %v1472
                  %v1474 = vld [vmem:[%s1382 + $0xb4] sm:$0xf]
                  %1475 = vst [vmem:[%s1383 + $0x168] sm:$0xf] %v1474
                  %v1476 = vld [vmem:[%s1382 + $0xb8] sm:$0xf]
                  %1477 = vst [vmem:[%s1383 + $0x170] sm:$0xf] %v1476
                  %v1478 = vld [vmem:[%s1382 + $0xbc] sm:$0xf]
                  %1479 = vst [vmem:[%s1383 + $0x178] sm:$0xf] %v1478
                  %v1480 = vld [vmem:[%s1382 + $0xc0] sm:$0xf]
                  %1481 = vst [vmem:[%s1383 + $0x180] sm:$0xf] %v1480
                  %v1482 = vld [vmem:[%s1382 + $0xc4] sm:$0xf]
                  %1483 = vst [vmem:[%s1383 + $0x188] sm:$0xf] %v1482
                  %v1484 = vld [vmem:[%s1382 + $0xc8] sm:$0xf]
                  %1485 = vst [vmem:[%s1383 + $0x190] sm:$0xf] %v1484
                  %v1486 = vld [vmem:[%s1382 + $0xcc] sm:$0xf]
                  %1487 = vst [vmem:[%s1383 + $0x198] sm:$0xf] %v1486
                  %v1488 = vld [vmem:[%s1382 + $0xd0] sm:$0xf]
                  %1489 = vst [vmem:[%s1383 + $0x1a0] sm:$0xf] %v1488
                  %v1490 = vld [vmem:[%s1382 + $0xd4] sm:$0xf]
                  %1491 = vst [vmem:[%s1383 + $0x1a8] sm:$0xf] %v1490
                  %v1492 = vld [vmem:[%s1382 + $0xd8] sm:$0xf]
                  %1493 = vst [vmem:[%s1383 + $0x1b0] sm:$0xf] %v1492
                  %v1494 = vld [vmem:[%s1382 + $0xdc] sm:$0xf]
                  %1495 = vst [vmem:[%s1383 + $0x1b8] sm:$0xf] %v1494
                  %v1496 = vld [vmem:[%s1382 + $0xe0] sm:$0xf]
                  %1497 = vst [vmem:[%s1383 + $0x1c0] sm:$0xf] %v1496
                  %v1498 = vld [vmem:[%s1382 + $0xe4] sm:$0xf]
                  %1499 = vst [vmem:[%s1383 + $0x1c8] sm:$0xf] %v1498
                  %v1500 = vld [vmem:[%s1382 + $0xe8] sm:$0xf]
                  %1501 = vst [vmem:[%s1383 + $0x1d0] sm:$0xf] %v1500
                  %v1502 = vld [vmem:[%s1382 + $0xec] sm:$0xf]
                  %1503 = vst [vmem:[%s1383 + $0x1d8] sm:$0xf] %v1502
                  %v1504 = vld [vmem:[%s1382 + $0xf0] sm:$0xf]
                  %1505 = vst [vmem:[%s1383 + $0x1e0] sm:$0xf] %v1504
                  %v1506 = vld [vmem:[%s1382 + $0xf4] sm:$0xf]
                  %1507 = vst [vmem:[%s1383 + $0x1e8] sm:$0xf] %v1506
                  %v1508 = vld [vmem:[%s1382 + $0xf8] sm:$0xf]
                  %1509 = vst [vmem:[%s1383 + $0x1f0] sm:$0xf] %v1508
                  %v1510 = vld [vmem:[%s1382 + $0xfc] sm:$0xf]
                  %1511 = vst [vmem:[%s1383 + $0x1f8] sm:$0xf] %v1510
                $region79: #{srm_fl_forward.6} parent=66 // loop_footer
                  %s1381 = sadd.s32 1, %s1377
                $region80: #{srm_fl_forward.6} parent=66 // loop_footer_branch
                  %1376 = sbr.rel target = $region76
                $region81: #{srm_fl_forward.6} parent=66 // loop_exit
                  _
              $region67: #{srm_fl_forward.6} parent=51 // pred_fallthru
                _
            $region52: #{srm_fl_forward.6} parent=47 // pred_fallthru
              _
            // Predicated region
            $region53: #{srm_fl_forward.6} parent=47 // pred_check
              _
            $region54: #{srm_fl_forward.6} parent=47 // pred_check_branch
              %1227 = sbr.rel (0) target = $region56
            $region55: #{srm_fl_forward.6} parent=47 // pred_region
              loop: start=0, step=1, limit=1
              $region57: #{srm_fl_forward.6} parent=55 // loop_pre_header
                _
              $region58: #{srm_fl_forward.6} parent=55 // loop_header
                %s1230 = sphi 0, %s1234
                %p1231 = scmp.ge.s32.totalorder %s1230, 1
                %s1235 = sphi %s1212, %s1212
                %s1236 = sphi %s1221, %s1221
              $region59: #{srm_fl_forward.6} parent=55 // loop_header_branch
                %1233 = sbr.rel (%p1231) target = $region63
              $region60: #{srm_fl_forward.6} parent=55 // loop_body
                %v1237 = vld [vmem:[%s1235] sm:$0xf]
                %1238 = vst [vmem:[%s1236] sm:$0xf] %v1237
                %v1239 = vld [vmem:[%s1235 + $0x4] sm:$0xf]
                %1240 = vst [vmem:[%s1236 + $0x8] sm:$0xf] %v1239
                %v1241 = vld [vmem:[%s1235 + $0x8] sm:$0xf]
                %1242 = vst [vmem:[%s1236 + $0x10] sm:$0xf] %v1241
                %v1243 = vld [vmem:[%s1235 + $0xc] sm:$0xf]
                %1244 = vst [vmem:[%s1236 + $0x18] sm:$0xf] %v1243
                %v1245 = vld [vmem:[%s1235 + $0x10] sm:$0xf]
                %1246 = vst [vmem:[%s1236 + $0x20] sm:$0xf] %v1245
                %v1247 = vld [vmem:[%s1235 + $0x14] sm:$0xf]
                %1248 = vst [vmem:[%s1236 + $0x28] sm:$0xf] %v1247
                %v1249 = vld [vmem:[%s1235 + $0x18] sm:$0xf]
                %1250 = vst [vmem:[%s1236 + $0x30] sm:$0xf] %v1249
                %v1251 = vld [vmem:[%s1235 + $0x1c] sm:$0xf]
                %1252 = vst [vmem:[%s1236 + $0x38] sm:$0xf] %v1251
                %v1253 = vld [vmem:[%s1235 + $0x20] sm:$0xf]
                %1254 = vst [vmem:[%s1236 + $0x40] sm:$0xf] %v1253
                %v1255 = vld [vmem:[%s1235 + $0x24] sm:$0xf]
                %1256 = vst [vmem:[%s1236 + $0x48] sm:$0xf] %v1255
                %v1257 = vld [vmem:[%s1235 + $0x28] sm:$0xf]
                %1258 = vst [vmem:[%s1236 + $0x50] sm:$0xf] %v1257
                %v1259 = vld [vmem:[%s1235 + $0x2c] sm:$0xf]
                %1260 = vst [vmem:[%s1236 + $0x58] sm:$0xf] %v1259
                %v1261 = vld [vmem:[%s1235 + $0x30] sm:$0xf]
                %1262 = vst [vmem:[%s1236 + $0x60] sm:$0xf] %v1261
                %v1263 = vld [vmem:[%s1235 + $0x34] sm:$0xf]
                %1264 = vst [vmem:[%s1236 + $0x68] sm:$0xf] %v1263
                %v1265 = vld [vmem:[%s1235 + $0x38] sm:$0xf]
                %1266 = vst [vmem:[%s1236 + $0x70] sm:$0xf] %v1265
                %v1267 = vld [vmem:[%s1235 + $0x3c] sm:$0xf]
                %1268 = vst [vmem:[%s1236 + $0x78] sm:$0xf] %v1267
                %v1269 = vld [vmem:[%s1235 + $0x40] sm:$0xf]
                %1270 = vst [vmem:[%s1236 + $0x80] sm:$0xf] %v1269
                %v1271 = vld [vmem:[%s1235 + $0x44] sm:$0xf]
                %1272 = vst [vmem:[%s1236 + $0x88] sm:$0xf] %v1271
                %v1273 = vld [vmem:[%s1235 + $0x48] sm:$0xf]
                %1274 = vst [vmem:[%s1236 + $0x90] sm:$0xf] %v1273
                %v1275 = vld [vmem:[%s1235 + $0x4c] sm:$0xf]
                %1276 = vst [vmem:[%s1236 + $0x98] sm:$0xf] %v1275
                %v1277 = vld [vmem:[%s1235 + $0x50] sm:$0xf]
                %1278 = vst [vmem:[%s1236 + $0xa0] sm:$0xf] %v1277
                %v1279 = vld [vmem:[%s1235 + $0x54] sm:$0xf]
                %1280 = vst [vmem:[%s1236 + $0xa8] sm:$0xf] %v1279
                %v1281 = vld [vmem:[%s1235 + $0x58] sm:$0xf]
                %1282 = vst [vmem:[%s1236 + $0xb0] sm:$0xf] %v1281
                %v1283 = vld [vmem:[%s1235 + $0x5c] sm:$0xf]
                %1284 = vst [vmem:[%s1236 + $0xb8] sm:$0xf] %v1283
                %v1285 = vld [vmem:[%s1235 + $0x60] sm:$0xf]
                %1286 = vst [vmem:[%s1236 + $0xc0] sm:$0xf] %v1285
                %v1287 = vld [vmem:[%s1235 + $0x64] sm:$0xf]
                %1288 = vst [vmem:[%s1236 + $0xc8] sm:$0xf] %v1287
                %v1289 = vld [vmem:[%s1235 + $0x68] sm:$0xf]
                %1290 = vst [vmem:[%s1236 + $0xd0] sm:$0xf] %v1289
                %v1291 = vld [vmem:[%s1235 + $0x6c] sm:$0xf]
                %1292 = vst [vmem:[%s1236 + $0xd8] sm:$0xf] %v1291
                %v1293 = vld [vmem:[%s1235 + $0x70] sm:$0xf]
                %1294 = vst [vmem:[%s1236 + $0xe0] sm:$0xf] %v1293
                %v1295 = vld [vmem:[%s1235 + $0x74] sm:$0xf]
                %1296 = vst [vmem:[%s1236 + $0xe8] sm:$0xf] %v1295
                %v1297 = vld [vmem:[%s1235 + $0x78] sm:$0xf]
                %1298 = vst [vmem:[%s1236 + $0xf0] sm:$0xf] %v1297
                %v1299 = vld [vmem:[%s1235 + $0x7c] sm:$0xf]
                %1300 = vst [vmem:[%s1236 + $0xf8] sm:$0xf] %v1299
                %v1301 = vld [vmem:[%s1235 + $0x80] sm:$0xf]
                %1302 = vst [vmem:[%s1236 + $0x100] sm:$0xf] %v1301
                %v1303 = vld [vmem:[%s1235 + $0x84] sm:$0xf]
                %1304 = vst [vmem:[%s1236 + $0x108] sm:$0xf] %v1303
                %v1305 = vld [vmem:[%s1235 + $0x88] sm:$0xf]
                %1306 = vst [vmem:[%s1236 + $0x110] sm:$0xf] %v1305
                %v1307 = vld [vmem:[%s1235 + $0x8c] sm:$0xf]
                %1308 = vst [vmem:[%s1236 + $0x118] sm:$0xf] %v1307
                %v1309 = vld [vmem:[%s1235 + $0x90] sm:$0xf]
                %1310 = vst [vmem:[%s1236 + $0x120] sm:$0xf] %v1309
                %v1311 = vld [vmem:[%s1235 + $0x94] sm:$0xf]
                %1312 = vst [vmem:[%s1236 + $0x128] sm:$0xf] %v1311
                %v1313 = vld [vmem:[%s1235 + $0x98] sm:$0xf]
                %1314 = vst [vmem:[%s1236 + $0x130] sm:$0xf] %v1313
                %v1315 = vld [vmem:[%s1235 + $0x9c] sm:$0xf]
                %1316 = vst [vmem:[%s1236 + $0x138] sm:$0xf] %v1315
                %v1317 = vld [vmem:[%s1235 + $0xa0] sm:$0xf]
                %1318 = vst [vmem:[%s1236 + $0x140] sm:$0xf] %v1317
                %v1319 = vld [vmem:[%s1235 + $0xa4] sm:$0xf]
                %1320 = vst [vmem:[%s1236 + $0x148] sm:$0xf] %v1319
                %v1321 = vld [vmem:[%s1235 + $0xa8] sm:$0xf]
                %1322 = vst [vmem:[%s1236 + $0x150] sm:$0xf] %v1321
                %v1323 = vld [vmem:[%s1235 + $0xac] sm:$0xf]
                %1324 = vst [vmem:[%s1236 + $0x158] sm:$0xf] %v1323
                %v1325 = vld [vmem:[%s1235 + $0xb0] sm:$0xf]
                %1326 = vst [vmem:[%s1236 + $0x160] sm:$0xf] %v1325
                %v1327 = vld [vmem:[%s1235 + $0xb4] sm:$0xf]
                %1328 = vst [vmem:[%s1236 + $0x168] sm:$0xf] %v1327
                %v1329 = vld [vmem:[%s1235 + $0xb8] sm:$0xf]
                %1330 = vst [vmem:[%s1236 + $0x170] sm:$0xf] %v1329
                %v1331 = vld [vmem:[%s1235 + $0xbc] sm:$0xf]
                %1332 = vst [vmem:[%s1236 + $0x178] sm:$0xf] %v1331
                %v1333 = vld [vmem:[%s1235 + $0xc0] sm:$0xf]
                %1334 = vst [vmem:[%s1236 + $0x180] sm:$0xf] %v1333
                %v1335 = vld [vmem:[%s1235 + $0xc4] sm:$0xf]
                %1336 = vst [vmem:[%s1236 + $0x188] sm:$0xf] %v1335
                %v1337 = vld [vmem:[%s1235 + $0xc8] sm:$0xf]
                %1338 = vst [vmem:[%s1236 + $0x190] sm:$0xf] %v1337
                %v1339 = vld [vmem:[%s1235 + $0xcc] sm:$0xf]
                %1340 = vst [vmem:[%s1236 + $0x198] sm:$0xf] %v1339
                %v1341 = vld [vmem:[%s1235 + $0xd0] sm:$0xf]
                %1342 = vst [vmem:[%s1236 + $0x1a0] sm:$0xf] %v1341
                %v1343 = vld [vmem:[%s1235 + $0xd4] sm:$0xf]
                %1344 = vst [vmem:[%s1236 + $0x1a8] sm:$0xf] %v1343
                %v1345 = vld [vmem:[%s1235 + $0xd8] sm:$0xf]
                %1346 = vst [vmem:[%s1236 + $0x1b0] sm:$0xf] %v1345
                %v1347 = vld [vmem:[%s1235 + $0xdc] sm:$0xf]
                %1348 = vst [vmem:[%s1236 + $0x1b8] sm:$0xf] %v1347
                %v1349 = vld [vmem:[%s1235 + $0xe0] sm:$0xf]
                %1350 = vst [vmem:[%s1236 + $0x1c0] sm:$0xf] %v1349
                %v1351 = vld [vmem:[%s1235 + $0xe4] sm:$0xf]
                %1352 = vst [vmem:[%s1236 + $0x1c8] sm:$0xf] %v1351
                %v1353 = vld [vmem:[%s1235 + $0xe8] sm:$0xf]
                %1354 = vst [vmem:[%s1236 + $0x1d0] sm:$0xf] %v1353
                %v1355 = vld [vmem:[%s1235 + $0xec] sm:$0xf]
                %1356 = vst [vmem:[%s1236 + $0x1d8] sm:$0xf] %v1355
                %v1357 = vld [vmem:[%s1235 + $0xf0] sm:$0xf]
                %1358 = vst [vmem:[%s1236 + $0x1e0] sm:$0xf] %v1357
                %v1359 = vld [vmem:[%s1235 + $0xf4] sm:$0xf]
                %1360 = vst [vmem:[%s1236 + $0x1e8] sm:$0xf] %v1359
                %v1361 = vld [vmem:[%s1235 + $0xf8] sm:$0xf]
                %1362 = vst [vmem:[%s1236 + $0x1f0] sm:$0xf] %v1361
                %v1363 = vld [vmem:[%s1235 + $0xfc] sm:$0xf]
                %1364 = vst [vmem:[%s1236 + $0x1f8] sm:$0xf] %v1363
              $region61: #{srm_fl_forward.6} parent=55 // loop_footer
                %s1234 = sadd.s32 1, %s1230
              $region62: #{srm_fl_forward.6} parent=55 // loop_footer_branch
                %1229 = sbr.rel target = $region58
              $region63: #{srm_fl_forward.6} parent=55 // loop_exit
                _
            $region56: #{srm_fl_forward.6} parent=47 // pred_fallthru
              _
          $region48: #{srm_fl_forward.6} parent=43 // pred_fallthru
            _
          %1512 = vnop
        $region44: #{srm_fl_forward.6} parent=31 // pred_fallthru
          _
      $region32: #{srm_fl_forward.6} parent=5 // pred_fallthru
        _
      %p1513 = scmp.le.s32.totalorder 2, %s15
      // Predicated region
      $region82: #{srm_fl_forward.6} parent=5 // pred_check
        %p1514 = pneg %p1513
      $region83: #{srm_fl_forward.6} parent=5 // pred_check_branch
        %1516 = sbr.rel (%p1514) target = $region85
      $region84: #{srm_fl_forward.6} parent=5 // pred_region
        %s1517 = ssub.s32 %s15, 2
        // Predicated region
        $region86: #{srm_fl_forward.6} parent=84 // pred_check
          %p1518 = pneg %p149
        $region87: #{srm_fl_forward.6} parent=84 // pred_check_branch
          %1520 = sbr.rel (%p1518) target = $region89
        $region88: #{srm_fl_forward.6} parent=84 // pred_region
          %s1521 = sand.u32 %s134, 1
          %s1522 = sand.u32 %s134, 1
          %s1523 = smul.addr %s1522, 256
          %s1524 = scalar_lea.vmem [#allocation6], %s1523
        $region89: #{srm_fl_forward.6} parent=84 // pred_fallthru
          _
      $region85: #{srm_fl_forward.6} parent=5 // pred_fallthru
        _
    $region6: #{srm_fl_forward.6} parent=1 // loop_footer
      %s19 = sadd.s32 1, %s15
    $region7: #{srm_fl_forward.6} parent=1 // loop_footer_branch
      %14 = sbr.rel target = $region3
    $region8: #{srm_fl_forward.6} parent=1 // loop_exit
      _
    %1525 = vsyncpa [#allocation3], 1
    %s1526 = scalar_lea.sflag [#allocation3], 1
    %1527 = vsyncpa %s1526, 1
    %1528 = vsyncpa [#allocation5], 1
    %s1529 = scalar_lea.sflag [#allocation5], 1
    %1530 = vsyncpa %s1529, 1

// kernel: srm_fl_forward.9
$region0: #{srm_fl_forward.9}
  #allocation0 [shape = 'u32[]', space=smem, size = 0x4, offset = 0x4, fixed_abs, tag = 'smem constant byte address 0x4 - core index']
  #allocation1 [shape = 'u32[144,128]{1,0:T(1,128)}', space=vmem, size = 0x12000, scoped, tag = 'internal scratch']
  %s0 = inlined_call_operand.vmem [shape: bf16[512,256], index: 0, kind: input, shape index: {}]
  %s1 = inlined_call_operand.vmem [shape: bf16[2,128,128], index: 1, kind: input, shape index: {}]
  %s2 = inlined_call_operand.vmem [shape: f32[2,1,128], index: 2, kind: input, shape index: {}]
  %s3 = inlined_call_operand.vmem [shape: bf16[512,256], index: 3, kind: output, shape index: {}]
  %s4 = sld [smem:[#allocation0]]
  $region123: #{srm_fl_forward.9} parent=0
    _
  %s6 = ssub.s32 1, %s4
  %s7 = scalar_select 0, %s6, %s4
  $region1: #{srm_fl_forward.9} parent=0
    #allocation2 [shape = 'u8[262144]{0}', space=vmem, size = 0x40000, scoped, tag = 'input window, operand 0']
    #allocation3 [shape = 'u8[262144]{0}', space=vmem, size = 0x40000, scoped, tag = 'output window, operand 0']
    loop: start=0, step=1, limit=4
    $region2: #{srm_fl_forward.9} parent=1 // loop_pre_header
      _
    $region3: #{srm_fl_forward.9} parent=1 // loop_header
      %s9 = sphi 0, %s13
      %p10 = scmp.ge.s32.totalorder %s9, 4
      %s16 = sphi 0, %s35
      %s17 = sphi 0, %s31
      %s18 = sphi 0, %s27
      %s19 = sphi 0, %s16
      %s20 = sphi 0, %s17
      %s21 = sphi 0, %s18
      %s22 = sphi 0, %s19
      %s23 = sphi 0, %s20
      %s24 = sphi 0, %s21
      %s40 = sphi 0, %s42
      %s43 = sphi 0, %s40
      %s44 = sphi 0, %s43
      %s60 = sphi 0, %s44
      %s68 = sphi 0, %s70
      %s71 = sphi 0, %s68
      %s72 = sphi 0, %s71
      %s88 = sphi 0, %s72
      %s96 = sphi 0, %s98
      %s99 = sphi 0, %s96
      %s100 = sphi 0, %s99
      %s116 = sphi 0, %s100
      %s126 = sphi 0, %s128
      %s129 = sphi 0, %s126
      %s130 = sphi 0, %s129
      %s146 = sphi 0, %s130
    $region4: #{srm_fl_forward.9} parent=1 // loop_header_branch
      %12 = sbr.rel (%p10) target = $region8
    $region5: #{srm_fl_forward.9} parent=1 // loop_body
      %s14 = ssub.s32 %s9, 1
      %s15 = ssub.s32 %s9, 2
      %s25 = sadd.s32 1, %s18
      %p26 = scmp.ge.s32.totalorder %s25, 1
      %s27 = scalar_select %p26, 0, %s25
      %s28 = sadd.s32 1, %s17
      %s29 = scalar_select %p26, %s28, %s17
      %p30 = scmp.ge.s32.totalorder %s29, 2
      %s31 = scalar_select %p30, 0, %s29
      %s32 = sadd.s32 1, %s16
      %s33 = scalar_select %p30, %s32, %s16
      %p34 = scmp.ge.s32.totalorder %s33, 1
      %s35 = scalar_select %p34, 0, %s33
      %s36 = ssub.s32 %s16, %s35
      %s37 = ssub.s32 %s17, %s31
      %s38 = sor.u32 %s36, %s37
      %p39 = scmp.eq.s32.totalorder %s38, 0
      %s41 = sadd.s32 %s40, 1
      %s42 = scalar_select %p39, %s40, %s41
      %p45 = pneg %p39
      %p46 = scmp.eq.s32.totalorder %s9, 1
      %p47 = por %p45, %p46
      %p48 = scmp.ne.s32.totalorder %s40, %s43
      %p49 = scmp.eq.s32.totalorder %s9, 0
      %p50 = por %p48, %p49
      %p51 = scmp.ne.s32.totalorder %s40, %s43
      %p52 = scmp.eq.s32.totalorder %s14, 1
      %p53 = por %p51, %p52
      %p54 = scmp.ne.s32.totalorder %s43, %s44
      %p55 = scmp.eq.s32.totalorder %s14, 0
      %p56 = por %p54, %p55
      %p57 = scmp.ne.s32.totalorder %s43, %s44
      %p58 = scmp.eq.s32.totalorder %s15, 1
      %p59 = por %p57, %p58
      %p61 = scmp.ne.s32.totalorder %s44, %s60
      %p62 = scmp.eq.s32.totalorder %s15, 0
      %p63 = por %p61, %p62
      %s64 = ssub.s32 %s17, %s31
      %s65 = ssub.s32 %s18, %s27
      %s66 = sor.u32 %s64, %s65
      %p67 = scmp.eq.s32.totalorder %s66, 0
      %s69 = sadd.s32 %s68, 1
      %s70 = scalar_select %p67, %s68, %s69
      %p73 = pneg %p67
      %p74 = scmp.eq.s32.totalorder %s9, 1
      %p75 = por %p73, %p74
      %p76 = scmp.ne.s32.totalorder %s68, %s71
      %p77 = scmp.eq.s32.totalorder %s9, 0
      %p78 = por %p76, %p77
      %p79 = scmp.ne.s32.totalorder %s68, %s71
      %p80 = scmp.eq.s32.totalorder %s14, 1
      %p81 = por %p79, %p80
      %p82 = scmp.ne.s32.totalorder %s71, %s72
      %p83 = scmp.eq.s32.totalorder %s14, 0
      %p84 = por %p82, %p83
      %p85 = scmp.ne.s32.totalorder %s71, %s72
      %p86 = scmp.eq.s32.totalorder %s15, 1
      %p87 = por %p85, %p86
      %p89 = scmp.ne.s32.totalorder %s72, %s88
      %p90 = scmp.eq.s32.totalorder %s15, 0
      %p91 = por %p89, %p90
      %s92 = ssub.s32 %s17, %s31
      %s93 = ssub.s32 %s18, %s27
      %s94 = sor.u32 %s92, %s93
      %p95 = scmp.eq.s32.totalorder %s94, 0
      %s97 = sadd.s32 %s96, 1
      %s98 = scalar_select %p95, %s96, %s97
      %p101 = pneg %p95
      %p102 = scmp.eq.s32.totalorder %s9, 1
      %p103 = por %p101, %p102
      %p104 = scmp.ne.s32.totalorder %s96, %s99
      %p105 = scmp.eq.s32.totalorder %s9, 0
      %p106 = por %p104, %p105
      %p107 = scmp.ne.s32.totalorder %s96, %s99
      %p108 = scmp.eq.s32.totalorder %s14, 1
      %p109 = por %p107, %p108
      %p110 = scmp.ne.s32.totalorder %s99, %s100
      %p111 = scmp.eq.s32.totalorder %s14, 0
      %p112 = por %p110, %p111
      %p113 = scmp.ne.s32.totalorder %s99, %s100
      %p114 = scmp.eq.s32.totalorder %s15, 1
      %p115 = por %p113, %p114
      %p117 = scmp.ne.s32.totalorder %s100, %s116
      %p118 = scmp.eq.s32.totalorder %s15, 0
      %p119 = por %p117, %p118
      %s120 = sadd.s32 %s17, %s18
      %s121 = sadd.s32 %s31, %s27
      %s122 = ssub.s32 %s16, %s35
      %s123 = ssub.s32 %s120, %s121
      %s124 = sor.u32 %s122, %s123
      %p125 = scmp.eq.s32.totalorder %s124, 0
      %s127 = sadd.s32 %s126, 1
      %s128 = scalar_select %p125, %s126, %s127
      %p131 = pneg %p125
      %p132 = scmp.eq.s32.totalorder %s9, 1
      %p133 = por %p131, %p132
      %p134 = scmp.ne.s32.totalorder %s126, %s129
      %p135 = scmp.eq.s32.totalorder %s9, 0
      %p136 = por %p134, %p135
      %p137 = scmp.ne.s32.totalorder %s126, %s129
      %p138 = scmp.eq.s32.totalorder %s14, 1
      %p139 = por %p137, %p138
      %p140 = scmp.ne.s32.totalorder %s129, %s130
      %p141 = scmp.eq.s32.totalorder %s14, 0
      %p142 = por %p140, %p141
      %p143 = scmp.ne.s32.totalorder %s129, %s130
      %p144 = scmp.eq.s32.totalorder %s15, 1
      %p145 = por %p143, %p144
      %p147 = scmp.ne.s32.totalorder %s130, %s146
      %p148 = scmp.eq.s32.totalorder %s15, 0
      %p149 = por %p147, %p148
      %p150 = scmp.le.s32.totalorder 1, %s9
      %p151 = scmp.lt.s32.totalorder %s9, 3
      %p152 = pnand %p150, %p151
      %p153 = pneg %p152
      // Predicated region
      $region9: #{srm_fl_forward.9} parent=5 // pred_check
        _
      $region10: #{srm_fl_forward.9} parent=5 // pred_check_branch
        %155 = sbr.rel (%p152) target = $region12
      $region11: #{srm_fl_forward.9} parent=5 // pred_region
        %s156 = ssub.s32 %s9, 1
      $region12: #{srm_fl_forward.9} parent=5 // pred_fallthru
        _
      %p157 = scmp.lt.s32.totalorder %s9, 2
      // Predicated region
      $region13: #{srm_fl_forward.9} parent=5 // pred_check
        %p158 = pneg %p157
      $region14: #{srm_fl_forward.9} parent=5 // pred_check_branch
        %160 = sbr.rel (%p158) target = $region16
      $region15: #{srm_fl_forward.9} parent=5 // pred_region
        // Predicated region
        $region17: #{srm_fl_forward.9} parent=15 // pred_check
          %p161 = pneg %p50
        $region18: #{srm_fl_forward.9} parent=15 // pred_check_branch
          %163 = sbr.rel (%p161) target = $region20
        $region19: #{srm_fl_forward.9} parent=15 // pred_region
          %s164 = sand.u32 %s40, 1
          %s165 = sand.u32 %s40, 1
          %s166 = smul.addr %s165, 256
          %s167 = scalar_lea.vmem [#allocation2], %s166
          %s168 = smul.u32 64, %s16
          %s169 = smul.addr %s168, 2
          %s170 = sadd.s32 %s17, %s169
          %s171 = smul.addr %s170, 4
          %s172 = scalar_lea.vmem %s0, %s171
          // Predicated region
          $region21: #{srm_fl_forward.9} parent=19 // pred_check
            _
          $region22: #{srm_fl_forward.9} parent=19 // pred_check_branch
            %174 = sbr.rel (0) target = $region24
          $region23: #{srm_fl_forward.9} parent=19 // pred_region
            // Predicated region
            $region25: #{srm_fl_forward.9} parent=23 // pred_check
              _
            $region26: #{srm_fl_forward.9} parent=23 // pred_check_branch
              %176 = sbr.rel target = $region28
            $region27: #{srm_fl_forward.9} parent=23 // pred_region
              // Predicated region
              $region40: #{srm_fl_forward.9} parent=27 // pred_check
                _
              $region41: #{srm_fl_forward.9} parent=27 // pred_check_branch
                %317 = sbr.rel (0) target = $region43
              $region42: #{srm_fl_forward.9} parent=27 // pred_region
                loop: start=0, step=1, limit=1
                $region44: #{srm_fl_forward.9} parent=42 // loop_pre_header
                  _
                $region45: #{srm_fl_forward.9} parent=42 // loop_header
                  %s319 = sphi 0, %s323
                  %p320 = scmp.ge.s32.totalorder %s319, 1
                  %s324 = sphi %s172, %s172
                  %s325 = sphi %s167, %s167
                $region46: #{srm_fl_forward.9} parent=42 // loop_header_branch
                  %322 = sbr.rel (%p320) target = $region50
                $region47: #{srm_fl_forward.9} parent=42 // loop_body
                  _
                $region48: #{srm_fl_forward.9} parent=42 // loop_footer
                  %s323 = sadd.s32 1, %s319
                $region49: #{srm_fl_forward.9} parent=42 // loop_footer_branch
                  %318 = sbr.rel target = $region45
                $region50: #{srm_fl_forward.9} parent=42 // loop_exit
                  _
                loop: start=0, step=1, limit=1
                $region51: #{srm_fl_forward.9} parent=42 // loop_pre_header
                  _
                $region52: #{srm_fl_forward.9} parent=42 // loop_header
                  %s328 = sphi 0, %s332
                  %p329 = scmp.ge.s32.totalorder %s328, 1
                  %s333 = sphi %s172, %s172
                  %s334 = sphi %s167, %s167
                $region53: #{srm_fl_forward.9} parent=42 // loop_header_branch
                  %331 = sbr.rel (%p329) target = $region57
                $region54: #{srm_fl_forward.9} parent=42 // loop_body
                  %v335 = vld [vmem:[%s333] sm:$0xf]
                  %336 = vst [vmem:[%s334] sm:$0xf] %v335
                  %v337 = vld [vmem:[%s333 + $0x8] sm:$0xf]
                  %338 = vst [vmem:[%s334 + $0x4] sm:$0xf] %v337
                  %v339 = vld [vmem:[%s333 + $0x10] sm:$0xf]
                  %340 = vst [vmem:[%s334 + $0x8] sm:$0xf] %v339
                  %v341 = vld [vmem:[%s333 + $0x18] sm:$0xf]
                  %342 = vst [vmem:[%s334 + $0xc] sm:$0xf] %v341
                  %v343 = vld [vmem:[%s333 + $0x20] sm:$0xf]
                  %344 = vst [vmem:[%s334 + $0x10] sm:$0xf] %v343
                  %v345 = vld [vmem:[%s333 + $0x28] sm:$0xf]
                  %346 = vst [vmem:[%s334 + $0x14] sm:$0xf] %v345
                  %v347 = vld [vmem:[%s333 + $0x30] sm:$0xf]
                  %348 = vst [vmem:[%s334 + $0x18] sm:$0xf] %v347
                  %v349 = vld [vmem:[%s333 + $0x38] sm:$0xf]
                  %350 = vst [vmem:[%s334 + $0x1c] sm:$0xf] %v349
                  %v351 = vld [vmem:[%s333 + $0x40] sm:$0xf]
                  %352 = vst [vmem:[%s334 + $0x20] sm:$0xf] %v351
                  %v353 = vld [vmem:[%s333 + $0x48] sm:$0xf]
                  %354 = vst [vmem:[%s334 + $0x24] sm:$0xf] %v353
                  %v355 = vld [vmem:[%s333 + $0x50] sm:$0xf]
                  %356 = vst [vmem:[%s334 + $0x28] sm:$0xf] %v355
                  %v357 = vld [vmem:[%s333 + $0x58] sm:$0xf]
                  %358 = vst [vmem:[%s334 + $0x2c] sm:$0xf] %v357
                  %v359 = vld [vmem:[%s333 + $0x60] sm:$0xf]
                  %360 = vst [vmem:[%s334 + $0x30] sm:$0xf] %v359
                  %v361 = vld [vmem:[%s333 + $0x68] sm:$0xf]
                  %362 = vst [vmem:[%s334 + $0x34] sm:$0xf] %v361
                  %v363 = vld [vmem:[%s333 + $0x70] sm:$0xf]
                  %364 = vst [vmem:[%s334 + $0x38] sm:$0xf] %v363
                  %v365 = vld [vmem:[%s333 + $0x78] sm:$0xf]
                  %366 = vst [vmem:[%s334 + $0x3c] sm:$0xf] %v365
                  %v367 = vld [vmem:[%s333 + $0x80] sm:$0xf]
                  %368 = vst [vmem:[%s334 + $0x40] sm:$0xf] %v367
                  %v369 = vld [vmem:[%s333 + $0x88] sm:$0xf]
                  %370 = vst [vmem:[%s334 + $0x44] sm:$0xf] %v369
                  %v371 = vld [vmem:[%s333 + $0x90] sm:$0xf]
                  %372 = vst [vmem:[%s334 + $0x48] sm:$0xf] %v371
                  %v373 = vld [vmem:[%s333 + $0x98] sm:$0xf]
                  %374 = vst [vmem:[%s334 + $0x4c] sm:$0xf] %v373
                  %v375 = vld [vmem:[%s333 + $0xa0] sm:$0xf]
                  %376 = vst [vmem:[%s334 + $0x50] sm:$0xf] %v375
                  %v377 = vld [vmem:[%s333 + $0xa8] sm:$0xf]
                  %378 = vst [vmem:[%s334 + $0x54] sm:$0xf] %v377
                  %v379 = vld [vmem:[%s333 + $0xb0] sm:$0xf]
                  %380 = vst [vmem:[%s334 + $0x58] sm:$0xf] %v379
                  %v381 = vld [vmem:[%s333 + $0xb8] sm:$0xf]
                  %382 = vst [vmem:[%s334 + $0x5c] sm:$0xf] %v381
                  %v383 = vld [vmem:[%s333 + $0xc0] sm:$0xf]
                  %384 = vst [vmem:[%s334 + $0x60] sm:$0xf] %v383
                  %v385 = vld [vmem:[%s333 + $0xc8] sm:$0xf]
                  %386 = vst [vmem:[%s334 + $0x64] sm:$0xf] %v385
                  %v387 = vld [vmem:[%s333 + $0xd0] sm:$0xf]
                  %388 = vst [vmem:[%s334 + $0x68] sm:$0xf] %v387
                  %v389 = vld [vmem:[%s333 + $0xd8] sm:$0xf]
                  %390 = vst [vmem:[%s334 + $0x6c] sm:$0xf] %v389
                  %v391 = vld [vmem:[%s333 + $0xe0] sm:$0xf]
                  %392 = vst [vmem:[%s334 + $0x70] sm:$0xf] %v391
                  %v393 = vld [vmem:[%s333 + $0xe8] sm:$0xf]
                  %394 = vst [vmem:[%s334 + $0x74] sm:$0xf] %v393
                  %v395 = vld [vmem:[%s333 + $0xf0] sm:$0xf]
                  %396 = vst [vmem:[%s334 + $0x78] sm:$0xf] %v395
                  %v397 = vld [vmem:[%s333 + $0xf8] sm:$0xf]
                  %398 = vst [vmem:[%s334 + $0x7c] sm:$0xf] %v397
                  %v399 = vld [vmem:[%s333 + $0x100] sm:$0xf]
                  %400 = vst [vmem:[%s334 + $0x80] sm:$0xf] %v399
                  %v401 = vld [vmem:[%s333 + $0x108] sm:$0xf]
                  %402 = vst [vmem:[%s334 + $0x84] sm:$0xf] %v401
                  %v403 = vld [vmem:[%s333 + $0x110] sm:$0xf]
                  %404 = vst [vmem:[%s334 + $0x88] sm:$0xf] %v403
                  %v405 = vld [vmem:[%s333 + $0x118] sm:$0xf]
                  %406 = vst [vmem:[%s334 + $0x8c] sm:$0xf] %v405
                  %v407 = vld [vmem:[%s333 + $0x120] sm:$0xf]
                  %408 = vst [vmem:[%s334 + $0x90] sm:$0xf] %v407
                  %v409 = vld [vmem:[%s333 + $0x128] sm:$0xf]
                  %410 = vst [vmem:[%s334 + $0x94] sm:$0xf] %v409
                  %v411 = vld [vmem:[%s333 + $0x130] sm:$0xf]
                  %412 = vst [vmem:[%s334 + $0x98] sm:$0xf] %v411
                  %v413 = vld [vmem:[%s333 + $0x138] sm:$0xf]
                  %414 = vst [vmem:[%s334 + $0x9c] sm:$0xf] %v413
                  %v415 = vld [vmem:[%s333 + $0x140] sm:$0xf]
                  %416 = vst [vmem:[%s334 + $0xa0] sm:$0xf] %v415
                  %v417 = vld [vmem:[%s333 + $0x148] sm:$0xf]
                  %418 = vst [vmem:[%s334 + $0xa4] sm:$0xf] %v417
                  %v419 = vld [vmem:[%s333 + $0x150] sm:$0xf]
                  %420 = vst [vmem:[%s334 + $0xa8] sm:$0xf] %v419
                  %v421 = vld [vmem:[%s333 + $0x158] sm:$0xf]
                  %422 = vst [vmem:[%s334 + $0xac] sm:$0xf] %v421
                  %v423 = vld [vmem:[%s333 + $0x160] sm:$0xf]
                  %424 = vst [vmem:[%s334 + $0xb0] sm:$0xf] %v423
                  %v425 = vld [vmem:[%s333 + $0x168] sm:$0xf]
                  %426 = vst [vmem:[%s334 + $0xb4] sm:$0xf] %v425
                  %v427 = vld [vmem:[%s333 + $0x170] sm:$0xf]
                  %428 = vst [vmem:[%s334 + $0xb8] sm:$0xf] %v427
                  %v429 = vld [vmem:[%s333 + $0x178] sm:$0xf]
                  %430 = vst [vmem:[%s334 + $0xbc] sm:$0xf] %v429
                  %v431 = vld [vmem:[%s333 + $0x180] sm:$0xf]
                  %432 = vst [vmem:[%s334 + $0xc0] sm:$0xf] %v431
                  %v433 = vld [vmem:[%s333 + $0x188] sm:$0xf]
                  %434 = vst [vmem:[%s334 + $0xc4] sm:$0xf] %v433
                  %v435 = vld [vmem:[%s333 + $0x190] sm:$0xf]
                  %436 = vst [vmem:[%s334 + $0xc8] sm:$0xf] %v435
                  %v437 = vld [vmem:[%s333 + $0x198] sm:$0xf]
                  %438 = vst [vmem:[%s334 + $0xcc] sm:$0xf] %v437
                  %v439 = vld [vmem:[%s333 + $0x1a0] sm:$0xf]
                  %440 = vst [vmem:[%s334 + $0xd0] sm:$0xf] %v439
                  %v441 = vld [vmem:[%s333 + $0x1a8] sm:$0xf]
                  %442 = vst [vmem:[%s334 + $0xd4] sm:$0xf] %v441
                  %v443 = vld [vmem:[%s333 + $0x1b0] sm:$0xf]
                  %444 = vst [vmem:[%s334 + $0xd8] sm:$0xf] %v443
                  %v445 = vld [vmem:[%s333 + $0x1b8] sm:$0xf]
                  %446 = vst [vmem:[%s334 + $0xdc] sm:$0xf] %v445
                  %v447 = vld [vmem:[%s333 + $0x1c0] sm:$0xf]
                  %448 = vst [vmem:[%s334 + $0xe0] sm:$0xf] %v447
                  %v449 = vld [vmem:[%s333 + $0x1c8] sm:$0xf]
                  %450 = vst [vmem:[%s334 + $0xe4] sm:$0xf] %v449
                  %v451 = vld [vmem:[%s333 + $0x1d0] sm:$0xf]
                  %452 = vst [vmem:[%s334 + $0xe8] sm:$0xf] %v451
                  %v453 = vld [vmem:[%s333 + $0x1d8] sm:$0xf]
                  %454 = vst [vmem:[%s334 + $0xec] sm:$0xf] %v453
                  %v455 = vld [vmem:[%s333 + $0x1e0] sm:$0xf]
                  %456 = vst [vmem:[%s334 + $0xf0] sm:$0xf] %v455
                  %v457 = vld [vmem:[%s333 + $0x1e8] sm:$0xf]
                  %458 = vst [vmem:[%s334 + $0xf4] sm:$0xf] %v457
                  %v459 = vld [vmem:[%s333 + $0x1f0] sm:$0xf]
                  %460 = vst [vmem:[%s334 + $0xf8] sm:$0xf] %v459
                  %v461 = vld [vmem:[%s333 + $0x1f8] sm:$0xf]
                  %462 = vst [vmem:[%s334 + $0xfc] sm:$0xf] %v461
                $region55: #{srm_fl_forward.9} parent=42 // loop_footer
                  %s332 = sadd.s32 1, %s328
                $region56: #{srm_fl_forward.9} parent=42 // loop_footer_branch
                  %327 = sbr.rel target = $region52
                $region57: #{srm_fl_forward.9} parent=42 // loop_exit
                  _
              $region43: #{srm_fl_forward.9} parent=27 // pred_fallthru
                _
            $region28: #{srm_fl_forward.9} parent=23 // pred_fallthru
              _
            // Predicated region
            $region29: #{srm_fl_forward.9} parent=23 // pred_check
              _
            $region30: #{srm_fl_forward.9} parent=23 // pred_check_branch
              %178 = sbr.rel (0) target = $region32
            $region31: #{srm_fl_forward.9} parent=23 // pred_region
              loop: start=0, step=1, limit=1
              $region33: #{srm_fl_forward.9} parent=31 // loop_pre_header
                _
              $region34: #{srm_fl_forward.9} parent=31 // loop_header
                %s181 = sphi 0, %s185
                %p182 = scmp.ge.s32.totalorder %s181, 1
                %s186 = sphi %s172, %s172
                %s187 = sphi %s167, %s167
              $region35: #{srm_fl_forward.9} parent=31 // loop_header_branch
                %184 = sbr.rel (%p182) target = $region39
              $region36: #{srm_fl_forward.9} parent=31 // loop_body
                %v188 = vld [vmem:[%s186] sm:$0xf]
                %189 = vst [vmem:[%s187] sm:$0xf] %v188
                %v190 = vld [vmem:[%s186 + $0x8] sm:$0xf]
                %191 = vst [vmem:[%s187 + $0x4] sm:$0xf] %v190
                %v192 = vld [vmem:[%s186 + $0x10] sm:$0xf]
                %193 = vst [vmem:[%s187 + $0x8] sm:$0xf] %v192
                %v194 = vld [vmem:[%s186 + $0x18] sm:$0xf]
                %195 = vst [vmem:[%s187 + $0xc] sm:$0xf] %v194
                %v196 = vld [vmem:[%s186 + $0x20] sm:$0xf]
                %197 = vst [vmem:[%s187 + $0x10] sm:$0xf] %v196
                %v198 = vld [vmem:[%s186 + $0x28] sm:$0xf]
                %199 = vst [vmem:[%s187 + $0x14] sm:$0xf] %v198
                %v200 = vld [vmem:[%s186 + $0x30] sm:$0xf]
                %201 = vst [vmem:[%s187 + $0x18] sm:$0xf] %v200
                %v202 = vld [vmem:[%s186 + $0x38] sm:$0xf]
                %203 = vst [vmem:[%s187 + $0x1c] sm:$0xf] %v202
                %v204 = vld [vmem:[%s186 + $0x40] sm:$0xf]
                %205 = vst [vmem:[%s187 + $0x20] sm:$0xf] %v204
                %v206 = vld [vmem:[%s186 + $0x48] sm:$0xf]
                %207 = vst [vmem:[%s187 + $0x24] sm:$0xf] %v206
                %v208 = vld [vmem:[%s186 + $0x50] sm:$0xf]
                %209 = vst [vmem:[%s187 + $0x28] sm:$0xf] %v208
                %v210 = vld [vmem:[%s186 + $0x58] sm:$0xf]
                %211 = vst [vmem:[%s187 + $0x2c] sm:$0xf] %v210
                %v212 = vld [vmem:[%s186 + $0x60] sm:$0xf]
                %213 = vst [vmem:[%s187 + $0x30] sm:$0xf] %v212
                %v214 = vld [vmem:[%s186 + $0x68] sm:$0xf]
                %215 = vst [vmem:[%s187 + $0x34] sm:$0xf] %v214
                %v216 = vld [vmem:[%s186 + $0x70] sm:$0xf]
                %217 = vst [vmem:[%s187 + $0x38] sm:$0xf] %v216
                %v218 = vld [vmem:[%s186 + $0x78] sm:$0xf]
                %219 = vst [vmem:[%s187 + $0x3c] sm:$0xf] %v218
                %v220 = vld [vmem:[%s186 + $0x80] sm:$0xf]
                %221 = vst [vmem:[%s187 + $0x40] sm:$0xf] %v220
                %v222 = vld [vmem:[%s186 + $0x88] sm:$0xf]
                %223 = vst [vmem:[%s187 + $0x44] sm:$0xf] %v222
                %v224 = vld [vmem:[%s186 + $0x90] sm:$0xf]
                %225 = vst [vmem:[%s187 + $0x48] sm:$0xf] %v224
                %v226 = vld [vmem:[%s186 + $0x98] sm:$0xf]
                %227 = vst [vmem:[%s187 + $0x4c] sm:$0xf] %v226
                %v228 = vld [vmem:[%s186 + $0xa0] sm:$0xf]
                %229 = vst [vmem:[%s187 + $0x50] sm:$0xf] %v228
                %v230 = vld [vmem:[%s186 + $0xa8] sm:$0xf]
                %231 = vst [vmem:[%s187 + $0x54] sm:$0xf] %v230
                %v232 = vld [vmem:[%s186 + $0xb0] sm:$0xf]
                %233 = vst [vmem:[%s187 + $0x58] sm:$0xf] %v232
                %v234 = vld [vmem:[%s186 + $0xb8] sm:$0xf]
                %235 = vst [vmem:[%s187 + $0x5c] sm:$0xf] %v234
                %v236 = vld [vmem:[%s186 + $0xc0] sm:$0xf]
                %237 = vst [vmem:[%s187 + $0x60] sm:$0xf] %v236
                %v238 = vld [vmem:[%s186 + $0xc8] sm:$0xf]
                %239 = vst [vmem:[%s187 + $0x64] sm:$0xf] %v238
                %v240 = vld [vmem:[%s186 + $0xd0] sm:$0xf]
                %241 = vst [vmem:[%s187 + $0x68] sm:$0xf] %v240
                %v242 = vld [vmem:[%s186 + $0xd8] sm:$0xf]
                %243 = vst [vmem:[%s187 + $0x6c] sm:$0xf] %v242
                %v244 = vld [vmem:[%s186 + $0xe0] sm:$0xf]
                %245 = vst [vmem:[%s187 + $0x70] sm:$0xf] %v244
                %v246 = vld [vmem:[%s186 + $0xe8] sm:$0xf]
                %247 = vst [vmem:[%s187 + $0x74] sm:$0xf] %v246
                %v248 = vld [vmem:[%s186 + $0xf0] sm:$0xf]
                %249 = vst [vmem:[%s187 + $0x78] sm:$0xf] %v248
                %v250 = vld [vmem:[%s186 + $0xf8] sm:$0xf]
                %251 = vst [vmem:[%s187 + $0x7c] sm:$0xf] %v250
                %v252 = vld [vmem:[%s186 + $0x100] sm:$0xf]
                %253 = vst [vmem:[%s187 + $0x80] sm:$0xf] %v252
                %v254 = vld [vmem:[%s186 + $0x108] sm:$0xf]
                %255 = vst [vmem:[%s187 + $0x84] sm:$0xf] %v254
                %v256 = vld [vmem:[%s186 + $0x110] sm:$0xf]
                %257 = vst [vmem:[%s187 + $0x88] sm:$0xf] %v256
                %v258 = vld [vmem:[%s186 + $0x118] sm:$0xf]
                %259 = vst [vmem:[%s187 + $0x8c] sm:$0xf] %v258
                %v260 = vld [vmem:[%s186 + $0x120] sm:$0xf]
                %261 = vst [vmem:[%s187 + $0x90] sm:$0xf] %v260
                %v262 = vld [vmem:[%s186 + $0x128] sm:$0xf]
                %263 = vst [vmem:[%s187 + $0x94] sm:$0xf] %v262
                %v264 = vld [vmem:[%s186 + $0x130] sm:$0xf]
                %265 = vst [vmem:[%s187 + $0x98] sm:$0xf] %v264
                %v266 = vld [vmem:[%s186 + $0x138] sm:$0xf]
                %267 = vst [vmem:[%s187 + $0x9c] sm:$0xf] %v266
                %v268 = vld [vmem:[%s186 + $0x140] sm:$0xf]
                %269 = vst [vmem:[%s187 + $0xa0] sm:$0xf] %v268
                %v270 = vld [vmem:[%s186 + $0x148] sm:$0xf]
                %271 = vst [vmem:[%s187 + $0xa4] sm:$0xf] %v270
                %v272 = vld [vmem:[%s186 + $0x150] sm:$0xf]
                %273 = vst [vmem:[%s187 + $0xa8] sm:$0xf] %v272
                %v274 = vld [vmem:[%s186 + $0x158] sm:$0xf]
                %275 = vst [vmem:[%s187 + $0xac] sm:$0xf] %v274
                %v276 = vld [vmem:[%s186 + $0x160] sm:$0xf]
                %277 = vst [vmem:[%s187 + $0xb0] sm:$0xf] %v276
                %v278 = vld [vmem:[%s186 + $0x168] sm:$0xf]
                %279 = vst [vmem:[%s187 + $0xb4] sm:$0xf] %v278
                %v280 = vld [vmem:[%s186 + $0x170] sm:$0xf]
                %281 = vst [vmem:[%s187 + $0xb8] sm:$0xf] %v280
                %v282 = vld [vmem:[%s186 + $0x178] sm:$0xf]
                %283 = vst [vmem:[%s187 + $0xbc] sm:$0xf] %v282
                %v284 = vld [vmem:[%s186 + $0x180] sm:$0xf]
                %285 = vst [vmem:[%s187 + $0xc0] sm:$0xf] %v284
                %v286 = vld [vmem:[%s186 + $0x188] sm:$0xf]
                %287 = vst [vmem:[%s187 + $0xc4] sm:$0xf] %v286
                %v288 = vld [vmem:[%s186 + $0x190] sm:$0xf]
                %289 = vst [vmem:[%s187 + $0xc8] sm:$0xf] %v288
                %v290 = vld [vmem:[%s186 + $0x198] sm:$0xf]
                %291 = vst [vmem:[%s187 + $0xcc] sm:$0xf] %v290
                %v292 = vld [vmem:[%s186 + $0x1a0] sm:$0xf]
                %293 = vst [vmem:[%s187 + $0xd0] sm:$0xf] %v292
                %v294 = vld [vmem:[%s186 + $0x1a8] sm:$0xf]
                %295 = vst [vmem:[%s187 + $0xd4] sm:$0xf] %v294
                %v296 = vld [vmem:[%s186 + $0x1b0] sm:$0xf]
                %297 = vst [vmem:[%s187 + $0xd8] sm:$0xf] %v296
                %v298 = vld [vmem:[%s186 + $0x1b8] sm:$0xf]
                %299 = vst [vmem:[%s187 + $0xdc] sm:$0xf] %v298
                %v300 = vld [vmem:[%s186 + $0x1c0] sm:$0xf]
                %301 = vst [vmem:[%s187 + $0xe0] sm:$0xf] %v300
                %v302 = vld [vmem:[%s186 + $0x1c8] sm:$0xf]
                %303 = vst [vmem:[%s187 + $0xe4] sm:$0xf] %v302
                %v304 = vld [vmem:[%s186 + $0x1d0] sm:$0xf]
                %305 = vst [vmem:[%s187 + $0xe8] sm:$0xf] %v304
                %v306 = vld [vmem:[%s186 + $0x1d8] sm:$0xf]
                %307 = vst [vmem:[%s187 + $0xec] sm:$0xf] %v306
                %v308 = vld [vmem:[%s186 + $0x1e0] sm:$0xf]
                %309 = vst [vmem:[%s187 + $0xf0] sm:$0xf] %v308
                %v310 = vld [vmem:[%s186 + $0x1e8] sm:$0xf]
                %311 = vst [vmem:[%s187 + $0xf4] sm:$0xf] %v310
                %v312 = vld [vmem:[%s186 + $0x1f0] sm:$0xf]
                %313 = vst [vmem:[%s187 + $0xf8] sm:$0xf] %v312
                %v314 = vld [vmem:[%s186 + $0x1f8] sm:$0xf]
                %315 = vst [vmem:[%s187 + $0xfc] sm:$0xf] %v314
              $region37: #{srm_fl_forward.9} parent=31 // loop_footer
                %s185 = sadd.s32 1, %s181
              $region38: #{srm_fl_forward.9} parent=31 // loop_footer_branch
                %180 = sbr.rel target = $region34
              $region39: #{srm_fl_forward.9} parent=31 // loop_exit
                _
            $region32: #{srm_fl_forward.9} parent=23 // pred_fallthru
              _
          $region24: #{srm_fl_forward.9} parent=19 // pred_fallthru
            _
          %463 = vnop
        $region20: #{srm_fl_forward.9} parent=15 // pred_fallthru
          _
        // Predicated region
        $region58: #{srm_fl_forward.9} parent=15 // pred_check
          %p464 = pneg %p78
        $region59: #{srm_fl_forward.9} parent=15 // pred_check_branch
          %466 = sbr.rel (%p464) target = $region61
        $region60: #{srm_fl_forward.9} parent=15 // pred_region
          %p467 = scmp.lt.s32.totalorder %s17, 1
          %s468 = scalar_select %p467, %s17, 1
          %p469 = scmp.lt.s32.totalorder %s18, 0
          %s470 = scalar_select %p469, %s18, 0
          %s471 = smul.addr %s468, 16
          %s472 = sadd.s32 %s470, %s471
          %s473 = smul.addr %s472, 4
          %s474 = scalar_lea.vmem %s1, %s473
        $region61: #{srm_fl_forward.9} parent=15 // pred_fallthru
          _
        // Predicated region
        $region62: #{srm_fl_forward.9} parent=15 // pred_check
          %p475 = pneg %p106
        $region63: #{srm_fl_forward.9} parent=15 // pred_check_branch
          %477 = sbr.rel (%p475) target = $region65
        $region64: #{srm_fl_forward.9} parent=15 // pred_region
          %p478 = scmp.lt.s32.totalorder %s17, 1
          %s479 = scalar_select %p478, %s17, 1
          %p480 = scmp.lt.s32.totalorder %s18, 0
          %s481 = scalar_select %p480, %s18, 0
          %s482 = sadd.s32 %s481, %s479
          %s483 = scalar_lea.vmem %s2, %s482
        $region65: #{srm_fl_forward.9} parent=15 // pred_fallthru
          _
      $region16: #{srm_fl_forward.9} parent=5 // pred_fallthru
        _
      %p484 = scmp.le.s32.totalorder 1, %s9
      %p485 = scmp.lt.s32.totalorder %s9, 3
      %p486 = pnand %p484, %p485
      %p487 = pneg %p486
      // Predicated region
      $region66: #{srm_fl_forward.9} parent=5 // pred_check
        _
      $region67: #{srm_fl_forward.9} parent=5 // pred_check_branch
        %489 = sbr.rel (%p486) target = $region69
      $region68: #{srm_fl_forward.9} parent=5 // pred_region
        %s490 = ssub.s32 %s9, 1
        %s491 = sand.u32 %s43, 1
        %s492 = sand.u32 %s43, 1
        %s493 = smul.addr %s492, 256
        %s494 = scalar_lea.vmem [#allocation2], %s493
        // Predicated region
        $region70: #{srm_fl_forward.9} parent=68 // pred_check
          %p495 = pneg %p56
        $region71: #{srm_fl_forward.9} parent=68 // pred_check_branch
          %497 = sbr.rel (%p495) target = $region73
        $region72: #{srm_fl_forward.9} parent=68 // pred_region
          _
        $region73: #{srm_fl_forward.9} parent=68 // pred_fallthru
          _
        %s498 = sand.u32 %s43, 1
        %s499 = sand.u32 %s43, 1
        %s500 = smul.addr %s499, 256
        %s501 = scalar_lea.vmem [#allocation2], %s500
        %p502 = pneg %p56
        %p503 = pneg %p53
        %p504 = scmp.lt.s32.totalorder %s20, 1
        %s505 = scalar_select %p504, %s20, 1
        %p506 = scmp.lt.s32.totalorder %s21, 0
        %s507 = scalar_select %p506, %s21, 0
        %s508 = smul.addr %s505, 16
        %s509 = sadd.s32 %s507, %s508
        %s510 = smul.addr %s509, 4
        %s511 = scalar_lea.vmem %s1, %s510
        %p512 = pneg %p84
        %p513 = pneg %p81
        %p514 = scmp.lt.s32.totalorder %s20, 1
        %s515 = scalar_select %p514, %s20, 1
        %p516 = scmp.lt.s32.totalorder %s21, 0
        %s517 = scalar_select %p516, %s21, 0
        %s518 = sadd.s32 %s517, %s515
        %s519 = scalar_lea.vmem %s2, %s518
        %p520 = pneg %p112
        %p521 = pneg %p109
        %p522 = pneg %p142
        %p523 = pneg %p139
        %s524 = sand.u32 %s129, 1
        %s525 = sand.u32 %s129, 1
        %s526 = smul.addr %s525, 256
        %s527 = scalar_lea.vmem [#allocation3], %s526
        %s528 = smul.u32 64, %s19
        %p529 = scmp.lt.s32.totalorder %s20, 1
        %s530 = scalar_select %p529, %s20, 1
        %p531 = scmp.lt.s32.totalorder %s21, 0
        %s532 = scalar_select %p531, %s21, 0
        %s533 = smul.addr %s530, 16
        %s534 = sadd.s32 %s532, %s533
        %s535 = smul.addr %s534, 4
        %s536 = scalar_lea.vmem %s1, %s535
        %p537 = scmp.lt.s32.totalorder %s20, 1
        %s538 = scalar_select %p537, %s20, 1
        %p539 = scmp.lt.s32.totalorder %s21, 0
        %s540 = scalar_select %p539, %s21, 0
        %s541 = sadd.s32 %s540, %s538
        %s542 = scalar_lea.vmem %s2, %s541
        %s543 = sadd.s32 %s20, %s21
        %s544 = smul.u32 64, %s19
        %v546 = vld [vmem:[%s494] sm:$0xf]
        %v547 = vld [vmem:[%s494 + $0x4] sm:$0xf]
        %v548 = vld [vmem:[%s494 + $0x8] sm:$0xf]
        %v549 = vld [vmem:[%s494 + $0xc] sm:$0xf]
        %v550 = vld [vmem:[%s494 + $0x10] sm:$0xf]
        %v551 = vld [vmem:[%s494 + $0x14] sm:$0xf]
        %v552 = vld [vmem:[%s494 + $0x18] sm:$0xf]
        %v553 = vld [vmem:[%s494 + $0x1c] sm:$0xf]
        %v554 = vld [vmem:[%s494 + $0x20] sm:$0xf]
        %v555 = vld [vmem:[%s494 + $0x24] sm:$0xf]
        %v556 = vld [vmem:[%s494 + $0x28] sm:$0xf]
        %v557 = vld [vmem:[%s494 + $0x2c] sm:$0xf]
        %v558 = vld [vmem:[%s494 + $0x30] sm:$0xf]
        %v559 = vld [vmem:[%s494 + $0x34] sm:$0xf]
        %v560 = vld [vmem:[%s494 + $0x38] sm:$0xf]
        %v561 = vld [vmem:[%s494 + $0x3c] sm:$0xf]
        %v562 = vld [vmem:[%s494 + $0x40] sm:$0xf]
        %v563 = vld [vmem:[%s494 + $0x44] sm:$0xf]
        %v564 = vld [vmem:[%s494 + $0x48] sm:$0xf]
        %v565 = vld [vmem:[%s494 + $0x4c] sm:$0xf]
        %v566 = vld [vmem:[%s494 + $0x50] sm:$0xf]
        %v567 = vld [vmem:[%s494 + $0x54] sm:$0xf]
        %v568 = vld [vmem:[%s494 + $0x58] sm:$0xf]
        %v569 = vld [vmem:[%s494 + $0x5c] sm:$0xf]
        %v570 = vld [vmem:[%s494 + $0x60] sm:$0xf]
        %v571 = vld [vmem:[%s494 + $0x64] sm:$0xf]
        %v572 = vld [vmem:[%s494 + $0x68] sm:$0xf]
        %v573 = vld [vmem:[%s494 + $0x6c] sm:$0xf]
        %v574 = vld [vmem:[%s494 + $0x70] sm:$0xf]
        %v575 = vld [vmem:[%s494 + $0x74] sm:$0xf]
        %v576 = vld [vmem:[%s494 + $0x78] sm:$0xf]
        %v577 = vld [vmem:[%s494 + $0x7c] sm:$0xf]
        %v578 = vld [vmem:[%s494 + $0x80] sm:$0xf]
        %v579 = vld [vmem:[%s494 + $0x84] sm:$0xf]
        %v580 = vld [vmem:[%s494 + $0x88] sm:$0xf]
        %v581 = vld [vmem:[%s494 + $0x8c] sm:$0xf]
        %v582 = vld [vmem:[%s494 + $0x90] sm:$0xf]
        %v583 = vld [vmem:[%s494 + $0x94] sm:$0xf]
        %v584 = vld [vmem:[%s494 + $0x98] sm:$0xf]
        %v585 = vld [vmem:[%s494 + $0x9c] sm:$0xf]
        %v586 = vld [vmem:[%s494 + $0xa0] sm:$0xf]
        %v587 = vld [vmem:[%s494 + $0xa4] sm:$0xf]
        %v588 = vld [vmem:[%s494 + $0xa8] sm:$0xf]
        %v589 = vld [vmem:[%s494 + $0xac] sm:$0xf]
        %v590 = vld [vmem:[%s494 + $0xb0] sm:$0xf]
        %v591 = vld [vmem:[%s494 + $0xb4] sm:$0xf]
        %v592 = vld [vmem:[%s494 + $0xb8] sm:$0xf]
        %v593 = vld [vmem:[%s494 + $0xbc] sm:$0xf]
        %v594 = vld [vmem:[%s494 + $0xc0] sm:$0xf]
        %v595 = vld [vmem:[%s494 + $0xc4] sm:$0xf]
        %v596 = vld [vmem:[%s494 + $0xc8] sm:$0xf]
        %v597 = vld [vmem:[%s494 + $0xcc] sm:$0xf]
        %v598 = vld [vmem:[%s494 + $0xd0] sm:$0xf]
        %v599 = vld [vmem:[%s494 + $0xd4] sm:$0xf]
        %v600 = vld [vmem:[%s494 + $0xd8] sm:$0xf]
        %v601 = vld [vmem:[%s494 + $0xdc] sm:$0xf]
        %v602 = vld [vmem:[%s494 + $0xe0] sm:$0xf]
        %v603 = vld [vmem:[%s494 + $0xe4] sm:$0xf]
        %v604 = vld [vmem:[%s494 + $0xe8] sm:$0xf]
        %v605 = vld [vmem:[%s494 + $0xec] sm:$0xf]
        %v606 = vld [vmem:[%s494 + $0xf0] sm:$0xf]
        %v607 = vld [vmem:[%s494 + $0xf4] sm:$0xf]
        %v608 = vld [vmem:[%s494 + $0xf8] sm:$0xf]
        %v609 = vld [vmem:[%s494 + $0xfc] sm:$0xf]
        %v610 = vld [vmem:[%s536] sm:$0xf]
        %v611 = vld [vmem:[%s536 + $0x4] sm:$0xf]
        %v612 = vld [vmem:[%s536 + $0x8] sm:$0xf]
        %v613 = vld [vmem:[%s536 + $0xc] sm:$0xf]
        %v614 = vld [vmem:[%s536 + $0x10] sm:$0xf]
        %v615 = vld [vmem:[%s536 + $0x14] sm:$0xf]
        %v616 = vld [vmem:[%s536 + $0x18] sm:$0xf]
        %v617 = vld [vmem:[%s536 + $0x1c] sm:$0xf]
        %v618 = vld [vmem:[%s536 + $0x20] sm:$0xf]
        %v619 = vld [vmem:[%s536 + $0x24] sm:$0xf]
        %v620 = vld [vmem:[%s536 + $0x28] sm:$0xf]
        %v621 = vld [vmem:[%s536 + $0x2c] sm:$0xf]
        %v622 = vld [vmem:[%s536 + $0x30] sm:$0xf]
        %v623 = vld [vmem:[%s536 + $0x34] sm:$0xf]
        %v624 = vld [vmem:[%s536 + $0x38] sm:$0xf]
        %v625 = vld [vmem:[%s536 + $0x3c] sm:$0xf]
        %v626 = vld [vmem:[%s542] sm:$0x1]
        %v628 = vlaneseq
        %v629 = vshrl.u32 %v628, 7
        %v630 = vsub.s32 0, %v629
        %v631 = vrot.slane %v626, %v630
        %v697 = vunpack.c.l.b16 %v546
        %v698 = vunpack.c.l.b16 %v547
        %v699 = vunpack.c.l.b16 %v548
        %v700 = vunpack.c.l.b16 %v549
        %v701 = vunpack.c.l.b16 %v550
        %v702 = vunpack.c.l.b16 %v551
        %v703 = vunpack.c.l.b16 %v552
        %v704 = vunpack.c.l.b16 %v553
        %v705 = vunpack.c.l.b16 %v554
        %v706 = vunpack.c.l.b16 %v555
        %v707 = vunpack.c.l.b16 %v556
        %v708 = vunpack.c.l.b16 %v557
        %v709 = vunpack.c.l.b16 %v558
        %v710 = vunpack.c.l.b16 %v559
        %v711 = vunpack.c.l.b16 %v560
        %v712 = vunpack.c.l.b16 %v561
        %v713 = vunpack.c.l.b16 %v562
        %v714 = vunpack.c.l.b16 %v563
        %v715 = vunpack.c.l.b16 %v564
        %v716 = vunpack.c.l.b16 %v565
        %v717 = vunpack.c.l.b16 %v566
        %v718 = vunpack.c.l.b16 %v567
        %v719 = vunpack.c.l.b16 %v568
        %v720 = vunpack.c.l.b16 %v569
        %v721 = vunpack.c.l.b16 %v570
        %v722 = vunpack.c.l.b16 %v571
        %v723 = vunpack.c.l.b16 %v572
        %v724 = vunpack.c.l.b16 %v573
        %v725 = vunpack.c.l.b16 %v574
        %v726 = vunpack.c.l.b16 %v575
        %v727 = vunpack.c.l.b16 %v576
        %v728 = vunpack.c.l.b16 %v577
        %v729 = vunpack.c.l.b16 %v578
        %v730 = vunpack.c.l.b16 %v579
        %v731 = vunpack.c.l.b16 %v580
        %v732 = vunpack.c.l.b16 %v581
        %v733 = vunpack.c.l.b16 %v582
        %v734 = vunpack.c.l.b16 %v583
        %v735 = vunpack.c.l.b16 %v584
        %v736 = vunpack.c.l.b16 %v585
        %v737 = vunpack.c.l.b16 %v586
        %v738 = vunpack.c.l.b16 %v587
        %v739 = vunpack.c.l.b16 %v588
        %v740 = vunpack.c.l.b16 %v589
        %v741 = vunpack.c.l.b16 %v590
        %v742 = vunpack.c.l.b16 %v591
        %v743 = vunpack.c.l.b16 %v592
        %v744 = vunpack.c.l.b16 %v593
        %v745 = vunpack.c.l.b16 %v594
        %v746 = vunpack.c.l.b16 %v595
        %v747 = vunpack.c.l.b16 %v596
        %v748 = vunpack.c.l.b16 %v597
        %v749 = vunpack.c.l.b16 %v598
        %v750 = vunpack.c.l.b16 %v599
        %v751 = vunpack.c.l.b16 %v600
        %v752 = vunpack.c.l.b16 %v601
        %v753 = vunpack.c.l.b16 %v602
        %v754 = vunpack.c.l.b16 %v603
        %v755 = vunpack.c.l.b16 %v604
        %v756 = vunpack.c.l.b16 %v605
        %v757 = vunpack.c.l.b16 %v606
        %v758 = vunpack.c.l.b16 %v607
        %v759 = vunpack.c.l.b16 %v608
        %v760 = vunpack.c.l.b16 %v609
        %v761 = vpack.c.b16 %v698, %v697
        %v762 = vpack.c.b16 %v700, %v699
        %v763 = vpack.c.b16 %v702, %v701
        %v764 = vpack.c.b16 %v704, %v703
        %v765 = vpack.c.b16 %v706, %v705
        %v766 = vpack.c.b16 %v708, %v707
        %v767 = vpack.c.b16 %v710, %v709
        %v768 = vpack.c.b16 %v712, %v711
        %v769 = vpack.c.b16 %v714, %v713
        %v770 = vpack.c.b16 %v716, %v715
        %v771 = vpack.c.b16 %v718, %v717
        %v772 = vpack.c.b16 %v720, %v719
        %v773 = vpack.c.b16 %v722, %v721
        %v774 = vpack.c.b16 %v724, %v723
        %v775 = vpack.c.b16 %v726, %v725
        %v776 = vpack.c.b16 %v728, %v727
        %v777 = vpack.c.b16 %v730, %v729
        %v778 = vpack.c.b16 %v732, %v731
        %v779 = vpack.c.b16 %v734, %v733
        %v780 = vpack.c.b16 %v736, %v735
        %v781 = vpack.c.b16 %v738, %v737
        %v782 = vpack.c.b16 %v740, %v739
        %v783 = vpack.c.b16 %v742, %v741
        %v784 = vpack.c.b16 %v744, %v743
        %v785 = vpack.c.b16 %v746, %v745
        %v786 = vpack.c.b16 %v748, %v747
        %v787 = vpack.c.b16 %v750, %v749
        %v788 = vpack.c.b16 %v752, %v751
        %v789 = vpack.c.b16 %v754, %v753
        %v790 = vpack.c.b16 %v756, %v755
        %v791 = vpack.c.b16 %v758, %v757
        %v792 = vpack.c.b16 %v760, %v759
        %v841 = vunpack.c.l.b16 %v610
        %v842 = vunpack.c.l.b16 %v611
        %v843 = vunpack.c.l.b16 %v612
        %v844 = vunpack.c.l.b16 %v613
        %v845 = vunpack.c.l.b16 %v614
        %v846 = vunpack.c.l.b16 %v615
        %v847 = vunpack.c.l.b16 %v616
        %v848 = vunpack.c.l.b16 %v617
        %v849 = vunpack.c.l.b16 %v618
        %v850 = vunpack.c.l.b16 %v619
        %v851 = vunpack.c.l.b16 %v620
        %v852 = vunpack.c.l.b16 %v621
        %v853 = vunpack.c.l.b16 %v622
        %v854 = vunpack.c.l.b16 %v623
        %v855 = vunpack.c.l.b16 %v624
        %v856 = vunpack.c.l.b16 %v625
        %v857 = vpack.c.b16 %v842, %v841
        %v858 = vpack.c.b16 %v844, %v843
        %v859 = vpack.c.b16 %v846, %v845
        %v860 = vpack.c.b16 %v848, %v847
        %v861 = vpack.c.b16 %v850, %v849
        %v862 = vpack.c.b16 %v852, %v851
        %v863 = vpack.c.b16 %v854, %v853
        %v864 = vpack.c.b16 %v856, %v855
        %873 = vmatprep.subr.bf16.mxu0 0
        %874 = vmatpush1.bf16.msra.mxu0 %v857
        %875 = vmatprep.subr.bf16.mxu0 0
        %876 = vmatpush1.bf16.msra.mxu0 %v858
        %877 = vmatprep.subr.bf16.mxu0 0
        %878 = vmatpush1.bf16.msra.mxu0 %v859
        %879 = vmatprep.subr.bf16.mxu0 0
        %880 = vmatpush1.bf16.msra.mxu0 %v860
        %881 = vmatprep.subr.bf16.mxu0 0
        %882 = vmatpush1.bf16.msra.mxu0 %v861
        %883 = vmatprep.subr.bf16.mxu0 0
        %884 = vmatpush1.bf16.msra.mxu0 %v862
        %885 = vmatprep.subr.bf16.mxu0 0
        %886 = vmatpush1.bf16.msra.mxu0 %v863
        %887 = vmatprep.subr.bf16.mxu0 0
        %888 = vmatpush1.bf16.msra.mxu0 %v864
        %889 = vmatprep.subr.bf16.mxu0 0
        %890 = vmatpush1.bf16.msra.mxu0 0
        %891 = vmatprep.subr.bf16.mxu0 0
        %892 = vmatpush1.bf16.msra.mxu0 0
        %893 = vmatprep.subr.bf16.mxu0 0
        %894 = vmatpush1.bf16.msra.mxu0 0
        %895 = vmatprep.subr.bf16.mxu0 0
        %896 = vmatpush1.bf16.msra.mxu0 0
        %897 = vmatprep.subr.bf16.mxu0 0
        %898 = vmatpush1.bf16.msra.mxu0 0
        %899 = vmatprep.subr.bf16.mxu0 0
        %900 = vmatpush1.bf16.msra.mxu0 0
        %901 = vmatprep.subr.bf16.mxu0 0
        %902 = vmatpush1.bf16.msra.mxu0 0
        %903 = vmatprep.subr.bf16.mxu0 0
        %904 = vmatpush1.bf16.msra.mxu0 0
        %905 = vmatprep.mubr.bf16.mxu0 0
        %906 = vmatmul.mubr.bf16.gmra.mrb[0].mxu0 %v761
        %v907 = vpop.f32.mrb[0].mxu0
        %v908 = vadd.f32 %v631, %v907
        %v909 = vpop.f32.mrb[0].mxu0
        %v910 = vpop.f32.mrb[0].mxu0
        %v911 = vadd.f32 %v631, %v910
        %v912 = vpop.f32.mrb[0].mxu0
        %913 = vmatprep.mubr.bf16.mxu0 0
        %914 = vmatmul.mubr.bf16.gmra.mrb[0].mxu0 %v762
        %v915 = vpop.f32.mrb[0].mxu0
        %v916 = vadd.f32 %v631, %v915
        %v917 = vpop.f32.mrb[0].mxu0
        %v918 = vpop.f32.mrb[0].mxu0
        %v919 = vadd.f32 %v631, %v918
        %v920 = vpop.f32.mrb[0].mxu0
        %921 = vmatprep.mubr.bf16.mxu0 0
        %922 = vmatmul.mubr.bf16.gmra.mrb[0].mxu0 %v763
        %v923 = vpop.f32.mrb[0].mxu0
        %v924 = vadd.f32 %v631, %v923
        %v925 = vpop.f32.mrb[0].mxu0
        %v926 = vpop.f32.mrb[0].mxu0
        %v927 = vadd.f32 %v631, %v926
        %v928 = vpop.f32.mrb[0].mxu0
        %929 = vmatprep.mubr.bf16.mxu0 0
        %930 = vmatmul.mubr.bf16.gmra.mrb[0].mxu0 %v764
        %v931 = vpop.f32.mrb[0].mxu0
        %v932 = vadd.f32 %v631, %v931
        %v933 = vpop.f32.mrb[0].mxu0
        %v934 = vpop.f32.mrb[0].mxu0
        %v935 = vadd.f32 %v631, %v934
        %v936 = vpop.f32.mrb[0].mxu0
        %937 = vmatprep.mubr.bf16.mxu0 0
        %938 = vmatmul.mubr.bf16.gmra.mrb[0].mxu0 %v765
        %v939 = vpop.f32.mrb[0].mxu0
        %v940 = vadd.f32 %v631, %v939
        %v941 = vpop.f32.mrb[0].mxu0
        %v942 = vpop.f32.mrb[0].mxu0
        %v943 = vadd.f32 %v631, %v942
        %v944 = vpop.f32.mrb[0].mxu0
        %945 = vmatprep.mubr.bf16.mxu0 0
        %946 = vmatmul.mubr.bf16.gmra.mrb[0].mxu0 %v766
        %v947 = vpop.f32.mrb[0].mxu0
        %v948 = vadd.f32 %v631, %v947
        %v949 = vpop.f32.mrb[0].mxu0
        %v950 = vpop.f32.mrb[0].mxu0
        %v951 = vadd.f32 %v631, %v950
        %v952 = vpop.f32.mrb[0].mxu0
        %953 = vmatprep.mubr.bf16.mxu0 0
        %954 = vmatmul.mubr.bf16.gmra.mrb[0].mxu0 %v767
        %v955 = vpop.f32.mrb[0].mxu0
        %v956 = vadd.f32 %v631, %v955
        %v957 = vpop.f32.mrb[0].mxu0
        %v958 = vpop.f32.mrb[0].mxu0
        %v959 = vadd.f32 %v631, %v958
        %v960 = vpop.f32.mrb[0].mxu0
        %961 = vmatprep.mubr.bf16.mxu0 0
        %962 = vmatmul.mubr.bf16.gmra.mrb[0].mxu0 %v768
        %v963 = vpop.f32.mrb[0].mxu0
        %v964 = vadd.f32 %v631, %v963
        %v965 = vpop.f32.mrb[0].mxu0
        %v966 = vpop.f32.mrb[0].mxu0
        %v967 = vadd.f32 %v631, %v966
        %v968 = vpop.f32.mrb[0].mxu0
        %969 = vmatprep.mubr.bf16.mxu0 0
        %970 = vmatmul.mubr.bf16.gmra.mrb[0].mxu0 %v769
        %v971 = vpop.f32.mrb[0].mxu0
        %v972 = vadd.f32 %v631, %v971
        %v973 = vpop.f32.mrb[0].mxu0
        %v974 = vpop.f32.mrb[0].mxu0
        %v975 = vadd.f32 %v631, %v974
        %v976 = vpop.f32.mrb[0].mxu0
        %977 = vmatprep.mubr.bf16.mxu0 0
        %978 = vmatmul.mubr.bf16.gmra.mrb[0].mxu0 %v770
        %v979 = vpop.f32.mrb[0].mxu0
        %v980 = vadd.f32 %v631, %v979
        %v981 = vpop.f32.mrb[0].mxu0
        %v982 = vpop.f32.mrb[0].mxu0
        %v983 = vadd.f32 %v631, %v982
        %v984 = vpop.f32.mrb[0].mxu0
        %985 = vmatprep.mubr.bf16.mxu0 0
        %986 = vmatmul.mubr.bf16.gmra.mrb[0].mxu0 %v771
        %v987 = vpop.f32.mrb[0].mxu0
        %v988 = vadd.f32 %v631, %v987
        %v989 = vpop.f32.mrb[0].mxu0
        %v990 = vpop.f32.mrb[0].mxu0
        %v991 = vadd.f32 %v631, %v990
        %v992 = vpop.f32.mrb[0].mxu0
        %993 = vmatprep.mubr.bf16.mxu0 0
        %994 = vmatmul.mubr.bf16.gmra.mrb[0].mxu0 %v772
        %v995 = vpop.f32.mrb[0].mxu0
        %v996 = vadd.f32 %v631, %v995
        %v997 = vpop.f32.mrb[0].mxu0
        %v998 = vpop.f32.mrb[0].mxu0
        %v999 = vadd.f32 %v631, %v998
        %v1000 = vpop.f32.mrb[0].mxu0
        %1001 = vmatprep.mubr.bf16.mxu0 0
        %1002 = vmatmul.mubr.bf16.gmra.mrb[0].mxu0 %v773
        %v1003 = vpop.f32.mrb[0].mxu0
        %v1004 = vadd.f32 %v631, %v1003
        %v1005 = vpop.f32.mrb[0].mxu0
        %v1006 = vpop.f32.mrb[0].mxu0
        %v1007 = vadd.f32 %v631, %v1006
        %v1008 = vpop.f32.mrb[0].mxu0
        %1009 = vmatprep.mubr.bf16.mxu0 0
        %1010 = vmatmul.mubr.bf16.gmra.mrb[0].mxu0 %v774
        %v1011 = vpop.f32.mrb[0].mxu0
        %v1012 = vadd.f32 %v631, %v1011
        %v1013 = vpop.f32.mrb[0].mxu0
        %v1014 = vpop.f32.mrb[0].mxu0
        %v1015 = vadd.f32 %v631, %v1014
        %v1016 = vpop.f32.mrb[0].mxu0
        %1017 = vmatprep.mubr.bf16.mxu0 0
        %1018 = vmatmul.mubr.bf16.gmra.mrb[0].mxu0 %v775
        %v1019 = vpop.f32.mrb[0].mxu0
        %v1020 = vadd.f32 %v631, %v1019
        %v1021 = vpop.f32.mrb[0].mxu0
        %v1022 = vpop.f32.mrb[0].mxu0
        %v1023 = vadd.f32 %v631, %v1022
        %v1024 = vpop.f32.mrb[0].mxu0
        %1025 = vmatprep.mubr.bf16.mxu0 0
        %1026 = vmatmul.mubr.bf16.gmra.mrb[0].mxu0 %v776
        %v1027 = vpop.f32.mrb[0].mxu0
        %v1028 = vadd.f32 %v631, %v1027
        %v1029 = vpop.f32.mrb[0].mxu0
        %v1030 = vpop.f32.mrb[0].mxu0
        %v1031 = vadd.f32 %v631, %v1030
        %v1032 = vpop.f32.mrb[0].mxu0
        %1033 = vmatprep.mubr.bf16.mxu0 0
        %1034 = vmatmul.mubr.bf16.gmra.mrb[0].mxu0 %v777
        %v1035 = vpop.f32.mrb[0].mxu0
        %v1036 = vadd.f32 %v631, %v1035
        %v1037 = vpop.f32.mrb[0].mxu0
        %v1038 = vpop.f32.mrb[0].mxu0
        %v1039 = vadd.f32 %v631, %v1038
        %v1040 = vpop.f32.mrb[0].mxu0
        %1041 = vmatprep.mubr.bf16.mxu0 0
        %1042 = vmatmul.mubr.bf16.gmra.mrb[0].mxu0 %v778
        %v1043 = vpop.f32.mrb[0].mxu0
        %v1044 = vadd.f32 %v631, %v1043
        %v1045 = vpop.f32.mrb[0].mxu0
        %v1046 = vpop.f32.mrb[0].mxu0
        %v1047 = vadd.f32 %v631, %v1046
        %v1048 = vpop.f32.mrb[0].mxu0
        %1049 = vmatprep.mubr.bf16.mxu0 0
        %1050 = vmatmul.mubr.bf16.gmra.mrb[0].mxu0 %v779
        %v1051 = vpop.f32.mrb[0].mxu0
        %v1052 = vadd.f32 %v631, %v1051
        %v1053 = vpop.f32.mrb[0].mxu0
        %v1054 = vpop.f32.mrb[0].mxu0
        %v1055 = vadd.f32 %v631, %v1054
        %v1056 = vpop.f32.mrb[0].mxu0
        %1057 = vmatprep.mubr.bf16.mxu0 0
        %1058 = vmatmul.mubr.bf16.gmra.mrb[0].mxu0 %v780
        %v1059 = vpop.f32.mrb[0].mxu0
        %v1060 = vadd.f32 %v631, %v1059
        %v1061 = vpop.f32.mrb[0].mxu0
        %v1062 = vpop.f32.mrb[0].mxu0
        %v1063 = vadd.f32 %v631, %v1062
        %v1064 = vpop.f32.mrb[0].mxu0
        %1065 = vmatprep.mubr.bf16.mxu0 0
        %1066 = vmatmul.mubr.bf16.gmra.mrb[0].mxu0 %v781
        %v1067 = vpop.f32.mrb[0].mxu0
        %v1068 = vadd.f32 %v631, %v1067
        %v1069 = vpop.f32.mrb[0].mxu0
        %v1070 = vpop.f32.mrb[0].mxu0
        %v1071 = vadd.f32 %v631, %v1070
        %v1072 = vpop.f32.mrb[0].mxu0
        %1073 = vmatprep.mubr.bf16.mxu0 0
        %1074 = vmatmul.mubr.bf16.gmra.mrb[0].mxu0 %v782
        %v1075 = vpop.f32.mrb[0].mxu0
        %v1076 = vadd.f32 %v631, %v1075
        %v1077 = vpop.f32.mrb[0].mxu0
        %v1078 = vpop.f32.mrb[0].mxu0
        %v1079 = vadd.f32 %v631, %v1078
        %v1080 = vpop.f32.mrb[0].mxu0
        %1081 = vmatprep.mubr.bf16.mxu0 0
        %1082 = vmatmul.mubr.bf16.gmra.mrb[0].mxu0 %v783
        %v1083 = vpop.f32.mrb[0].mxu0
        %v1084 = vadd.f32 %v631, %v1083
        %v1085 = vpop.f32.mrb[0].mxu0
        %v1086 = vpop.f32.mrb[0].mxu0
        %v1087 = vadd.f32 %v631, %v1086
        %v1088 = vpop.f32.mrb[0].mxu0
        %1089 = vmatprep.mubr.bf16.mxu0 0
        %1090 = vmatmul.mubr.bf16.gmra.mrb[0].mxu0 %v784
        %v1091 = vpop.f32.mrb[0].mxu0
        %v1092 = vadd.f32 %v631, %v1091
        %v1093 = vpop.f32.mrb[0].mxu0
        %v1094 = vpop.f32.mrb[0].mxu0
        %v1095 = vadd.f32 %v631, %v1094
        %v1096 = vpop.f32.mrb[0].mxu0
        %1097 = vmatprep.mubr.bf16.mxu0 0
        %1098 = vmatmul.mubr.bf16.gmra.mrb[0].mxu0 %v785
        %v1099 = vpop.f32.mrb[0].mxu0
        %v1100 = vadd.f32 %v631, %v1099
        %v1101 = vpop.f32.mrb[0].mxu0
        %v1102 = vpop.f32.mrb[0].mxu0
        %v1103 = vadd.f32 %v631, %v1102
        %v1104 = vpop.f32.mrb[0].mxu0
        %1105 = vmatprep.mubr.bf16.mxu0 0
        %1106 = vmatmul.mubr.bf16.gmra.mrb[0].mxu0 %v786
        %v1107 = vpop.f32.mrb[0].mxu0
        %v1108 = vadd.f32 %v631, %v1107
        %v1109 = vpop.f32.mrb[0].mxu0
        %v1110 = vpop.f32.mrb[0].mxu0
        %v1111 = vadd.f32 %v631, %v1110
        %v1112 = vpop.f32.mrb[0].mxu0
        %1113 = vmatprep.mubr.bf16.mxu0 0
        %1114 = vmatmul.mubr.bf16.gmra.mrb[0].mxu0 %v787
        %v1115 = vpop.f32.mrb[0].mxu0
        %v1116 = vadd.f32 %v631, %v1115
        %v1117 = vpop.f32.mrb[0].mxu0
        %v1118 = vpop.f32.mrb[0].mxu0
        %v1119 = vadd.f32 %v631, %v1118
        %v1120 = vpop.f32.mrb[0].mxu0
        %1121 = vmatprep.mubr.bf16.mxu0 0
        %1122 = vmatmul.mubr.bf16.gmra.mrb[0].mxu0 %v788
        %v1123 = vpop.f32.mrb[0].mxu0
        %v1124 = vadd.f32 %v631, %v1123
        %v1125 = vpop.f32.mrb[0].mxu0
        %v1126 = vpop.f32.mrb[0].mxu0
        %v1127 = vadd.f32 %v631, %v1126
        %v1128 = vpop.f32.mrb[0].mxu0
        %1129 = vmatprep.mubr.bf16.mxu0 0
        %1130 = vmatmul.mubr.bf16.gmra.mrb[0].mxu0 %v789
        %v1131 = vpop.f32.mrb[0].mxu0
        %v1132 = vadd.f32 %v631, %v1131
        %v1133 = vpop.f32.mrb[0].mxu0
        %v1134 = vpop.f32.mrb[0].mxu0
        %v1135 = vadd.f32 %v631, %v1134
        %v1136 = vpop.f32.mrb[0].mxu0
        %1137 = vmatprep.mubr.bf16.mxu0 0
        %1138 = vmatmul.mubr.bf16.gmra.mrb[0].mxu0 %v790
        %v1139 = vpop.f32.mrb[0].mxu0
        %v1140 = vadd.f32 %v631, %v1139
        %v1141 = vpop.f32.mrb[0].mxu0
        %v1142 = vpop.f32.mrb[0].mxu0
        %v1143 = vadd.f32 %v631, %v1142
        %v1144 = vpop.f32.mrb[0].mxu0
        %1145 = vmatprep.mubr.bf16.mxu0 0
        %1146 = vmatmul.mubr.bf16.gmra.mrb[0].mxu0 %v791
        %v1147 = vpop.f32.mrb[0].mxu0
        %v1148 = vadd.f32 %v631, %v1147
        %v1149 = vpop.f32.mrb[0].mxu0
        %v1150 = vpop.f32.mrb[0].mxu0
        %v1151 = vadd.f32 %v631, %v1150
        %v1152 = vpop.f32.mrb[0].mxu0
        %1153 = vmatprep.mubr.bf16.mxu0 0
        %1154 = vmatmul.mubr.bf16.gmra.mrb[0].mxu0 %v792
        %v1155 = vpop.f32.mrb[0].mxu0
        %v1156 = vadd.f32 %v631, %v1155
        %v1157 = vpop.f32.mrb[0].mxu0
        %v1158 = vpop.f32.mrb[0].mxu0
        %v1159 = vadd.f32 %v631, %v1158
        %v1160 = vpop.f32.mrb[0].mxu0
        %1161 = vdwg.mxu0
        %v1162 = vpack.c.bf16 %v911, %v908
        %v1163 = vpack.c.bf16 %v919, %v916
        %v1164 = vpack.c.bf16 %v927, %v924
        %v1165 = vpack.c.bf16 %v935, %v932
        %v1166 = vpack.c.bf16 %v943, %v940
        %v1167 = vpack.c.bf16 %v951, %v948
        %v1168 = vpack.c.bf16 %v959, %v956
        %v1169 = vpack.c.bf16 %v967, %v964
        %v1170 = vpack.c.bf16 %v975, %v972
        %v1171 = vpack.c.bf16 %v983, %v980
        %v1172 = vpack.c.bf16 %v991, %v988
        %v1173 = vpack.c.bf16 %v999, %v996
        %v1174 = vpack.c.bf16 %v1007, %v1004
        %v1175 = vpack.c.bf16 %v1015, %v1012
        %v1176 = vpack.c.bf16 %v1023, %v1020
        %v1177 = vpack.c.bf16 %v1031, %v1028
        %v1178 = vpack.c.bf16 %v1039, %v1036
        %v1179 = vpack.c.bf16 %v1047, %v1044
        %v1180 = vpack.c.bf16 %v1055, %v1052
        %v1181 = vpack.c.bf16 %v1063, %v1060
        %v1182 = vpack.c.bf16 %v1071, %v1068
        %v1183 = vpack.c.bf16 %v1079, %v1076
        %v1184 = vpack.c.bf16 %v1087, %v1084
        %v1185 = vpack.c.bf16 %v1095, %v1092
        %v1186 = vpack.c.bf16 %v1103, %v1100
        %v1187 = vpack.c.bf16 %v1111, %v1108
        %v1188 = vpack.c.bf16 %v1119, %v1116
        %v1189 = vpack.c.bf16 %v1127, %v1124
        %v1190 = vpack.c.bf16 %v1135, %v1132
        %v1191 = vpack.c.bf16 %v1143, %v1140
        %v1192 = vpack.c.bf16 %v1151, %v1148
        %v1193 = vpack.c.bf16 %v1159, %v1156
        %v1226 = vunpack.c.l.b16 %v1162
        %v1227 = vunpack.c.h.b16 %v1162
        %v1228 = vunpack.c.l.b16 %v1163
        %v1229 = vunpack.c.h.b16 %v1163
        %v1230 = vunpack.c.l.b16 %v1164
        %v1231 = vunpack.c.h.b16 %v1164
        %v1232 = vunpack.c.l.b16 %v1165
        %v1233 = vunpack.c.h.b16 %v1165
        %v1234 = vunpack.c.l.b16 %v1166
        %v1235 = vunpack.c.h.b16 %v1166
        %v1236 = vunpack.c.l.b16 %v1167
        %v1237 = vunpack.c.h.b16 %v1167
        %v1238 = vunpack.c.l.b16 %v1168
        %v1239 = vunpack.c.h.b16 %v1168
        %v1240 = vunpack.c.l.b16 %v1169
        %v1241 = vunpack.c.h.b16 %v1169
        %v1242 = vunpack.c.l.b16 %v1170
        %v1243 = vunpack.c.h.b16 %v1170
        %v1244 = vunpack.c.l.b16 %v1171
        %v1245 = vunpack.c.h.b16 %v1171
        %v1246 = vunpack.c.l.b16 %v1172
        %v1247 = vunpack.c.h.b16 %v1172
        %v1248 = vunpack.c.l.b16 %v1173
        %v1249 = vunpack.c.h.b16 %v1173
        %v1250 = vunpack.c.l.b16 %v1174
        %v1251 = vunpack.c.h.b16 %v1174
        %v1252 = vunpack.c.l.b16 %v1175
        %v1253 = vunpack.c.h.b16 %v1175
        %v1254 = vunpack.c.l.b16 %v1176
        %v1255 = vunpack.c.h.b16 %v1176
        %v1256 = vunpack.c.l.b16 %v1177
        %v1257 = vunpack.c.h.b16 %v1177
        %v1258 = vunpack.c.l.b16 %v1178
        %v1259 = vunpack.c.h.b16 %v1178
        %v1260 = vunpack.c.l.b16 %v1179
        %v1261 = vunpack.c.h.b16 %v1179
        %v1262 = vunpack.c.l.b16 %v1180
        %v1263 = vunpack.c.h.b16 %v1180
        %v1264 = vunpack.c.l.b16 %v1181
        %v1265 = vunpack.c.h.b16 %v1181
        %v1266 = vunpack.c.l.b16 %v1182
        %v1267 = vunpack.c.h.b16 %v1182
        %v1268 = vunpack.c.l.b16 %v1183
        %v1269 = vunpack.c.h.b16 %v1183
        %v1270 = vunpack.c.l.b16 %v1184
        %v1271 = vunpack.c.h.b16 %v1184
        %v1272 = vunpack.c.l.b16 %v1185
        %v1273 = vunpack.c.h.b16 %v1185
        %v1274 = vunpack.c.l.b16 %v1186
        %v1275 = vunpack.c.h.b16 %v1186
        %v1276 = vunpack.c.l.b16 %v1187
        %v1277 = vunpack.c.h.b16 %v1187
        %v1278 = vunpack.c.l.b16 %v1188
        %v1279 = vunpack.c.h.b16 %v1188
        %v1280 = vunpack.c.l.b16 %v1189
        %v1281 = vunpack.c.h.b16 %v1189
        %v1282 = vunpack.c.l.b16 %v1190
        %v1283 = vunpack.c.h.b16 %v1190
        %v1284 = vunpack.c.l.b16 %v1191
        %v1285 = vunpack.c.h.b16 %v1191
        %v1286 = vunpack.c.l.b16 %v1192
        %v1287 = vunpack.c.h.b16 %v1192
        %v1288 = vunpack.c.l.b16 %v1193
        %v1289 = vunpack.c.h.b16 %v1193
        %v1290 = vpack.c.b16 %v1226, %v1226
        %v1291 = vpack.c.b16 %v1227, %v1227
        %v1292 = vpack.c.b16 %v1228, %v1228
        %v1293 = vpack.c.b16 %v1229, %v1229
        %v1294 = vpack.c.b16 %v1230, %v1230
        %v1295 = vpack.c.b16 %v1231, %v1231
        %v1296 = vpack.c.b16 %v1232, %v1232
        %v1297 = vpack.c.b16 %v1233, %v1233
        %v1298 = vpack.c.b16 %v1234, %v1234
        %v1299 = vpack.c.b16 %v1235, %v1235
        %v1300 = vpack.c.b16 %v1236, %v1236
        %v1301 = vpack.c.b16 %v1237, %v1237
        %v1302 = vpack.c.b16 %v1238, %v1238
        %v1303 = vpack.c.b16 %v1239, %v1239
        %v1304 = vpack.c.b16 %v1240, %v1240
        %v1305 = vpack.c.b16 %v1241, %v1241
        %v1306 = vpack.c.b16 %v1242, %v1242
        %v1307 = vpack.c.b16 %v1243, %v1243
        %v1308 = vpack.c.b16 %v1244, %v1244
        %v1309 = vpack.c.b16 %v1245, %v1245
        %v1310 = vpack.c.b16 %v1246, %v1246
        %v1311 = vpack.c.b16 %v1247, %v1247
        %v1312 = vpack.c.b16 %v1248, %v1248
        %v1313 = vpack.c.b16 %v1249, %v1249
        %v1314 = vpack.c.b16 %v1250, %v1250
        %v1315 = vpack.c.b16 %v1251, %v1251
        %v1316 = vpack.c.b16 %v1252, %v1252
        %v1317 = vpack.c.b16 %v1253, %v1253
        %v1318 = vpack.c.b16 %v1254, %v1254
        %v1319 = vpack.c.b16 %v1255, %v1255
        %v1320 = vpack.c.b16 %v1256, %v1256
        %v1321 = vpack.c.b16 %v1257, %v1257
        %v1322 = vpack.c.b16 %v1258, %v1258
        %v1323 = vpack.c.b16 %v1259, %v1259
        %v1324 = vpack.c.b16 %v1260, %v1260
        %v1325 = vpack.c.b16 %v1261, %v1261
        %v1326 = vpack.c.b16 %v1262, %v1262
        %v1327 = vpack.c.b16 %v1263, %v1263
        %v1328 = vpack.c.b16 %v1264, %v1264
        %v1329 = vpack.c.b16 %v1265, %v1265
        %v1330 = vpack.c.b16 %v1266, %v1266
        %v1331 = vpack.c.b16 %v1267, %v1267
        %v1332 = vpack.c.b16 %v1268, %v1268
        %v1333 = vpack.c.b16 %v1269, %v1269
        %v1334 = vpack.c.b16 %v1270, %v1270
        %v1335 = vpack.c.b16 %v1271, %v1271
        %v1336 = vpack.c.b16 %v1272, %v1272
        %v1337 = vpack.c.b16 %v1273, %v1273
        %v1338 = vpack.c.b16 %v1274, %v1274
        %v1339 = vpack.c.b16 %v1275, %v1275
        %v1340 = vpack.c.b16 %v1276, %v1276
        %v1341 = vpack.c.b16 %v1277, %v1277
        %v1342 = vpack.c.b16 %v1278, %v1278
        %v1343 = vpack.c.b16 %v1279, %v1279
        %v1344 = vpack.c.b16 %v1280, %v1280
        %v1345 = vpack.c.b16 %v1281, %v1281
        %v1346 = vpack.c.b16 %v1282, %v1282
        %v1347 = vpack.c.b16 %v1283, %v1283
        %v1348 = vpack.c.b16 %v1284, %v1284
        %v1349 = vpack.c.b16 %v1285, %v1285
        %v1350 = vpack.c.b16 %v1286, %v1286
        %v1351 = vpack.c.b16 %v1287, %v1287
        %v1352 = vpack.c.b16 %v1288, %v1288
        %v1353 = vpack.c.b16 %v1289, %v1289
        %1418 = vst [vmem:[%s527] sm:$0xf] %v1290
        %1419 = vst [vmem:[%s527 + $0x4] sm:$0xf] %v1291
        %1420 = vst [vmem:[%s527 + $0x8] sm:$0xf] %v1292
        %1421 = vst [vmem:[%s527 + $0xc] sm:$0xf] %v1293
        %1422 = vst [vmem:[%s527 + $0x10] sm:$0xf] %v1294
        %1423 = vst [vmem:[%s527 + $0x14] sm:$0xf] %v1295
        %1424 = vst [vmem:[%s527 + $0x18] sm:$0xf] %v1296
        %1425 = vst [vmem:[%s527 + $0x1c] sm:$0xf] %v1297
        %1426 = vst [vmem:[%s527 + $0x20] sm:$0xf] %v1298
        %1427 = vst [vmem:[%s527 + $0x24] sm:$0xf] %v1299
        %1428 = vst [vmem:[%s527 + $0x28] sm:$0xf] %v1300
        %1429 = vst [vmem:[%s527 + $0x2c] sm:$0xf] %v1301
        %1430 = vst [vmem:[%s527 + $0x30] sm:$0xf] %v1302
        %1431 = vst [vmem:[%s527 + $0x34] sm:$0xf] %v1303
        %1432 = vst [vmem:[%s527 + $0x38] sm:$0xf] %v1304
        %1433 = vst [vmem:[%s527 + $0x3c] sm:$0xf] %v1305
        %1434 = vst [vmem:[%s527 + $0x40] sm:$0xf] %v1306
        %1435 = vst [vmem:[%s527 + $0x44] sm:$0xf] %v1307
        %1436 = vst [vmem:[%s527 + $0x48] sm:$0xf] %v1308
        %1437 = vst [vmem:[%s527 + $0x4c] sm:$0xf] %v1309
        %1438 = vst [vmem:[%s527 + $0x50] sm:$0xf] %v1310
        %1439 = vst [vmem:[%s527 + $0x54] sm:$0xf] %v1311
        %1440 = vst [vmem:[%s527 + $0x58] sm:$0xf] %v1312
        %1441 = vst [vmem:[%s527 + $0x5c] sm:$0xf] %v1313
        %1442 = vst [vmem:[%s527 + $0x60] sm:$0xf] %v1314
        %1443 = vst [vmem:[%s527 + $0x64] sm:$0xf] %v1315
        %1444 = vst [vmem:[%s527 + $0x68] sm:$0xf] %v1316
        %1445 = vst [vmem:[%s527 + $0x6c] sm:$0xf] %v1317
        %1446 = vst [vmem:[%s527 + $0x70] sm:$0xf] %v1318
        %1447 = vst [vmem:[%s527 + $0x74] sm:$0xf] %v1319
        %1448 = vst [vmem:[%s527 + $0x78] sm:$0xf] %v1320
        %1449 = vst [vmem:[%s527 + $0x7c] sm:$0xf] %v1321
        %1450 = vst [vmem:[%s527 + $0x80] sm:$0xf] %v1322
        %1451 = vst [vmem:[%s527 + $0x84] sm:$0xf] %v1323
        %1452 = vst [vmem:[%s527 + $0x88] sm:$0xf] %v1324
        %1453 = vst [vmem:[%s527 + $0x8c] sm:$0xf] %v1325
        %1454 = vst [vmem:[%s527 + $0x90] sm:$0xf] %v1326
        %1455 = vst [vmem:[%s527 + $0x94] sm:$0xf] %v1327
        %1456 = vst [vmem:[%s527 + $0x98] sm:$0xf] %v1328
        %1457 = vst [vmem:[%s527 + $0x9c] sm:$0xf] %v1329
        %1458 = vst [vmem:[%s527 + $0xa0] sm:$0xf] %v1330
        %1459 = vst [vmem:[%s527 + $0xa4] sm:$0xf] %v1331
        %1460 = vst [vmem:[%s527 + $0xa8] sm:$0xf] %v1332
        %1461 = vst [vmem:[%s527 + $0xac] sm:$0xf] %v1333
        %1462 = vst [vmem:[%s527 + $0xb0] sm:$0xf] %v1334
        %1463 = vst [vmem:[%s527 + $0xb4] sm:$0xf] %v1335
        %1464 = vst [vmem:[%s527 + $0xb8] sm:$0xf] %v1336
        %1465 = vst [vmem:[%s527 + $0xbc] sm:$0xf] %v1337
        %1466 = vst [vmem:[%s527 + $0xc0] sm:$0xf] %v1338
        %1467 = vst [vmem:[%s527 + $0xc4] sm:$0xf] %v1339
        %1468 = vst [vmem:[%s527 + $0xc8] sm:$0xf] %v1340
        %1469 = vst [vmem:[%s527 + $0xcc] sm:$0xf] %v1341
        %1470 = vst [vmem:[%s527 + $0xd0] sm:$0xf] %v1342
        %1471 = vst [vmem:[%s527 + $0xd4] sm:$0xf] %v1343
        %1472 = vst [vmem:[%s527 + $0xd8] sm:$0xf] %v1344
        %1473 = vst [vmem:[%s527 + $0xdc] sm:$0xf] %v1345
        %1474 = vst [vmem:[%s527 + $0xe0] sm:$0xf] %v1346
        %1475 = vst [vmem:[%s527 + $0xe4] sm:$0xf] %v1347
        %1476 = vst [vmem:[%s527 + $0xe8] sm:$0xf] %v1348
        %1477 = vst [vmem:[%s527 + $0xec] sm:$0xf] %v1349
        %1478 = vst [vmem:[%s527 + $0xf0] sm:$0xf] %v1350
        %1479 = vst [vmem:[%s527 + $0xf4] sm:$0xf] %v1351
        %1480 = vst [vmem:[%s527 + $0xf8] sm:$0xf] %v1352
        %1481 = vst [vmem:[%s527 + $0xfc] sm:$0xf] %v1353
        %s1482 = sand.u32 %s129, 1
        %s1483 = sand.u32 %s129, 1
        %s1484 = smul.addr %s1483, 256
        %s1485 = scalar_lea.vmem [#allocation3], %s1484
        // Predicated region
        $region74: #{srm_fl_forward.9} parent=68 // pred_check
          %p1486 = pneg %p139
        $region75: #{srm_fl_forward.9} parent=68 // pred_check_branch
          %1488 = sbr.rel (%p1486) target = $region77
        $region76: #{srm_fl_forward.9} parent=68 // pred_region
          %s1489 = sadd.s32 %s20, %s21
          %s1490 = smul.u32 64, %s19
          %s1491 = smul.addr %s1490, 2
          %s1492 = sadd.s32 %s1489, %s1491
          %s1493 = smul.addr %s1492, 4
          %s1494 = scalar_lea.vmem %s3, %s1493
          // Predicated region
          $region78: #{srm_fl_forward.9} parent=76 // pred_check
            _
          $region79: #{srm_fl_forward.9} parent=76 // pred_check_branch
            %1496 = sbr.rel (0) target = $region81
          $region80: #{srm_fl_forward.9} parent=76 // pred_region
            // Predicated region
            $region82: #{srm_fl_forward.9} parent=80 // pred_check
              _
            $region83: #{srm_fl_forward.9} parent=80 // pred_check_branch
              %1498 = sbr.rel target = $region85
            $region84: #{srm_fl_forward.9} parent=80 // pred_region
              // Predicated region
              $region97: #{srm_fl_forward.9} parent=84 // pred_check
                _
              $region98: #{srm_fl_forward.9} parent=84 // pred_check_branch
                %1639 = sbr.rel (0) target = $region100
              $region99: #{srm_fl_forward.9} parent=84 // pred_region
                loop: start=0, step=1, limit=1
                $region101: #{srm_fl_forward.9} parent=99 // loop_pre_header
                  _
                $region102: #{srm_fl_forward.9} parent=99 // loop_header
                  %s1641 = sphi 0, %s1645
                  %p1642 = scmp.ge.s32.totalorder %s1641, 1
                  %s1646 = sphi %s1485, %s1485
                  %s1647 = sphi %s1494, %s1494
                $region103: #{srm_fl_forward.9} parent=99 // loop_header_branch
                  %1644 = sbr.rel (%p1642) target = $region107
                $region104: #{srm_fl_forward.9} parent=99 // loop_body
                  _
                $region105: #{srm_fl_forward.9} parent=99 // loop_footer
                  %s1645 = sadd.s32 1, %s1641
                $region106: #{srm_fl_forward.9} parent=99 // loop_footer_branch
                  %1640 = sbr.rel target = $region102
                $region107: #{srm_fl_forward.9} parent=99 // loop_exit
                  _
                loop: start=0, step=1, limit=1
                $region108: #{srm_fl_forward.9} parent=99 // loop_pre_header
                  _
                $region109: #{srm_fl_forward.9} parent=99 // loop_header
                  %s1650 = sphi 0, %s1654
                  %p1651 = scmp.ge.s32.totalorder %s1650, 1
                  %s1655 = sphi %s1485, %s1485
                  %s1656 = sphi %s1494, %s1494
                $region110: #{srm_fl_forward.9} parent=99 // loop_header_branch
                  %1653 = sbr.rel (%p1651) target = $region114
                $region111: #{srm_fl_forward.9} parent=99 // loop_body
                  %v1657 = vld [vmem:[%s1655] sm:$0xf]
                  %1658 = vst [vmem:[%s1656] sm:$0xf] %v1657
                  %v1659 = vld [vmem:[%s1655 + $0x4] sm:$0xf]
                  %1660 = vst [vmem:[%s1656 + $0x8] sm:$0xf] %v1659
                  %v1661 = vld [vmem:[%s1655 + $0x8] sm:$0xf]
                  %1662 = vst [vmem:[%s1656 + $0x10] sm:$0xf] %v1661
                  %v1663 = vld [vmem:[%s1655 + $0xc] sm:$0xf]
                  %1664 = vst [vmem:[%s1656 + $0x18] sm:$0xf] %v1663
                  %v1665 = vld [vmem:[%s1655 + $0x10] sm:$0xf]
                  %1666 = vst [vmem:[%s1656 + $0x20] sm:$0xf] %v1665
                  %v1667 = vld [vmem:[%s1655 + $0x14] sm:$0xf]
                  %1668 = vst [vmem:[%s1656 + $0x28] sm:$0xf] %v1667
                  %v1669 = vld [vmem:[%s1655 + $0x18] sm:$0xf]
                  %1670 = vst [vmem:[%s1656 + $0x30] sm:$0xf] %v1669
                  %v1671 = vld [vmem:[%s1655 + $0x1c] sm:$0xf]
                  %1672 = vst [vmem:[%s1656 + $0x38] sm:$0xf] %v1671
                  %v1673 = vld [vmem:[%s1655 + $0x20] sm:$0xf]
                  %1674 = vst [vmem:[%s1656 + $0x40] sm:$0xf] %v1673
                  %v1675 = vld [vmem:[%s1655 + $0x24] sm:$0xf]
                  %1676 = vst [vmem:[%s1656 + $0x48] sm:$0xf] %v1675
                  %v1677 = vld [vmem:[%s1655 + $0x28] sm:$0xf]
                  %1678 = vst [vmem:[%s1656 + $0x50] sm:$0xf] %v1677
                  %v1679 = vld [vmem:[%s1655 + $0x2c] sm:$0xf]
                  %1680 = vst [vmem:[%s1656 + $0x58] sm:$0xf] %v1679
                  %v1681 = vld [vmem:[%s1655 + $0x30] sm:$0xf]
                  %1682 = vst [vmem:[%s1656 + $0x60] sm:$0xf] %v1681
                  %v1683 = vld [vmem:[%s1655 + $0x34] sm:$0xf]
                  %1684 = vst [vmem:[%s1656 + $0x68] sm:$0xf] %v1683
                  %v1685 = vld [vmem:[%s1655 + $0x38] sm:$0xf]
                  %1686 = vst [vmem:[%s1656 + $0x70] sm:$0xf] %v1685
                  %v1687 = vld [vmem:[%s1655 + $0x3c] sm:$0xf]
                  %1688 = vst [vmem:[%s1656 + $0x78] sm:$0xf] %v1687
                  %v1689 = vld [vmem:[%s1655 + $0x40] sm:$0xf]
                  %1690 = vst [vmem:[%s1656 + $0x80] sm:$0xf] %v1689
                  %v1691 = vld [vmem:[%s1655 + $0x44] sm:$0xf]
                  %1692 = vst [vmem:[%s1656 + $0x88] sm:$0xf] %v1691
                  %v1693 = vld [vmem:[%s1655 + $0x48] sm:$0xf]
                  %1694 = vst [vmem:[%s1656 + $0x90] sm:$0xf] %v1693
                  %v1695 = vld [vmem:[%s1655 + $0x4c] sm:$0xf]
                  %1696 = vst [vmem:[%s1656 + $0x98] sm:$0xf] %v1695
                  %v1697 = vld [vmem:[%s1655 + $0x50] sm:$0xf]
                  %1698 = vst [vmem:[%s1656 + $0xa0] sm:$0xf] %v1697
                  %v1699 = vld [vmem:[%s1655 + $0x54] sm:$0xf]
                  %1700 = vst [vmem:[%s1656 + $0xa8] sm:$0xf] %v1699
                  %v1701 = vld [vmem:[%s1655 + $0x58] sm:$0xf]
                  %1702 = vst [vmem:[%s1656 + $0xb0] sm:$0xf] %v1701
                  %v1703 = vld [vmem:[%s1655 + $0x5c] sm:$0xf]
                  %1704 = vst [vmem:[%s1656 + $0xb8] sm:$0xf] %v1703
                  %v1705 = vld [vmem:[%s1655 + $0x60] sm:$0xf]
                  %1706 = vst [vmem:[%s1656 + $0xc0] sm:$0xf] %v1705
                  %v1707 = vld [vmem:[%s1655 + $0x64] sm:$0xf]
                  %1708 = vst [vmem:[%s1656 + $0xc8] sm:$0xf] %v1707
                  %v1709 = vld [vmem:[%s1655 + $0x68] sm:$0xf]
                  %1710 = vst [vmem:[%s1656 + $0xd0] sm:$0xf] %v1709
                  %v1711 = vld [vmem:[%s1655 + $0x6c] sm:$0xf]
                  %1712 = vst [vmem:[%s1656 + $0xd8] sm:$0xf] %v1711
                  %v1713 = vld [vmem:[%s1655 + $0x70] sm:$0xf]
                  %1714 = vst [vmem:[%s1656 + $0xe0] sm:$0xf] %v1713
                  %v1715 = vld [vmem:[%s1655 + $0x74] sm:$0xf]
                  %1716 = vst [vmem:[%s1656 + $0xe8] sm:$0xf] %v1715
                  %v1717 = vld [vmem:[%s1655 + $0x78] sm:$0xf]
                  %1718 = vst [vmem:[%s1656 + $0xf0] sm:$0xf] %v1717
                  %v1719 = vld [vmem:[%s1655 + $0x7c] sm:$0xf]
                  %1720 = vst [vmem:[%s1656 + $0xf8] sm:$0xf] %v1719
                  %v1721 = vld [vmem:[%s1655 + $0x80] sm:$0xf]
                  %1722 = vst [vmem:[%s1656 + $0x100] sm:$0xf] %v1721
                  %v1723 = vld [vmem:[%s1655 + $0x84] sm:$0xf]
                  %1724 = vst [vmem:[%s1656 + $0x108] sm:$0xf] %v1723
                  %v1725 = vld [vmem:[%s1655 + $0x88] sm:$0xf]
                  %1726 = vst [vmem:[%s1656 + $0x110] sm:$0xf] %v1725
                  %v1727 = vld [vmem:[%s1655 + $0x8c] sm:$0xf]
                  %1728 = vst [vmem:[%s1656 + $0x118] sm:$0xf] %v1727
                  %v1729 = vld [vmem:[%s1655 + $0x90] sm:$0xf]
                  %1730 = vst [vmem:[%s1656 + $0x120] sm:$0xf] %v1729
                  %v1731 = vld [vmem:[%s1655 + $0x94] sm:$0xf]
                  %1732 = vst [vmem:[%s1656 + $0x128] sm:$0xf] %v1731
                  %v1733 = vld [vmem:[%s1655 + $0x98] sm:$0xf]
                  %1734 = vst [vmem:[%s1656 + $0x130] sm:$0xf] %v1733
                  %v1735 = vld [vmem:[%s1655 + $0x9c] sm:$0xf]
                  %1736 = vst [vmem:[%s1656 + $0x138] sm:$0xf] %v1735
                  %v1737 = vld [vmem:[%s1655 + $0xa0] sm:$0xf]
                  %1738 = vst [vmem:[%s1656 + $0x140] sm:$0xf] %v1737
                  %v1739 = vld [vmem:[%s1655 + $0xa4] sm:$0xf]
                  %1740 = vst [vmem:[%s1656 + $0x148] sm:$0xf] %v1739
                  %v1741 = vld [vmem:[%s1655 + $0xa8] sm:$0xf]
                  %1742 = vst [vmem:[%s1656 + $0x150] sm:$0xf] %v1741
                  %v1743 = vld [vmem:[%s1655 + $0xac] sm:$0xf]
                  %1744 = vst [vmem:[%s1656 + $0x158] sm:$0xf] %v1743
                  %v1745 = vld [vmem:[%s1655 + $0xb0] sm:$0xf]
                  %1746 = vst [vmem:[%s1656 + $0x160] sm:$0xf] %v1745
                  %v1747 = vld [vmem:[%s1655 + $0xb4] sm:$0xf]
                  %1748 = vst [vmem:[%s1656 + $0x168] sm:$0xf] %v1747
                  %v1749 = vld [vmem:[%s1655 + $0xb8] sm:$0xf]
                  %1750 = vst [vmem:[%s1656 + $0x170] sm:$0xf] %v1749
                  %v1751 = vld [vmem:[%s1655 + $0xbc] sm:$0xf]
                  %1752 = vst [vmem:[%s1656 + $0x178] sm:$0xf] %v1751
                  %v1753 = vld [vmem:[%s1655 + $0xc0] sm:$0xf]
                  %1754 = vst [vmem:[%s1656 + $0x180] sm:$0xf] %v1753
                  %v1755 = vld [vmem:[%s1655 + $0xc4] sm:$0xf]
                  %1756 = vst [vmem:[%s1656 + $0x188] sm:$0xf] %v1755
                  %v1757 = vld [vmem:[%s1655 + $0xc8] sm:$0xf]
                  %1758 = vst [vmem:[%s1656 + $0x190] sm:$0xf] %v1757
                  %v1759 = vld [vmem:[%s1655 + $0xcc] sm:$0xf]
                  %1760 = vst [vmem:[%s1656 + $0x198] sm:$0xf] %v1759
                  %v1761 = vld [vmem:[%s1655 + $0xd0] sm:$0xf]
                  %1762 = vst [vmem:[%s1656 + $0x1a0] sm:$0xf] %v1761
                  %v1763 = vld [vmem:[%s1655 + $0xd4] sm:$0xf]
                  %1764 = vst [vmem:[%s1656 + $0x1a8] sm:$0xf] %v1763
                  %v1765 = vld [vmem:[%s1655 + $0xd8] sm:$0xf]
                  %1766 = vst [vmem:[%s1656 + $0x1b0] sm:$0xf] %v1765
                  %v1767 = vld [vmem:[%s1655 + $0xdc] sm:$0xf]
                  %1768 = vst [vmem:[%s1656 + $0x1b8] sm:$0xf] %v1767
                  %v1769 = vld [vmem:[%s1655 + $0xe0] sm:$0xf]
                  %1770 = vst [vmem:[%s1656 + $0x1c0] sm:$0xf] %v1769
                  %v1771 = vld [vmem:[%s1655 + $0xe4] sm:$0xf]
                  %1772 = vst [vmem:[%s1656 + $0x1c8] sm:$0xf] %v1771
                  %v1773 = vld [vmem:[%s1655 + $0xe8] sm:$0xf]
                  %1774 = vst [vmem:[%s1656 + $0x1d0] sm:$0xf] %v1773
                  %v1775 = vld [vmem:[%s1655 + $0xec] sm:$0xf]
                  %1776 = vst [vmem:[%s1656 + $0x1d8] sm:$0xf] %v1775
                  %v1777 = vld [vmem:[%s1655 + $0xf0] sm:$0xf]
                  %1778 = vst [vmem:[%s1656 + $0x1e0] sm:$0xf] %v1777
                  %v1779 = vld [vmem:[%s1655 + $0xf4] sm:$0xf]
                  %1780 = vst [vmem:[%s1656 + $0x1e8] sm:$0xf] %v1779
                  %v1781 = vld [vmem:[%s1655 + $0xf8] sm:$0xf]
                  %1782 = vst [vmem:[%s1656 + $0x1f0] sm:$0xf] %v1781
                  %v1783 = vld [vmem:[%s1655 + $0xfc] sm:$0xf]
                  %1784 = vst [vmem:[%s1656 + $0x1f8] sm:$0xf] %v1783
                $region112: #{srm_fl_forward.9} parent=99 // loop_footer
                  %s1654 = sadd.s32 1, %s1650
                $region113: #{srm_fl_forward.9} parent=99 // loop_footer_branch
                  %1649 = sbr.rel target = $region109
                $region114: #{srm_fl_forward.9} parent=99 // loop_exit
                  _
              $region100: #{srm_fl_forward.9} parent=84 // pred_fallthru
                _
            $region85: #{srm_fl_forward.9} parent=80 // pred_fallthru
              _
            // Predicated region
            $region86: #{srm_fl_forward.9} parent=80 // pred_check
              _
            $region87: #{srm_fl_forward.9} parent=80 // pred_check_branch
              %1500 = sbr.rel (0) target = $region89
            $region88: #{srm_fl_forward.9} parent=80 // pred_region
              loop: start=0, step=1, limit=1
              $region90: #{srm_fl_forward.9} parent=88 // loop_pre_header
                _
              $region91: #{srm_fl_forward.9} parent=88 // loop_header
                %s1503 = sphi 0, %s1507
                %p1504 = scmp.ge.s32.totalorder %s1503, 1
                %s1508 = sphi %s1485, %s1485
                %s1509 = sphi %s1494, %s1494
              $region92: #{srm_fl_forward.9} parent=88 // loop_header_branch
                %1506 = sbr.rel (%p1504) target = $region96
              $region93: #{srm_fl_forward.9} parent=88 // loop_body
                %v1510 = vld [vmem:[%s1508] sm:$0xf]
                %1511 = vst [vmem:[%s1509] sm:$0xf] %v1510
                %v1512 = vld [vmem:[%s1508 + $0x4] sm:$0xf]
                %1513 = vst [vmem:[%s1509 + $0x8] sm:$0xf] %v1512
                %v1514 = vld [vmem:[%s1508 + $0x8] sm:$0xf]
                %1515 = vst [vmem:[%s1509 + $0x10] sm:$0xf] %v1514
                %v1516 = vld [vmem:[%s1508 + $0xc] sm:$0xf]
                %1517 = vst [vmem:[%s1509 + $0x18] sm:$0xf] %v1516
                %v1518 = vld [vmem:[%s1508 + $0x10] sm:$0xf]
                %1519 = vst [vmem:[%s1509 + $0x20] sm:$0xf] %v1518
                %v1520 = vld [vmem:[%s1508 + $0x14] sm:$0xf]
                %1521 = vst [vmem:[%s1509 + $0x28] sm:$0xf] %v1520
                %v1522 = vld [vmem:[%s1508 + $0x18] sm:$0xf]
                %1523 = vst [vmem:[%s1509 + $0x30] sm:$0xf] %v1522
                %v1524 = vld [vmem:[%s1508 + $0x1c] sm:$0xf]
                %1525 = vst [vmem:[%s1509 + $0x38] sm:$0xf] %v1524
                %v1526 = vld [vmem:[%s1508 + $0x20] sm:$0xf]
                %1527 = vst [vmem:[%s1509 + $0x40] sm:$0xf] %v1526
                %v1528 = vld [vmem:[%s1508 + $0x24] sm:$0xf]
                %1529 = vst [vmem:[%s1509 + $0x48] sm:$0xf] %v1528
                %v1530 = vld [vmem:[%s1508 + $0x28] sm:$0xf]
                %1531 = vst [vmem:[%s1509 + $0x50] sm:$0xf] %v1530
                %v1532 = vld [vmem:[%s1508 + $0x2c] sm:$0xf]
                %1533 = vst [vmem:[%s1509 + $0x58] sm:$0xf] %v1532
                %v1534 = vld [vmem:[%s1508 + $0x30] sm:$0xf]
                %1535 = vst [vmem:[%s1509 + $0x60] sm:$0xf] %v1534
                %v1536 = vld [vmem:[%s1508 + $0x34] sm:$0xf]
                %1537 = vst [vmem:[%s1509 + $0x68] sm:$0xf] %v1536
                %v1538 = vld [vmem:[%s1508 + $0x38] sm:$0xf]
                %1539 = vst [vmem:[%s1509 + $0x70] sm:$0xf] %v1538
                %v1540 = vld [vmem:[%s1508 + $0x3c] sm:$0xf]
                %1541 = vst [vmem:[%s1509 + $0x78] sm:$0xf] %v1540
                %v1542 = vld [vmem:[%s1508 + $0x40] sm:$0xf]
                %1543 = vst [vmem:[%s1509 + $0x80] sm:$0xf] %v1542
                %v1544 = vld [vmem:[%s1508 + $0x44] sm:$0xf]
                %1545 = vst [vmem:[%s1509 + $0x88] sm:$0xf] %v1544
                %v1546 = vld [vmem:[%s1508 + $0x48] sm:$0xf]
                %1547 = vst [vmem:[%s1509 + $0x90] sm:$0xf] %v1546
                %v1548 = vld [vmem:[%s1508 + $0x4c] sm:$0xf]
                %1549 = vst [vmem:[%s1509 + $0x98] sm:$0xf] %v1548
                %v1550 = vld [vmem:[%s1508 + $0x50] sm:$0xf]
                %1551 = vst [vmem:[%s1509 + $0xa0] sm:$0xf] %v1550
                %v1552 = vld [vmem:[%s1508 + $0x54] sm:$0xf]
                %1553 = vst [vmem:[%s1509 + $0xa8] sm:$0xf] %v1552
                %v1554 = vld [vmem:[%s1508 + $0x58] sm:$0xf]
                %1555 = vst [vmem:[%s1509 + $0xb0] sm:$0xf] %v1554
                %v1556 = vld [vmem:[%s1508 + $0x5c] sm:$0xf]
                %1557 = vst [vmem:[%s1509 + $0xb8] sm:$0xf] %v1556
                %v1558 = vld [vmem:[%s1508 + $0x60] sm:$0xf]
                %1559 = vst [vmem:[%s1509 + $0xc0] sm:$0xf] %v1558
                %v1560 = vld [vmem:[%s1508 + $0x64] sm:$0xf]
                %1561 = vst [vmem:[%s1509 + $0xc8] sm:$0xf] %v1560
                %v1562 = vld [vmem:[%s1508 + $0x68] sm:$0xf]
                %1563 = vst [vmem:[%s1509 + $0xd0] sm:$0xf] %v1562
                %v1564 = vld [vmem:[%s1508 + $0x6c] sm:$0xf]
                %1565 = vst [vmem:[%s1509 + $0xd8] sm:$0xf] %v1564
                %v1566 = vld [vmem:[%s1508 + $0x70] sm:$0xf]
                %1567 = vst [vmem:[%s1509 + $0xe0] sm:$0xf] %v1566
                %v1568 = vld [vmem:[%s1508 + $0x74] sm:$0xf]
                %1569 = vst [vmem:[%s1509 + $0xe8] sm:$0xf] %v1568
                %v1570 = vld [vmem:[%s1508 + $0x78] sm:$0xf]
                %1571 = vst [vmem:[%s1509 + $0xf0] sm:$0xf] %v1570
                %v1572 = vld [vmem:[%s1508 + $0x7c] sm:$0xf]
                %1573 = vst [vmem:[%s1509 + $0xf8] sm:$0xf] %v1572
                %v1574 = vld [vmem:[%s1508 + $0x80] sm:$0xf]
                %1575 = vst [vmem:[%s1509 + $0x100] sm:$0xf] %v1574
                %v1576 = vld [vmem:[%s1508 + $0x84] sm:$0xf]
                %1577 = vst [vmem:[%s1509 + $0x108] sm:$0xf] %v1576
                %v1578 = vld [vmem:[%s1508 + $0x88] sm:$0xf]
                %1579 = vst [vmem:[%s1509 + $0x110] sm:$0xf] %v1578
                %v1580 = vld [vmem:[%s1508 + $0x8c] sm:$0xf]
                %1581 = vst [vmem:[%s1509 + $0x118] sm:$0xf] %v1580
                %v1582 = vld [vmem:[%s1508 + $0x90] sm:$0xf]
                %1583 = vst [vmem:[%s1509 + $0x120] sm:$0xf] %v1582
                %v1584 = vld [vmem:[%s1508 + $0x94] sm:$0xf]
                %1585 = vst [vmem:[%s1509 + $0x128] sm:$0xf] %v1584
                %v1586 = vld [vmem:[%s1508 + $0x98] sm:$0xf]
                %1587 = vst [vmem:[%s1509 + $0x130] sm:$0xf] %v1586
                %v1588 = vld [vmem:[%s1508 + $0x9c] sm:$0xf]
                %1589 = vst [vmem:[%s1509 + $0x138] sm:$0xf] %v1588
                %v1590 = vld [vmem:[%s1508 + $0xa0] sm:$0xf]
                %1591 = vst [vmem:[%s1509 + $0x140] sm:$0xf] %v1590
                %v1592 = vld [vmem:[%s1508 + $0xa4] sm:$0xf]
                %1593 = vst [vmem:[%s1509 + $0x148] sm:$0xf] %v1592
                %v1594 = vld [vmem:[%s1508 + $0xa8] sm:$0xf]
                %1595 = vst [vmem:[%s1509 + $0x150] sm:$0xf] %v1594
                %v1596 = vld [vmem:[%s1508 + $0xac] sm:$0xf]
                %1597 = vst [vmem:[%s1509 + $0x158] sm:$0xf] %v1596
                %v1598 = vld [vmem:[%s1508 + $0xb0] sm:$0xf]
                %1599 = vst [vmem:[%s1509 + $0x160] sm:$0xf] %v1598
                %v1600 = vld [vmem:[%s1508 + $0xb4] sm:$0xf]
                %1601 = vst [vmem:[%s1509 + $0x168] sm:$0xf] %v1600
                %v1602 = vld [vmem:[%s1508 + $0xb8] sm:$0xf]
                %1603 = vst [vmem:[%s1509 + $0x170] sm:$0xf] %v1602
                %v1604 = vld [vmem:[%s1508 + $0xbc] sm:$0xf]
                %1605 = vst [vmem:[%s1509 + $0x178] sm:$0xf] %v1604
                %v1606 = vld [vmem:[%s1508 + $0xc0] sm:$0xf]
                %1607 = vst [vmem:[%s1509 + $0x180] sm:$0xf] %v1606
                %v1608 = vld [vmem:[%s1508 + $0xc4] sm:$0xf]
                %1609 = vst [vmem:[%s1509 + $0x188] sm:$0xf] %v1608
                %v1610 = vld [vmem:[%s1508 + $0xc8] sm:$0xf]
                %1611 = vst [vmem:[%s1509 + $0x190] sm:$0xf] %v1610
                %v1612 = vld [vmem:[%s1508 + $0xcc] sm:$0xf]
                %1613 = vst [vmem:[%s1509 + $0x198] sm:$0xf] %v1612
                %v1614 = vld [vmem:[%s1508 + $0xd0] sm:$0xf]
                %1615 = vst [vmem:[%s1509 + $0x1a0] sm:$0xf] %v1614
                %v1616 = vld [vmem:[%s1508 + $0xd4] sm:$0xf]
                %1617 = vst [vmem:[%s1509 + $0x1a8] sm:$0xf] %v1616
                %v1618 = vld [vmem:[%s1508 + $0xd8] sm:$0xf]
                %1619 = vst [vmem:[%s1509 + $0x1b0] sm:$0xf] %v1618
                %v1620 = vld [vmem:[%s1508 + $0xdc] sm:$0xf]
                %1621 = vst [vmem:[%s1509 + $0x1b8] sm:$0xf] %v1620
                %v1622 = vld [vmem:[%s1508 + $0xe0] sm:$0xf]
                %1623 = vst [vmem:[%s1509 + $0x1c0] sm:$0xf] %v1622
                %v1624 = vld [vmem:[%s1508 + $0xe4] sm:$0xf]
                %1625 = vst [vmem:[%s1509 + $0x1c8] sm:$0xf] %v1624
                %v1626 = vld [vmem:[%s1508 + $0xe8] sm:$0xf]
                %1627 = vst [vmem:[%s1509 + $0x1d0] sm:$0xf] %v1626
                %v1628 = vld [vmem:[%s1508 + $0xec] sm:$0xf]
                %1629 = vst [vmem:[%s1509 + $0x1d8] sm:$0xf] %v1628
                %v1630 = vld [vmem:[%s1508 + $0xf0] sm:$0xf]
                %1631 = vst [vmem:[%s1509 + $0x1e0] sm:$0xf] %v1630
                %v1632 = vld [vmem:[%s1508 + $0xf4] sm:$0xf]
                %1633 = vst [vmem:[%s1509 + $0x1e8] sm:$0xf] %v1632
                %v1634 = vld [vmem:[%s1508 + $0xf8] sm:$0xf]
                %1635 = vst [vmem:[%s1509 + $0x1f0] sm:$0xf] %v1634
                %v1636 = vld [vmem:[%s1508 + $0xfc] sm:$0xf]
                %1637 = vst [vmem:[%s1509 + $0x1f8] sm:$0xf] %v1636
              $region94: #{srm_fl_forward.9} parent=88 // loop_footer
                %s1507 = sadd.s32 1, %s1503
              $region95: #{srm_fl_forward.9} parent=88 // loop_footer_branch
                %1502 = sbr.rel target = $region91
              $region96: #{srm_fl_forward.9} parent=88 // loop_exit
                _
            $region89: #{srm_fl_forward.9} parent=80 // pred_fallthru
              _
          $region81: #{srm_fl_forward.9} parent=76 // pred_fallthru
            _
          %1785 = vnop
        $region77: #{srm_fl_forward.9} parent=68 // pred_fallthru
          _
      $region69: #{srm_fl_forward.9} parent=5 // pred_fallthru
        _
      %p1786 = scmp.le.s32.totalorder 2, %s9
      // Predicated region
      $region115: #{srm_fl_forward.9} parent=5 // pred_check
        %p1787 = pneg %p1786
      $region116: #{srm_fl_forward.9} parent=5 // pred_check_branch
        %1789 = sbr.rel (%p1787) target = $region118
      $region117: #{srm_fl_forward.9} parent=5 // pred_region
        %s1790 = ssub.s32 %s9, 2
        // Predicated region
        $region119: #{srm_fl_forward.9} parent=117 // pred_check
          %p1791 = pneg %p145
        $region120: #{srm_fl_forward.9} parent=117 // pred_check_branch
          %1793 = sbr.rel (%p1791) target = $region122
        $region121: #{srm_fl_forward.9} parent=117 // pred_region
          %s1794 = sand.u32 %s130, 1
          %s1795 = sand.u32 %s130, 1
          %s1796 = smul.addr %s1795, 256
          %s1797 = scalar_lea.vmem [#allocation3], %s1796
        $region122: #{srm_fl_forward.9} parent=117 // pred_fallthru
          _
      $region118: #{srm_fl_forward.9} parent=5 // pred_fallthru
        _
    $region6: #{srm_fl_forward.9} parent=1 // loop_footer
      %s13 = sadd.s32 1, %s9
    $region7: #{srm_fl_forward.9} parent=1 // loop_footer_branch
      %8 = sbr.rel target = $region3
    $region8: #{srm_fl_forward.9} parent=1 // loop_exit
      _

// kernel: srm_fl_forward.7
$region0: #{srm_fl_forward.7}
  #allocation0 [shape = 'u32[]', space=smem, size = 0x4, offset = 0x4, fixed_abs, tag = 'smem constant byte address 0x4 - core index']
  #allocation1 [shape = 'u32[144,128]{1,0:T(1,128)}', space=vmem, size = 0x12000, scoped, tag = 'internal scratch']
  %s0 = inlined_call_operand.vmem [shape: bf16[2,16,16,256], index: 0, kind: input, shape index: {}, may-alias: {0,1,2}]
  %s1 = inlined_call_operand.vmem [shape: bf16[2,16,16,256], index: 1, kind: input, shape index: {}, may-alias: {0,1,2}]
  %s2 = inlined_call_operand.vmem [shape: bf16[2,16,16,256], index: 2, kind: input, shape index: {}, may-alias: {0,1,2}]
  %s3 = inlined_call_operand.vmem [shape: bf16[2,3,384,128], index: 3, kind: input, shape index: {}]
  %s4 = inlined_call_operand.vmem [shape: f32[2,1,128], index: 4, kind: input, shape index: {}]
  %s5 = inlined_call_operand.vmem [shape: bf16[2,16,16,256], index: 5, kind: output, shape index: {}]
  %s6 = sld [smem:[#allocation0]]
  $region213: #{srm_fl_forward.7} parent=0
    _
  %s8 = ssub.s32 1, %s6
  %s9 = scalar_select 0, %s8, %s6
  $region1: #{srm_fl_forward.7} parent=0
    #allocation2 [shape = 'u8[65536]{0}', space=vmem, size = 0x10000, scoped, tag = 'input window, operand 0']
    #allocation3 [shape = 'u8[8192]{0}', space=vmem, size = 0x2000, scoped, tag = 'input window, operand 1']
    #allocation4 [shape = 'u8[8192]{0}', space=vmem, size = 0x2000, scoped, tag = 'input window, operand 2']
    #allocation5 [shape = 'u8[65536]{0}', space=vmem, size = 0x10000, scoped, tag = 'output window, operand 0']
    loop: start=0, step=1, limit=10
    $region2: #{srm_fl_forward.7} parent=1 // loop_pre_header
      _
    $region3: #{srm_fl_forward.7} parent=1 // loop_header
      %s11 = sphi 0, %s15
      %p12 = scmp.ge.s32.totalorder %s11, 10
      %s18 = sphi 0, %s44
      %s19 = sphi 0, %s40
      %s20 = sphi 0, %s36
      %s21 = sphi 0, %s32
      %s22 = sphi 0, %s18
      %s23 = sphi 0, %s19
      %s24 = sphi 0, %s20
      %s25 = sphi 0, %s21
      %s26 = sphi 0, %s22
      %s27 = sphi 0, %s23
      %s28 = sphi 0, %s24
      %s29 = sphi 0, %s25
      %s51 = sphi 0, %s53
      %s54 = sphi 0, %s51
      %s55 = sphi 0, %s54
      %s71 = sphi 0, %s55
      %s89 = sphi 0, %s91
      %s92 = sphi 0, %s89
      %s93 = sphi 0, %s92
      %s109 = sphi 0, %s93
      %s127 = sphi 0, %s129
      %s130 = sphi 0, %s127
      %s131 = sphi 0, %s130
      %s147 = sphi 0, %s131
      %s155 = sphi 0, %s157
      %s158 = sphi 0, %s155
      %s159 = sphi 0, %s158
      %s175 = sphi 0, %s159
      %s183 = sphi 0, %s185
      %s186 = sphi 0, %s183
      %s187 = sphi 0, %s186
      %s203 = sphi 0, %s187
      %s215 = sphi 0, %s217
      %s218 = sphi 0, %s215
      %s219 = sphi 0, %s218
      %s235 = sphi 0, %s219
    $region4: #{srm_fl_forward.7} parent=1 // loop_header_branch
      %14 = sbr.rel (%p12) target = $region8
    $region5: #{srm_fl_forward.7} parent=1 // loop_body
      %s16 = ssub.s32 %s11, 1
      %s17 = ssub.s32 %s11, 2
      %s30 = sadd.s32 1, %s21
      %p31 = scmp.ge.s32.totalorder %s30, 2
      %s32 = scalar_select %p31, 0, %s30
      %s33 = sadd.s32 1, %s20
      %s34 = scalar_select %p31, %s33, %s20
      %p35 = scmp.ge.s32.totalorder %s34, 1
      %s36 = scalar_select %p35, 0, %s34
      %s37 = sadd.s32 1, %s19
      %s38 = scalar_select %p35, %s37, %s19
      %p39 = scmp.ge.s32.totalorder %s38, 2
      %s40 = scalar_select %p39, 0, %s38
      %s41 = sadd.s32 1, %s18
      %s42 = scalar_select %p39, %s41, %s18
      %p43 = scmp.ge.s32.totalorder %s42, 2
      %s44 = scalar_select %p43, 0, %s42
      %s45 = ssub.s32 %s18, %s44
      %s46 = ssub.s32 %s21, %s32
      %s47 = sor.u32 %s45, %s46
      %s48 = ssub.s32 %s19, %s40
      %s49 = sor.u32 %s47, %s48
      %p50 = scmp.eq.s32.totalorder %s49, 0
      %s52 = sadd.s32 %s51, 1
      %s53 = scalar_select %p50, %s51, %s52
      %p56 = pneg %p50
      %p57 = scmp.eq.s32.totalorder %s11, 7
      %p58 = por %p56, %p57
      %p59 = scmp.ne.s32.totalorder %s51, %s54
      %p60 = scmp.eq.s32.totalorder %s11, 0
      %p61 = por %p59, %p60
      %p62 = scmp.ne.s32.totalorder %s51, %s54
      %p63 = scmp.eq.s32.totalorder %s16, 7
      %p64 = por %p62, %p63
      %p65 = scmp.ne.s32.totalorder %s54, %s55
      %p66 = scmp.eq.s32.totalorder %s16, 0
      %p67 = por %p65, %p66
      %p68 = scmp.ne.s32.totalorder %s54, %s55
      %p69 = scmp.eq.s32.totalorder %s17, 7
      %p70 = por %p68, %p69
      %p72 = scmp.ne.s32.totalorder %s55, %s71
      %p73 = scmp.eq.s32.totalorder %s17, 0
      %p74 = por %p72, %p73
      %s75 = smul.u32 %s21, 8
      %s76 = ssub.s32 %s75, 1
      %p77 = scmp.gt.s32.totalorder %s76, 0
      %s78 = scalar_select %p77, %s76, 0
      %s79 = smul.u32 %s32, 8
      %s80 = ssub.s32 %s79, 1
      %p81 = scmp.gt.s32.totalorder %s80, 0
      %s82 = scalar_select %p81, %s80, 0
      %s83 = ssub.s32 %s18, %s44
      %s84 = ssub.s32 %s78, %s82
      %s85 = sor.u32 %s83, %s84
      %s86 = ssub.s32 %s19, %s40
      %s87 = sor.u32 %s85, %s86
      %p88 = scmp.eq.s32.totalorder %s87, 0
      %s90 = sadd.s32 %s89, 1
      %s91 = scalar_select %p88, %s89, %s90
      %p94 = pneg %p88
      %p95 = scmp.eq.s32.totalorder %s11, 7
      %p96 = por %p94, %p95
      %p97 = scmp.ne.s32.totalorder %s89, %s92
      %p98 = scmp.eq.s32.totalorder %s11, 0
      %p99 = por %p97, %p98
      %p100 = scmp.ne.s32.totalorder %s89, %s92
      %p101 = scmp.eq.s32.totalorder %s16, 7
      %p102 = por %p100, %p101
      %p103 = scmp.ne.s32.totalorder %s92, %s93
      %p104 = scmp.eq.s32.totalorder %s16, 0
      %p105 = por %p103, %p104
      %p106 = scmp.ne.s32.totalorder %s92, %s93
      %p107 = scmp.eq.s32.totalorder %s17, 7
      %p108 = por %p106, %p107
      %p110 = scmp.ne.s32.totalorder %s93, %s109
      %p111 = scmp.eq.s32.totalorder %s17, 0
      %p112 = por %p110, %p111
      %s113 = smul.u32 %s21, 8
      %s114 = sadd.s32 %s113, 8
      %p115 = scmp.lt.s32.totalorder %s114, 15
      %s116 = scalar_select %p115, %s114, 15
      %s117 = smul.u32 %s32, 8
      %s118 = sadd.s32 %s117, 8
      %p119 = scmp.lt.s32.totalorder %s118, 15
      %s120 = scalar_select %p119, %s118, 15
      %s121 = ssub.s32 %s18, %s44
      %s122 = ssub.s32 %s116, %s120
      %s123 = sor.u32 %s121, %s122
      %s124 = ssub.s32 %s19, %s40
      %s125 = sor.u32 %s123, %s124
      %p126 = scmp.eq.s32.totalorder %s125, 0
      %s128 = sadd.s32 %s127, 1
      %s129 = scalar_select %p126, %s127, %s128
      %p132 = pneg %p126
      %p133 = scmp.eq.s32.totalorder %s11, 7
      %p134 = por %p132, %p133
      %p135 = scmp.ne.s32.totalorder %s127, %s130
      %p136 = scmp.eq.s32.totalorder %s11, 0
      %p137 = por %p135, %p136
      %p138 = scmp.ne.s32.totalorder %s127, %s130
      %p139 = scmp.eq.s32.totalorder %s16, 7
      %p140 = por %p138, %p139
      %p141 = scmp.ne.s32.totalorder %s130, %s131
      %p142 = scmp.eq.s32.totalorder %s16, 0
      %p143 = por %p141, %p142
      %p144 = scmp.ne.s32.totalorder %s130, %s131
      %p145 = scmp.eq.s32.totalorder %s17, 7
      %p146 = por %p144, %p145
      %p148 = scmp.ne.s32.totalorder %s131, %s147
      %p149 = scmp.eq.s32.totalorder %s17, 0
      %p150 = por %p148, %p149
      %s151 = ssub.s32 %s19, %s40
      %s152 = ssub.s32 %s20, %s36
      %s153 = sor.u32 %s151, %s152
      %p154 = scmp.eq.s32.totalorder %s153, 0
      %s156 = sadd.s32 %s155, 1
      %s157 = scalar_select %p154, %s155, %s156
      %p160 = pneg %p154
      %p161 = scmp.eq.s32.totalorder %s11, 7
      %p162 = por %p160, %p161
      %p163 = scmp.ne.s32.totalorder %s155, %s158
      %p164 = scmp.eq.s32.totalorder %s11, 0
      %p165 = por %p163, %p164
      %p166 = scmp.ne.s32.totalorder %s155, %s158
      %p167 = scmp.eq.s32.totalorder %s16, 7
      %p168 = por %p166, %p167
      %p169 = scmp.ne.s32.totalorder %s158, %s159
      %p170 = scmp.eq.s32.totalorder %s16, 0
      %p171 = por %p169, %p170
      %p172 = scmp.ne.s32.totalorder %s158, %s159
      %p173 = scmp.eq.s32.totalorder %s17, 7
      %p174 = por %p172, %p173
      %p176 = scmp.ne.s32.totalorder %s159, %s175
      %p177 = scmp.eq.s32.totalorder %s17, 0
      %p178 = por %p176, %p177
      %s179 = ssub.s32 %s19, %s40
      %s180 = ssub.s32 %s20, %s36
      %s181 = sor.u32 %s179, %s180
      %p182 = scmp.eq.s32.totalorder %s181, 0
      %s184 = sadd.s32 %s183, 1
      %s185 = scalar_select %p182, %s183, %s184
      %p188 = pneg %p182
      %p189 = scmp.eq.s32.totalorder %s11, 7
      %p190 = por %p188, %p189
      %p191 = scmp.ne.s32.totalorder %s183, %s186
      %p192 = scmp.eq.s32.totalorder %s11, 0
      %p193 = por %p191, %p192
      %p194 = scmp.ne.s32.totalorder %s183, %s186
      %p195 = scmp.eq.s32.totalorder %s16, 7
      %p196 = por %p194, %p195
      %p197 = scmp.ne.s32.totalorder %s186, %s187
      %p198 = scmp.eq.s32.totalorder %s16, 0
      %p199 = por %p197, %p198
      %p200 = scmp.ne.s32.totalorder %s186, %s187
      %p201 = scmp.eq.s32.totalorder %s17, 7
      %p202 = por %p200, %p201
      %p204 = scmp.ne.s32.totalorder %s187, %s203
      %p205 = scmp.eq.s32.totalorder %s17, 0
      %p206 = por %p204, %p205
      %s207 = sadd.s32 %s19, %s20
      %s208 = sadd.s32 %s40, %s36
      %s209 = ssub.s32 %s18, %s44
      %s210 = ssub.s32 %s21, %s32
      %s211 = sor.u32 %s209, %s210
      %s212 = ssub.s32 %s207, %s208
      %s213 = sor.u32 %s211, %s212
      %p214 = scmp.eq.s32.totalorder %s213, 0
      %s216 = sadd.s32 %s215, 1
      %s217 = scalar_select %p214, %s215, %s216
      %p220 = pneg %p214
      %p221 = scmp.eq.s32.totalorder %s11, 7
      %p222 = por %p220, %p221
      %p223 = scmp.ne.s32.totalorder %s215, %s218
      %p224 = scmp.eq.s32.totalorder %s11, 0
      %p225 = por %p223, %p224
      %p226 = scmp.ne.s32.totalorder %s215, %s218
      %p227 = scmp.eq.s32.totalorder %s16, 7
      %p228 = por %p226, %p227
      %p229 = scmp.ne.s32.totalorder %s218, %s219
      %p230 = scmp.eq.s32.totalorder %s16, 0
      %p231 = por %p229, %p230
      %p232 = scmp.ne.s32.totalorder %s218, %s219
      %p233 = scmp.eq.s32.totalorder %s17, 7
      %p234 = por %p232, %p233
      %p236 = scmp.ne.s32.totalorder %s219, %s235
      %p237 = scmp.eq.s32.totalorder %s17, 0
      %p238 = por %p236, %p237
      %p239 = scmp.le.s32.totalorder 1, %s11
      %p240 = scmp.lt.s32.totalorder %s11, 9
      %p241 = pnand %p239, %p240
      %p242 = pneg %p241
      // Predicated region
      $region9: #{srm_fl_forward.7} parent=5 // pred_check
        _
      $region10: #{srm_fl_forward.7} parent=5 // pred_check_branch
        %244 = sbr.rel (%p241) target = $region12
      $region11: #{srm_fl_forward.7} parent=5 // pred_region
        %s245 = ssub.s32 %s11, 1
      $region12: #{srm_fl_forward.7} parent=5 // pred_fallthru
        _
      %p246 = scmp.lt.s32.totalorder %s11, 8
      // Predicated region
      $region13: #{srm_fl_forward.7} parent=5 // pred_check
        %p247 = pneg %p246
      $region14: #{srm_fl_forward.7} parent=5 // pred_check_branch
        %249 = sbr.rel (%p247) target = $region16
      $region15: #{srm_fl_forward.7} parent=5 // pred_region
        // Predicated region
        $region17: #{srm_fl_forward.7} parent=15 // pred_check
          %p250 = pneg %p61
        $region18: #{srm_fl_forward.7} parent=15 // pred_check_branch
          %252 = sbr.rel (%p250) target = $region20
        $region19: #{srm_fl_forward.7} parent=15 // pred_region
          %s253 = sand.u32 %s51, 1
          %s254 = sand.u32 %s51, 1
          %s255 = smul.addr %s254, 64
          %s256 = scalar_lea.vmem [#allocation2], %s255
          %s257 = smul.u32 8, %s21
          %s258 = smul.addr %s257, 4
          %s259 = sadd.s32 %s19, %s258
          %s260 = smul.addr %s18, 64
          %s261 = sadd.s32 %s259, %s260
          %s262 = smul.addr %s261, 4
          %s263 = scalar_lea.vmem %s0, %s262
          // Predicated region
          $region21: #{srm_fl_forward.7} parent=19 // pred_check
            _
          $region22: #{srm_fl_forward.7} parent=19 // pred_check_branch
            %265 = sbr.rel (0) target = $region24
          $region23: #{srm_fl_forward.7} parent=19 // pred_region
            // Predicated region
            $region25: #{srm_fl_forward.7} parent=23 // pred_check
              _
            $region26: #{srm_fl_forward.7} parent=23 // pred_check_branch
              %267 = sbr.rel target = $region28
            $region27: #{srm_fl_forward.7} parent=23 // pred_region
              // Predicated region
              $region40: #{srm_fl_forward.7} parent=27 // pred_check
                _
              $region41: #{srm_fl_forward.7} parent=27 // pred_check_branch
                %312 = sbr.rel (0) target = $region43
              $region42: #{srm_fl_forward.7} parent=27 // pred_region
                loop: start=0, step=1, limit=1
                $region44: #{srm_fl_forward.7} parent=42 // loop_pre_header
                  _
                $region45: #{srm_fl_forward.7} parent=42 // loop_header
                  %s314 = sphi 0, %s318
                  %p315 = scmp.ge.s32.totalorder %s314, 1
                  %s319 = sphi %s263, %s263
                  %s320 = sphi %s256, %s256
                $region46: #{srm_fl_forward.7} parent=42 // loop_header_branch
                  %317 = sbr.rel (%p315) target = $region50
                $region47: #{srm_fl_forward.7} parent=42 // loop_body
                  _
                $region48: #{srm_fl_forward.7} parent=42 // loop_footer
                  %s318 = sadd.s32 1, %s314
                $region49: #{srm_fl_forward.7} parent=42 // loop_footer_branch
                  %313 = sbr.rel target = $region45
                $region50: #{srm_fl_forward.7} parent=42 // loop_exit
                  _
                loop: start=0, step=1, limit=1
                $region51: #{srm_fl_forward.7} parent=42 // loop_pre_header
                  _
                $region52: #{srm_fl_forward.7} parent=42 // loop_header
                  %s323 = sphi 0, %s327
                  %p324 = scmp.ge.s32.totalorder %s323, 1
                  %s328 = sphi %s263, %s263
                  %s329 = sphi %s256, %s256
                $region53: #{srm_fl_forward.7} parent=42 // loop_header_branch
                  %326 = sbr.rel (%p324) target = $region57
                $region54: #{srm_fl_forward.7} parent=42 // loop_body
                  %v330 = vld [vmem:[%s328] sm:$0xf]
                  %331 = vst [vmem:[%s329] sm:$0xf] %v330
                  %v332 = vld [vmem:[%s328 + $0x8] sm:$0xf]
                  %333 = vst [vmem:[%s329 + $0x4] sm:$0xf] %v332
                  %v334 = vld [vmem:[%s328 + $0x10] sm:$0xf]
                  %335 = vst [vmem:[%s329 + $0x8] sm:$0xf] %v334
                  %v336 = vld [vmem:[%s328 + $0x18] sm:$0xf]
                  %337 = vst [vmem:[%s329 + $0xc] sm:$0xf] %v336
                  %v338 = vld [vmem:[%s328 + $0x20] sm:$0xf]
                  %339 = vst [vmem:[%s329 + $0x10] sm:$0xf] %v338
                  %v340 = vld [vmem:[%s328 + $0x28] sm:$0xf]
                  %341 = vst [vmem:[%s329 + $0x14] sm:$0xf] %v340
                  %v342 = vld [vmem:[%s328 + $0x30] sm:$0xf]
                  %343 = vst [vmem:[%s329 + $0x18] sm:$0xf] %v342
                  %v344 = vld [vmem:[%s328 + $0x38] sm:$0xf]
                  %345 = vst [vmem:[%s329 + $0x1c] sm:$0xf] %v344
                  %v346 = vld [vmem:[%s328 + $0x40] sm:$0xf]
                  %347 = vst [vmem:[%s329 + $0x20] sm:$0xf] %v346
                  %v348 = vld [vmem:[%s328 + $0x48] sm:$0xf]
                  %349 = vst [vmem:[%s329 + $0x24] sm:$0xf] %v348
                  %v350 = vld [vmem:[%s328 + $0x50] sm:$0xf]
                  %351 = vst [vmem:[%s329 + $0x28] sm:$0xf] %v350
                  %v352 = vld [vmem:[%s328 + $0x58] sm:$0xf]
                  %353 = vst [vmem:[%s329 + $0x2c] sm:$0xf] %v352
                  %v354 = vld [vmem:[%s328 + $0x60] sm:$0xf]
                  %355 = vst [vmem:[%s329 + $0x30] sm:$0xf] %v354
                  %v356 = vld [vmem:[%s328 + $0x68] sm:$0xf]
                  %357 = vst [vmem:[%s329 + $0x34] sm:$0xf] %v356
                  %v358 = vld [vmem:[%s328 + $0x70] sm:$0xf]
                  %359 = vst [vmem:[%s329 + $0x38] sm:$0xf] %v358
                  %v360 = vld [vmem:[%s328 + $0x78] sm:$0xf]
                  %361 = vst [vmem:[%s329 + $0x3c] sm:$0xf] %v360
                $region55: #{srm_fl_forward.7} parent=42 // loop_footer
                  %s327 = sadd.s32 1, %s323
                $region56: #{srm_fl_forward.7} parent=42 // loop_footer_branch
                  %322 = sbr.rel target = $region52
                $region57: #{srm_fl_forward.7} parent=42 // loop_exit
                  _
              $region43: #{srm_fl_forward.7} parent=27 // pred_fallthru
                _
            $region28: #{srm_fl_forward.7} parent=23 // pred_fallthru
              _
            // Predicated region
            $region29: #{srm_fl_forward.7} parent=23 // pred_check
              _
            $region30: #{srm_fl_forward.7} parent=23 // pred_check_branch
              %269 = sbr.rel (0) target = $region32
            $region31: #{srm_fl_forward.7} parent=23 // pred_region
              loop: start=0, step=1, limit=1
              $region33: #{srm_fl_forward.7} parent=31 // loop_pre_header
                _
              $region34: #{srm_fl_forward.7} parent=31 // loop_header
                %s272 = sphi 0, %s276
                %p273 = scmp.ge.s32.totalorder %s272, 1
                %s277 = sphi %s263, %s263
                %s278 = sphi %s256, %s256
              $region35: #{srm_fl_forward.7} parent=31 // loop_header_branch
                %275 = sbr.rel (%p273) target = $region39
              $region36: #{srm_fl_forward.7} parent=31 // loop_body
                %v279 = vld [vmem:[%s277] sm:$0xf]
                %280 = vst [vmem:[%s278] sm:$0xf] %v279
                %v281 = vld [vmem:[%s277 + $0x8] sm:$0xf]
                %282 = vst [vmem:[%s278 + $0x4] sm:$0xf] %v281
                %v283 = vld [vmem:[%s277 + $0x10] sm:$0xf]
                %284 = vst [vmem:[%s278 + $0x8] sm:$0xf] %v283
                %v285 = vld [vmem:[%s277 + $0x18] sm:$0xf]
                %286 = vst [vmem:[%s278 + $0xc] sm:$0xf] %v285
                %v287 = vld [vmem:[%s277 + $0x20] sm:$0xf]
                %288 = vst [vmem:[%s278 + $0x10] sm:$0xf] %v287
                %v289 = vld [vmem:[%s277 + $0x28] sm:$0xf]
                %290 = vst [vmem:[%s278 + $0x14] sm:$0xf] %v289
                %v291 = vld [vmem:[%s277 + $0x30] sm:$0xf]
                %292 = vst [vmem:[%s278 + $0x18] sm:$0xf] %v291
                %v293 = vld [vmem:[%s277 + $0x38] sm:$0xf]
                %294 = vst [vmem:[%s278 + $0x1c] sm:$0xf] %v293
                %v295 = vld [vmem:[%s277 + $0x40] sm:$0xf]
                %296 = vst [vmem:[%s278 + $0x20] sm:$0xf] %v295
                %v297 = vld [vmem:[%s277 + $0x48] sm:$0xf]
                %298 = vst [vmem:[%s278 + $0x24] sm:$0xf] %v297
                %v299 = vld [vmem:[%s277 + $0x50] sm:$0xf]
                %300 = vst [vmem:[%s278 + $0x28] sm:$0xf] %v299
                %v301 = vld [vmem:[%s277 + $0x58] sm:$0xf]
                %302 = vst [vmem:[%s278 + $0x2c] sm:$0xf] %v301
                %v303 = vld [vmem:[%s277 + $0x60] sm:$0xf]
                %304 = vst [vmem:[%s278 + $0x30] sm:$0xf] %v303
                %v305 = vld [vmem:[%s277 + $0x68] sm:$0xf]
                %306 = vst [vmem:[%s278 + $0x34] sm:$0xf] %v305
                %v307 = vld [vmem:[%s277 + $0x70] sm:$0xf]
                %308 = vst [vmem:[%s278 + $0x38] sm:$0xf] %v307
                %v309 = vld [vmem:[%s277 + $0x78] sm:$0xf]
                %310 = vst [vmem:[%s278 + $0x3c] sm:$0xf] %v309
              $region37: #{srm_fl_forward.7} parent=31 // loop_footer
                %s276 = sadd.s32 1, %s272
              $region38: #{srm_fl_forward.7} parent=31 // loop_footer_branch
                %271 = sbr.rel target = $region34
              $region39: #{srm_fl_forward.7} parent=31 // loop_exit
                _
            $region32: #{srm_fl_forward.7} parent=23 // pred_fallthru
              _
          $region24: #{srm_fl_forward.7} parent=19 // pred_fallthru
            _
          %362 = vnop
        $region20: #{srm_fl_forward.7} parent=15 // pred_fallthru
          _
        // Predicated region
        $region58: #{srm_fl_forward.7} parent=15 // pred_check
          %p363 = pneg %p99
        $region59: #{srm_fl_forward.7} parent=15 // pred_check_branch
          %365 = sbr.rel (%p363) target = $region61
        $region60: #{srm_fl_forward.7} parent=15 // pred_region
          %s366 = sand.u32 %s89, 1
          %s367 = sand.u32 %s89, 1
          %s368 = smul.addr %s367, 8
          %s369 = scalar_lea.vmem [#allocation3], %s368
          %s370 = smul.u32 %s21, 8
          %s371 = ssub.s32 %s370, 1
          %p372 = scmp.gt.s32.totalorder %s371, 0
          %s373 = scalar_select %p372, %s371, 0
          %s374 = smul.addr %s373, 4
          %s375 = sadd.s32 %s19, %s374
          %s376 = smul.addr %s18, 64
          %s377 = sadd.s32 %s375, %s376
          %s378 = smul.addr %s377, 4
          %s379 = scalar_lea.vmem %s1, %s378
          // Predicated region
          $region62: #{srm_fl_forward.7} parent=60 // pred_check
            _
          $region63: #{srm_fl_forward.7} parent=60 // pred_check_branch
            %381 = sbr.rel (0) target = $region65
          $region64: #{srm_fl_forward.7} parent=60 // pred_region
            // Predicated region
            $region66: #{srm_fl_forward.7} parent=64 // pred_check
              _
            $region67: #{srm_fl_forward.7} parent=64 // pred_check_branch
              %383 = sbr.rel target = $region69
            $region68: #{srm_fl_forward.7} parent=64 // pred_region
              // Predicated region
              $region81: #{srm_fl_forward.7} parent=68 // pred_check
                _
              $region82: #{srm_fl_forward.7} parent=68 // pred_check_branch
                %400 = sbr.rel (0) target = $region84
              $region83: #{srm_fl_forward.7} parent=68 // pred_region
                loop: start=0, step=1, limit=1
                $region85: #{srm_fl_forward.7} parent=83 // loop_pre_header
                  _
                $region86: #{srm_fl_forward.7} parent=83 // loop_header
                  %s402 = sphi 0, %s406
                  %p403 = scmp.ge.s32.totalorder %s402, 1
                  %s407 = sphi %s379, %s379
                  %s408 = sphi %s369, %s369
                $region87: #{srm_fl_forward.7} parent=83 // loop_header_branch
                  %405 = sbr.rel (%p403) target = $region91
                $region88: #{srm_fl_forward.7} parent=83 // loop_body
                  _
                $region89: #{srm_fl_forward.7} parent=83 // loop_footer
                  %s406 = sadd.s32 1, %s402
                $region90: #{srm_fl_forward.7} parent=83 // loop_footer_branch
                  %401 = sbr.rel target = $region86
                $region91: #{srm_fl_forward.7} parent=83 // loop_exit
                  _
                loop: start=0, step=1, limit=1
                $region92: #{srm_fl_forward.7} parent=83 // loop_pre_header
                  _
                $region93: #{srm_fl_forward.7} parent=83 // loop_header
                  %s411 = sphi 0, %s415
                  %p412 = scmp.ge.s32.totalorder %s411, 1
                  %s416 = sphi %s379, %s379
                  %s417 = sphi %s369, %s369
                $region94: #{srm_fl_forward.7} parent=83 // loop_header_branch
                  %414 = sbr.rel (%p412) target = $region98
                $region95: #{srm_fl_forward.7} parent=83 // loop_body
                  %v418 = vld [vmem:[%s416] sm:$0xf]
                  %419 = vst [vmem:[%s417] sm:$0xf] %v418
                  %v420 = vld [vmem:[%s416 + $0x8] sm:$0xf]
                  %421 = vst [vmem:[%s417 + $0x4] sm:$0xf] %v420
                $region96: #{srm_fl_forward.7} parent=83 // loop_footer
                  %s415 = sadd.s32 1, %s411
                $region97: #{srm_fl_forward.7} parent=83 // loop_footer_branch
                  %410 = sbr.rel target = $region93
                $region98: #{srm_fl_forward.7} parent=83 // loop_exit
                  _
              $region84: #{srm_fl_forward.7} parent=68 // pred_fallthru
                _
            $region69: #{srm_fl_forward.7} parent=64 // pred_fallthru
              _
            // Predicated region
            $region70: #{srm_fl_forward.7} parent=64 // pred_check
              _
            $region71: #{srm_fl_forward.7} parent=64 // pred_check_branch
              %385 = sbr.rel (0) target = $region73
            $region72: #{srm_fl_forward.7} parent=64 // pred_region
              loop: start=0, step=1, limit=1
              $region74: #{srm_fl_forward.7} parent=72 // loop_pre_header
                _
              $region75: #{srm_fl_forward.7} parent=72 // loop_header
                %s388 = sphi 0, %s392
                %p389 = scmp.ge.s32.totalorder %s388, 1
                %s393 = sphi %s379, %s379
                %s394 = sphi %s369, %s369
              $region76: #{srm_fl_forward.7} parent=72 // loop_header_branch
                %391 = sbr.rel (%p389) target = $region80
              $region77: #{srm_fl_forward.7} parent=72 // loop_body
                %v395 = vld [vmem:[%s393] sm:$0xf]
                %396 = vst [vmem:[%s394] sm:$0xf] %v395
                %v397 = vld [vmem:[%s393 + $0x8] sm:$0xf]
                %398 = vst [vmem:[%s394 + $0x4] sm:$0xf] %v397
              $region78: #{srm_fl_forward.7} parent=72 // loop_footer
                %s392 = sadd.s32 1, %s388
              $region79: #{srm_fl_forward.7} parent=72 // loop_footer_branch
                %387 = sbr.rel target = $region75
              $region80: #{srm_fl_forward.7} parent=72 // loop_exit
                _
            $region73: #{srm_fl_forward.7} parent=64 // pred_fallthru
              _
          $region65: #{srm_fl_forward.7} parent=60 // pred_fallthru
            _
          %422 = vnop
        $region61: #{srm_fl_forward.7} parent=15 // pred_fallthru
          _
        // Predicated region
        $region99: #{srm_fl_forward.7} parent=15 // pred_check
          %p423 = pneg %p137
        $region100: #{srm_fl_forward.7} parent=15 // pred_check_branch
          %425 = sbr.rel (%p423) target = $region102
        $region101: #{srm_fl_forward.7} parent=15 // pred_region
          %s426 = sand.u32 %s127, 1
          %s427 = sand.u32 %s127, 1
          %s428 = smul.addr %s427, 8
          %s429 = scalar_lea.vmem [#allocation4], %s428
          %s430 = smul.u32 %s21, 8
          %s431 = sadd.s32 %s430, 8
          %p432 = scmp.lt.s32.totalorder %s431, 15
          %s433 = scalar_select %p432, %s431, 15
          %s434 = smul.addr %s433, 4
          %s435 = sadd.s32 %s19, %s434
          %s436 = smul.addr %s18, 64
          %s437 = sadd.s32 %s435, %s436
          %s438 = smul.addr %s437, 4
          %s439 = scalar_lea.vmem %s2, %s438
          // Predicated region
          $region103: #{srm_fl_forward.7} parent=101 // pred_check
            _
          $region104: #{srm_fl_forward.7} parent=101 // pred_check_branch
            %441 = sbr.rel (0) target = $region106
          $region105: #{srm_fl_forward.7} parent=101 // pred_region
            // Predicated region
            $region107: #{srm_fl_forward.7} parent=105 // pred_check
              _
            $region108: #{srm_fl_forward.7} parent=105 // pred_check_branch
              %443 = sbr.rel target = $region110
            $region109: #{srm_fl_forward.7} parent=105 // pred_region
              // Predicated region
              $region122: #{srm_fl_forward.7} parent=109 // pred_check
                _
              $region123: #{srm_fl_forward.7} parent=109 // pred_check_branch
                %460 = sbr.rel (0) target = $region125
              $region124: #{srm_fl_forward.7} parent=109 // pred_region
                loop: start=0, step=1, limit=1
                $region126: #{srm_fl_forward.7} parent=124 // loop_pre_header
                  _
                $region127: #{srm_fl_forward.7} parent=124 // loop_header
                  %s462 = sphi 0, %s466
                  %p463 = scmp.ge.s32.totalorder %s462, 1
                  %s467 = sphi %s439, %s439
                  %s468 = sphi %s429, %s429
                $region128: #{srm_fl_forward.7} parent=124 // loop_header_branch
                  %465 = sbr.rel (%p463) target = $region132
                $region129: #{srm_fl_forward.7} parent=124 // loop_body
                  _
                $region130: #{srm_fl_forward.7} parent=124 // loop_footer
                  %s466 = sadd.s32 1, %s462
                $region131: #{srm_fl_forward.7} parent=124 // loop_footer_branch
                  %461 = sbr.rel target = $region127
                $region132: #{srm_fl_forward.7} parent=124 // loop_exit
                  _
                loop: start=0, step=1, limit=1
                $region133: #{srm_fl_forward.7} parent=124 // loop_pre_header
                  _
                $region134: #{srm_fl_forward.7} parent=124 // loop_header
                  %s471 = sphi 0, %s475
                  %p472 = scmp.ge.s32.totalorder %s471, 1
                  %s476 = sphi %s439, %s439
                  %s477 = sphi %s429, %s429
                $region135: #{srm_fl_forward.7} parent=124 // loop_header_branch
                  %474 = sbr.rel (%p472) target = $region139
                $region136: #{srm_fl_forward.7} parent=124 // loop_body
                  %v478 = vld [vmem:[%s476] sm:$0xf]
                  %479 = vst [vmem:[%s477] sm:$0xf] %v478
                  %v480 = vld [vmem:[%s476 + $0x8] sm:$0xf]
                  %481 = vst [vmem:[%s477 + $0x4] sm:$0xf] %v480
                $region137: #{srm_fl_forward.7} parent=124 // loop_footer
                  %s475 = sadd.s32 1, %s471
                $region138: #{srm_fl_forward.7} parent=124 // loop_footer_branch
                  %470 = sbr.rel target = $region134
                $region139: #{srm_fl_forward.7} parent=124 // loop_exit
                  _
              $region125: #{srm_fl_forward.7} parent=109 // pred_fallthru
                _
            $region110: #{srm_fl_forward.7} parent=105 // pred_fallthru
              _
            // Predicated region
            $region111: #{srm_fl_forward.7} parent=105 // pred_check
              _
            $region112: #{srm_fl_forward.7} parent=105 // pred_check_branch
              %445 = sbr.rel (0) target = $region114
            $region113: #{srm_fl_forward.7} parent=105 // pred_region
              loop: start=0, step=1, limit=1
              $region115: #{srm_fl_forward.7} parent=113 // loop_pre_header
                _
              $region116: #{srm_fl_forward.7} parent=113 // loop_header
                %s448 = sphi 0, %s452
                %p449 = scmp.ge.s32.totalorder %s448, 1
                %s453 = sphi %s439, %s439
                %s454 = sphi %s429, %s429
              $region117: #{srm_fl_forward.7} parent=113 // loop_header_branch
                %451 = sbr.rel (%p449) target = $region121
              $region118: #{srm_fl_forward.7} parent=113 // loop_body
                %v455 = vld [vmem:[%s453] sm:$0xf]
                %456 = vst [vmem:[%s454] sm:$0xf] %v455
                %v457 = vld [vmem:[%s453 + $0x8] sm:$0xf]
                %458 = vst [vmem:[%s454 + $0x4] sm:$0xf] %v457
              $region119: #{srm_fl_forward.7} parent=113 // loop_footer
                %s452 = sadd.s32 1, %s448
              $region120: #{srm_fl_forward.7} parent=113 // loop_footer_branch
                %447 = sbr.rel target = $region116
              $region121: #{srm_fl_forward.7} parent=113 // loop_exit
                _
            $region114: #{srm_fl_forward.7} parent=105 // pred_fallthru
              _
          $region106: #{srm_fl_forward.7} parent=101 // pred_fallthru
            _
          %482 = vnop
        $region102: #{srm_fl_forward.7} parent=15 // pred_fallthru
          _
        // Predicated region
        $region140: #{srm_fl_forward.7} parent=15 // pred_check
          %p483 = pneg %p165
        $region141: #{srm_fl_forward.7} parent=15 // pred_check_branch
          %485 = sbr.rel (%p483) target = $region143
        $region142: #{srm_fl_forward.7} parent=15 // pred_region
          %p486 = scmp.lt.s32.totalorder %s19, 1
          %s487 = scalar_select %p486, %s19, 1
          %p488 = scmp.lt.s32.totalorder %s20, 0
          %s489 = scalar_select %p488, %s20, 0
          %s490 = smul.addr %s487, 144
          %s491 = sadd.s32 %s489, %s490
          %s492 = smul.addr %s491, 4
          %s493 = scalar_lea.vmem %s3, %s492
        $region143: #{srm_fl_forward.7} parent=15 // pred_fallthru
          _
        // Predicated region
        $region144: #{srm_fl_forward.7} parent=15 // pred_check
          %p494 = pneg %p193
        $region145: #{srm_fl_forward.7} parent=15 // pred_check_branch
          %496 = sbr.rel (%p494) target = $region147
        $region146: #{srm_fl_forward.7} parent=15 // pred_region
          %p497 = scmp.lt.s32.totalorder %s19, 1
          %s498 = scalar_select %p497, %s19, 1
          %p499 = scmp.lt.s32.totalorder %s20, 0
          %s500 = scalar_select %p499, %s20, 0
          %s501 = sadd.s32 %s500, %s498
          %s502 = scalar_lea.vmem %s4, %s501
        $region147: #{srm_fl_forward.7} parent=15 // pred_fallthru
          _
      $region16: #{srm_fl_forward.7} parent=5 // pred_fallthru
        _
      %p503 = scmp.le.s32.totalorder 1, %s11
      %p504 = scmp.lt.s32.totalorder %s11, 9
      %p505 = pnand %p503, %p504
      %p506 = pneg %p505
      // Predicated region
      $region148: #{srm_fl_forward.7} parent=5 // pred_check
        _
      $region149: #{srm_fl_forward.7} parent=5 // pred_check_branch
        %508 = sbr.rel (%p505) target = $region151
      $region150: #{srm_fl_forward.7} parent=5 // pred_region
        %s509 = ssub.s32 %s11, 1
        %s510 = sand.u32 %s54, 1
        %s511 = sand.u32 %s54, 1
        %s512 = smul.addr %s511, 64
        %s513 = scalar_lea.vmem [#allocation2], %s512
        // Predicated region
        $region152: #{srm_fl_forward.7} parent=150 // pred_check
          %p514 = pneg %p67
        $region153: #{srm_fl_forward.7} parent=150 // pred_check_branch
          %516 = sbr.rel (%p514) target = $region155
        $region154: #{srm_fl_forward.7} parent=150 // pred_region
          _
        $region155: #{srm_fl_forward.7} parent=150 // pred_fallthru
          _
        %s517 = sand.u32 %s92, 1
        %s518 = sand.u32 %s92, 1
        %s519 = smul.addr %s518, 8
        %s520 = scalar_lea.vmem [#allocation3], %s519
        // Predicated region
        $region156: #{srm_fl_forward.7} parent=150 // pred_check
          %p521 = pneg %p105
        $region157: #{srm_fl_forward.7} parent=150 // pred_check_branch
          %523 = sbr.rel (%p521) target = $region159
        $region158: #{srm_fl_forward.7} parent=150 // pred_region
          _
        $region159: #{srm_fl_forward.7} parent=150 // pred_fallthru
          _
        %s524 = sand.u32 %s130, 1
        %s525 = sand.u32 %s130, 1
        %s526 = smul.addr %s525, 8
        %s527 = scalar_lea.vmem [#allocation4], %s526
        // Predicated region
        $region160: #{srm_fl_forward.7} parent=150 // pred_check
          %p528 = pneg %p143
        $region161: #{srm_fl_forward.7} parent=150 // pred_check_branch
          %530 = sbr.rel (%p528) target = $region163
        $region162: #{srm_fl_forward.7} parent=150 // pred_region
          _
        $region163: #{srm_fl_forward.7} parent=150 // pred_fallthru
          _
        %s531 = sand.u32 %s54, 1
        %s532 = sand.u32 %s54, 1
        %s533 = smul.addr %s532, 64
        %s534 = scalar_lea.vmem [#allocation2], %s533
        %p535 = pneg %p67
        %p536 = pneg %p64
        %s537 = sand.u32 %s92, 1
        %s538 = sand.u32 %s92, 1
        %s539 = smul.addr %s538, 8
        %s540 = scalar_lea.vmem [#allocation3], %s539
        %p541 = pneg %p105
        %p542 = pneg %p102
        %s543 = sand.u32 %s130, 1
        %s544 = sand.u32 %s130, 1
        %s545 = smul.addr %s544, 8
        %s546 = scalar_lea.vmem [#allocation4], %s545
        %p547 = pneg %p143
        %p548 = pneg %p140
        %p549 = scmp.lt.s32.totalorder %s23, 1
        %s550 = scalar_select %p549, %s23, 1
        %p551 = scmp.lt.s32.totalorder %s24, 0
        %s552 = scalar_select %p551, %s24, 0
        %s553 = smul.addr %s550, 144
        %s554 = sadd.s32 %s552, %s553
        %s555 = smul.addr %s554, 4
        %s556 = scalar_lea.vmem %s3, %s555
        %p557 = pneg %p171
        %p558 = pneg %p168
        %p559 = scmp.lt.s32.totalorder %s23, 1
        %s560 = scalar_select %p559, %s23, 1
        %p561 = scmp.lt.s32.totalorder %s24, 0
        %s562 = scalar_select %p561, %s24, 0
        %s563 = sadd.s32 %s562, %s560
        %s564 = scalar_lea.vmem %s4, %s563
        %p565 = pneg %p199
        %p566 = pneg %p196
        %p567 = pneg %p231
        %p568 = pneg %p228
        %s569 = sand.u32 %s218, 1
        %s570 = sand.u32 %s218, 1
        %s571 = smul.addr %s570, 64
        %s572 = scalar_lea.vmem [#allocation5], %s571
        %s573 = smul.u32 8, %s25
        %s574 = smul.u32 %s25, 8
        %s575 = ssub.s32 %s574, 1
        %p576 = scmp.gt.s32.totalorder %s575, 0
        %s577 = scalar_select %p576, %s575, 0
        %s578 = smul.u32 %s25, 8
        %s579 = sadd.s32 %s578, 8
        %p580 = scmp.lt.s32.totalorder %s579, 15
        %s581 = scalar_select %p580, %s579, 15
        %p582 = scmp.lt.s32.totalorder %s23, 1
        %s583 = scalar_select %p582, %s23, 1
        %p584 = scmp.lt.s32.totalorder %s24, 0
        %s585 = scalar_select %p584, %s24, 0
        %s586 = smul.addr %s583, 144
        %s587 = sadd.s32 %s585, %s586
        %s588 = smul.addr %s587, 4
        %s589 = scalar_lea.vmem %s3, %s588
        %p590 = scmp.lt.s32.totalorder %s23, 1
        %s591 = scalar_select %p590, %s23, 1
        %p592 = scmp.lt.s32.totalorder %s24, 0
        %s593 = scalar_select %p592, %s24, 0
        %s594 = sadd.s32 %s593, %s591
        %s595 = scalar_lea.vmem %s4, %s594
        %s596 = sadd.s32 %s23, %s24
        %s597 = smul.u32 8, %s25
        %v599 = vld [vmem:[%s520] sm:$0xf]
        %v600 = vld [vmem:[%s520 + $0x4] sm:$0xf]
        %v601 = vld [vmem:[%s527] sm:$0xf]
        %v602 = vld [vmem:[%s527 + $0x4] sm:$0xf]
        %p603 = scmp.eq.s32.totalorder %s25, 0
        %s604 = scalar_select %p603, 1, 0
        %v605 = vstv %s604
        %vm606 = vcmp.eq.s32.totalorder %v605, 1
        %v607 = vsel %vm606, 0, %v599
        %v608 = vsel %vm606, 0, %v600
        %p609 = scmp.eq.s32.totalorder %s25, 1
        %s610 = scalar_select %p609, 1, 0
        %v611 = vstv %s610
        %vm612 = vcmp.eq.s32.totalorder %v611, 1
        %v613 = vsel %vm612, 0, %v601
        %v614 = vsel %vm612, 0, %v602
        %v615 = vld [vmem:[%s513] sm:$0xf]
        %v616 = vld [vmem:[%s513 + $0x4] sm:$0xf]
        %v617 = vld [vmem:[%s513 + $0x8] sm:$0xf]
        %v618 = vld [vmem:[%s513 + $0xc] sm:$0xf]
        %v619 = vld [vmem:[%s513 + $0x10] sm:$0xf]
        %v620 = vld [vmem:[%s513 + $0x14] sm:$0xf]
        %v621 = vld [vmem:[%s513 + $0x18] sm:$0xf]
        %v622 = vld [vmem:[%s513 + $0x1c] sm:$0xf]
        %v623 = vld [vmem:[%s513 + $0x20] sm:$0xf]
        %v624 = vld [vmem:[%s513 + $0x24] sm:$0xf]
        %v625 = vld [vmem:[%s513 + $0x28] sm:$0xf]
        %v626 = vld [vmem:[%s513 + $0x2c] sm:$0xf]
        %v627 = vld [vmem:[%s513 + $0x30] sm:$0xf]
        %v628 = vld [vmem:[%s513 + $0x34] sm:$0xf]
        %v629 = vld [vmem:[%s513 + $0x38] sm:$0xf]
        %v630 = vld [vmem:[%s513 + $0x3c] sm:$0xf]
        %v651 = vunpack.c.l.b16 %v607
        %v652 = vunpack.c.l.b16 %v608
        %v653 = vunpack.c.l.b16 %v615
        %v654 = vunpack.c.l.b16 %v616
        %v655 = vunpack.c.l.b16 %v617
        %v656 = vunpack.c.l.b16 %v618
        %v657 = vunpack.c.l.b16 %v619
        %v658 = vunpack.c.l.b16 %v620
        %v659 = vunpack.c.l.b16 %v621
        %v660 = vunpack.c.l.b16 %v622
        %v661 = vunpack.c.l.b16 %v623
        %v662 = vunpack.c.l.b16 %v624
        %v663 = vunpack.c.l.b16 %v625
        %v664 = vunpack.c.l.b16 %v626
        %v665 = vunpack.c.l.b16 %v627
        %v666 = vunpack.c.l.b16 %v628
        %v667 = vunpack.c.l.b16 %v629
        %v668 = vunpack.c.l.b16 %v630
        %v669 = vunpack.c.l.b16 %v613
        %v670 = vunpack.c.l.b16 %v614
        %v671 = vpack.c.b16 %v652, %v651
        %v672 = vpack.c.b16 %v654, %v653
        %v673 = vpack.c.b16 %v656, %v655
        %v674 = vpack.c.b16 %v658, %v657
        %v675 = vpack.c.b16 %v660, %v659
        %v676 = vpack.c.b16 %v662, %v661
        %v677 = vpack.c.b16 %v664, %v663
        %v678 = vpack.c.b16 %v666, %v665
        %v679 = vpack.c.b16 %v668, %v667
        %v680 = vpack.c.b16 %v670, %v669
        %v682 = vshrl.u32 %v671, 16
        %v684 = vrot.slane %v682, 7
        %v685 = vshll.u32 %v671, 16
        %v687 = vor.u32 %v684, %v685
        %v689 = vshrl.u32 %v672, 16
        %v691 = vrot.slane %v689, 7
        %v692 = vshll.u32 %v672, 16
        %v694 = vor.u32 %v691, %v692
        %v696 = vshrl.u32 %v673, 16
        %v698 = vrot.slane %v696, 7
        %v699 = vshll.u32 %v673, 16
        %v701 = vor.u32 %v698, %v699
        %v703 = vshrl.u32 %v674, 16
        %v705 = vrot.slane %v703, 7
        %v706 = vshll.u32 %v674, 16
        %v708 = vor.u32 %v705, %v706
        %v710 = vshrl.u32 %v675, 16
        %v712 = vrot.slane %v710, 7
        %v713 = vshll.u32 %v675, 16
        %v715 = vor.u32 %v712, %v713
        %v717 = vshrl.u32 %v676, 16
        %v719 = vrot.slane %v717, 7
        %v720 = vshll.u32 %v676, 16
        %v722 = vor.u32 %v719, %v720
        %v724 = vshrl.u32 %v677, 16
        %v726 = vrot.slane %v724, 7
        %v727 = vshll.u32 %v677, 16
        %v729 = vor.u32 %v726, %v727
        %v731 = vshrl.u32 %v678, 16
        %v733 = vrot.slane %v731, 7
        %v734 = vshll.u32 %v678, 16
        %v736 = vor.u32 %v733, %v734
        %v738 = vshrl.u32 %v679, 16
        %v740 = vrot.slane %v738, 7
        %v741 = vshll.u32 %v679, 16
        %v743 = vor.u32 %v740, %v741
        %v745 = vshrl.u32 %v680, 16
        %v747 = vrot.slane %v745, 7
        %v748 = vshll.u32 %v680, 16
        %v750 = vor.u32 %v747, %v748
        %vm761 = vcmask 1040384
        %vm762 = vsmask.f32 256
        %vm763 = vmand %vm761, %vm762
        %v764 = vsel %vm763, 0, %v687
        %v765 = vsel %vm763, 0, %v694
        %v766 = vsel %vm763, 0, %v701
        %v767 = vsel %vm763, 0, %v708
        %v768 = vsel %vm763, 0, %v715
        %v769 = vsel %vm763, 0, %v722
        %v770 = vsel %vm763, 0, %v729
        %v771 = vsel %vm763, 0, %v736
        %v772 = vsel %vm763, 0, %v743
        %v773 = vsel %vm763, 0, %v750
        %v774 = vrot.slane %v685, 1
        %v775 = vor.u32 %v682, %v774
        %v776 = vrot.slane %v692, 1
        %v777 = vor.u32 %v689, %v776
        %v778 = vrot.slane %v699, 1
        %v779 = vor.u32 %v696, %v778
        %v780 = vrot.slane %v706, 1
        %v781 = vor.u32 %v703, %v780
        %v782 = vrot.slane %v713, 1
        %v783 = vor.u32 %v710, %v782
        %v784 = vrot.slane %v720, 1
        %v785 = vor.u32 %v717, %v784
        %v786 = vrot.slane %v727, 1
        %v787 = vor.u32 %v724, %v786
        %v788 = vrot.slane %v734, 1
        %v789 = vor.u32 %v731, %v788
        %v790 = vrot.slane %v741, 1
        %v791 = vor.u32 %v738, %v790
        %v792 = vrot.slane %v748, 1
        %v793 = vor.u32 %v745, %v792
        %vm804 = vcmask 1047552
        %vm805 = vsmask.f32 7424
        %vm806 = vmand %vm804, %vm805
        %v807 = vsel %vm806, %v775, 0
        %v808 = vsel %vm806, %v777, 0
        %v809 = vsel %vm806, %v779, 0
        %v810 = vsel %vm806, %v781, 0
        %v811 = vsel %vm806, %v783, 0
        %v812 = vsel %vm806, %v785, 0
        %v813 = vsel %vm806, %v787, 0
        %v814 = vsel %vm806, %v789, 0
        %v815 = vsel %vm806, %v791, 0
        %v816 = vsel %vm806, %v793, 0
        %v827 = vld [vmem:[%s589] sm:$0xf]
        %v828 = vld [vmem:[%s589 + $0x4] sm:$0xf]
        %v829 = vld [vmem:[%s589 + $0x8] sm:$0xf]
        %v830 = vld [vmem:[%s589 + $0xc] sm:$0xf]
        %v831 = vld [vmem:[%s589 + $0x10] sm:$0xf]
        %v832 = vld [vmem:[%s589 + $0x14] sm:$0xf]
        %v833 = vld [vmem:[%s589 + $0x18] sm:$0xf]
        %v834 = vld [vmem:[%s589 + $0x1c] sm:$0xf]
        %v835 = vld [vmem:[%s589 + $0x20] sm:$0xf]
        %v836 = vld [vmem:[%s589 + $0x24] sm:$0xf]
        %v837 = vld [vmem:[%s589 + $0x28] sm:$0xf]
        %v838 = vld [vmem:[%s589 + $0x2c] sm:$0xf]
        %v839 = vld [vmem:[%s589 + $0x30] sm:$0xf]
        %v840 = vld [vmem:[%s589 + $0x34] sm:$0xf]
        %v841 = vld [vmem:[%s589 + $0x38] sm:$0xf]
        %v842 = vld [vmem:[%s589 + $0x3c] sm:$0xf]
        %v843 = vld [vmem:[%s589 + $0x40] sm:$0xf]
        %v844 = vld [vmem:[%s589 + $0x44] sm:$0xf]
        %v845 = vld [vmem:[%s589 + $0x48] sm:$0xf]
        %v846 = vld [vmem:[%s589 + $0x4c] sm:$0xf]
        %v847 = vld [vmem:[%s589 + $0x50] sm:$0xf]
        %v848 = vld [vmem:[%s589 + $0x54] sm:$0xf]
        %v849 = vld [vmem:[%s589 + $0x58] sm:$0xf]
        %v850 = vld [vmem:[%s589 + $0x5c] sm:$0xf]
        %v851 = vld [vmem:[%s589 + $0x60] sm:$0xf]
        %v852 = vld [vmem:[%s589 + $0x64] sm:$0xf]
        %v853 = vld [vmem:[%s589 + $0x68] sm:$0xf]
        %v854 = vld [vmem:[%s589 + $0x6c] sm:$0xf]
        %v855 = vld [vmem:[%s589 + $0x70] sm:$0xf]
        %v856 = vld [vmem:[%s589 + $0x74] sm:$0xf]
        %v857 = vld [vmem:[%s589 + $0x78] sm:$0xf]
        %v858 = vld [vmem:[%s589 + $0x7c] sm:$0xf]
        %v859 = vld [vmem:[%s589 + $0x80] sm:$0xf]
        %v860 = vld [vmem:[%s589 + $0x84] sm:$0xf]
        %v861 = vld [vmem:[%s589 + $0x88] sm:$0xf]
        %v862 = vld [vmem:[%s589 + $0x8c] sm:$0xf]
        %v863 = vld [vmem:[%s589 + $0x90] sm:$0xf]
        %v864 = vld [vmem:[%s589 + $0x94] sm:$0xf]
        %v865 = vld [vmem:[%s589 + $0x98] sm:$0xf]
        %v866 = vld [vmem:[%s589 + $0x9c] sm:$0xf]
        %v867 = vld [vmem:[%s589 + $0xa0] sm:$0xf]
        %v868 = vld [vmem:[%s589 + $0xa4] sm:$0xf]
        %v869 = vld [vmem:[%s589 + $0xa8] sm:$0xf]
        %v870 = vld [vmem:[%s589 + $0xac] sm:$0xf]
        %v871 = vld [vmem:[%s589 + $0xb0] sm:$0xf]
        %v872 = vld [vmem:[%s589 + $0xb4] sm:$0xf]
        %v873 = vld [vmem:[%s589 + $0xb8] sm:$0xf]
        %v874 = vld [vmem:[%s589 + $0xbc] sm:$0xf]
        %s875 = scalar_lea.vmem %s589, 192
        %v876 = vld [vmem:[%s875] sm:$0xf]
        %v877 = vld [vmem:[%s875 + $0x4] sm:$0xf]
        %v878 = vld [vmem:[%s875 + $0x8] sm:$0xf]
        %v879 = vld [vmem:[%s875 + $0xc] sm:$0xf]
        %v880 = vld [vmem:[%s875 + $0x10] sm:$0xf]
        %v881 = vld [vmem:[%s875 + $0x14] sm:$0xf]
        %v882 = vld [vmem:[%s875 + $0x18] sm:$0xf]
        %v883 = vld [vmem:[%s875 + $0x1c] sm:$0xf]
        %v884 = vld [vmem:[%s875 + $0x20] sm:$0xf]
        %v885 = vld [vmem:[%s875 + $0x24] sm:$0xf]
        %v886 = vld [vmem:[%s875 + $0x28] sm:$0xf]
        %v887 = vld [vmem:[%s875 + $0x2c] sm:$0xf]
        %v888 = vld [vmem:[%s875 + $0x30] sm:$0xf]
        %v889 = vld [vmem:[%s875 + $0x34] sm:$0xf]
        %v890 = vld [vmem:[%s875 + $0x38] sm:$0xf]
        %v891 = vld [vmem:[%s875 + $0x3c] sm:$0xf]
        %v892 = vld [vmem:[%s875 + $0x40] sm:$0xf]
        %v893 = vld [vmem:[%s875 + $0x44] sm:$0xf]
        %v894 = vld [vmem:[%s875 + $0x48] sm:$0xf]
        %v895 = vld [vmem:[%s875 + $0x4c] sm:$0xf]
        %v896 = vld [vmem:[%s875 + $0x50] sm:$0xf]
        %v897 = vld [vmem:[%s875 + $0x54] sm:$0xf]
        %v898 = vld [vmem:[%s875 + $0x58] sm:$0xf]
        %v899 = vld [vmem:[%s875 + $0x5c] sm:$0xf]
        %v900 = vld [vmem:[%s875 + $0x60] sm:$0xf]
        %v901 = vld [vmem:[%s875 + $0x64] sm:$0xf]
        %v902 = vld [vmem:[%s875 + $0x68] sm:$0xf]
        %v903 = vld [vmem:[%s875 + $0x6c] sm:$0xf]
        %v904 = vld [vmem:[%s875 + $0x70] sm:$0xf]
        %v905 = vld [vmem:[%s875 + $0x74] sm:$0xf]
        %v906 = vld [vmem:[%s875 + $0x78] sm:$0xf]
        %v907 = vld [vmem:[%s875 + $0x7c] sm:$0xf]
        %v908 = vld [vmem:[%s875 + $0x80] sm:$0xf]
        %v909 = vld [vmem:[%s875 + $0x84] sm:$0xf]
        %v910 = vld [vmem:[%s875 + $0x88] sm:$0xf]
        %v911 = vld [vmem:[%s875 + $0x8c] sm:$0xf]
        %v912 = vld [vmem:[%s875 + $0x90] sm:$0xf]
        %v913 = vld [vmem:[%s875 + $0x94] sm:$0xf]
        %v914 = vld [vmem:[%s875 + $0x98] sm:$0xf]
        %v915 = vld [vmem:[%s875 + $0x9c] sm:$0xf]
        %v916 = vld [vmem:[%s875 + $0xa0] sm:$0xf]
        %v917 = vld [vmem:[%s875 + $0xa4] sm:$0xf]
        %v918 = vld [vmem:[%s875 + $0xa8] sm:$0xf]
        %v919 = vld [vmem:[%s875 + $0xac] sm:$0xf]
        %v920 = vld [vmem:[%s875 + $0xb0] sm:$0xf]
        %v921 = vld [vmem:[%s875 + $0xb4] sm:$0xf]
        %v922 = vld [vmem:[%s875 + $0xb8] sm:$0xf]
        %v923 = vld [vmem:[%s875 + $0xbc] sm:$0xf]
        %v972 = vunpack.c.l.b16 %v876
        %v973 = vunpack.c.l.b16 %v877
        %v974 = vunpack.c.l.b16 %v878
        %v975 = vunpack.c.l.b16 %v879
        %v976 = vunpack.c.l.b16 %v880
        %v977 = vunpack.c.l.b16 %v881
        %v978 = vunpack.c.l.b16 %v882
        %v979 = vunpack.c.l.b16 %v883
        %v980 = vunpack.c.l.b16 %v884
        %v981 = vunpack.c.l.b16 %v885
        %v982 = vunpack.c.l.b16 %v886
        %v983 = vunpack.c.l.b16 %v887
        %v984 = vunpack.c.l.b16 %v888
        %v985 = vunpack.c.l.b16 %v889
        %v986 = vunpack.c.l.b16 %v890
        %v987 = vunpack.c.l.b16 %v891
        %v988 = vunpack.c.l.b16 %v892
        %v989 = vunpack.c.l.b16 %v893
        %v990 = vunpack.c.l.b16 %v894
        %v991 = vunpack.c.l.b16 %v895
        %v992 = vunpack.c.l.b16 %v896
        %v993 = vunpack.c.l.b16 %v897
        %v994 = vunpack.c.l.b16 %v898
        %v995 = vunpack.c.l.b16 %v899
        %v996 = vunpack.c.l.b16 %v900
        %v997 = vunpack.c.l.b16 %v901
        %v998 = vunpack.c.l.b16 %v902
        %v999 = vunpack.c.l.b16 %v903
        %v1000 = vunpack.c.l.b16 %v904
        %v1001 = vunpack.c.l.b16 %v905
        %v1002 = vunpack.c.l.b16 %v906
        %v1003 = vunpack.c.l.b16 %v907
        %v1004 = vunpack.c.l.b16 %v908
        %v1005 = vunpack.c.l.b16 %v909
        %v1006 = vunpack.c.l.b16 %v910
        %v1007 = vunpack.c.l.b16 %v911
        %v1008 = vunpack.c.l.b16 %v912
        %v1009 = vunpack.c.l.b16 %v913
        %v1010 = vunpack.c.l.b16 %v914
        %v1011 = vunpack.c.l.b16 %v915
        %v1012 = vunpack.c.l.b16 %v916
        %v1013 = vunpack.c.l.b16 %v917
        %v1014 = vunpack.c.l.b16 %v918
        %v1015 = vunpack.c.l.b16 %v919
        %v1016 = vunpack.c.l.b16 %v920
        %v1017 = vunpack.c.l.b16 %v921
        %v1018 = vunpack.c.l.b16 %v922
        %v1019 = vunpack.c.l.b16 %v923
        %v1020 = vpack.c.b16 %v973, %v972
        %v1021 = vpack.c.b16 %v975, %v974
        %v1022 = vpack.c.b16 %v977, %v976
        %v1023 = vpack.c.b16 %v979, %v978
        %v1024 = vpack.c.b16 %v981, %v980
        %v1025 = vpack.c.b16 %v983, %v982
        %v1026 = vpack.c.b16 %v985, %v984
        %v1027 = vpack.c.b16 %v987, %v986
        %v1028 = vpack.c.b16 %v989, %v988
        %v1029 = vpack.c.b16 %v991, %v990
        %v1030 = vpack.c.b16 %v993, %v992
        %v1031 = vpack.c.b16 %v995, %v994
        %v1032 = vpack.c.b16 %v997, %v996
        %v1033 = vpack.c.b16 %v999, %v998
        %v1034 = vpack.c.b16 %v1001, %v1000
        %v1035 = vpack.c.b16 %v1003, %v1002
        %v1036 = vpack.c.b16 %v1005, %v1004
        %v1037 = vpack.c.b16 %v1007, %v1006
        %v1038 = vpack.c.b16 %v1009, %v1008
        %v1039 = vpack.c.b16 %v1011, %v1010
        %v1040 = vpack.c.b16 %v1013, %v1012
        %v1041 = vpack.c.b16 %v1015, %v1014
        %v1042 = vpack.c.b16 %v1017, %v1016
        %v1043 = vpack.c.b16 %v1019, %v1018
        %1068 = vmatprep.subr.bf16.mxu0 0
        %1069 = vmatpush1.bf16.msra.mxu0 %v1020
        %1070 = vmatprep.subr.bf16.mxu0 0
        %1071 = vmatpush1.bf16.msra.mxu0 %v1021
        %1072 = vmatprep.subr.bf16.mxu0 0
        %1073 = vmatpush1.bf16.msra.mxu0 %v1022
        %1074 = vmatprep.subr.bf16.mxu0 0
        %1075 = vmatpush1.bf16.msra.mxu0 %v1023
        %1076 = vmatprep.subr.bf16.mxu0 0
        %1077 = vmatpush1.bf16.msra.mxu0 %v1024
        %1078 = vmatprep.subr.bf16.mxu0 0
        %1079 = vmatpush1.bf16.msra.mxu0 %v1025
        %1080 = vmatprep.subr.bf16.mxu0 0
        %1081 = vmatpush1.bf16.msra.mxu0 %v1026
        %1082 = vmatprep.subr.bf16.mxu0 0
        %1083 = vmatpush1.bf16.msra.mxu0 %v1027
        %1084 = vmatprep.subr.bf16.mxu0 0
        %1085 = vmatpush1.bf16.msra.mxu0 %v1028
        %1086 = vmatprep.subr.bf16.mxu0 0
        %1087 = vmatpush1.bf16.msra.mxu0 %v1029
        %1088 = vmatprep.subr.bf16.mxu0 0
        %1089 = vmatpush1.bf16.msra.mxu0 %v1030
        %1090 = vmatprep.subr.bf16.mxu0 0
        %1091 = vmatpush1.bf16.msra.mxu0 %v1031
        %1092 = vmatprep.subr.bf16.mxu0 0
        %1093 = vmatpush1.bf16.msra.mxu0 %v1032
        %1094 = vmatprep.subr.bf16.mxu0 0
        %1095 = vmatpush1.bf16.msra.mxu0 %v1033
        %1096 = vmatprep.subr.bf16.mxu0 0
        %1097 = vmatpush1.bf16.msra.mxu0 %v1034
        %1098 = vmatprep.subr.bf16.mxu0 0
        %1099 = vmatpush1.bf16.msra.mxu0 %v1035
        %1100 = vmatprep.mubr.bf16.mxu0 %v672
        %1101 = vmatmul.mubr.bf16.gmra.mrb[0].mxu0 %v765
        %v1102 = vpop.f32.mrb[0].mxu0
        %v1103 = vadd.f32 0.0, %v1102
        %v1104 = vpop.f32.mrb[0].mxu0
        %v1105 = vpop.f32.mrb[0].mxu0
        %v1106 = vadd.f32 0.0, %v1105
        %v1107 = vpop.f32.mrb[0].mxu0
        %1108 = vmatprep.mubr.bf16.mxu0 %v673
        %1109 = vmatmul.mubr.bf16.gmra.mrb[0].mxu0 %v766
        %v1110 = vpop.f32.mrb[0].mxu0
        %v1111 = vadd.f32 0.0, %v1110
        %v1112 = vpop.f32.mrb[0].mxu0
        %v1113 = vpop.f32.mrb[0].mxu0
        %v1114 = vadd.f32 0.0, %v1113
        %v1115 = vpop.f32.mrb[0].mxu0
        %1116 = vmatprep.mubr.bf16.mxu0 %v674
        %1117 = vmatmul.mubr.bf16.gmra.mrb[0].mxu0 %v767
        %v1118 = vpop.f32.mrb[0].mxu0
        %v1119 = vadd.f32 0.0, %v1118
        %v1120 = vpop.f32.mrb[0].mxu0
        %v1121 = vpop.f32.mrb[0].mxu0
        %v1122 = vadd.f32 0.0, %v1121
        %v1123 = vpop.f32.mrb[0].mxu0
        %1124 = vmatprep.mubr.bf16.mxu0 %v675
        %1125 = vmatmul.mubr.bf16.gmra.mrb[0].mxu0 %v768
        %v1126 = vpop.f32.mrb[0].mxu0
        %v1127 = vadd.f32 0.0, %v1126
        %v1128 = vpop.f32.mrb[0].mxu0
        %v1129 = vpop.f32.mrb[0].mxu0
        %v1130 = vadd.f32 0.0, %v1129
        %v1131 = vpop.f32.mrb[0].mxu0
        %1132 = vmatprep.mubr.bf16.mxu0 %v676
        %1133 = vmatmul.mubr.bf16.gmra.mrb[0].mxu0 %v769
        %v1134 = vpop.f32.mrb[0].mxu0
        %v1135 = vadd.f32 0.0, %v1134
        %v1136 = vpop.f32.mrb[0].mxu0
        %v1137 = vpop.f32.mrb[0].mxu0
        %v1138 = vadd.f32 0.0, %v1137
        %v1139 = vpop.f32.mrb[0].mxu0
        %1140 = vmatprep.mubr.bf16.mxu0 %v677
        %1141 = vmatmul.mubr.bf16.gmra.mrb[0].mxu0 %v770
        %v1142 = vpop.f32.mrb[0].mxu0
        %v1143 = vadd.f32 0.0, %v1142
        %v1144 = vpop.f32.mrb[0].mxu0
        %v1145 = vpop.f32.mrb[0].mxu0
        %v1146 = vadd.f32 0.0, %v1145
        %v1147 = vpop.f32.mrb[0].mxu0
        %1148 = vmatprep.mubr.bf16.mxu0 %v678
        %1149 = vmatmul.mubr.bf16.gmra.mrb[0].mxu0 %v771
        %v1150 = vpop.f32.mrb[0].mxu0
        %v1151 = vadd.f32 0.0, %v1150
        %v1152 = vpop.f32.mrb[0].mxu0
        %v1153 = vpop.f32.mrb[0].mxu0
        %v1154 = vadd.f32 0.0, %v1153
        %v1155 = vpop.f32.mrb[0].mxu0
        %1156 = vmatprep.mubr.bf16.mxu0 %v679
        %1157 = vmatmul.mubr.bf16.gmra.mrb[0].mxu0 %v772
        %v1158 = vpop.f32.mrb[0].mxu0
        %v1159 = vadd.f32 0.0, %v1158
        %v1160 = vpop.f32.mrb[0].mxu0
        %v1161 = vpop.f32.mrb[0].mxu0
        %v1162 = vadd.f32 0.0, %v1161
        %v1163 = vpop.f32.mrb[0].mxu0
        %1164 = vdwg.mxu0
        %1165 = vmatprep.subr.bf16.mxu0 0
        %1166 = vmatpush1.bf16.msra.mxu0 %v1036
        %1167 = vmatprep.subr.bf16.mxu0 0
        %1168 = vmatpush1.bf16.msra.mxu0 %v1037
        %1169 = vmatprep.subr.bf16.mxu0 0
        %1170 = vmatpush1.bf16.msra.mxu0 %v1038
        %1171 = vmatprep.subr.bf16.mxu0 0
        %1172 = vmatpush1.bf16.msra.mxu0 %v1039
        %1173 = vmatprep.subr.bf16.mxu0 0
        %1174 = vmatpush1.bf16.msra.mxu0 %v1040
        %1175 = vmatprep.subr.bf16.mxu0 0
        %1176 = vmatpush1.bf16.msra.mxu0 %v1041
        %1177 = vmatprep.subr.bf16.mxu0 0
        %1178 = vmatpush1.bf16.msra.mxu0 %v1042
        %1179 = vmatprep.subr.bf16.mxu0 0
        %1180 = vmatpush1.bf16.msra.mxu0 %v1043
        %1181 = vmatprep.subr.bf16.mxu0 0
        %1182 = vmatpush1.bf16.msra.mxu0 0
        %1183 = vmatprep.subr.bf16.mxu0 0
        %1184 = vmatpush1.bf16.msra.mxu0 0
        %1185 = vmatprep.subr.bf16.mxu0 0
        %1186 = vmatpush1.bf16.msra.mxu0 0
        %1187 = vmatprep.subr.bf16.mxu0 0
        %1188 = vmatpush1.bf16.msra.mxu0 0
        %1189 = vmatprep.subr.bf16.mxu0 0
        %1190 = vmatpush1.bf16.msra.mxu0 0
        %1191 = vmatprep.subr.bf16.mxu0 0
        %1192 = vmatpush1.bf16.msra.mxu0 0
        %1193 = vmatprep.subr.bf16.mxu0 0
        %1194 = vmatpush1.bf16.msra.mxu0 0
        %1195 = vmatprep.subr.bf16.mxu0 0
        %1196 = vmatpush1.bf16.msra.mxu0 0
        %1197 = vmatprep.mubr.bf16.mxu0 0
        %1198 = vmatmul.mubr.bf16.gmra.mrb[0].mxu0 %v808
        %v1199 = vpop.f32.mrb[0].mxu0
        %v1200 = vadd.f32 %v1103, %v1199
        %v1201 = vpop.f32.mrb[0].mxu0
        %v1202 = vpop.f32.mrb[0].mxu0
        %v1203 = vadd.f32 %v1106, %v1202
        %v1204 = vpop.f32.mrb[0].mxu0
        %1205 = vmatprep.mubr.bf16.mxu0 0
        %1206 = vmatmul.mubr.bf16.gmra.mrb[0].mxu0 %v809
        %v1207 = vpop.f32.mrb[0].mxu0
        %v1208 = vadd.f32 %v1111, %v1207
        %v1209 = vpop.f32.mrb[0].mxu0
        %v1210 = vpop.f32.mrb[0].mxu0
        %v1211 = vadd.f32 %v1114, %v1210
        %v1212 = vpop.f32.mrb[0].mxu0
        %1213 = vmatprep.mubr.bf16.mxu0 0
        %1214 = vmatmul.mubr.bf16.gmra.mrb[0].mxu0 %v810
        %v1215 = vpop.f32.mrb[0].mxu0
        %v1216 = vadd.f32 %v1119, %v1215
        %v1217 = vpop.f32.mrb[0].mxu0
        %v1218 = vpop.f32.mrb[0].mxu0
        %v1219 = vadd.f32 %v1122, %v1218
        %v1220 = vpop.f32.mrb[0].mxu0
        %1221 = vmatprep.mubr.bf16.mxu0 0
        %1222 = vmatmul.mubr.bf16.gmra.mrb[0].mxu0 %v811
        %v1223 = vpop.f32.mrb[0].mxu0
        %v1224 = vadd.f32 %v1127, %v1223
        %v1225 = vpop.f32.mrb[0].mxu0
        %v1226 = vpop.f32.mrb[0].mxu0
        %v1227 = vadd.f32 %v1130, %v1226
        %v1228 = vpop.f32.mrb[0].mxu0
        %1229 = vmatprep.mubr.bf16.mxu0 0
        %1230 = vmatmul.mubr.bf16.gmra.mrb[0].mxu0 %v812
        %v1231 = vpop.f32.mrb[0].mxu0
        %v1232 = vadd.f32 %v1135, %v1231
        %v1233 = vpop.f32.mrb[0].mxu0
        %v1234 = vpop.f32.mrb[0].mxu0
        %v1235 = vadd.f32 %v1138, %v1234
        %v1236 = vpop.f32.mrb[0].mxu0
        %1237 = vmatprep.mubr.bf16.mxu0 0
        %1238 = vmatmul.mubr.bf16.gmra.mrb[0].mxu0 %v813
        %v1239 = vpop.f32.mrb[0].mxu0
        %v1240 = vadd.f32 %v1143, %v1239
        %v1241 = vpop.f32.mrb[0].mxu0
        %v1242 = vpop.f32.mrb[0].mxu0
        %v1243 = vadd.f32 %v1146, %v1242
        %v1244 = vpop.f32.mrb[0].mxu0
        %1245 = vmatprep.mubr.bf16.mxu0 0
        %1246 = vmatmul.mubr.bf16.gmra.mrb[0].mxu0 %v814
        %v1247 = vpop.f32.mrb[0].mxu0
        %v1248 = vadd.f32 %v1151, %v1247
        %v1249 = vpop.f32.mrb[0].mxu0
        %v1250 = vpop.f32.mrb[0].mxu0
        %v1251 = vadd.f32 %v1154, %v1250
        %v1252 = vpop.f32.mrb[0].mxu0
        %1253 = vmatprep.mubr.bf16.mxu0 0
        %1254 = vmatmul.mubr.bf16.gmra.mrb[0].mxu0 %v815
        %v1255 = vpop.f32.mrb[0].mxu0
        %v1256 = vadd.f32 %v1159, %v1255
        %v1257 = vpop.f32.mrb[0].mxu0
        %v1258 = vpop.f32.mrb[0].mxu0
        %v1259 = vadd.f32 %v1162, %v1258
        %v1260 = vpop.f32.mrb[0].mxu0
        %1261 = vdwg.mxu0
        %v1310 = vunpack.c.l.b16 %v827
        %v1311 = vunpack.c.l.b16 %v828
        %v1312 = vunpack.c.l.b16 %v829
        %v1313 = vunpack.c.l.b16 %v830
        %v1314 = vunpack.c.l.b16 %v831
        %v1315 = vunpack.c.l.b16 %v832
        %v1316 = vunpack.c.l.b16 %v833
        %v1317 = vunpack.c.l.b16 %v834
        %v1318 = vunpack.c.l.b16 %v835
        %v1319 = vunpack.c.l.b16 %v836
        %v1320 = vunpack.c.l.b16 %v837
        %v1321 = vunpack.c.l.b16 %v838
        %v1322 = vunpack.c.l.b16 %v839
        %v1323 = vunpack.c.l.b16 %v840
        %v1324 = vunpack.c.l.b16 %v841
        %v1325 = vunpack.c.l.b16 %v842
        %v1326 = vunpack.c.l.b16 %v843
        %v1327 = vunpack.c.l.b16 %v844
        %v1328 = vunpack.c.l.b16 %v845
        %v1329 = vunpack.c.l.b16 %v846
        %v1330 = vunpack.c.l.b16 %v847
        %v1331 = vunpack.c.l.b16 %v848
        %v1332 = vunpack.c.l.b16 %v849
        %v1333 = vunpack.c.l.b16 %v850
        %v1334 = vunpack.c.l.b16 %v851
        %v1335 = vunpack.c.l.b16 %v852
        %v1336 = vunpack.c.l.b16 %v853
        %v1337 = vunpack.c.l.b16 %v854
        %v1338 = vunpack.c.l.b16 %v855
        %v1339 = vunpack.c.l.b16 %v856
        %v1340 = vunpack.c.l.b16 %v857
        %v1341 = vunpack.c.l.b16 %v858
        %v1342 = vunpack.c.l.b16 %v859
        %v1343 = vunpack.c.l.b16 %v860
        %v1344 = vunpack.c.l.b16 %v861
        %v1345 = vunpack.c.l.b16 %v862
        %v1346 = vunpack.c.l.b16 %v863
        %v1347 = vunpack.c.l.b16 %v864
        %v1348 = vunpack.c.l.b16 %v865
        %v1349 = vunpack.c.l.b16 %v866
        %v1350 = vunpack.c.l.b16 %v867
        %v1351 = vunpack.c.l.b16 %v868
        %v1352 = vunpack.c.l.b16 %v869
        %v1353 = vunpack.c.l.b16 %v870
        %v1354 = vunpack.c.l.b16 %v871
        %v1355 = vunpack.c.l.b16 %v872
        %v1356 = vunpack.c.l.b16 %v873
        %v1357 = vunpack.c.l.b16 %v874
        %v1358 = vpack.c.b16 %v1311, %v1310
        %v1359 = vpack.c.b16 %v1313, %v1312
        %v1360 = vpack.c.b16 %v1315, %v1314
        %v1361 = vpack.c.b16 %v1317, %v1316
        %v1362 = vpack.c.b16 %v1319, %v1318
        %v1363 = vpack.c.b16 %v1321, %v1320
        %v1364 = vpack.c.b16 %v1323, %v1322
        %v1365 = vpack.c.b16 %v1325, %v1324
        %v1366 = vpack.c.b16 %v1327, %v1326
        %v1367 = vpack.c.b16 %v1329, %v1328
        %v1368 = vpack.c.b16 %v1331, %v1330
        %v1369 = vpack.c.b16 %v1333, %v1332
        %v1370 = vpack.c.b16 %v1335, %v1334
        %v1371 = vpack.c.b16 %v1337, %v1336
        %v1372 = vpack.c.b16 %v1339, %v1338
        %v1373 = vpack.c.b16 %v1341, %v1340
        %v1374 = vpack.c.b16 %v1343, %v1342
        %v1375 = vpack.c.b16 %v1345, %v1344
        %v1376 = vpack.c.b16 %v1347, %v1346
        %v1377 = vpack.c.b16 %v1349, %v1348
        %v1378 = vpack.c.b16 %v1351, %v1350
        %v1379 = vpack.c.b16 %v1353, %v1352
        %v1380 = vpack.c.b16 %v1355, %v1354
        %v1381 = vpack.c.b16 %v1357, %v1356
        %1406 = vmatprep.subr.bf16.mxu0 0
        %1407 = vmatpush1.bf16.msra.mxu0 %v1358
        %1408 = vmatprep.subr.bf16.mxu0 0
        %1409 = vmatpush1.bf16.msra.mxu0 %v1359
        %1410 = vmatprep.subr.bf16.mxu0 0
        %1411 = vmatpush1.bf16.msra.mxu0 %v1360
        %1412 = vmatprep.subr.bf16.mxu0 0
        %1413 = vmatpush1.bf16.msra.mxu0 %v1361
        %1414 = vmatprep.subr.bf16.mxu0 0
        %1415 = vmatpush1.bf16.msra.mxu0 %v1362
        %1416 = vmatprep.subr.bf16.mxu0 0
        %1417 = vmatpush1.bf16.msra.mxu0 %v1363
        %1418 = vmatprep.subr.bf16.mxu0 0
        %1419 = vmatpush1.bf16.msra.mxu0 %v1364
        %1420 = vmatprep.subr.bf16.mxu0 0
        %1421 = vmatpush1.bf16.msra.mxu0 %v1365
        %1422 = vmatprep.subr.bf16.mxu0 0
        %1423 = vmatpush1.bf16.msra.mxu0 %v1366
        %1424 = vmatprep.subr.bf16.mxu0 0
        %1425 = vmatpush1.bf16.msra.mxu0 %v1367
        %1426 = vmatprep.subr.bf16.mxu0 0
        %1427 = vmatpush1.bf16.msra.mxu0 %v1368
        %1428 = vmatprep.subr.bf16.mxu0 0
        %1429 = vmatpush1.bf16.msra.mxu0 %v1369
        %1430 = vmatprep.subr.bf16.mxu0 0
        %1431 = vmatpush1.bf16.msra.mxu0 %v1370
        %1432 = vmatprep.subr.bf16.mxu0 0
        %1433 = vmatpush1.bf16.msra.mxu0 %v1371
        %1434 = vmatprep.subr.bf16.mxu0 0
        %1435 = vmatpush1.bf16.msra.mxu0 %v1372
        %1436 = vmatprep.subr.bf16.mxu0 0
        %1437 = vmatpush1.bf16.msra.mxu0 %v1373
        %1438 = vmatprep.mubr.bf16.mxu0 %v671
        %1439 = vmatmul.mubr.bf16.gmra.mrb[0].mxu0 %v764
        %v1440 = vpop.f32.mrb[0].mxu0
        %v1441 = vadd.f32 %v1200, %v1440
        %v1442 = vpop.f32.mrb[0].mxu0
        %v1443 = vpop.f32.mrb[0].mxu0
        %v1444 = vadd.f32 %v1203, %v1443
        %v1445 = vpop.f32.mrb[0].mxu0
        %1446 = vmatprep.mubr.bf16.mxu0 %v672
        %1447 = vmatmul.mubr.bf16.gmra.mrb[0].mxu0 %v765
        %v1448 = vpop.f32.mrb[0].mxu0
        %v1449 = vadd.f32 %v1208, %v1448
        %v1450 = vpop.f32.mrb[0].mxu0
        %v1451 = vpop.f32.mrb[0].mxu0
        %v1452 = vadd.f32 %v1211, %v1451
        %v1453 = vpop.f32.mrb[0].mxu0
        %1454 = vmatprep.mubr.bf16.mxu0 %v673
        %1455 = vmatmul.mubr.bf16.gmra.mrb[0].mxu0 %v766
        %v1456 = vpop.f32.mrb[0].mxu0
        %v1457 = vadd.f32 %v1216, %v1456
        %v1458 = vpop.f32.mrb[0].mxu0
        %v1459 = vpop.f32.mrb[0].mxu0
        %v1460 = vadd.f32 %v1219, %v1459
        %v1461 = vpop.f32.mrb[0].mxu0
        %1462 = vmatprep.mubr.bf16.mxu0 %v674
        %1463 = vmatmul.mubr.bf16.gmra.mrb[0].mxu0 %v767
        %v1464 = vpop.f32.mrb[0].mxu0
        %v1465 = vadd.f32 %v1224, %v1464
        %v1466 = vpop.f32.mrb[0].mxu0
        %v1467 = vpop.f32.mrb[0].mxu0
        %v1468 = vadd.f32 %v1227, %v1467
        %v1469 = vpop.f32.mrb[0].mxu0
        %1470 = vmatprep.mubr.bf16.mxu0 %v675
        %1471 = vmatmul.mubr.bf16.gmra.mrb[0].mxu0 %v768
        %v1472 = vpop.f32.mrb[0].mxu0
        %v1473 = vadd.f32 %v1232, %v1472
        %v1474 = vpop.f32.mrb[0].mxu0
        %v1475 = vpop.f32.mrb[0].mxu0
        %v1476 = vadd.f32 %v1235, %v1475
        %v1477 = vpop.f32.mrb[0].mxu0
        %1478 = vmatprep.mubr.bf16.mxu0 %v676
        %1479 = vmatmul.mubr.bf16.gmra.mrb[0].mxu0 %v769
        %v1480 = vpop.f32.mrb[0].mxu0
        %v1481 = vadd.f32 %v1240, %v1480
        %v1482 = vpop.f32.mrb[0].mxu0
        %v1483 = vpop.f32.mrb[0].mxu0
        %v1484 = vadd.f32 %v1243, %v1483
        %v1485 = vpop.f32.mrb[0].mxu0
        %1486 = vmatprep.mubr.bf16.mxu0 %v677
        %1487 = vmatmul.mubr.bf16.gmra.mrb[0].mxu0 %v770
        %v1488 = vpop.f32.mrb[0].mxu0
        %v1489 = vadd.f32 %v1248, %v1488
        %v1490 = vpop.f32.mrb[0].mxu0
        %v1491 = vpop.f32.mrb[0].mxu0
        %v1492 = vadd.f32 %v1251, %v1491
        %v1493 = vpop.f32.mrb[0].mxu0
        %1494 = vmatprep.mubr.bf16.mxu0 %v678
        %1495 = vmatmul.mubr.bf16.gmra.mrb[0].mxu0 %v771
        %v1496 = vpop.f32.mrb[0].mxu0
        %v1497 = vadd.f32 %v1256, %v1496
        %v1498 = vpop.f32.mrb[0].mxu0
        %v1499 = vpop.f32.mrb[0].mxu0
        %v1500 = vadd.f32 %v1259, %v1499
        %v1501 = vpop.f32.mrb[0].mxu0
        %1502 = vdwg.mxu0
        %1503 = vmatprep.subr.bf16.mxu0 0
        %1504 = vmatpush1.bf16.msra.mxu0 %v1374
        %1505 = vmatprep.subr.bf16.mxu0 0
        %1506 = vmatpush1.bf16.msra.mxu0 %v1375
        %1507 = vmatprep.subr.bf16.mxu0 0
        %1508 = vmatpush1.bf16.msra.mxu0 %v1376
        %1509 = vmatprep.subr.bf16.mxu0 0
        %1510 = vmatpush1.bf16.msra.mxu0 %v1377
        %1511 = vmatprep.subr.bf16.mxu0 0
        %1512 = vmatpush1.bf16.msra.mxu0 %v1378
        %1513 = vmatprep.subr.bf16.mxu0 0
        %1514 = vmatpush1.bf16.msra.mxu0 %v1379
        %1515 = vmatprep.subr.bf16.mxu0 0
        %1516 = vmatpush1.bf16.msra.mxu0 %v1380
        %1517 = vmatprep.subr.bf16.mxu0 0
        %1518 = vmatpush1.bf16.msra.mxu0 %v1381
        %1519 = vmatprep.subr.bf16.mxu0 0
        %1520 = vmatpush1.bf16.msra.mxu0 0
        %1521 = vmatprep.subr.bf16.mxu0 0
        %1522 = vmatpush1.bf16.msra.mxu0 0
        %1523 = vmatprep.subr.bf16.mxu0 0
        %1524 = vmatpush1.bf16.msra.mxu0 0
        %1525 = vmatprep.subr.bf16.mxu0 0
        %1526 = vmatpush1.bf16.msra.mxu0 0
        %1527 = vmatprep.subr.bf16.mxu0 0
        %1528 = vmatpush1.bf16.msra.mxu0 0
        %1529 = vmatprep.subr.bf16.mxu0 0
        %1530 = vmatpush1.bf16.msra.mxu0 0
        %1531 = vmatprep.subr.bf16.mxu0 0
        %1532 = vmatpush1.bf16.msra.mxu0 0
        %1533 = vmatprep.subr.bf16.mxu0 0
        %1534 = vmatpush1.bf16.msra.mxu0 0
        %1535 = vmatprep.mubr.bf16.mxu0 0
        %1536 = vmatmul.mubr.bf16.gmra.mrb[0].mxu0 %v807
        %v1537 = vpop.f32.mrb[0].mxu0
        %v1538 = vadd.f32 %v1441, %v1537
        %v1539 = vpop.f32.mrb[0].mxu0
        %v1540 = vpop.f32.mrb[0].mxu0
        %v1541 = vadd.f32 %v1444, %v1540
        %v1542 = vpop.f32.mrb[0].mxu0
        %1543 = vmatprep.mubr.bf16.mxu0 0
        %1544 = vmatmul.mubr.bf16.gmra.mrb[0].mxu0 %v808
        %v1545 = vpop.f32.mrb[0].mxu0
        %v1546 = vadd.f32 %v1449, %v1545
        %v1547 = vpop.f32.mrb[0].mxu0
        %v1548 = vpop.f32.mrb[0].mxu0
        %v1549 = vadd.f32 %v1452, %v1548
        %v1550 = vpop.f32.mrb[0].mxu0
        %1551 = vmatprep.mubr.bf16.mxu0 0
        %1552 = vmatmul.mubr.bf16.gmra.mrb[0].mxu0 %v809
        %v1553 = vpop.f32.mrb[0].mxu0
        %v1554 = vadd.f32 %v1457, %v1553
        %v1555 = vpop.f32.mrb[0].mxu0
        %v1556 = vpop.f32.mrb[0].mxu0
        %v1557 = vadd.f32 %v1460, %v1556
        %v1558 = vpop.f32.mrb[0].mxu0
        %1559 = vmatprep.mubr.bf16.mxu0 0
        %1560 = vmatmul.mubr.bf16.gmra.mrb[0].mxu0 %v810
        %v1561 = vpop.f32.mrb[0].mxu0
        %v1562 = vadd.f32 %v1465, %v1561
        %v1563 = vpop.f32.mrb[0].mxu0
        %v1564 = vpop.f32.mrb[0].mxu0
        %v1565 = vadd.f32 %v1468, %v1564
        %v1566 = vpop.f32.mrb[0].mxu0
        %1567 = vmatprep.mubr.bf16.mxu0 0
        %1568 = vmatmul.mubr.bf16.gmra.mrb[0].mxu0 %v811
        %v1569 = vpop.f32.mrb[0].mxu0
        %v1570 = vadd.f32 %v1473, %v1569
        %v1571 = vpop.f32.mrb[0].mxu0
        %v1572 = vpop.f32.mrb[0].mxu0
        %v1573 = vadd.f32 %v1476, %v1572
        %v1574 = vpop.f32.mrb[0].mxu0
        %1575 = vmatprep.mubr.bf16.mxu0 0
        %1576 = vmatmul.mubr.bf16.gmra.mrb[0].mxu0 %v812
        %v1577 = vpop.f32.mrb[0].mxu0
        %v1578 = vadd.f32 %v1481, %v1577
        %v1579 = vpop.f32.mrb[0].mxu0
        %v1580 = vpop.f32.mrb[0].mxu0
        %v1581 = vadd.f32 %v1484, %v1580
        %v1582 = vpop.f32.mrb[0].mxu0
        %1583 = vmatprep.mubr.bf16.mxu0 0
        %1584 = vmatmul.mubr.bf16.gmra.mrb[0].mxu0 %v813
        %v1585 = vpop.f32.mrb[0].mxu0
        %v1586 = vadd.f32 %v1489, %v1585
        %v1587 = vpop.f32.mrb[0].mxu0
        %v1588 = vpop.f32.mrb[0].mxu0
        %v1589 = vadd.f32 %v1492, %v1588
        %v1590 = vpop.f32.mrb[0].mxu0
        %1591 = vmatprep.mubr.bf16.mxu0 0
        %1592 = vmatmul.mubr.bf16.gmra.mrb[0].mxu0 %v814
        %v1593 = vpop.f32.mrb[0].mxu0
        %v1594 = vadd.f32 %v1497, %v1593
        %v1595 = vpop.f32.mrb[0].mxu0
        %v1596 = vpop.f32.mrb[0].mxu0
        %v1597 = vadd.f32 %v1500, %v1596
        %v1598 = vpop.f32.mrb[0].mxu0
        %1599 = vdwg.mxu0
        %s1600 = scalar_lea.vmem %s589, 384
        %v1601 = vld [vmem:[%s1600] sm:$0xf]
        %v1602 = vld [vmem:[%s1600 + $0x4] sm:$0xf]
        %v1603 = vld [vmem:[%s1600 + $0x8] sm:$0xf]
        %v1604 = vld [vmem:[%s1600 + $0xc] sm:$0xf]
        %v1605 = vld [vmem:[%s1600 + $0x10] sm:$0xf]
        %v1606 = vld [vmem:[%s1600 + $0x14] sm:$0xf]
        %v1607 = vld [vmem:[%s1600 + $0x18] sm:$0xf]
        %v1608 = vld [vmem:[%s1600 + $0x1c] sm:$0xf]
        %v1609 = vld [vmem:[%s1600 + $0x20] sm:$0xf]
        %v1610 = vld [vmem:[%s1600 + $0x24] sm:$0xf]
        %v1611 = vld [vmem:[%s1600 + $0x28] sm:$0xf]
        %v1612 = vld [vmem:[%s1600 + $0x2c] sm:$0xf]
        %v1613 = vld [vmem:[%s1600 + $0x30] sm:$0xf]
        %v1614 = vld [vmem:[%s1600 + $0x34] sm:$0xf]
        %v1615 = vld [vmem:[%s1600 + $0x38] sm:$0xf]
        %v1616 = vld [vmem:[%s1600 + $0x3c] sm:$0xf]
        %v1617 = vld [vmem:[%s1600 + $0x40] sm:$0xf]
        %v1618 = vld [vmem:[%s1600 + $0x44] sm:$0xf]
        %v1619 = vld [vmem:[%s1600 + $0x48] sm:$0xf]
        %v1620 = vld [vmem:[%s1600 + $0x4c] sm:$0xf]
        %v1621 = vld [vmem:[%s1600 + $0x50] sm:$0xf]
        %v1622 = vld [vmem:[%s1600 + $0x54] sm:$0xf]
        %v1623 = vld [vmem:[%s1600 + $0x58] sm:$0xf]
        %v1624 = vld [vmem:[%s1600 + $0x5c] sm:$0xf]
        %v1625 = vld [vmem:[%s1600 + $0x60] sm:$0xf]
        %v1626 = vld [vmem:[%s1600 + $0x64] sm:$0xf]
        %v1627 = vld [vmem:[%s1600 + $0x68] sm:$0xf]
        %v1628 = vld [vmem:[%s1600 + $0x6c] sm:$0xf]
        %v1629 = vld [vmem:[%s1600 + $0x70] sm:$0xf]
        %v1630 = vld [vmem:[%s1600 + $0x74] sm:$0xf]
        %v1631 = vld [vmem:[%s1600 + $0x78] sm:$0xf]
        %v1632 = vld [vmem:[%s1600 + $0x7c] sm:$0xf]
        %v1633 = vld [vmem:[%s1600 + $0x80] sm:$0xf]
        %v1634 = vld [vmem:[%s1600 + $0x84] sm:$0xf]
        %v1635 = vld [vmem:[%s1600 + $0x88] sm:$0xf]
        %v1636 = vld [vmem:[%s1600 + $0x8c] sm:$0xf]
        %v1637 = vld [vmem:[%s1600 + $0x90] sm:$0xf]
        %v1638 = vld [vmem:[%s1600 + $0x94] sm:$0xf]
        %v1639 = vld [vmem:[%s1600 + $0x98] sm:$0xf]
        %v1640 = vld [vmem:[%s1600 + $0x9c] sm:$0xf]
        %v1641 = vld [vmem:[%s1600 + $0xa0] sm:$0xf]
        %v1642 = vld [vmem:[%s1600 + $0xa4] sm:$0xf]
        %v1643 = vld [vmem:[%s1600 + $0xa8] sm:$0xf]
        %v1644 = vld [vmem:[%s1600 + $0xac] sm:$0xf]
        %v1645 = vld [vmem:[%s1600 + $0xb0] sm:$0xf]
        %v1646 = vld [vmem:[%s1600 + $0xb4] sm:$0xf]
        %v1647 = vld [vmem:[%s1600 + $0xb8] sm:$0xf]
        %v1648 = vld [vmem:[%s1600 + $0xbc] sm:$0xf]
        %v1697 = vunpack.c.l.b16 %v1601
        %v1698 = vunpack.c.l.b16 %v1602
        %v1699 = vunpack.c.l.b16 %v1603
        %v1700 = vunpack.c.l.b16 %v1604
        %v1701 = vunpack.c.l.b16 %v1605
        %v1702 = vunpack.c.l.b16 %v1606
        %v1703 = vunpack.c.l.b16 %v1607
        %v1704 = vunpack.c.l.b16 %v1608
        %v1705 = vunpack.c.l.b16 %v1609
        %v1706 = vunpack.c.l.b16 %v1610
        %v1707 = vunpack.c.l.b16 %v1611
        %v1708 = vunpack.c.l.b16 %v1612
        %v1709 = vunpack.c.l.b16 %v1613
        %v1710 = vunpack.c.l.b16 %v1614
        %v1711 = vunpack.c.l.b16 %v1615
        %v1712 = vunpack.c.l.b16 %v1616
        %v1713 = vunpack.c.l.b16 %v1617
        %v1714 = vunpack.c.l.b16 %v1618
        %v1715 = vunpack.c.l.b16 %v1619
        %v1716 = vunpack.c.l.b16 %v1620
        %v1717 = vunpack.c.l.b16 %v1621
        %v1718 = vunpack.c.l.b16 %v1622
        %v1719 = vunpack.c.l.b16 %v1623
        %v1720 = vunpack.c.l.b16 %v1624
        %v1721 = vunpack.c.l.b16 %v1625
        %v1722 = vunpack.c.l.b16 %v1626
        %v1723 = vunpack.c.l.b16 %v1627
        %v1724 = vunpack.c.l.b16 %v1628
        %v1725 = vunpack.c.l.b16 %v1629
        %v1726 = vunpack.c.l.b16 %v1630
        %v1727 = vunpack.c.l.b16 %v1631
        %v1728 = vunpack.c.l.b16 %v1632
        %v1729 = vunpack.c.l.b16 %v1633
        %v1730 = vunpack.c.l.b16 %v1634
        %v1731 = vunpack.c.l.b16 %v1635
        %v1732 = vunpack.c.l.b16 %v1636
        %v1733 = vunpack.c.l.b16 %v1637
        %v1734 = vunpack.c.l.b16 %v1638
        %v1735 = vunpack.c.l.b16 %v1639
        %v1736 = vunpack.c.l.b16 %v1640
        %v1737 = vunpack.c.l.b16 %v1641
        %v1738 = vunpack.c.l.b16 %v1642
        %v1739 = vunpack.c.l.b16 %v1643
        %v1740 = vunpack.c.l.b16 %v1644
        %v1741 = vunpack.c.l.b16 %v1645
        %v1742 = vunpack.c.l.b16 %v1646
        %v1743 = vunpack.c.l.b16 %v1647
        %v1744 = vunpack.c.l.b16 %v1648
        %v1745 = vpack.c.b16 %v1698, %v1697
        %v1746 = vpack.c.b16 %v1700, %v1699
        %v1747 = vpack.c.b16 %v1702, %v1701
        %v1748 = vpack.c.b16 %v1704, %v1703
        %v1749 = vpack.c.b16 %v1706, %v1705
        %v1750 = vpack.c.b16 %v1708, %v1707
        %v1751 = vpack.c.b16 %v1710, %v1709
        %v1752 = vpack.c.b16 %v1712, %v1711
        %v1753 = vpack.c.b16 %v1714, %v1713
        %v1754 = vpack.c.b16 %v1716, %v1715
        %v1755 = vpack.c.b16 %v1718, %v1717
        %v1756 = vpack.c.b16 %v1720, %v1719
        %v1757 = vpack.c.b16 %v1722, %v1721
        %v1758 = vpack.c.b16 %v1724, %v1723
        %v1759 = vpack.c.b16 %v1726, %v1725
        %v1760 = vpack.c.b16 %v1728, %v1727
        %v1761 = vpack.c.b16 %v1730, %v1729
        %v1762 = vpack.c.b16 %v1732, %v1731
        %v1763 = vpack.c.b16 %v1734, %v1733
        %v1764 = vpack.c.b16 %v1736, %v1735
        %v1765 = vpack.c.b16 %v1738, %v1737
        %v1766 = vpack.c.b16 %v1740, %v1739
        %v1767 = vpack.c.b16 %v1742, %v1741
        %v1768 = vpack.c.b16 %v1744, %v1743
        %1793 = vmatprep.subr.bf16.mxu0 0
        %1794 = vmatpush1.bf16.msra.mxu0 %v1745
        %1795 = vmatprep.subr.bf16.mxu0 0
        %1796 = vmatpush1.bf16.msra.mxu0 %v1746
        %1797 = vmatprep.subr.bf16.mxu0 0
        %1798 = vmatpush1.bf16.msra.mxu0 %v1747
        %1799 = vmatprep.subr.bf16.mxu0 0
        %1800 = vmatpush1.bf16.msra.mxu0 %v1748
        %1801 = vmatprep.subr.bf16.mxu0 0
        %1802 = vmatpush1.bf16.msra.mxu0 %v1749
        %1803 = vmatprep.subr.bf16.mxu0 0
        %1804 = vmatpush1.bf16.msra.mxu0 %v1750
        %1805 = vmatprep.subr.bf16.mxu0 0
        %1806 = vmatpush1.bf16.msra.mxu0 %v1751
        %1807 = vmatprep.subr.bf16.mxu0 0
        %1808 = vmatpush1.bf16.msra.mxu0 %v1752
        %1809 = vmatprep.subr.bf16.mxu0 0
        %1810 = vmatpush1.bf16.msra.mxu0 %v1753
        %1811 = vmatprep.subr.bf16.mxu0 0
        %1812 = vmatpush1.bf16.msra.mxu0 %v1754
        %1813 = vmatprep.subr.bf16.mxu0 0
        %1814 = vmatpush1.bf16.msra.mxu0 %v1755
        %1815 = vmatprep.subr.bf16.mxu0 0
        %1816 = vmatpush1.bf16.msra.mxu0 %v1756
        %1817 = vmatprep.subr.bf16.mxu0 0
        %1818 = vmatpush1.bf16.msra.mxu0 %v1757
        %1819 = vmatprep.subr.bf16.mxu0 0
        %1820 = vmatpush1.bf16.msra.mxu0 %v1758
        %1821 = vmatprep.subr.bf16.mxu0 0
        %1822 = vmatpush1.bf16.msra.mxu0 %v1759
        %1823 = vmatprep.subr.bf16.mxu0 0
        %1824 = vmatpush1.bf16.msra.mxu0 %v1760
        %1825 = vmatprep.mubr.bf16.mxu0 %v673
        %1826 = vmatmul.mubr.bf16.gmra.mrb[0].mxu0 %v766
        %v1827 = vpop.f32.mrb[0].mxu0
        %v1828 = vadd.f32 0.0, %v1827
        %v1829 = vpop.f32.mrb[0].mxu0
        %v1830 = vpop.f32.mrb[0].mxu0
        %v1831 = vadd.f32 0.0, %v1830
        %v1832 = vpop.f32.mrb[0].mxu0
        %1833 = vmatprep.mubr.bf16.mxu0 %v674
        %1834 = vmatmul.mubr.bf16.gmra.mrb[0].mxu0 %v767
        %v1835 = vpop.f32.mrb[0].mxu0
        %v1836 = vadd.f32 0.0, %v1835
        %v1837 = vpop.f32.mrb[0].mxu0
        %v1838 = vpop.f32.mrb[0].mxu0
        %v1839 = vadd.f32 0.0, %v1838
        %v1840 = vpop.f32.mrb[0].mxu0
        %1841 = vmatprep.mubr.bf16.mxu0 %v675
        %1842 = vmatmul.mubr.bf16.gmra.mrb[0].mxu0 %v768
        %v1843 = vpop.f32.mrb[0].mxu0
        %v1844 = vadd.f32 0.0, %v1843
        %v1845 = vpop.f32.mrb[0].mxu0
        %v1846 = vpop.f32.mrb[0].mxu0
        %v1847 = vadd.f32 0.0, %v1846
        %v1848 = vpop.f32.mrb[0].mxu0
        %1849 = vmatprep.mubr.bf16.mxu0 %v676
        %1850 = vmatmul.mubr.bf16.gmra.mrb[0].mxu0 %v769
        %v1851 = vpop.f32.mrb[0].mxu0
        %v1852 = vadd.f32 0.0, %v1851
        %v1853 = vpop.f32.mrb[0].mxu0
        %v1854 = vpop.f32.mrb[0].mxu0
        %v1855 = vadd.f32 0.0, %v1854
        %v1856 = vpop.f32.mrb[0].mxu0
        %1857 = vmatprep.mubr.bf16.mxu0 %v677
        %1858 = vmatmul.mubr.bf16.gmra.mrb[0].mxu0 %v770
        %v1859 = vpop.f32.mrb[0].mxu0
        %v1860 = vadd.f32 0.0, %v1859
        %v1861 = vpop.f32.mrb[0].mxu0
        %v1862 = vpop.f32.mrb[0].mxu0
        %v1863 = vadd.f32 0.0, %v1862
        %v1864 = vpop.f32.mrb[0].mxu0
        %1865 = vmatprep.mubr.bf16.mxu0 %v678
        %1866 = vmatmul.mubr.bf16.gmra.mrb[0].mxu0 %v771
        %v1867 = vpop.f32.mrb[0].mxu0
        %v1868 = vadd.f32 0.0, %v1867
        %v1869 = vpop.f32.mrb[0].mxu0
        %v1870 = vpop.f32.mrb[0].mxu0
        %v1871 = vadd.f32 0.0, %v1870
        %v1872 = vpop.f32.mrb[0].mxu0
        %1873 = vmatprep.mubr.bf16.mxu0 %v679
        %1874 = vmatmul.mubr.bf16.gmra.mrb[0].mxu0 %v772
        %v1875 = vpop.f32.mrb[0].mxu0
        %v1876 = vadd.f32 0.0, %v1875
        %v1877 = vpop.f32.mrb[0].mxu0
        %v1878 = vpop.f32.mrb[0].mxu0
        %v1879 = vadd.f32 0.0, %v1878
        %v1880 = vpop.f32.mrb[0].mxu0
        %1881 = vmatprep.mubr.bf16.mxu0 %v680
        %1882 = vmatmul.mubr.bf16.gmra.mrb[0].mxu0 %v773
        %v1883 = vpop.f32.mrb[0].mxu0
        %v1884 = vadd.f32 0.0, %v1883
        %v1885 = vpop.f32.mrb[0].mxu0
        %v1886 = vpop.f32.mrb[0].mxu0
        %v1887 = vadd.f32 0.0, %v1886
        %v1888 = vpop.f32.mrb[0].mxu0
        %1889 = vdwg.mxu0
        %1890 = vmatprep.subr.bf16.mxu0 0
        %1891 = vmatpush1.bf16.msra.mxu0 %v1761
        %1892 = vmatprep.subr.bf16.mxu0 0
        %1893 = vmatpush1.bf16.msra.mxu0 %v1762
        %1894 = vmatprep.subr.bf16.mxu0 0
        %1895 = vmatpush1.bf16.msra.mxu0 %v1763
        %1896 = vmatprep.subr.bf16.mxu0 0
        %1897 = vmatpush1.bf16.msra.mxu0 %v1764
        %1898 = vmatprep.subr.bf16.mxu0 0
        %1899 = vmatpush1.bf16.msra.mxu0 %v1765
        %1900 = vmatprep.subr.bf16.mxu0 0
        %1901 = vmatpush1.bf16.msra.mxu0 %v1766
        %1902 = vmatprep.subr.bf16.mxu0 0
        %1903 = vmatpush1.bf16.msra.mxu0 %v1767
        %1904 = vmatprep.subr.bf16.mxu0 0
        %1905 = vmatpush1.bf16.msra.mxu0 %v1768
        %1906 = vmatprep.subr.bf16.mxu0 0
        %1907 = vmatpush1.bf16.msra.mxu0 0
        %1908 = vmatprep.subr.bf16.mxu0 0
        %1909 = vmatpush1.bf16.msra.mxu0 0
        %1910 = vmatprep.subr.bf16.mxu0 0
        %1911 = vmatpush1.bf16.msra.mxu0 0
        %1912 = vmatprep.subr.bf16.mxu0 0
        %1913 = vmatpush1.bf16.msra.mxu0 0
        %1914 = vmatprep.subr.bf16.mxu0 0
        %1915 = vmatpush1.bf16.msra.mxu0 0
        %1916 = vmatprep.subr.bf16.mxu0 0
        %1917 = vmatpush1.bf16.msra.mxu0 0
        %1918 = vmatprep.subr.bf16.mxu0 0
        %1919 = vmatpush1.bf16.msra.mxu0 0
        %1920 = vmatprep.subr.bf16.mxu0 0
        %1921 = vmatpush1.bf16.msra.mxu0 0
        %1922 = vmatprep.mubr.bf16.mxu0 0
        %1923 = vmatmul.mubr.bf16.gmra.mrb[0].mxu0 %v809
        %v1924 = vpop.f32.mrb[0].mxu0
        %v1925 = vadd.f32 %v1828, %v1924
        %v1926 = vpop.f32.mrb[0].mxu0
        %v1927 = vpop.f32.mrb[0].mxu0
        %v1928 = vadd.f32 %v1831, %v1927
        %v1929 = vpop.f32.mrb[0].mxu0
        %1930 = vmatprep.mubr.bf16.mxu0 0
        %1931 = vmatmul.mubr.bf16.gmra.mrb[0].mxu0 %v810
        %v1932 = vpop.f32.mrb[0].mxu0
        %v1933 = vadd.f32 %v1836, %v1932
        %v1934 = vpop.f32.mrb[0].mxu0
        %v1935 = vpop.f32.mrb[0].mxu0
        %v1936 = vadd.f32 %v1839, %v1935
        %v1937 = vpop.f32.mrb[0].mxu0
        %1938 = vmatprep.mubr.bf16.mxu0 0
        %1939 = vmatmul.mubr.bf16.gmra.mrb[0].mxu0 %v811
        %v1940 = vpop.f32.mrb[0].mxu0
        %v1941 = vadd.f32 %v1844, %v1940
        %v1942 = vpop.f32.mrb[0].mxu0
        %v1943 = vpop.f32.mrb[0].mxu0
        %v1944 = vadd.f32 %v1847, %v1943
        %v1945 = vpop.f32.mrb[0].mxu0
        %1946 = vmatprep.mubr.bf16.mxu0 0
        %1947 = vmatmul.mubr.bf16.gmra.mrb[0].mxu0 %v812
        %v1948 = vpop.f32.mrb[0].mxu0
        %v1949 = vadd.f32 %v1852, %v1948
        %v1950 = vpop.f32.mrb[0].mxu0
        %v1951 = vpop.f32.mrb[0].mxu0
        %v1952 = vadd.f32 %v1855, %v1951
        %v1953 = vpop.f32.mrb[0].mxu0
        %1954 = vmatprep.mubr.bf16.mxu0 0
        %1955 = vmatmul.mubr.bf16.gmra.mrb[0].mxu0 %v813
        %v1956 = vpop.f32.mrb[0].mxu0
        %v1957 = vadd.f32 %v1860, %v1956
        %v1958 = vpop.f32.mrb[0].mxu0
        %v1959 = vpop.f32.mrb[0].mxu0
        %v1960 = vadd.f32 %v1863, %v1959
        %v1961 = vpop.f32.mrb[0].mxu0
        %1962 = vmatprep.mubr.bf16.mxu0 0
        %1963 = vmatmul.mubr.bf16.gmra.mrb[0].mxu0 %v814
        %v1964 = vpop.f32.mrb[0].mxu0
        %v1965 = vadd.f32 %v1868, %v1964
        %v1966 = vpop.f32.mrb[0].mxu0
        %v1967 = vpop.f32.mrb[0].mxu0
        %v1968 = vadd.f32 %v1871, %v1967
        %v1969 = vpop.f32.mrb[0].mxu0
        %1970 = vmatprep.mubr.bf16.mxu0 0
        %1971 = vmatmul.mubr.bf16.gmra.mrb[0].mxu0 %v815
        %v1972 = vpop.f32.mrb[0].mxu0
        %v1973 = vadd.f32 %v1876, %v1972
        %v1974 = vpop.f32.mrb[0].mxu0
        %v1975 = vpop.f32.mrb[0].mxu0
        %v1976 = vadd.f32 %v1879, %v1975
        %v1977 = vpop.f32.mrb[0].mxu0
        %1978 = vmatprep.mubr.bf16.mxu0 0
        %1979 = vmatmul.mubr.bf16.gmra.mrb[0].mxu0 %v816
        %v1980 = vpop.f32.mrb[0].mxu0
        %v1981 = vadd.f32 %v1884, %v1980
        %v1982 = vpop.f32.mrb[0].mxu0
        %v1983 = vpop.f32.mrb[0].mxu0
        %v1984 = vadd.f32 %v1887, %v1983
        %v1985 = vpop.f32.mrb[0].mxu0
        %1986 = vdwg.mxu0
        %v1987 = vadd.f32 %v1538, %v1925
        %v1988 = vadd.f32 %v1541, %v1928
        %v1989 = vadd.f32 %v1546, %v1933
        %v1990 = vadd.f32 %v1549, %v1936
        %v1991 = vadd.f32 %v1554, %v1941
        %v1992 = vadd.f32 %v1557, %v1944
        %v1993 = vadd.f32 %v1562, %v1949
        %v1994 = vadd.f32 %v1565, %v1952
        %v1995 = vadd.f32 %v1570, %v1957
        %v1996 = vadd.f32 %v1573, %v1960
        %v1997 = vadd.f32 %v1578, %v1965
        %v1998 = vadd.f32 %v1581, %v1968
        %v1999 = vadd.f32 %v1586, %v1973
        %v2000 = vadd.f32 %v1589, %v1976
        %v2001 = vadd.f32 %v1594, %v1981
        %v2002 = vadd.f32 %v1597, %v1984
        %v2003 = vld [vmem:[%s595] sm:$0x1]
        %v2005 = vlaneseq
        %v2006 = vshrl.u32 %v2005, 7
        %v2007 = vsub.s32 0, %v2006
        %v2008 = vrot.slane %v2003, %v2007
        %v2010 = vadd.f32 %v1987, %v2008
        %v2011 = vadd.f32 %v1988, %v2008
        %v2012 = vadd.f32 %v1989, %v2008
        %v2013 = vadd.f32 %v1990, %v2008
        %v2014 = vadd.f32 %v1991, %v2008
        %v2015 = vadd.f32 %v1992, %v2008
        %v2016 = vadd.f32 %v1993, %v2008
        %v2017 = vadd.f32 %v1994, %v2008
        %v2018 = vadd.f32 %v1995, %v2008
        %v2019 = vadd.f32 %v1996, %v2008
        %v2020 = vadd.f32 %v1997, %v2008
        %v2021 = vadd.f32 %v1998, %v2008
        %v2022 = vadd.f32 %v1999, %v2008
        %v2023 = vadd.f32 %v2000, %v2008
        %v2024 = vadd.f32 %v2001, %v2008
        %v2025 = vadd.f32 %v2002, %v2008
        %v2026 = vpack.c.bf16 %v2011, %v2010
        %v2027 = vpack.c.bf16 %v2013, %v2012
        %v2028 = vpack.c.bf16 %v2015, %v2014
        %v2029 = vpack.c.bf16 %v2017, %v2016
        %v2030 = vpack.c.bf16 %v2019, %v2018
        %v2031 = vpack.c.bf16 %v2021, %v2020
        %v2032 = vpack.c.bf16 %v2023, %v2022
        %v2033 = vpack.c.bf16 %v2025, %v2024
        %v2042 = vunpack.c.l.b16 %v2026
        %v2043 = vunpack.c.h.b16 %v2026
        %v2044 = vunpack.c.l.b16 %v2027
        %v2045 = vunpack.c.h.b16 %v2027
        %v2046 = vunpack.c.l.b16 %v2028
        %v2047 = vunpack.c.h.b16 %v2028
        %v2048 = vunpack.c.l.b16 %v2029
        %v2049 = vunpack.c.h.b16 %v2029
        %v2050 = vunpack.c.l.b16 %v2030
        %v2051 = vunpack.c.h.b16 %v2030
        %v2052 = vunpack.c.l.b16 %v2031
        %v2053 = vunpack.c.h.b16 %v2031
        %v2054 = vunpack.c.l.b16 %v2032
        %v2055 = vunpack.c.h.b16 %v2032
        %v2056 = vunpack.c.l.b16 %v2033
        %v2057 = vunpack.c.h.b16 %v2033
        %v2058 = vpack.c.b16 %v2042, %v2042
        %v2059 = vpack.c.b16 %v2043, %v2043
        %v2060 = vpack.c.b16 %v2044, %v2044
        %v2061 = vpack.c.b16 %v2045, %v2045
        %v2062 = vpack.c.b16 %v2046, %v2046
        %v2063 = vpack.c.b16 %v2047, %v2047
        %v2064 = vpack.c.b16 %v2048, %v2048
        %v2065 = vpack.c.b16 %v2049, %v2049
        %v2066 = vpack.c.b16 %v2050, %v2050
        %v2067 = vpack.c.b16 %v2051, %v2051
        %v2068 = vpack.c.b16 %v2052, %v2052
        %v2069 = vpack.c.b16 %v2053, %v2053
        %v2070 = vpack.c.b16 %v2054, %v2054
        %v2071 = vpack.c.b16 %v2055, %v2055
        %v2072 = vpack.c.b16 %v2056, %v2056
        %v2073 = vpack.c.b16 %v2057, %v2057
        %2090 = vst [vmem:[%s572] sm:$0xf] %v2058
        %2091 = vst [vmem:[%s572 + $0x4] sm:$0xf] %v2059
        %2092 = vst [vmem:[%s572 + $0x8] sm:$0xf] %v2060
        %2093 = vst [vmem:[%s572 + $0xc] sm:$0xf] %v2061
        %2094 = vst [vmem:[%s572 + $0x10] sm:$0xf] %v2062
        %2095 = vst [vmem:[%s572 + $0x14] sm:$0xf] %v2063
        %2096 = vst [vmem:[%s572 + $0x18] sm:$0xf] %v2064
        %2097 = vst [vmem:[%s572 + $0x1c] sm:$0xf] %v2065
        %2098 = vst [vmem:[%s572 + $0x20] sm:$0xf] %v2066
        %2099 = vst [vmem:[%s572 + $0x24] sm:$0xf] %v2067
        %2100 = vst [vmem:[%s572 + $0x28] sm:$0xf] %v2068
        %2101 = vst [vmem:[%s572 + $0x2c] sm:$0xf] %v2069
        %2102 = vst [vmem:[%s572 + $0x30] sm:$0xf] %v2070
        %2103 = vst [vmem:[%s572 + $0x34] sm:$0xf] %v2071
        %2104 = vst [vmem:[%s572 + $0x38] sm:$0xf] %v2072
        %2105 = vst [vmem:[%s572 + $0x3c] sm:$0xf] %v2073
        %s2106 = sand.u32 %s218, 1
        %s2107 = sand.u32 %s218, 1
        %s2108 = smul.addr %s2107, 64
        %s2109 = scalar_lea.vmem [#allocation5], %s2108
        // Predicated region
        $region164: #{srm_fl_forward.7} parent=150 // pred_check
          %p2110 = pneg %p228
        $region165: #{srm_fl_forward.7} parent=150 // pred_check_branch
          %2112 = sbr.rel (%p2110) target = $region167
        $region166: #{srm_fl_forward.7} parent=150 // pred_region
          %s2113 = sadd.s32 %s23, %s24
          %s2114 = smul.u32 8, %s25
          %s2115 = smul.addr %s2114, 4
          %s2116 = sadd.s32 %s2113, %s2115
          %s2117 = smul.addr %s22, 64
          %s2118 = sadd.s32 %s2116, %s2117
          %s2119 = smul.addr %s2118, 4
          %s2120 = scalar_lea.vmem %s5, %s2119
          // Predicated region
          $region168: #{srm_fl_forward.7} parent=166 // pred_check
            _
          $region169: #{srm_fl_forward.7} parent=166 // pred_check_branch
            %2122 = sbr.rel (0) target = $region171
          $region170: #{srm_fl_forward.7} parent=166 // pred_region
            // Predicated region
            $region172: #{srm_fl_forward.7} parent=170 // pred_check
              _
            $region173: #{srm_fl_forward.7} parent=170 // pred_check_branch
              %2124 = sbr.rel target = $region175
            $region174: #{srm_fl_forward.7} parent=170 // pred_region
              // Predicated region
              $region187: #{srm_fl_forward.7} parent=174 // pred_check
                _
              $region188: #{srm_fl_forward.7} parent=174 // pred_check_branch
                %2169 = sbr.rel (0) target = $region190
              $region189: #{srm_fl_forward.7} parent=174 // pred_region
                loop: start=0, step=1, limit=1
                $region191: #{srm_fl_forward.7} parent=189 // loop_pre_header
                  _
                $region192: #{srm_fl_forward.7} parent=189 // loop_header
                  %s2171 = sphi 0, %s2175
                  %p2172 = scmp.ge.s32.totalorder %s2171, 1
                  %s2176 = sphi %s2109, %s2109
                  %s2177 = sphi %s2120, %s2120
                $region193: #{srm_fl_forward.7} parent=189 // loop_header_branch
                  %2174 = sbr.rel (%p2172) target = $region197
                $region194: #{srm_fl_forward.7} parent=189 // loop_body
                  _
                $region195: #{srm_fl_forward.7} parent=189 // loop_footer
                  %s2175 = sadd.s32 1, %s2171
                $region196: #{srm_fl_forward.7} parent=189 // loop_footer_branch
                  %2170 = sbr.rel target = $region192
                $region197: #{srm_fl_forward.7} parent=189 // loop_exit
                  _
                loop: start=0, step=1, limit=1
                $region198: #{srm_fl_forward.7} parent=189 // loop_pre_header
                  _
                $region199: #{srm_fl_forward.7} parent=189 // loop_header
                  %s2180 = sphi 0, %s2184
                  %p2181 = scmp.ge.s32.totalorder %s2180, 1
                  %s2185 = sphi %s2109, %s2109
                  %s2186 = sphi %s2120, %s2120
                $region200: #{srm_fl_forward.7} parent=189 // loop_header_branch
                  %2183 = sbr.rel (%p2181) target = $region204
                $region201: #{srm_fl_forward.7} parent=189 // loop_body
                  %v2187 = vld [vmem:[%s2185] sm:$0xf]
                  %2188 = vst [vmem:[%s2186] sm:$0xf] %v2187
                  %v2189 = vld [vmem:[%s2185 + $0x4] sm:$0xf]
                  %2190 = vst [vmem:[%s2186 + $0x8] sm:$0xf] %v2189
                  %v2191 = vld [vmem:[%s2185 + $0x8] sm:$0xf]
                  %2192 = vst [vmem:[%s2186 + $0x10] sm:$0xf] %v2191
                  %v2193 = vld [vmem:[%s2185 + $0xc] sm:$0xf]
                  %2194 = vst [vmem:[%s2186 + $0x18] sm:$0xf] %v2193
                  %v2195 = vld [vmem:[%s2185 + $0x10] sm:$0xf]
                  %2196 = vst [vmem:[%s2186 + $0x20] sm:$0xf] %v2195
                  %v2197 = vld [vmem:[%s2185 + $0x14] sm:$0xf]
                  %2198 = vst [vmem:[%s2186 + $0x28] sm:$0xf] %v2197
                  %v2199 = vld [vmem:[%s2185 + $0x18] sm:$0xf]
                  %2200 = vst [vmem:[%s2186 + $0x30] sm:$0xf] %v2199
                  %v2201 = vld [vmem:[%s2185 + $0x1c] sm:$0xf]
                  %2202 = vst [vmem:[%s2186 + $0x38] sm:$0xf] %v2201
                  %v2203 = vld [vmem:[%s2185 + $0x20] sm:$0xf]
                  %2204 = vst [vmem:[%s2186 + $0x40] sm:$0xf] %v2203
                  %v2205 = vld [vmem:[%s2185 + $0x24] sm:$0xf]
                  %2206 = vst [vmem:[%s2186 + $0x48] sm:$0xf] %v2205
                  %v2207 = vld [vmem:[%s2185 + $0x28] sm:$0xf]
                  %2208 = vst [vmem:[%s2186 + $0x50] sm:$0xf] %v2207
                  %v2209 = vld [vmem:[%s2185 + $0x2c] sm:$0xf]
                  %2210 = vst [vmem:[%s2186 + $0x58] sm:$0xf] %v2209
                  %v2211 = vld [vmem:[%s2185 + $0x30] sm:$0xf]
                  %2212 = vst [vmem:[%s2186 + $0x60] sm:$0xf] %v2211
                  %v2213 = vld [vmem:[%s2185 + $0x34] sm:$0xf]
                  %2214 = vst [vmem:[%s2186 + $0x68] sm:$0xf] %v2213
                  %v2215 = vld [vmem:[%s2185 + $0x38] sm:$0xf]
                  %2216 = vst [vmem:[%s2186 + $0x70] sm:$0xf] %v2215
                  %v2217 = vld [vmem:[%s2185 + $0x3c] sm:$0xf]
                  %2218 = vst [vmem:[%s2186 + $0x78] sm:$0xf] %v2217
                $region202: #{srm_fl_forward.7} parent=189 // loop_footer
                  %s2184 = sadd.s32 1, %s2180
                $region203: #{srm_fl_forward.7} parent=189 // loop_footer_branch
                  %2179 = sbr.rel target = $region199
                $region204: #{srm_fl_forward.7} parent=189 // loop_exit
                  _
              $region190: #{srm_fl_forward.7} parent=174 // pred_fallthru
                _
            $region175: #{srm_fl_forward.7} parent=170 // pred_fallthru
              _
            // Predicated region
            $region176: #{srm_fl_forward.7} parent=170 // pred_check
              _
            $region177: #{srm_fl_forward.7} parent=170 // pred_check_branch
              %2126 = sbr.rel (0) target = $region179
            $region178: #{srm_fl_forward.7} parent=170 // pred_region
              loop: start=0, step=1, limit=1
              $region180: #{srm_fl_forward.7} parent=178 // loop_pre_header
                _
              $region181: #{srm_fl_forward.7} parent=178 // loop_header
                %s2129 = sphi 0, %s2133
                %p2130 = scmp.ge.s32.totalorder %s2129, 1
                %s2134 = sphi %s2109, %s2109
                %s2135 = sphi %s2120, %s2120
              $region182: #{srm_fl_forward.7} parent=178 // loop_header_branch
                %2132 = sbr.rel (%p2130) target = $region186
              $region183: #{srm_fl_forward.7} parent=178 // loop_body
                %v2136 = vld [vmem:[%s2134] sm:$0xf]
                %2137 = vst [vmem:[%s2135] sm:$0xf] %v2136
                %v2138 = vld [vmem:[%s2134 + $0x4] sm:$0xf]
                %2139 = vst [vmem:[%s2135 + $0x8] sm:$0xf] %v2138
                %v2140 = vld [vmem:[%s2134 + $0x8] sm:$0xf]
                %2141 = vst [vmem:[%s2135 + $0x10] sm:$0xf] %v2140
                %v2142 = vld [vmem:[%s2134 + $0xc] sm:$0xf]
                %2143 = vst [vmem:[%s2135 + $0x18] sm:$0xf] %v2142
                %v2144 = vld [vmem:[%s2134 + $0x10] sm:$0xf]
                %2145 = vst [vmem:[%s2135 + $0x20] sm:$0xf] %v2144
                %v2146 = vld [vmem:[%s2134 + $0x14] sm:$0xf]
                %2147 = vst [vmem:[%s2135 + $0x28] sm:$0xf] %v2146
                %v2148 = vld [vmem:[%s2134 + $0x18] sm:$0xf]
                %2149 = vst [vmem:[%s2135 + $0x30] sm:$0xf] %v2148
                %v2150 = vld [vmem:[%s2134 + $0x1c] sm:$0xf]
                %2151 = vst [vmem:[%s2135 + $0x38] sm:$0xf] %v2150
                %v2152 = vld [vmem:[%s2134 + $0x20] sm:$0xf]
                %2153 = vst [vmem:[%s2135 + $0x40] sm:$0xf] %v2152
                %v2154 = vld [vmem:[%s2134 + $0x24] sm:$0xf]
                %2155 = vst [vmem:[%s2135 + $0x48] sm:$0xf] %v2154
                %v2156 = vld [vmem:[%s2134 + $0x28] sm:$0xf]
                %2157 = vst [vmem:[%s2135 + $0x50] sm:$0xf] %v2156
                %v2158 = vld [vmem:[%s2134 + $0x2c] sm:$0xf]
                %2159 = vst [vmem:[%s2135 + $0x58] sm:$0xf] %v2158
                %v2160 = vld [vmem:[%s2134 + $0x30] sm:$0xf]
                %2161 = vst [vmem:[%s2135 + $0x60] sm:$0xf] %v2160
                %v2162 = vld [vmem:[%s2134 + $0x34] sm:$0xf]
                %2163 = vst [vmem:[%s2135 + $0x68] sm:$0xf] %v2162
                %v2164 = vld [vmem:[%s2134 + $0x38] sm:$0xf]
                %2165 = vst [vmem:[%s2135 + $0x70] sm:$0xf] %v2164
                %v2166 = vld [vmem:[%s2134 + $0x3c] sm:$0xf]
                %2167 = vst [vmem:[%s2135 + $0x78] sm:$0xf] %v2166
              $region184: #{srm_fl_forward.7} parent=178 // loop_footer
                %s2133 = sadd.s32 1, %s2129
              $region185: #{srm_fl_forward.7} parent=178 // loop_footer_branch
                %2128 = sbr.rel target = $region181
              $region186: #{srm_fl_forward.7} parent=178 // loop_exit
                _
            $region179: #{srm_fl_forward.7} parent=170 // pred_fallthru
              _
          $region171: #{srm_fl_forward.7} parent=166 // pred_fallthru
            _
          %2219 = vnop
        $region167: #{srm_fl_forward.7} parent=150 // pred_fallthru
          _
      $region151: #{srm_fl_forward.7} parent=5 // pred_fallthru
        _
      %p2220 = scmp.le.s32.totalorder 2, %s11
      // Predicated region
      $region205: #{srm_fl_forward.7} parent=5 // pred_check
        %p2221 = pneg %p2220
      $region206: #{srm_fl_forward.7} parent=5 // pred_check_branch
        %2223 = sbr.rel (%p2221) target = $region208
      $region207: #{srm_fl_forward.7} parent=5 // pred_region
        %s2224 = ssub.s32 %s11, 2
        // Predicated region
        $region209: #{srm_fl_forward.7} parent=207 // pred_check
          %p2225 = pneg %p234
        $region210: #{srm_fl_forward.7} parent=207 // pred_check_branch
          %2227 = sbr.rel (%p2225) target = $region212
        $region211: #{srm_fl_forward.7} parent=207 // pred_region
          %s2228 = sand.u32 %s219, 1
          %s2229 = sand.u32 %s219, 1
          %s2230 = smul.addr %s2229, 64
          %s2231 = scalar_lea.vmem [#allocation5], %s2230
        $region212: #{srm_fl_forward.7} parent=207 // pred_fallthru
          _
      $region208: #{srm_fl_forward.7} parent=5 // pred_fallthru
        _
    $region6: #{srm_fl_forward.7} parent=1 // loop_footer
      %s15 = sadd.s32 1, %s11
    $region7: #{srm_fl_forward.7} parent=1 // loop_footer_branch
      %10 = sbr.rel target = $region3
    $region8: #{srm_fl_forward.7} parent=1 // loop_exit
      _

// kernel: srm_fl_forward.11
$region0: #{srm_fl_forward.11}
  #allocation0 [shape = 'u32[]', space=smem, size = 0x4, offset = 0x4, fixed_abs, tag = 'smem constant byte address 0x4 - core index']
  #allocation1 [shape = 'u32[144,128]{1,0:T(1,128)}', space=vmem, size = 0x12000, scoped, tag = 'internal scratch']
  %s0 = inlined_call_operand.vmem [shape: f32[2,128,256], index: 0, kind: input, shape index: {}]
  %s1 = inlined_call_operand.vmem [shape: f32[2,128,1], index: 1, kind: input, shape index: {}]
  %s2 = inlined_call_operand.vmem [shape: f32[2,128,1], index: 2, kind: input, shape index: {}]
  %s3 = inlined_call_operand.vmem [shape: bf16[2,256,256], index: 3, kind: input, shape index: {}, may-alias: {3,4}]
  %s4 = inlined_call_operand.vmem [shape: bf16[2,256,256], index: 4, kind: input, shape index: {}, may-alias: {3,4}]
  %s5 = inlined_call_operand.vmem [shape: f32[2,128,256], index: 5, kind: output, shape index: {}]
  %s6 = sld [smem:[#allocation0]]
  $region207: #{srm_fl_forward.11} parent=0
    _
  %s8 = ssub.s32 1, %s6
  %s9 = scalar_select 0, %s8, %s6
  $region1: #{srm_fl_forward.11} parent=0
    #allocation2 [shape = 'u8[131072]{0}', space=vmem, size = 0x20000, scoped, tag = 'input window, operand 0']
    #allocation3 [shape = 'u8[65536]{0}', space=vmem, size = 0x10000, scoped, tag = 'input window, operand 3']
    #allocation4 [shape = 'u8[65536]{0}', space=vmem, size = 0x10000, scoped, tag = 'input window, operand 4']
    #allocation5 [shape = 'u8[131072]{0}', space=vmem, size = 0x20000, scoped, tag = 'output window, operand 0']
    loop: start=0, step=1, limit=6
    $region2: #{srm_fl_forward.11} parent=1 // loop_pre_header
      _
    $region3: #{srm_fl_forward.11} parent=1 // loop_header
      %s11 = sphi 0, %s15
      %p12 = scmp.ge.s32.totalorder %s11, 6
      %s18 = sphi 0, %s37
      %s19 = sphi 0, %s33
      %s20 = sphi 0, %s29
      %s21 = sphi 0, %s18
      %s22 = sphi 0, %s19
      %s23 = sphi 0, %s20
      %s24 = sphi 0, %s21
      %s25 = sphi 0, %s22
      %s26 = sphi 0, %s23
      %s44 = sphi 0, %s46
      %s47 = sphi 0, %s44
      %s48 = sphi 0, %s47
      %s64 = sphi 0, %s48
      %s72 = sphi 0, %s74
      %s75 = sphi 0, %s72
      %s76 = sphi 0, %s75
      %s92 = sphi 0, %s76
      %s100 = sphi 0, %s102
      %s103 = sphi 0, %s100
      %s104 = sphi 0, %s103
      %s120 = sphi 0, %s104
      %s130 = sphi 0, %s132
      %s133 = sphi 0, %s130
      %s134 = sphi 0, %s133
      %s150 = sphi 0, %s134
      %s162 = sphi 0, %s164
      %s165 = sphi 0, %s162
      %s166 = sphi 0, %s165
      %s182 = sphi 0, %s166
      %s192 = sphi 0, %s194
      %s195 = sphi 0, %s192
      %s196 = sphi 0, %s195
      %s212 = sphi 0, %s196
    $region4: #{srm_fl_forward.11} parent=1 // loop_header_branch
      %14 = sbr.rel (%p12) target = $region8
    $region5: #{srm_fl_forward.11} parent=1 // loop_body
      %s16 = ssub.s32 %s11, 1
      %s17 = ssub.s32 %s11, 2
      %s27 = sadd.s32 1, %s20
      %p28 = scmp.ge.s32.totalorder %s27, 2
      %s29 = scalar_select %p28, 0, %s27
      %s30 = sadd.s32 1, %s19
      %s31 = scalar_select %p28, %s30, %s19
      %p32 = scmp.ge.s32.totalorder %s31, 1
      %s33 = scalar_select %p32, 0, %s31
      %s34 = sadd.s32 1, %s18
      %s35 = scalar_select %p32, %s34, %s18
      %p36 = scmp.ge.s32.totalorder %s35, 2
      %s37 = scalar_select %p36, 0, %s35
      %s38 = ssub.s32 %s18, %s37
      %s39 = ssub.s32 %s19, %s33
      %s40 = sor.u32 %s38, %s39
      %s41 = ssub.s32 %s20, %s29
      %s42 = sor.u32 %s40, %s41
      %p43 = scmp.eq.s32.totalorder %s42, 0
      %s45 = sadd.s32 %s44, 1
      %s46 = scalar_select %p43, %s44, %s45
      %p49 = pneg %p43
      %p50 = scmp.eq.s32.totalorder %s11, 3
      %p51 = por %p49, %p50
      %p52 = scmp.ne.s32.totalorder %s44, %s47
      %p53 = scmp.eq.s32.totalorder %s11, 0
      %p54 = por %p52, %p53
      %p55 = scmp.ne.s32.totalorder %s44, %s47
      %p56 = scmp.eq.s32.totalorder %s16, 3
      %p57 = por %p55, %p56
      %p58 = scmp.ne.s32.totalorder %s47, %s48
      %p59 = scmp.eq.s32.totalorder %s16, 0
      %p60 = por %p58, %p59
      %p61 = scmp.ne.s32.totalorder %s47, %s48
      %p62 = scmp.eq.s32.totalorder %s17, 3
      %p63 = por %p61, %p62
      %p65 = scmp.ne.s32.totalorder %s48, %s64
      %p66 = scmp.eq.s32.totalorder %s17, 0
      %p67 = por %p65, %p66
      %s68 = ssub.s32 %s18, %s37
      %s69 = ssub.s32 %s19, %s33
      %s70 = sor.u32 %s68, %s69
      %p71 = scmp.eq.s32.totalorder %s70, 0
      %s73 = sadd.s32 %s72, 1
      %s74 = scalar_select %p71, %s72, %s73
      %p77 = pneg %p71
      %p78 = scmp.eq.s32.totalorder %s11, 3
      %p79 = por %p77, %p78
      %p80 = scmp.ne.s32.totalorder %s72, %s75
      %p81 = scmp.eq.s32.totalorder %s11, 0
      %p82 = por %p80, %p81
      %p83 = scmp.ne.s32.totalorder %s72, %s75
      %p84 = scmp.eq.s32.totalorder %s16, 3
      %p85 = por %p83, %p84
      %p86 = scmp.ne.s32.totalorder %s75, %s76
      %p87 = scmp.eq.s32.totalorder %s16, 0
      %p88 = por %p86, %p87
      %p89 = scmp.ne.s32.totalorder %s75, %s76
      %p90 = scmp.eq.s32.totalorder %s17, 3
      %p91 = por %p89, %p90
      %p93 = scmp.ne.s32.totalorder %s76, %s92
      %p94 = scmp.eq.s32.totalorder %s17, 0
      %p95 = por %p93, %p94
      %s96 = ssub.s32 %s18, %s37
      %s97 = ssub.s32 %s19, %s33
      %s98 = sor.u32 %s96, %s97
      %p99 = scmp.eq.s32.totalorder %s98, 0
      %s101 = sadd.s32 %s100, 1
      %s102 = scalar_select %p99, %s100, %s101
      %p105 = pneg %p99
      %p106 = scmp.eq.s32.totalorder %s11, 3
      %p107 = por %p105, %p106
      %p108 = scmp.ne.s32.totalorder %s100, %s103
      %p109 = scmp.eq.s32.totalorder %s11, 0
      %p110 = por %p108, %p109
      %p111 = scmp.ne.s32.totalorder %s100, %s103
      %p112 = scmp.eq.s32.totalorder %s16, 3
      %p113 = por %p111, %p112
      %p114 = scmp.ne.s32.totalorder %s103, %s104
      %p115 = scmp.eq.s32.totalorder %s16, 0
      %p116 = por %p114, %p115
      %p117 = scmp.ne.s32.totalorder %s103, %s104
      %p118 = scmp.eq.s32.totalorder %s17, 3
      %p119 = por %p117, %p118
      %p121 = scmp.ne.s32.totalorder %s104, %s120
      %p122 = scmp.eq.s32.totalorder %s17, 0
      %p123 = por %p121, %p122
      %s124 = ssub.s32 %s18, %s37
      %s125 = ssub.s32 %s20, %s29
      %s126 = sor.u32 %s124, %s125
      %s127 = ssub.s32 %s19, %s33
      %s128 = sor.u32 %s126, %s127
      %p129 = scmp.eq.s32.totalorder %s128, 0
      %s131 = sadd.s32 %s130, 1
      %s132 = scalar_select %p129, %s130, %s131
      %p135 = pneg %p129
      %p136 = scmp.eq.s32.totalorder %s11, 3
      %p137 = por %p135, %p136
      %p138 = scmp.ne.s32.totalorder %s130, %s133
      %p139 = scmp.eq.s32.totalorder %s11, 0
      %p140 = por %p138, %p139
      %p141 = scmp.ne.s32.totalorder %s130, %s133
      %p142 = scmp.eq.s32.totalorder %s16, 3
      %p143 = por %p141, %p142
      %p144 = scmp.ne.s32.totalorder %s133, %s134
      %p145 = scmp.eq.s32.totalorder %s16, 0
      %p146 = por %p144, %p145
      %p147 = scmp.ne.s32.totalorder %s133, %s134
      %p148 = scmp.eq.s32.totalorder %s17, 3
      %p149 = por %p147, %p148
      %p151 = scmp.ne.s32.totalorder %s134, %s150
      %p152 = scmp.eq.s32.totalorder %s17, 0
      %p153 = por %p151, %p152
      %s154 = sadd.s32 %s19, 1
      %s155 = sadd.s32 %s33, 1
      %s156 = ssub.s32 %s18, %s37
      %s157 = ssub.s32 %s20, %s29
      %s158 = sor.u32 %s156, %s157
      %s159 = ssub.s32 %s154, %s155
      %s160 = sor.u32 %s158, %s159
      %p161 = scmp.eq.s32.totalorder %s160, 0
      %s163 = sadd.s32 %s162, 1
      %s164 = scalar_select %p161, %s162, %s163
      %p167 = pneg %p161
      %p168 = scmp.eq.s32.totalorder %s11, 3
      %p169 = por %p167, %p168
      %p170 = scmp.ne.s32.totalorder %s162, %s165
      %p171 = scmp.eq.s32.totalorder %s11, 0
      %p172 = por %p170, %p171
      %p173 = scmp.ne.s32.totalorder %s162, %s165
      %p174 = scmp.eq.s32.totalorder %s16, 3
      %p175 = por %p173, %p174
      %p176 = scmp.ne.s32.totalorder %s165, %s166
      %p177 = scmp.eq.s32.totalorder %s16, 0
      %p178 = por %p176, %p177
      %p179 = scmp.ne.s32.totalorder %s165, %s166
      %p180 = scmp.eq.s32.totalorder %s17, 3
      %p181 = por %p179, %p180
      %p183 = scmp.ne.s32.totalorder %s166, %s182
      %p184 = scmp.eq.s32.totalorder %s17, 0
      %p185 = por %p183, %p184
      %s186 = ssub.s32 %s18, %s37
      %s187 = ssub.s32 %s19, %s33
      %s188 = sor.u32 %s186, %s187
      %s189 = ssub.s32 %s20, %s29
      %s190 = sor.u32 %s188, %s189
      %p191 = scmp.eq.s32.totalorder %s190, 0
      %s193 = sadd.s32 %s192, 1
      %s194 = scalar_select %p191, %s192, %s193
      %p197 = pneg %p191
      %p198 = scmp.eq.s32.totalorder %s11, 3
      %p199 = por %p197, %p198
      %p200 = scmp.ne.s32.totalorder %s192, %s195
      %p201 = scmp.eq.s32.totalorder %s11, 0
      %p202 = por %p200, %p201
      %p203 = scmp.ne.s32.totalorder %s192, %s195
      %p204 = scmp.eq.s32.totalorder %s16, 3
      %p205 = por %p203, %p204
      %p206 = scmp.ne.s32.totalorder %s195, %s196
      %p207 = scmp.eq.s32.totalorder %s16, 0
      %p208 = por %p206, %p207
      %p209 = scmp.ne.s32.totalorder %s195, %s196
      %p210 = scmp.eq.s32.totalorder %s17, 3
      %p211 = por %p209, %p210
      %p213 = scmp.ne.s32.totalorder %s196, %s212
      %p214 = scmp.eq.s32.totalorder %s17, 0
      %p215 = por %p213, %p214
      %p216 = scmp.le.s32.totalorder 1, %s11
      %p217 = scmp.lt.s32.totalorder %s11, 5
      %p218 = pnand %p216, %p217
      %p219 = pneg %p218
      // Predicated region
      $region9: #{srm_fl_forward.11} parent=5 // pred_check
        _
      $region10: #{srm_fl_forward.11} parent=5 // pred_check_branch
        %221 = sbr.rel (%p218) target = $region12
      $region11: #{srm_fl_forward.11} parent=5 // pred_region
        %s222 = ssub.s32 %s11, 1
      $region12: #{srm_fl_forward.11} parent=5 // pred_fallthru
        _
      %p223 = scmp.lt.s32.totalorder %s11, 4
      // Predicated region
      $region13: #{srm_fl_forward.11} parent=5 // pred_check
        %p224 = pneg %p223
      $region14: #{srm_fl_forward.11} parent=5 // pred_check_branch
        %226 = sbr.rel (%p224) target = $region16
      $region15: #{srm_fl_forward.11} parent=5 // pred_region
        // Predicated region
        $region17: #{srm_fl_forward.11} parent=15 // pred_check
          %p227 = pneg %p54
        $region18: #{srm_fl_forward.11} parent=15 // pred_check_branch
          %229 = sbr.rel (%p227) target = $region20
        $region19: #{srm_fl_forward.11} parent=15 // pred_region
          %s230 = sand.u32 %s44, 1
          %s231 = sand.u32 %s44, 1
          %s232 = smul.addr %s231, 128
          %s233 = scalar_lea.vmem [#allocation2], %s232
          %s234 = smul.u32 16, %s19
          %s235 = smul.addr %s234, 2
          %s236 = sadd.s32 %s20, %s235
          %s237 = smul.addr %s18, 32
          %s238 = sadd.s32 %s236, %s237
          %s239 = smul.addr %s238, 8
          %s240 = scalar_lea.vmem %s0, %s239
          // Predicated region
          $region21: #{srm_fl_forward.11} parent=19 // pred_check
            _
          $region22: #{srm_fl_forward.11} parent=19 // pred_check_branch
            %242 = sbr.rel (0) target = $region24
          $region23: #{srm_fl_forward.11} parent=19 // pred_region
            // Predicated region
            $region25: #{srm_fl_forward.11} parent=23 // pred_check
              _
            $region26: #{srm_fl_forward.11} parent=23 // pred_check_branch
              %244 = sbr.rel (0) target = $region28
            $region27: #{srm_fl_forward.11} parent=23 // pred_region
              // Predicated region
              $region40: #{srm_fl_forward.11} parent=27 // pred_check
                _
              $region41: #{srm_fl_forward.11} parent=27 // pred_check_branch
                %289 = sbr.rel (0) target = $region43
              $region42: #{srm_fl_forward.11} parent=27 // pred_region
                loop: start=0, step=1, limit=1
                $region44: #{srm_fl_forward.11} parent=42 // loop_pre_header
                  _
                $region45: #{srm_fl_forward.11} parent=42 // loop_header
                  %s291 = sphi 0, %s295
                  %p292 = scmp.ge.s32.totalorder %s291, 1
                  %s296 = sphi %s240, %s240
                  %s297 = sphi %s233, %s233
                $region46: #{srm_fl_forward.11} parent=42 // loop_header_branch
                  %294 = sbr.rel (%p292) target = $region50
                $region47: #{srm_fl_forward.11} parent=42 // loop_body
                  %v298 = vld [vmem:[%s296] sm:$0xff]
                  %299 = vst [vmem:[%s297] sm:$0xff] %v298
                  %v300 = vld [vmem:[%s296 + $0x10] sm:$0xff]
                  %301 = vst [vmem:[%s297 + $0x8] sm:$0xff] %v300
                  %v302 = vld [vmem:[%s296 + $0x20] sm:$0xff]
                  %303 = vst [vmem:[%s297 + $0x10] sm:$0xff] %v302
                  %v304 = vld [vmem:[%s296 + $0x30] sm:$0xff]
                  %305 = vst [vmem:[%s297 + $0x18] sm:$0xff] %v304
                  %v306 = vld [vmem:[%s296 + $0x40] sm:$0xff]
                  %307 = vst [vmem:[%s297 + $0x20] sm:$0xff] %v306
                  %v308 = vld [vmem:[%s296 + $0x50] sm:$0xff]
                  %309 = vst [vmem:[%s297 + $0x28] sm:$0xff] %v308
                  %v310 = vld [vmem:[%s296 + $0x60] sm:$0xff]
                  %311 = vst [vmem:[%s297 + $0x30] sm:$0xff] %v310
                  %v312 = vld [vmem:[%s296 + $0x70] sm:$0xff]
                  %313 = vst [vmem:[%s297 + $0x38] sm:$0xff] %v312
                  %v314 = vld [vmem:[%s296 + $0x80] sm:$0xff]
                  %315 = vst [vmem:[%s297 + $0x40] sm:$0xff] %v314
                  %v316 = vld [vmem:[%s296 + $0x90] sm:$0xff]
                  %317 = vst [vmem:[%s297 + $0x48] sm:$0xff] %v316
                  %v318 = vld [vmem:[%s296 + $0xa0] sm:$0xff]
                  %319 = vst [vmem:[%s297 + $0x50] sm:$0xff] %v318
                  %v320 = vld [vmem:[%s296 + $0xb0] sm:$0xff]
                  %321 = vst [vmem:[%s297 + $0x58] sm:$0xff] %v320
                  %v322 = vld [vmem:[%s296 + $0xc0] sm:$0xff]
                  %323 = vst [vmem:[%s297 + $0x60] sm:$0xff] %v322
                  %v324 = vld [vmem:[%s296 + $0xd0] sm:$0xff]
                  %325 = vst [vmem:[%s297 + $0x68] sm:$0xff] %v324
                  %v326 = vld [vmem:[%s296 + $0xe0] sm:$0xff]
                  %327 = vst [vmem:[%s297 + $0x70] sm:$0xff] %v326
                  %v328 = vld [vmem:[%s296 + $0xf0] sm:$0xff]
                  %329 = vst [vmem:[%s297 + $0x78] sm:$0xff] %v328
                $region48: #{srm_fl_forward.11} parent=42 // loop_footer
                  %s295 = sadd.s32 1, %s291
                $region49: #{srm_fl_forward.11} parent=42 // loop_footer_branch
                  %290 = sbr.rel target = $region45
                $region50: #{srm_fl_forward.11} parent=42 // loop_exit
                  _
              $region43: #{srm_fl_forward.11} parent=27 // pred_fallthru
                _
              // Predicated region
              $region51: #{srm_fl_forward.11} parent=27 // pred_check
                _
              $region52: #{srm_fl_forward.11} parent=27 // pred_check_branch
                %331 = sbr.rel target = $region54
              $region53: #{srm_fl_forward.11} parent=27 // pred_region
                _
              $region54: #{srm_fl_forward.11} parent=27 // pred_fallthru
                _
            $region28: #{srm_fl_forward.11} parent=23 // pred_fallthru
              _
            // Predicated region
            $region29: #{srm_fl_forward.11} parent=23 // pred_check
              _
            $region30: #{srm_fl_forward.11} parent=23 // pred_check_branch
              %246 = sbr.rel target = $region32
            $region31: #{srm_fl_forward.11} parent=23 // pred_region
              loop: start=0, step=1, limit=1
              $region33: #{srm_fl_forward.11} parent=31 // loop_pre_header
                _
              $region34: #{srm_fl_forward.11} parent=31 // loop_header
                %s249 = sphi 0, %s253
                %p250 = scmp.ge.s32.totalorder %s249, 1
                %s254 = sphi %s240, %s240
                %s255 = sphi %s233, %s233
              $region35: #{srm_fl_forward.11} parent=31 // loop_header_branch
                %252 = sbr.rel (%p250) target = $region39
              $region36: #{srm_fl_forward.11} parent=31 // loop_body
                %v256 = vld [vmem:[%s254] sm:$0xff]
                %257 = vst [vmem:[%s255] sm:$0xff] %v256
                %v258 = vld [vmem:[%s254 + $0x10] sm:$0xff]
                %259 = vst [vmem:[%s255 + $0x8] sm:$0xff] %v258
                %v260 = vld [vmem:[%s254 + $0x20] sm:$0xff]
                %261 = vst [vmem:[%s255 + $0x10] sm:$0xff] %v260
                %v262 = vld [vmem:[%s254 + $0x30] sm:$0xff]
                %263 = vst [vmem:[%s255 + $0x18] sm:$0xff] %v262
                %v264 = vld [vmem:[%s254 + $0x40] sm:$0xff]
                %265 = vst [vmem:[%s255 + $0x20] sm:$0xff] %v264
                %v266 = vld [vmem:[%s254 + $0x50] sm:$0xff]
                %267 = vst [vmem:[%s255 + $0x28] sm:$0xff] %v266
                %v268 = vld [vmem:[%s254 + $0x60] sm:$0xff]
                %269 = vst [vmem:[%s255 + $0x30] sm:$0xff] %v268
                %v270 = vld [vmem:[%s254 + $0x70] sm:$0xff]
                %271 = vst [vmem:[%s255 + $0x38] sm:$0xff] %v270
                %v272 = vld [vmem:[%s254 + $0x80] sm:$0xff]
                %273 = vst [vmem:[%s255 + $0x40] sm:$0xff] %v272
                %v274 = vld [vmem:[%s254 + $0x90] sm:$0xff]
                %275 = vst [vmem:[%s255 + $0x48] sm:$0xff] %v274
                %v276 = vld [vmem:[%s254 + $0xa0] sm:$0xff]
                %277 = vst [vmem:[%s255 + $0x50] sm:$0xff] %v276
                %v278 = vld [vmem:[%s254 + $0xb0] sm:$0xff]
                %279 = vst [vmem:[%s255 + $0x58] sm:$0xff] %v278
                %v280 = vld [vmem:[%s254 + $0xc0] sm:$0xff]
                %281 = vst [vmem:[%s255 + $0x60] sm:$0xff] %v280
                %v282 = vld [vmem:[%s254 + $0xd0] sm:$0xff]
                %283 = vst [vmem:[%s255 + $0x68] sm:$0xff] %v282
                %v284 = vld [vmem:[%s254 + $0xe0] sm:$0xff]
                %285 = vst [vmem:[%s255 + $0x70] sm:$0xff] %v284
                %v286 = vld [vmem:[%s254 + $0xf0] sm:$0xff]
                %287 = vst [vmem:[%s255 + $0x78] sm:$0xff] %v286
              $region37: #{srm_fl_forward.11} parent=31 // loop_footer
                %s253 = sadd.s32 1, %s249
              $region38: #{srm_fl_forward.11} parent=31 // loop_footer_branch
                %248 = sbr.rel target = $region34
              $region39: #{srm_fl_forward.11} parent=31 // loop_exit
                _
            $region32: #{srm_fl_forward.11} parent=23 // pred_fallthru
              _
          $region24: #{srm_fl_forward.11} parent=19 // pred_fallthru
            _
          %332 = vnop
        $region20: #{srm_fl_forward.11} parent=15 // pred_fallthru
          _
        // Predicated region
        $region55: #{srm_fl_forward.11} parent=15 // pred_check
          %p333 = pneg %p82
        $region56: #{srm_fl_forward.11} parent=15 // pred_check_branch
          %335 = sbr.rel (%p333) target = $region58
        $region57: #{srm_fl_forward.11} parent=15 // pred_region
          %s336 = smul.u32 16, %s19
          %p337 = scmp.lt.s32.totalorder %s18, 1
          %s338 = scalar_select %p337, %s18, 1
          %p339 = scmp.lt.s32.totalorder %s336, 15
          %s340 = scalar_select %p339, %s336, 15
          %s341 = smul.addr %s338, 16
          %s342 = sadd.s32 %s340, %s341
          %s343 = smul.addr %s342, 8
          %s344 = scalar_lea.vmem %s1, %s343
          %s345 = smul.u32 16, %s19
        $region58: #{srm_fl_forward.11} parent=15 // pred_fallthru
          _
        // Predicated region
        $region59: #{srm_fl_forward.11} parent=15 // pred_check
          %p346 = pneg %p110
        $region60: #{srm_fl_forward.11} parent=15 // pred_check_branch
          %348 = sbr.rel (%p346) target = $region62
        $region61: #{srm_fl_forward.11} parent=15 // pred_region
          %s349 = smul.u32 16, %s19
          %p350 = scmp.lt.s32.totalorder %s18, 1
          %s351 = scalar_select %p350, %s18, 1
          %p352 = scmp.lt.s32.totalorder %s349, 15
          %s353 = scalar_select %p352, %s349, 15
          %s354 = smul.addr %s351, 16
          %s355 = sadd.s32 %s353, %s354
          %s356 = smul.addr %s355, 8
          %s357 = scalar_lea.vmem %s2, %s356
          %s358 = smul.u32 16, %s19
        $region62: #{srm_fl_forward.11} parent=15 // pred_fallthru
          _
        // Predicated region
        $region63: #{srm_fl_forward.11} parent=15 // pred_check
          %p359 = pneg %p140
        $region64: #{srm_fl_forward.11} parent=15 // pred_check_branch
          %361 = sbr.rel (%p359) target = $region66
        $region65: #{srm_fl_forward.11} parent=15 // pred_region
          %s362 = sand.u32 %s130, 1
          %s363 = sand.u32 %s130, 1
          %s364 = smul.addr %s363, 64
          %s365 = scalar_lea.vmem [#allocation3], %s364
          %s366 = smul.u32 16, %s20
          %s367 = smul.addr %s366, 2
          %s368 = sadd.s32 %s19, %s367
          %s369 = smul.addr %s18, 64
          %s370 = sadd.s32 %s368, %s369
          %s371 = smul.addr %s370, 4
          %s372 = scalar_lea.vmem %s3, %s371
          // Predicated region
          $region67: #{srm_fl_forward.11} parent=65 // pred_check
            _
          $region68: #{srm_fl_forward.11} parent=65 // pred_check_branch
            %374 = sbr.rel (0) target = $region70
          $region69: #{srm_fl_forward.11} parent=65 // pred_region
            // Predicated region
            $region71: #{srm_fl_forward.11} parent=69 // pred_check
              _
            $region72: #{srm_fl_forward.11} parent=69 // pred_check_branch
              %376 = sbr.rel target = $region74
            $region73: #{srm_fl_forward.11} parent=69 // pred_region
              // Predicated region
              $region86: #{srm_fl_forward.11} parent=73 // pred_check
                _
              $region87: #{srm_fl_forward.11} parent=73 // pred_check_branch
                %421 = sbr.rel (0) target = $region89
              $region88: #{srm_fl_forward.11} parent=73 // pred_region
                loop: start=0, step=1, limit=1
                $region90: #{srm_fl_forward.11} parent=88 // loop_pre_header
                  _
                $region91: #{srm_fl_forward.11} parent=88 // loop_header
                  %s423 = sphi 0, %s427
                  %p424 = scmp.ge.s32.totalorder %s423, 1
                  %s428 = sphi %s372, %s372
                  %s429 = sphi %s365, %s365
                $region92: #{srm_fl_forward.11} parent=88 // loop_header_branch
                  %426 = sbr.rel (%p424) target = $region96
                $region93: #{srm_fl_forward.11} parent=88 // loop_body
                  _
                $region94: #{srm_fl_forward.11} parent=88 // loop_footer
                  %s427 = sadd.s32 1, %s423
                $region95: #{srm_fl_forward.11} parent=88 // loop_footer_branch
                  %422 = sbr.rel target = $region91
                $region96: #{srm_fl_forward.11} parent=88 // loop_exit
                  _
                loop: start=0, step=1, limit=1
                $region97: #{srm_fl_forward.11} parent=88 // loop_pre_header
                  _
                $region98: #{srm_fl_forward.11} parent=88 // loop_header
                  %s432 = sphi 0, %s436
                  %p433 = scmp.ge.s32.totalorder %s432, 1
                  %s437 = sphi %s372, %s372
                  %s438 = sphi %s365, %s365
                $region99: #{srm_fl_forward.11} parent=88 // loop_header_branch
                  %435 = sbr.rel (%p433) target = $region103
                $region100: #{srm_fl_forward.11} parent=88 // loop_body
                  %v439 = vld [vmem:[%s437] sm:$0xf]
                  %440 = vst [vmem:[%s438] sm:$0xf] %v439
                  %v441 = vld [vmem:[%s437 + $0x8] sm:$0xf]
                  %442 = vst [vmem:[%s438 + $0x4] sm:$0xf] %v441
                  %v443 = vld [vmem:[%s437 + $0x10] sm:$0xf]
                  %444 = vst [vmem:[%s438 + $0x8] sm:$0xf] %v443
                  %v445 = vld [vmem:[%s437 + $0x18] sm:$0xf]
                  %446 = vst [vmem:[%s438 + $0xc] sm:$0xf] %v445
                  %v447 = vld [vmem:[%s437 + $0x20] sm:$0xf]
                  %448 = vst [vmem:[%s438 + $0x10] sm:$0xf] %v447
                  %v449 = vld [vmem:[%s437 + $0x28] sm:$0xf]
                  %450 = vst [vmem:[%s438 + $0x14] sm:$0xf] %v449
                  %v451 = vld [vmem:[%s437 + $0x30] sm:$0xf]
                  %452 = vst [vmem:[%s438 + $0x18] sm:$0xf] %v451
                  %v453 = vld [vmem:[%s437 + $0x38] sm:$0xf]
                  %454 = vst [vmem:[%s438 + $0x1c] sm:$0xf] %v453
                  %v455 = vld [vmem:[%s437 + $0x40] sm:$0xf]
                  %456 = vst [vmem:[%s438 + $0x20] sm:$0xf] %v455
                  %v457 = vld [vmem:[%s437 + $0x48] sm:$0xf]
                  %458 = vst [vmem:[%s438 + $0x24] sm:$0xf] %v457
                  %v459 = vld [vmem:[%s437 + $0x50] sm:$0xf]
                  %460 = vst [vmem:[%s438 + $0x28] sm:$0xf] %v459
                  %v461 = vld [vmem:[%s437 + $0x58] sm:$0xf]
                  %462 = vst [vmem:[%s438 + $0x2c] sm:$0xf] %v461
                  %v463 = vld [vmem:[%s437 + $0x60] sm:$0xf]
                  %464 = vst [vmem:[%s438 + $0x30] sm:$0xf] %v463
                  %v465 = vld [vmem:[%s437 + $0x68] sm:$0xf]
                  %466 = vst [vmem:[%s438 + $0x34] sm:$0xf] %v465
                  %v467 = vld [vmem:[%s437 + $0x70] sm:$0xf]
                  %468 = vst [vmem:[%s438 + $0x38] sm:$0xf] %v467
                  %v469 = vld [vmem:[%s437 + $0x78] sm:$0xf]
                  %470 = vst [vmem:[%s438 + $0x3c] sm:$0xf] %v469
                $region101: #{srm_fl_forward.11} parent=88 // loop_footer
                  %s436 = sadd.s32 1, %s432
                $region102: #{srm_fl_forward.11} parent=88 // loop_footer_branch
                  %431 = sbr.rel target = $region98
                $region103: #{srm_fl_forward.11} parent=88 // loop_exit
                  _
              $region89: #{srm_fl_forward.11} parent=73 // pred_fallthru
                _
            $region74: #{srm_fl_forward.11} parent=69 // pred_fallthru
              _
            // Predicated region
            $region75: #{srm_fl_forward.11} parent=69 // pred_check
              _
            $region76: #{srm_fl_forward.11} parent=69 // pred_check_branch
              %378 = sbr.rel (0) target = $region78
            $region77: #{srm_fl_forward.11} parent=69 // pred_region
              loop: start=0, step=1, limit=1
              $region79: #{srm_fl_forward.11} parent=77 // loop_pre_header
                _
              $region80: #{srm_fl_forward.11} parent=77 // loop_header
                %s381 = sphi 0, %s385
                %p382 = scmp.ge.s32.totalorder %s381, 1
                %s386 = sphi %s372, %s372
                %s387 = sphi %s365, %s365
              $region81: #{srm_fl_forward.11} parent=77 // loop_header_branch
                %384 = sbr.rel (%p382) target = $region85
              $region82: #{srm_fl_forward.11} parent=77 // loop_body
                %v388 = vld [vmem:[%s386] sm:$0xf]
                %389 = vst [vmem:[%s387] sm:$0xf] %v388
                %v390 = vld [vmem:[%s386 + $0x8] sm:$0xf]
                %391 = vst [vmem:[%s387 + $0x4] sm:$0xf] %v390
                %v392 = vld [vmem:[%s386 + $0x10] sm:$0xf]
                %393 = vst [vmem:[%s387 + $0x8] sm:$0xf] %v392
                %v394 = vld [vmem:[%s386 + $0x18] sm:$0xf]
                %395 = vst [vmem:[%s387 + $0xc] sm:$0xf] %v394
                %v396 = vld [vmem:[%s386 + $0x20] sm:$0xf]
                %397 = vst [vmem:[%s387 + $0x10] sm:$0xf] %v396
                %v398 = vld [vmem:[%s386 + $0x28] sm:$0xf]
                %399 = vst [vmem:[%s387 + $0x14] sm:$0xf] %v398
                %v400 = vld [vmem:[%s386 + $0x30] sm:$0xf]
                %401 = vst [vmem:[%s387 + $0x18] sm:$0xf] %v400
                %v402 = vld [vmem:[%s386 + $0x38] sm:$0xf]
                %403 = vst [vmem:[%s387 + $0x1c] sm:$0xf] %v402
                %v404 = vld [vmem:[%s386 + $0x40] sm:$0xf]
                %405 = vst [vmem:[%s387 + $0x20] sm:$0xf] %v404
                %v406 = vld [vmem:[%s386 + $0x48] sm:$0xf]
                %407 = vst [vmem:[%s387 + $0x24] sm:$0xf] %v406
                %v408 = vld [vmem:[%s386 + $0x50] sm:$0xf]
                %409 = vst [vmem:[%s387 + $0x28] sm:$0xf] %v408
                %v410 = vld [vmem:[%s386 + $0x58] sm:$0xf]
                %411 = vst [vmem:[%s387 + $0x2c] sm:$0xf] %v410
                %v412 = vld [vmem:[%s386 + $0x60] sm:$0xf]
                %413 = vst [vmem:[%s387 + $0x30] sm:$0xf] %v412
                %v414 = vld [vmem:[%s386 + $0x68] sm:$0xf]
                %415 = vst [vmem:[%s387 + $0x34] sm:$0xf] %v414
                %v416 = vld [vmem:[%s386 + $0x70] sm:$0xf]
                %417 = vst [vmem:[%s387 + $0x38] sm:$0xf] %v416
                %v418 = vld [vmem:[%s386 + $0x78] sm:$0xf]
                %419 = vst [vmem:[%s387 + $0x3c] sm:$0xf] %v418
              $region83: #{srm_fl_forward.11} parent=77 // loop_footer
                %s385 = sadd.s32 1, %s381
              $region84: #{srm_fl_forward.11} parent=77 // loop_footer_branch
                %380 = sbr.rel target = $region80
              $region85: #{srm_fl_forward.11} parent=77 // loop_exit
                _
            $region78: #{srm_fl_forward.11} parent=69 // pred_fallthru
              _
          $region70: #{srm_fl_forward.11} parent=65 // pred_fallthru
            _
          %471 = vnop
        $region66: #{srm_fl_forward.11} parent=15 // pred_fallthru
          _
        // Predicated region
        $region104: #{srm_fl_forward.11} parent=15 // pred_check
          %p472 = pneg %p172
        $region105: #{srm_fl_forward.11} parent=15 // pred_check_branch
          %474 = sbr.rel (%p472) target = $region107
        $region106: #{srm_fl_forward.11} parent=15 // pred_region
          %s475 = sand.u32 %s162, 1
          %s476 = sand.u32 %s162, 1
          %s477 = smul.addr %s476, 64
          %s478 = scalar_lea.vmem [#allocation4], %s477
          %s479 = sadd.s32 %s19, 1
          %s480 = smul.u32 16, %s20
          %s481 = smul.addr %s480, 2
          %s482 = sadd.s32 %s479, %s481
          %s483 = smul.addr %s18, 64
          %s484 = sadd.s32 %s482, %s483
          %s485 = smul.addr %s484, 4
          %s486 = scalar_lea.vmem %s4, %s485
          // Predicated region
          $region108: #{srm_fl_forward.11} parent=106 // pred_check
            _
          $region109: #{srm_fl_forward.11} parent=106 // pred_check_branch
            %488 = sbr.rel (0) target = $region111
          $region110: #{srm_fl_forward.11} parent=106 // pred_region
            // Predicated region
            $region112: #{srm_fl_forward.11} parent=110 // pred_check
              _
            $region113: #{srm_fl_forward.11} parent=110 // pred_check_branch
              %490 = sbr.rel target = $region115
            $region114: #{srm_fl_forward.11} parent=110 // pred_region
              // Predicated region
              $region127: #{srm_fl_forward.11} parent=114 // pred_check
                _
              $region128: #{srm_fl_forward.11} parent=114 // pred_check_branch
                %535 = sbr.rel (0) target = $region130
              $region129: #{srm_fl_forward.11} parent=114 // pred_region
                loop: start=0, step=1, limit=1
                $region131: #{srm_fl_forward.11} parent=129 // loop_pre_header
                  _
                $region132: #{srm_fl_forward.11} parent=129 // loop_header
                  %s537 = sphi 0, %s541
                  %p538 = scmp.ge.s32.totalorder %s537, 1
                  %s542 = sphi %s486, %s486
                  %s543 = sphi %s478, %s478
                $region133: #{srm_fl_forward.11} parent=129 // loop_header_branch
                  %540 = sbr.rel (%p538) target = $region137
                $region134: #{srm_fl_forward.11} parent=129 // loop_body
                  _
                $region135: #{srm_fl_forward.11} parent=129 // loop_footer
                  %s541 = sadd.s32 1, %s537
                $region136: #{srm_fl_forward.11} parent=129 // loop_footer_branch
                  %536 = sbr.rel target = $region132
                $region137: #{srm_fl_forward.11} parent=129 // loop_exit
                  _
                loop: start=0, step=1, limit=1
                $region138: #{srm_fl_forward.11} parent=129 // loop_pre_header
                  _
                $region139: #{srm_fl_forward.11} parent=129 // loop_header
                  %s546 = sphi 0, %s550
                  %p547 = scmp.ge.s32.totalorder %s546, 1
                  %s551 = sphi %s486, %s486
                  %s552 = sphi %s478, %s478
                $region140: #{srm_fl_forward.11} parent=129 // loop_header_branch
                  %549 = sbr.rel (%p547) target = $region144
                $region141: #{srm_fl_forward.11} parent=129 // loop_body
                  %v553 = vld [vmem:[%s551] sm:$0xf]
                  %554 = vst [vmem:[%s552] sm:$0xf] %v553
                  %v555 = vld [vmem:[%s551 + $0x8] sm:$0xf]
                  %556 = vst [vmem:[%s552 + $0x4] sm:$0xf] %v555
                  %v557 = vld [vmem:[%s551 + $0x10] sm:$0xf]
                  %558 = vst [vmem:[%s552 + $0x8] sm:$0xf] %v557
                  %v559 = vld [vmem:[%s551 + $0x18] sm:$0xf]
                  %560 = vst [vmem:[%s552 + $0xc] sm:$0xf] %v559
                  %v561 = vld [vmem:[%s551 + $0x20] sm:$0xf]
                  %562 = vst [vmem:[%s552 + $0x10] sm:$0xf] %v561
                  %v563 = vld [vmem:[%s551 + $0x28] sm:$0xf]
                  %564 = vst [vmem:[%s552 + $0x14] sm:$0xf] %v563
                  %v565 = vld [vmem:[%s551 + $0x30] sm:$0xf]
                  %566 = vst [vmem:[%s552 + $0x18] sm:$0xf] %v565
                  %v567 = vld [vmem:[%s551 + $0x38] sm:$0xf]
                  %568 = vst [vmem:[%s552 + $0x1c] sm:$0xf] %v567
                  %v569 = vld [vmem:[%s551 + $0x40] sm:$0xf]
                  %570 = vst [vmem:[%s552 + $0x20] sm:$0xf] %v569
                  %v571 = vld [vmem:[%s551 + $0x48] sm:$0xf]
                  %572 = vst [vmem:[%s552 + $0x24] sm:$0xf] %v571
                  %v573 = vld [vmem:[%s551 + $0x50] sm:$0xf]
                  %574 = vst [vmem:[%s552 + $0x28] sm:$0xf] %v573
                  %v575 = vld [vmem:[%s551 + $0x58] sm:$0xf]
                  %576 = vst [vmem:[%s552 + $0x2c] sm:$0xf] %v575
                  %v577 = vld [vmem:[%s551 + $0x60] sm:$0xf]
                  %578 = vst [vmem:[%s552 + $0x30] sm:$0xf] %v577
                  %v579 = vld [vmem:[%s551 + $0x68] sm:$0xf]
                  %580 = vst [vmem:[%s552 + $0x34] sm:$0xf] %v579
                  %v581 = vld [vmem:[%s551 + $0x70] sm:$0xf]
                  %582 = vst [vmem:[%s552 + $0x38] sm:$0xf] %v581
                  %v583 = vld [vmem:[%s551 + $0x78] sm:$0xf]
                  %584 = vst [vmem:[%s552 + $0x3c] sm:$0xf] %v583
                $region142: #{srm_fl_forward.11} parent=129 // loop_footer
                  %s550 = sadd.s32 1, %s546
                $region143: #{srm_fl_forward.11} parent=129 // loop_footer_branch
                  %545 = sbr.rel target = $region139
                $region144: #{srm_fl_forward.11} parent=129 // loop_exit
                  _
              $region130: #{srm_fl_forward.11} parent=114 // pred_fallthru
                _
            $region115: #{srm_fl_forward.11} parent=110 // pred_fallthru
              _
            // Predicated region
            $region116: #{srm_fl_forward.11} parent=110 // pred_check
              _
            $region117: #{srm_fl_forward.11} parent=110 // pred_check_branch
              %492 = sbr.rel (0) target = $region119
            $region118: #{srm_fl_forward.11} parent=110 // pred_region
              loop: start=0, step=1, limit=1
              $region120: #{srm_fl_forward.11} parent=118 // loop_pre_header
                _
              $region121: #{srm_fl_forward.11} parent=118 // loop_header
                %s495 = sphi 0, %s499
                %p496 = scmp.ge.s32.totalorder %s495, 1
                %s500 = sphi %s486, %s486
                %s501 = sphi %s478, %s478
              $region122: #{srm_fl_forward.11} parent=118 // loop_header_branch
                %498 = sbr.rel (%p496) target = $region126
              $region123: #{srm_fl_forward.11} parent=118 // loop_body
                %v502 = vld [vmem:[%s500] sm:$0xf]
                %503 = vst [vmem:[%s501] sm:$0xf] %v502
                %v504 = vld [vmem:[%s500 + $0x8] sm:$0xf]
                %505 = vst [vmem:[%s501 + $0x4] sm:$0xf] %v504
                %v506 = vld [vmem:[%s500 + $0x10] sm:$0xf]
                %507 = vst [vmem:[%s501 + $0x8] sm:$0xf] %v506
                %v508 = vld [vmem:[%s500 + $0x18] sm:$0xf]
                %509 = vst [vmem:[%s501 + $0xc] sm:$0xf] %v508
                %v510 = vld [vmem:[%s500 + $0x20] sm:$0xf]
                %511 = vst [vmem:[%s501 + $0x10] sm:$0xf] %v510
                %v512 = vld [vmem:[%s500 + $0x28] sm:$0xf]
                %513 = vst [vmem:[%s501 + $0x14] sm:$0xf] %v512
                %v514 = vld [vmem:[%s500 + $0x30] sm:$0xf]
                %515 = vst [vmem:[%s501 + $0x18] sm:$0xf] %v514
                %v516 = vld [vmem:[%s500 + $0x38] sm:$0xf]
                %517 = vst [vmem:[%s501 + $0x1c] sm:$0xf] %v516
                %v518 = vld [vmem:[%s500 + $0x40] sm:$0xf]
                %519 = vst [vmem:[%s501 + $0x20] sm:$0xf] %v518
                %v520 = vld [vmem:[%s500 + $0x48] sm:$0xf]
                %521 = vst [vmem:[%s501 + $0x24] sm:$0xf] %v520
                %v522 = vld [vmem:[%s500 + $0x50] sm:$0xf]
                %523 = vst [vmem:[%s501 + $0x28] sm:$0xf] %v522
                %v524 = vld [vmem:[%s500 + $0x58] sm:$0xf]
                %525 = vst [vmem:[%s501 + $0x2c] sm:$0xf] %v524
                %v526 = vld [vmem:[%s500 + $0x60] sm:$0xf]
                %527 = vst [vmem:[%s501 + $0x30] sm:$0xf] %v526
                %v528 = vld [vmem:[%s500 + $0x68] sm:$0xf]
                %529 = vst [vmem:[%s501 + $0x34] sm:$0xf] %v528
                %v530 = vld [vmem:[%s500 + $0x70] sm:$0xf]
                %531 = vst [vmem:[%s501 + $0x38] sm:$0xf] %v530
                %v532 = vld [vmem:[%s500 + $0x78] sm:$0xf]
                %533 = vst [vmem:[%s501 + $0x3c] sm:$0xf] %v532
              $region124: #{srm_fl_forward.11} parent=118 // loop_footer
                %s499 = sadd.s32 1, %s495
              $region125: #{srm_fl_forward.11} parent=118 // loop_footer_branch
                %494 = sbr.rel target = $region121
              $region126: #{srm_fl_forward.11} parent=118 // loop_exit
                _
            $region119: #{srm_fl_forward.11} parent=110 // pred_fallthru
              _
          $region111: #{srm_fl_forward.11} parent=106 // pred_fallthru
            _
          %585 = vnop
        $region107: #{srm_fl_forward.11} parent=15 // pred_fallthru
          _
      $region16: #{srm_fl_forward.11} parent=5 // pred_fallthru
        _
      %p586 = scmp.le.s32.totalorder 1, %s11
      %p587 = scmp.lt.s32.totalorder %s11, 5
      %p588 = pnand %p586, %p587
      %p589 = pneg %p588
      // Predicated region
      $region145: #{srm_fl_forward.11} parent=5 // pred_check
        _
      $region146: #{srm_fl_forward.11} parent=5 // pred_check_branch
        %591 = sbr.rel (%p588) target = $region148
      $region147: #{srm_fl_forward.11} parent=5 // pred_region
        %s592 = ssub.s32 %s11, 1
        %s593 = sand.u32 %s47, 1
        %s594 = sand.u32 %s47, 1
        %s595 = smul.addr %s594, 128
        %s596 = scalar_lea.vmem [#allocation2], %s595
        // Predicated region
        $region149: #{srm_fl_forward.11} parent=147 // pred_check
          %p597 = pneg %p60
        $region150: #{srm_fl_forward.11} parent=147 // pred_check_branch
          %599 = sbr.rel (%p597) target = $region152
        $region151: #{srm_fl_forward.11} parent=147 // pred_region
          _
        $region152: #{srm_fl_forward.11} parent=147 // pred_fallthru
          _
        %s600 = sand.u32 %s133, 1
        %s601 = sand.u32 %s133, 1
        %s602 = smul.addr %s601, 64
        %s603 = scalar_lea.vmem [#allocation3], %s602
        // Predicated region
        $region153: #{srm_fl_forward.11} parent=147 // pred_check
          %p604 = pneg %p146
        $region154: #{srm_fl_forward.11} parent=147 // pred_check_branch
          %606 = sbr.rel (%p604) target = $region156
        $region155: #{srm_fl_forward.11} parent=147 // pred_region
          _
        $region156: #{srm_fl_forward.11} parent=147 // pred_fallthru
          _
        %s607 = sand.u32 %s165, 1
        %s608 = sand.u32 %s165, 1
        %s609 = smul.addr %s608, 64
        %s610 = scalar_lea.vmem [#allocation4], %s609
        // Predicated region
        $region157: #{srm_fl_forward.11} parent=147 // pred_check
          %p611 = pneg %p178
        $region158: #{srm_fl_forward.11} parent=147 // pred_check_branch
          %613 = sbr.rel (%p611) target = $region160
        $region159: #{srm_fl_forward.11} parent=147 // pred_region
          _
        $region160: #{srm_fl_forward.11} parent=147 // pred_fallthru
          _
        %s614 = sand.u32 %s47, 1
        %s615 = sand.u32 %s47, 1
        %s616 = smul.addr %s615, 128
        %s617 = scalar_lea.vmem [#allocation2], %s616
        %p618 = pneg %p60
        %p619 = pneg %p57
        %s620 = smul.u32 16, %s22
        %p621 = scmp.lt.s32.totalorder %s21, 1
        %s622 = scalar_select %p621, %s21, 1
        %p623 = scmp.lt.s32.totalorder %s620, 15
        %s624 = scalar_select %p623, %s620, 15
        %s625 = smul.addr %s622, 16
        %s626 = sadd.s32 %s624, %s625
        %s627 = smul.addr %s626, 8
        %s628 = scalar_lea.vmem %s1, %s627
        %p629 = pneg %p88
        %p630 = pneg %p85
        %s631 = smul.u32 16, %s22
        %p632 = scmp.lt.s32.totalorder %s21, 1
        %s633 = scalar_select %p632, %s21, 1
        %p634 = scmp.lt.s32.totalorder %s631, 15
        %s635 = scalar_select %p634, %s631, 15
        %s636 = smul.addr %s633, 16
        %s637 = sadd.s32 %s635, %s636
        %s638 = smul.addr %s637, 8
        %s639 = scalar_lea.vmem %s2, %s638
        %p640 = pneg %p116
        %p641 = pneg %p113
        %s642 = sand.u32 %s133, 1
        %s643 = sand.u32 %s133, 1
        %s644 = smul.addr %s643, 64
        %s645 = scalar_lea.vmem [#allocation3], %s644
        %p646 = pneg %p146
        %p647 = pneg %p143
        %s648 = sand.u32 %s165, 1
        %s649 = sand.u32 %s165, 1
        %s650 = smul.addr %s649, 64
        %s651 = scalar_lea.vmem [#allocation4], %s650
        %p652 = pneg %p178
        %p653 = pneg %p175
        %p654 = pneg %p208
        %p655 = pneg %p205
        %s656 = sand.u32 %s195, 1
        %s657 = sand.u32 %s195, 1
        %s658 = smul.addr %s657, 128
        %s659 = scalar_lea.vmem [#allocation5], %s658
        %s660 = smul.u32 16, %s22
        %s661 = smul.u32 16, %s22
        %p662 = scmp.lt.s32.totalorder %s21, 1
        %s663 = scalar_select %p662, %s21, 1
        %p664 = scmp.lt.s32.totalorder %s661, 15
        %s665 = scalar_select %p664, %s661, 15
        %s666 = smul.addr %s663, 16
        %s667 = sadd.s32 %s665, %s666
        %s668 = smul.addr %s667, 8
        %s669 = scalar_lea.vmem %s1, %s668
        %s670 = smul.u32 16, %s22
        %s671 = smul.u32 16, %s22
        %p672 = scmp.lt.s32.totalorder %s21, 1
        %s673 = scalar_select %p672, %s21, 1
        %p674 = scmp.lt.s32.totalorder %s671, 15
        %s675 = scalar_select %p674, %s671, 15
        %s676 = smul.addr %s673, 16
        %s677 = sadd.s32 %s675, %s676
        %s678 = smul.addr %s677, 8
        %s679 = scalar_lea.vmem %s2, %s678
        %s680 = smul.u32 16, %s22
        %s681 = smul.u32 16, %s23
        %s682 = sadd.s32 %s22, 1
        %s683 = smul.u32 16, %s23
        %s684 = smul.u32 16, %s22
        %v685 = vld [vmem:[%s596] sm:$0xff]
        %v686 = vld [vmem:[%s596 + $0x8] sm:$0xff]
        %v687 = vld [vmem:[%s596 + $0x10] sm:$0xff]
        %v688 = vld [vmem:[%s596 + $0x18] sm:$0xff]
        %v689 = vld [vmem:[%s596 + $0x20] sm:$0xff]
        %v690 = vld [vmem:[%s596 + $0x28] sm:$0xff]
        %v691 = vld [vmem:[%s596 + $0x30] sm:$0xff]
        %v692 = vld [vmem:[%s596 + $0x38] sm:$0xff]
        %v693 = vld [vmem:[%s596 + $0x40] sm:$0xff]
        %v694 = vld [vmem:[%s596 + $0x48] sm:$0xff]
        %v695 = vld [vmem:[%s596 + $0x50] sm:$0xff]
        %v696 = vld [vmem:[%s596 + $0x58] sm:$0xff]
        %v697 = vld [vmem:[%s596 + $0x60] sm:$0xff]
        %v698 = vld [vmem:[%s596 + $0x68] sm:$0xff]
        %v699 = vld [vmem:[%s596 + $0x70] sm:$0xff]
        %v700 = vld [vmem:[%s596 + $0x78] sm:$0xff]
        %v701 = vld [vmem:[%s669] sm:$0xff]
        %v702 = vld [vmem:[%s669 + $0x8] sm:$0xff]
        %v703 = vld [vmem:[%s669 + $0x10] sm:$0xff]
        %v704 = vld [vmem:[%s669 + $0x18] sm:$0xff]
        %v705 = vld [vmem:[%s669 + $0x20] sm:$0xff]
        %v706 = vld [vmem:[%s669 + $0x28] sm:$0xff]
        %v707 = vld [vmem:[%s669 + $0x30] sm:$0xff]
        %v708 = vld [vmem:[%s669 + $0x38] sm:$0xff]
        %v709 = vld [vmem:[%s669 + $0x40] sm:$0xff]
        %v710 = vld [vmem:[%s669 + $0x48] sm:$0xff]
        %v711 = vld [vmem:[%s669 + $0x50] sm:$0xff]
        %v712 = vld [vmem:[%s669 + $0x58] sm:$0xff]
        %v713 = vld [vmem:[%s669 + $0x60] sm:$0xff]
        %v714 = vld [vmem:[%s669 + $0x68] sm:$0xff]
        %v715 = vld [vmem:[%s669 + $0x70] sm:$0xff]
        %v716 = vld [vmem:[%s669 + $0x78] sm:$0xff]
        %718 = vset.pattern.permute.xlu0 0
        %719 = vperm.xlu0 %718, %v701
        %v720 = vpop.permute.xlu0 %719
        %723 = vset.pattern.permute.xlu0 0
        %724 = vperm.xlu0 %723, %v702
        %v725 = vpop.permute.xlu0 %724
        %728 = vset.pattern.permute.xlu0 0
        %729 = vperm.xlu0 %728, %v703
        %v730 = vpop.permute.xlu0 %729
        %733 = vset.pattern.permute.xlu0 0
        %734 = vperm.xlu0 %733, %v704
        %v735 = vpop.permute.xlu0 %734
        %738 = vset.pattern.permute.xlu0 0
        %739 = vperm.xlu0 %738, %v705
        %v740 = vpop.permute.xlu0 %739
        %743 = vset.pattern.permute.xlu0 0
        %744 = vperm.xlu0 %743, %v706
        %v745 = vpop.permute.xlu0 %744
        %748 = vset.pattern.permute.xlu0 0
        %749 = vperm.xlu0 %748, %v707
        %v750 = vpop.permute.xlu0 %749
        %753 = vset.pattern.permute.xlu0 0
        %754 = vperm.xlu0 %753, %v708
        %v755 = vpop.permute.xlu0 %754
        %758 = vset.pattern.permute.xlu0 0
        %759 = vperm.xlu0 %758, %v709
        %v760 = vpop.permute.xlu0 %759
        %763 = vset.pattern.permute.xlu0 0
        %764 = vperm.xlu0 %763, %v710
        %v765 = vpop.permute.xlu0 %764
        %768 = vset.pattern.permute.xlu0 0
        %769 = vperm.xlu0 %768, %v711
        %v770 = vpop.permute.xlu0 %769
        %773 = vset.pattern.permute.xlu0 0
        %774 = vperm.xlu0 %773, %v712
        %v775 = vpop.permute.xlu0 %774
        %778 = vset.pattern.permute.xlu0 0
        %779 = vperm.xlu0 %778, %v713
        %v780 = vpop.permute.xlu0 %779
        %783 = vset.pattern.permute.xlu0 0
        %784 = vperm.xlu0 %783, %v714
        %v785 = vpop.permute.xlu0 %784
        %788 = vset.pattern.permute.xlu0 0
        %789 = vperm.xlu0 %788, %v715
        %v790 = vpop.permute.xlu0 %789
        %793 = vset.pattern.permute.xlu0 0
        %794 = vperm.xlu0 %793, %v716
        %v795 = vpop.permute.xlu0 %794
        %v797 = vsub.f32 %v685, %v720
        %v798 = vsub.f32 %v686, %v725
        %v799 = vsub.f32 %v687, %v730
        %v800 = vsub.f32 %v688, %v735
        %v801 = vsub.f32 %v689, %v740
        %v802 = vsub.f32 %v690, %v745
        %v803 = vsub.f32 %v691, %v750
        %v804 = vsub.f32 %v692, %v755
        %v805 = vsub.f32 %v693, %v760
        %v806 = vsub.f32 %v694, %v765
        %v807 = vsub.f32 %v695, %v770
        %v808 = vsub.f32 %v696, %v775
        %v809 = vsub.f32 %v697, %v780
        %v810 = vsub.f32 %v698, %v785
        %v811 = vsub.f32 %v699, %v790
        %v812 = vsub.f32 %v700, %v795
        %v813 = vld [vmem:[%s679] sm:$0xff]
        %v814 = vld [vmem:[%s679 + $0x8] sm:$0xff]
        %v815 = vld [vmem:[%s679 + $0x10] sm:$0xff]
        %v816 = vld [vmem:[%s679 + $0x18] sm:$0xff]
        %v817 = vld [vmem:[%s679 + $0x20] sm:$0xff]
        %v818 = vld [vmem:[%s679 + $0x28] sm:$0xff]
        %v819 = vld [vmem:[%s679 + $0x30] sm:$0xff]
        %v820 = vld [vmem:[%s679 + $0x38] sm:$0xff]
        %v821 = vld [vmem:[%s679 + $0x40] sm:$0xff]
        %v822 = vld [vmem:[%s679 + $0x48] sm:$0xff]
        %v823 = vld [vmem:[%s679 + $0x50] sm:$0xff]
        %v824 = vld [vmem:[%s679 + $0x58] sm:$0xff]
        %v825 = vld [vmem:[%s679 + $0x60] sm:$0xff]
        %v826 = vld [vmem:[%s679 + $0x68] sm:$0xff]
        %v827 = vld [vmem:[%s679 + $0x70] sm:$0xff]
        %v828 = vld [vmem:[%s679 + $0x78] sm:$0xff]
        %830 = vset.pattern.permute.xlu0 0
        %831 = vperm.xlu0 %830, %v813
        %v832 = vpop.permute.xlu0 %831
        %835 = vset.pattern.permute.xlu0 0
        %836 = vperm.xlu0 %835, %v814
        %v837 = vpop.permute.xlu0 %836
        %840 = vset.pattern.permute.xlu0 0
        %841 = vperm.xlu0 %840, %v815
        %v842 = vpop.permute.xlu0 %841
        %845 = vset.pattern.permute.xlu0 0
        %846 = vperm.xlu0 %845, %v816
        %v847 = vpop.permute.xlu0 %846
        %850 = vset.pattern.permute.xlu0 0
        %851 = vperm.xlu0 %850, %v817
        %v852 = vpop.permute.xlu0 %851
        %855 = vset.pattern.permute.xlu0 0
        %856 = vperm.xlu0 %855, %v818
        %v857 = vpop.permute.xlu0 %856
        %860 = vset.pattern.permute.xlu0 0
        %861 = vperm.xlu0 %860, %v819
        %v862 = vpop.permute.xlu0 %861
        %865 = vset.pattern.permute.xlu0 0
        %866 = vperm.xlu0 %865, %v820
        %v867 = vpop.permute.xlu0 %866
        %870 = vset.pattern.permute.xlu0 0
        %871 = vperm.xlu0 %870, %v821
        %v872 = vpop.permute.xlu0 %871
        %875 = vset.pattern.permute.xlu0 0
        %876 = vperm.xlu0 %875, %v822
        %v877 = vpop.permute.xlu0 %876
        %880 = vset.pattern.permute.xlu0 0
        %881 = vperm.xlu0 %880, %v823
        %v882 = vpop.permute.xlu0 %881
        %885 = vset.pattern.permute.xlu0 0
        %886 = vperm.xlu0 %885, %v824
        %v887 = vpop.permute.xlu0 %886
        %890 = vset.pattern.permute.xlu0 0
        %891 = vperm.xlu0 %890, %v825
        %v892 = vpop.permute.xlu0 %891
        %895 = vset.pattern.permute.xlu0 0
        %896 = vperm.xlu0 %895, %v826
        %v897 = vpop.permute.xlu0 %896
        %900 = vset.pattern.permute.xlu0 0
        %901 = vperm.xlu0 %900, %v827
        %v902 = vpop.permute.xlu0 %901
        %905 = vset.pattern.permute.xlu0 0
        %906 = vperm.xlu0 %905, %v828
        %v907 = vpop.permute.xlu0 %906
        %v909 = vmul.f32 %v797, %v832
        %v910 = vmul.f32 %v798, %v837
        %v911 = vmul.f32 %v799, %v842
        %v912 = vmul.f32 %v800, %v847
        %v913 = vmul.f32 %v801, %v852
        %v914 = vmul.f32 %v802, %v857
        %v915 = vmul.f32 %v803, %v862
        %v916 = vmul.f32 %v804, %v867
        %v917 = vmul.f32 %v805, %v872
        %v918 = vmul.f32 %v806, %v877
        %v919 = vmul.f32 %v807, %v882
        %v920 = vmul.f32 %v808, %v887
        %v921 = vmul.f32 %v809, %v892
        %v922 = vmul.f32 %v810, %v897
        %v923 = vmul.f32 %v811, %v902
        %v924 = vmul.f32 %v812, %v907
        %v925 = vld [vmem:[%s603] sm:$0xf]
        %v926 = vld [vmem:[%s603 + $0x4] sm:$0xf]
        %v927 = vld [vmem:[%s603 + $0x8] sm:$0xf]
        %v928 = vld [vmem:[%s603 + $0xc] sm:$0xf]
        %v929 = vld [vmem:[%s603 + $0x10] sm:$0xf]
        %v930 = vld [vmem:[%s603 + $0x14] sm:$0xf]
        %v931 = vld [vmem:[%s603 + $0x18] sm:$0xf]
        %v932 = vld [vmem:[%s603 + $0x1c] sm:$0xf]
        %v933 = vld [vmem:[%s603 + $0x20] sm:$0xf]
        %v934 = vld [vmem:[%s603 + $0x24] sm:$0xf]
        %v935 = vld [vmem:[%s603 + $0x28] sm:$0xf]
        %v936 = vld [vmem:[%s603 + $0x2c] sm:$0xf]
        %v937 = vld [vmem:[%s603 + $0x30] sm:$0xf]
        %v938 = vld [vmem:[%s603 + $0x34] sm:$0xf]
        %v939 = vld [vmem:[%s603 + $0x38] sm:$0xf]
        %v940 = vld [vmem:[%s603 + $0x3c] sm:$0xf]
        %v957 = vunpack.c.l.b16 %v925
        %v958 = vunpack.c.l.b16 %v926
        %v959 = vunpack.c.l.b16 %v927
        %v960 = vunpack.c.l.b16 %v928
        %v961 = vunpack.c.l.b16 %v929
        %v962 = vunpack.c.l.b16 %v930
        %v963 = vunpack.c.l.b16 %v931
        %v964 = vunpack.c.l.b16 %v932
        %v965 = vunpack.c.l.b16 %v933
        %v966 = vunpack.c.l.b16 %v934
        %v967 = vunpack.c.l.b16 %v935
        %v968 = vunpack.c.l.b16 %v936
        %v969 = vunpack.c.l.b16 %v937
        %v970 = vunpack.c.l.b16 %v938
        %v971 = vunpack.c.l.b16 %v939
        %v972 = vunpack.c.l.b16 %v940
        %v973 = vpack.c.b16 %v958, %v957
        %v974 = vpack.c.b16 %v960, %v959
        %v975 = vpack.c.b16 %v962, %v961
        %v976 = vpack.c.b16 %v964, %v963
        %v977 = vpack.c.b16 %v966, %v965
        %v978 = vpack.c.b16 %v968, %v967
        %v979 = vpack.c.b16 %v970, %v969
        %v980 = vpack.c.b16 %v972, %v971
        %989 = vxpose.xlu0.c.b16.start [1/8] %v973, 128
        %990 = vxpose.xlu0.c.b16.cont [2/8] %v974, 128
        %991 = vxpose.xlu0.c.b16.cont [3/8] %v975, 128
        %992 = vxpose.xlu0.c.b16.cont [4/8] %v976, 128
        %993 = vxpose.xlu0.c.b16.cont [5/8] %v977, 128
        %994 = vxpose.xlu0.c.b16.cont [6/8] %v978, 128
        %995 = vxpose.xlu0.c.b16.cont [7/8] %v979, 128
        %996 = vxpose.xlu0.c.b16.end [8/8] %v980, 128
        %v997 = vpop.trf.xlu0
        %v998 = vpop.trf.xlu0
        %v999 = vpop.trf.xlu0
        %v1000 = vpop.trf.xlu0
        %v1001 = vpop.trf.xlu0
        %v1002 = vpop.trf.xlu0
        %v1003 = vpop.trf.xlu0
        %v1004 = vpop.trf.xlu0
        %v1005 = vunpack.c.l.bf16 %v997
        %v1006 = vunpack.c.h.bf16 %v997
        %v1007 = vunpack.c.l.bf16 %v998
        %v1008 = vunpack.c.h.bf16 %v998
        %v1009 = vunpack.c.l.bf16 %v999
        %v1010 = vunpack.c.h.bf16 %v999
        %v1011 = vunpack.c.l.bf16 %v1000
        %v1012 = vunpack.c.h.bf16 %v1000
        %v1013 = vunpack.c.l.bf16 %v1001
        %v1014 = vunpack.c.h.bf16 %v1001
        %v1015 = vunpack.c.l.bf16 %v1002
        %v1016 = vunpack.c.h.bf16 %v1002
        %v1017 = vunpack.c.l.bf16 %v1003
        %v1018 = vunpack.c.h.bf16 %v1003
        %v1019 = vunpack.c.l.bf16 %v1004
        %v1020 = vunpack.c.h.bf16 %v1004
        %v1021 = vld [vmem:[%s610] sm:$0xf]
        %v1022 = vld [vmem:[%s610 + $0x4] sm:$0xf]
        %v1023 = vld [vmem:[%s610 + $0x8] sm:$0xf]
        %v1024 = vld [vmem:[%s610 + $0xc] sm:$0xf]
        %v1025 = vld [vmem:[%s610 + $0x10] sm:$0xf]
        %v1026 = vld [vmem:[%s610 + $0x14] sm:$0xf]
        %v1027 = vld [vmem:[%s610 + $0x18] sm:$0xf]
        %v1028 = vld [vmem:[%s610 + $0x1c] sm:$0xf]
        %v1029 = vld [vmem:[%s610 + $0x20] sm:$0xf]
        %v1030 = vld [vmem:[%s610 + $0x24] sm:$0xf]
        %v1031 = vld [vmem:[%s610 + $0x28] sm:$0xf]
        %v1032 = vld [vmem:[%s610 + $0x2c] sm:$0xf]
        %v1033 = vld [vmem:[%s610 + $0x30] sm:$0xf]
        %v1034 = vld [vmem:[%s610 + $0x34] sm:$0xf]
        %v1035 = vld [vmem:[%s610 + $0x38] sm:$0xf]
        %v1036 = vld [vmem:[%s610 + $0x3c] sm:$0xf]
        %v1053 = vunpack.c.l.b16 %v1021
        %v1054 = vunpack.c.l.b16 %v1022
        %v1055 = vunpack.c.l.b16 %v1023
        %v1056 = vunpack.c.l.b16 %v1024
        %v1057 = vunpack.c.l.b16 %v1025
        %v1058 = vunpack.c.l.b16 %v1026
        %v1059 = vunpack.c.l.b16 %v1027
        %v1060 = vunpack.c.l.b16 %v1028
        %v1061 = vunpack.c.l.b16 %v1029
        %v1062 = vunpack.c.l.b16 %v1030
        %v1063 = vunpack.c.l.b16 %v1031
        %v1064 = vunpack.c.l.b16 %v1032
        %v1065 = vunpack.c.l.b16 %v1033
        %v1066 = vunpack.c.l.b16 %v1034
        %v1067 = vunpack.c.l.b16 %v1035
        %v1068 = vunpack.c.l.b16 %v1036
        %v1069 = vpack.c.b16 %v1054, %v1053
        %v1070 = vpack.c.b16 %v1056, %v1055
        %v1071 = vpack.c.b16 %v1058, %v1057
        %v1072 = vpack.c.b16 %v1060, %v1059
        %v1073 = vpack.c.b16 %v1062, %v1061
        %v1074 = vpack.c.b16 %v1064, %v1063
        %v1075 = vpack.c.b16 %v1066, %v1065
        %v1076 = vpack.c.b16 %v1068, %v1067
        %1085 = vxpose.xlu0.c.b16.start [1/8] %v1069, 128
        %1086 = vxpose.xlu0.c.b16.cont [2/8] %v1070, 128
        %1087 = vxpose.xlu0.c.b16.cont [3/8] %v1071, 128
        %1088 = vxpose.xlu0.c.b16.cont [4/8] %v1072, 128
        %1089 = vxpose.xlu0.c.b16.cont [5/8] %v1073, 128
        %1090 = vxpose.xlu0.c.b16.cont [6/8] %v1074, 128
        %1091 = vxpose.xlu0.c.b16.cont [7/8] %v1075, 128
        %1092 = vxpose.xlu0.c.b16.end [8/8] %v1076, 128
        %v1093 = vpop.trf.xlu0
        %v1094 = vpop.trf.xlu0
        %v1095 = vpop.trf.xlu0
        %v1096 = vpop.trf.xlu0
        %v1097 = vpop.trf.xlu0
        %v1098 = vpop.trf.xlu0
        %v1099 = vpop.trf.xlu0
        %v1100 = vpop.trf.xlu0
        %v1101 = vunpack.c.l.bf16 %v1093
        %v1102 = vunpack.c.h.bf16 %v1093
        %v1103 = vunpack.c.l.bf16 %v1094
        %v1104 = vunpack.c.h.bf16 %v1094
        %v1105 = vunpack.c.l.bf16 %v1095
        %v1106 = vunpack.c.h.bf16 %v1095
        %v1107 = vunpack.c.l.bf16 %v1096
        %v1108 = vunpack.c.h.bf16 %v1096
        %v1109 = vunpack.c.l.bf16 %v1097
        %v1110 = vunpack.c.h.bf16 %v1097
        %v1111 = vunpack.c.l.bf16 %v1098
        %v1112 = vunpack.c.h.bf16 %v1098
        %v1113 = vunpack.c.l.bf16 %v1099
        %v1114 = vunpack.c.h.bf16 %v1099
        %v1115 = vunpack.c.l.bf16 %v1100
        %v1116 = vunpack.c.h.bf16 %v1100
        %v1117 = vmul.f32 %v909, %v1005
        %v1118 = vmul.f32 %v910, %v1006
        %v1119 = vmul.f32 %v911, %v1007
        %v1120 = vmul.f32 %v912, %v1008
        %v1121 = vmul.f32 %v913, %v1009
        %v1122 = vmul.f32 %v914, %v1010
        %v1123 = vmul.f32 %v915, %v1011
        %v1124 = vmul.f32 %v916, %v1012
        %v1125 = vmul.f32 %v917, %v1013
        %v1126 = vmul.f32 %v918, %v1014
        %v1127 = vmul.f32 %v919, %v1015
        %v1128 = vmul.f32 %v920, %v1016
        %v1129 = vmul.f32 %v921, %v1017
        %v1130 = vmul.f32 %v922, %v1018
        %v1131 = vmul.f32 %v923, %v1019
        %v1132 = vmul.f32 %v924, %v1020
        %v1133 = vadd.f32 %v1117, %v1101
        %v1134 = vadd.f32 %v1118, %v1102
        %v1135 = vadd.f32 %v1119, %v1103
        %v1136 = vadd.f32 %v1120, %v1104
        %v1137 = vadd.f32 %v1121, %v1105
        %v1138 = vadd.f32 %v1122, %v1106
        %v1139 = vadd.f32 %v1123, %v1107
        %v1140 = vadd.f32 %v1124, %v1108
        %v1141 = vadd.f32 %v1125, %v1109
        %v1142 = vadd.f32 %v1126, %v1110
        %v1143 = vadd.f32 %v1127, %v1111
        %v1144 = vadd.f32 %v1128, %v1112
        %v1145 = vadd.f32 %v1129, %v1113
        %v1146 = vadd.f32 %v1130, %v1114
        %v1147 = vadd.f32 %v1131, %v1115
        %v1148 = vadd.f32 %v1132, %v1116
        %1149 = vst [vmem:[%s659] sm:$0xff] %v1133
        %1150 = vst [vmem:[%s659 + $0x8] sm:$0xff] %v1134
        %1151 = vst [vmem:[%s659 + $0x10] sm:$0xff] %v1135
        %1152 = vst [vmem:[%s659 + $0x18] sm:$0xff] %v1136
        %1153 = vst [vmem:[%s659 + $0x20] sm:$0xff] %v1137
        %1154 = vst [vmem:[%s659 + $0x28] sm:$0xff] %v1138
        %1155 = vst [vmem:[%s659 + $0x30] sm:$0xff] %v1139
        %1156 = vst [vmem:[%s659 + $0x38] sm:$0xff] %v1140
        %1157 = vst [vmem:[%s659 + $0x40] sm:$0xff] %v1141
        %1158 = vst [vmem:[%s659 + $0x48] sm:$0xff] %v1142
        %1159 = vst [vmem:[%s659 + $0x50] sm:$0xff] %v1143
        %1160 = vst [vmem:[%s659 + $0x58] sm:$0xff] %v1144
        %1161 = vst [vmem:[%s659 + $0x60] sm:$0xff] %v1145
        %1162 = vst [vmem:[%s659 + $0x68] sm:$0xff] %v1146
        %1163 = vst [vmem:[%s659 + $0x70] sm:$0xff] %v1147
        %1164 = vst [vmem:[%s659 + $0x78] sm:$0xff] %v1148
        %s1165 = sand.u32 %s195, 1
        %s1166 = sand.u32 %s195, 1
        %s1167 = smul.addr %s1166, 128
        %s1168 = scalar_lea.vmem [#allocation5], %s1167
        // Predicated region
        $region161: #{srm_fl_forward.11} parent=147 // pred_check
          %p1169 = pneg %p205
        $region162: #{srm_fl_forward.11} parent=147 // pred_check_branch
          %1171 = sbr.rel (%p1169) target = $region164
        $region163: #{srm_fl_forward.11} parent=147 // pred_region
          %s1172 = smul.u32 16, %s22
          %s1173 = smul.addr %s1172, 2
          %s1174 = sadd.s32 %s23, %s1173
          %s1175 = smul.addr %s21, 32
          %s1176 = sadd.s32 %s1174, %s1175
          %s1177 = smul.addr %s1176, 8
          %s1178 = scalar_lea.vmem %s5, %s1177
          // Predicated region
          $region165: #{srm_fl_forward.11} parent=163 // pred_check
            _
          $region166: #{srm_fl_forward.11} parent=163 // pred_check_branch
            %1180 = sbr.rel (0) target = $region168
          $region167: #{srm_fl_forward.11} parent=163 // pred_region
            // Predicated region
            $region169: #{srm_fl_forward.11} parent=167 // pred_check
              _
            $region170: #{srm_fl_forward.11} parent=167 // pred_check_branch
              %1182 = sbr.rel (0) target = $region172
            $region171: #{srm_fl_forward.11} parent=167 // pred_region
              // Predicated region
              $region184: #{srm_fl_forward.11} parent=171 // pred_check
                _
              $region185: #{srm_fl_forward.11} parent=171 // pred_check_branch
                %1227 = sbr.rel (0) target = $region187
              $region186: #{srm_fl_forward.11} parent=171 // pred_region
                loop: start=0, step=1, limit=1
                $region188: #{srm_fl_forward.11} parent=186 // loop_pre_header
                  _
                $region189: #{srm_fl_forward.11} parent=186 // loop_header
                  %s1229 = sphi 0, %s1233
                  %p1230 = scmp.ge.s32.totalorder %s1229, 1
                  %s1234 = sphi %s1168, %s1168
                  %s1235 = sphi %s1178, %s1178
                $region190: #{srm_fl_forward.11} parent=186 // loop_header_branch
                  %1232 = sbr.rel (%p1230) target = $region194
                $region191: #{srm_fl_forward.11} parent=186 // loop_body
                  %v1236 = vld [vmem:[%s1234] sm:$0xff]
                  %1237 = vst [vmem:[%s1235] sm:$0xff] %v1236
                  %v1238 = vld [vmem:[%s1234 + $0x8] sm:$0xff]
                  %1239 = vst [vmem:[%s1235 + $0x10] sm:$0xff] %v1238
                  %v1240 = vld [vmem:[%s1234 + $0x10] sm:$0xff]
                  %1241 = vst [vmem:[%s1235 + $0x20] sm:$0xff] %v1240
                  %v1242 = vld [vmem:[%s1234 + $0x18] sm:$0xff]
                  %1243 = vst [vmem:[%s1235 + $0x30] sm:$0xff] %v1242
                  %v1244 = vld [vmem:[%s1234 + $0x20] sm:$0xff]
                  %1245 = vst [vmem:[%s1235 + $0x40] sm:$0xff] %v1244
                  %v1246 = vld [vmem:[%s1234 + $0x28] sm:$0xff]
                  %1247 = vst [vmem:[%s1235 + $0x50] sm:$0xff] %v1246
                  %v1248 = vld [vmem:[%s1234 + $0x30] sm:$0xff]
                  %1249 = vst [vmem:[%s1235 + $0x60] sm:$0xff] %v1248
                  %v1250 = vld [vmem:[%s1234 + $0x38] sm:$0xff]
                  %1251 = vst [vmem:[%s1235 + $0x70] sm:$0xff] %v1250
                  %v1252 = vld [vmem:[%s1234 + $0x40] sm:$0xff]
                  %1253 = vst [vmem:[%s1235 + $0x80] sm:$0xff] %v1252
                  %v1254 = vld [vmem:[%s1234 + $0x48] sm:$0xff]
                  %1255 = vst [vmem:[%s1235 + $0x90] sm:$0xff] %v1254
                  %v1256 = vld [vmem:[%s1234 + $0x50] sm:$0xff]
                  %1257 = vst [vmem:[%s1235 + $0xa0] sm:$0xff] %v1256
                  %v1258 = vld [vmem:[%s1234 + $0x58] sm:$0xff]
                  %1259 = vst [vmem:[%s1235 + $0xb0] sm:$0xff] %v1258
                  %v1260 = vld [vmem:[%s1234 + $0x60] sm:$0xff]
                  %1261 = vst [vmem:[%s1235 + $0xc0] sm:$0xff] %v1260
                  %v1262 = vld [vmem:[%s1234 + $0x68] sm:$0xff]
                  %1263 = vst [vmem:[%s1235 + $0xd0] sm:$0xff] %v1262
                  %v1264 = vld [vmem:[%s1234 + $0x70] sm:$0xff]
                  %1265 = vst [vmem:[%s1235 + $0xe0] sm:$0xff] %v1264
                  %v1266 = vld [vmem:[%s1234 + $0x78] sm:$0xff]
                  %1267 = vst [vmem:[%s1235 + $0xf0] sm:$0xff] %v1266
                $region192: #{srm_fl_forward.11} parent=186 // loop_footer
                  %s1233 = sadd.s32 1, %s1229
                $region193: #{srm_fl_forward.11} parent=186 // loop_footer_branch
                  %1228 = sbr.rel target = $region189
                $region194: #{srm_fl_forward.11} parent=186 // loop_exit
                  _
              $region187: #{srm_fl_forward.11} parent=171 // pred_fallthru
                _
              // Predicated region
              $region195: #{srm_fl_forward.11} parent=171 // pred_check
                _
              $region196: #{srm_fl_forward.11} parent=171 // pred_check_branch
                %1269 = sbr.rel target = $region198
              $region197: #{srm_fl_forward.11} parent=171 // pred_region
                _
              $region198: #{srm_fl_forward.11} parent=171 // pred_fallthru
                _
            $region172: #{srm_fl_forward.11} parent=167 // pred_fallthru
              _
            // Predicated region
            $region173: #{srm_fl_forward.11} parent=167 // pred_check
              _
            $region174: #{srm_fl_forward.11} parent=167 // pred_check_branch
              %1184 = sbr.rel target = $region176
            $region175: #{srm_fl_forward.11} parent=167 // pred_region
              loop: start=0, step=1, limit=1
              $region177: #{srm_fl_forward.11} parent=175 // loop_pre_header
                _
              $region178: #{srm_fl_forward.11} parent=175 // loop_header
                %s1187 = sphi 0, %s1191
                %p1188 = scmp.ge.s32.totalorder %s1187, 1
                %s1192 = sphi %s1168, %s1168
                %s1193 = sphi %s1178, %s1178
              $region179: #{srm_fl_forward.11} parent=175 // loop_header_branch
                %1190 = sbr.rel (%p1188) target = $region183
              $region180: #{srm_fl_forward.11} parent=175 // loop_body
                %v1194 = vld [vmem:[%s1192] sm:$0xff]
                %1195 = vst [vmem:[%s1193] sm:$0xff] %v1194
                %v1196 = vld [vmem:[%s1192 + $0x8] sm:$0xff]
                %1197 = vst [vmem:[%s1193 + $0x10] sm:$0xff] %v1196
                %v1198 = vld [vmem:[%s1192 + $0x10] sm:$0xff]
                %1199 = vst [vmem:[%s1193 + $0x20] sm:$0xff] %v1198
                %v1200 = vld [vmem:[%s1192 + $0x18] sm:$0xff]
                %1201 = vst [vmem:[%s1193 + $0x30] sm:$0xff] %v1200
                %v1202 = vld [vmem:[%s1192 + $0x20] sm:$0xff]
                %1203 = vst [vmem:[%s1193 + $0x40] sm:$0xff] %v1202
                %v1204 = vld [vmem:[%s1192 + $0x28] sm:$0xff]
                %1205 = vst [vmem:[%s1193 + $0x50] sm:$0xff] %v1204
                %v1206 = vld [vmem:[%s1192 + $0x30] sm:$0xff]
                %1207 = vst [vmem:[%s1193 + $0x60] sm:$0xff] %v1206
                %v1208 = vld [vmem:[%s1192 + $0x38] sm:$0xff]
                %1209 = vst [vmem:[%s1193 + $0x70] sm:$0xff] %v1208
                %v1210 = vld [vmem:[%s1192 + $0x40] sm:$0xff]
                %1211 = vst [vmem:[%s1193 + $0x80] sm:$0xff] %v1210
                %v1212 = vld [vmem:[%s1192 + $0x48] sm:$0xff]
                %1213 = vst [vmem:[%s1193 + $0x90] sm:$0xff] %v1212
                %v1214 = vld [vmem:[%s1192 + $0x50] sm:$0xff]
                %1215 = vst [vmem:[%s1193 + $0xa0] sm:$0xff] %v1214
                %v1216 = vld [vmem:[%s1192 + $0x58] sm:$0xff]
                %1217 = vst [vmem:[%s1193 + $0xb0] sm:$0xff] %v1216
                %v1218 = vld [vmem:[%s1192 + $0x60] sm:$0xff]
                %1219 = vst [vmem:[%s1193 + $0xc0] sm:$0xff] %v1218
                %v1220 = vld [vmem:[%s1192 + $0x68] sm:$0xff]
                %1221 = vst [vmem:[%s1193 + $0xd0] sm:$0xff] %v1220
                %v1222 = vld [vmem:[%s1192 + $0x70] sm:$0xff]
                %1223 = vst [vmem:[%s1193 + $0xe0] sm:$0xff] %v1222
                %v1224 = vld [vmem:[%s1192 + $0x78] sm:$0xff]
                %1225 = vst [vmem:[%s1193 + $0xf0] sm:$0xff] %v1224
              $region181: #{srm_fl_forward.11} parent=175 // loop_footer
                %s1191 = sadd.s32 1, %s1187
              $region182: #{srm_fl_forward.11} parent=175 // loop_footer_branch
                %1186 = sbr.rel target = $region178
              $region183: #{srm_fl_forward.11} parent=175 // loop_exit
                _
            $region176: #{srm_fl_forward.11} parent=167 // pred_fallthru
              _
          $region168: #{srm_fl_forward.11} parent=163 // pred_fallthru
            _
          %1270 = vnop
        $region164: #{srm_fl_forward.11} parent=147 // pred_fallthru
          _
      $region148: #{srm_fl_forward.11} parent=5 // pred_fallthru
        _
      %p1271 = scmp.le.s32.totalorder 2, %s11
      // Predicated region
      $region199: #{srm_fl_forward.11} parent=5 // pred_check
        %p1272 = pneg %p1271
      $region200: #{srm_fl_forward.11} parent=5 // pred_check_branch
        %1274 = sbr.rel (%p1272) target = $region202
      $region201: #{srm_fl_forward.11} parent=5 // pred_region
        %s1275 = ssub.s32 %s11, 2
        // Predicated region
        $region203: #{srm_fl_forward.11} parent=201 // pred_check
          %p1276 = pneg %p211
        $region204: #{srm_fl_forward.11} parent=201 // pred_check_branch
          %1278 = sbr.rel (%p1276) target = $region206
        $region205: #{srm_fl_forward.11} parent=201 // pred_region
          %s1279 = sand.u32 %s196, 1
          %s1280 = sand.u32 %s196, 1
          %s1281 = smul.addr %s1280, 128
          %s1282 = scalar_lea.vmem [#allocation5], %s1281
        $region206: #{srm_fl_forward.11} parent=201 // pred_fallthru
          _
      $region202: #{srm_fl_forward.11} parent=5 // pred_fallthru
        _
    $region6: #{srm_fl_forward.11} parent=1 // loop_footer
      %s15 = sadd.s32 1, %s11
    $region7: #{srm_fl_forward.11} parent=1 // loop_footer_branch
      %10 = sbr.rel target = $region3
    $region8: #{srm_fl_forward.11} parent=1 // loop_exit
      _

// kernel: srm_fl_forward.10
$region0: #{srm_fl_forward.10}
  #allocation0 [shape = 'u32[]', space=smem, size = 0x4, offset = 0x4, fixed_abs, tag = 'smem constant byte address 0x4 - core index']
  #allocation1 [shape = 'u32[144,128]{1,0:T(1,128)}', space=vmem, size = 0x12000, scoped, tag = 'internal scratch']
  #allocation2 [shape = 'f32[128,1]{1,0:T(8,128)}', space=vmem, size = 0x10000, scoped, tag = 'scratch operand']
  #allocation3 [shape = 'f32[128,1]{1,0:T(8,128)}', space=vmem, size = 0x10000, scoped, tag = 'scratch operand']
  %s0 = inlined_call_operand.vmem [shape: f32[2,128,256], index: 0, kind: input, shape index: {}]
  %s1 = inlined_call_operand.vmem [shape: f32[2,128,1], index: 1, kind: output, shape index: {0}]
  %s2 = inlined_call_operand.vmem [shape: f32[2,128,1], index: 2, kind: output, shape index: {1}]
  %3 = xla_tuple %s1, %s2
  %s4 = sld [smem:[#allocation0]]
  $region95: #{srm_fl_forward.10} parent=0
    _
  %s6 = ssub.s32 1, %s4
  %s7 = scalar_select 0, %s6, %s4
  $region1: #{srm_fl_forward.10} parent=0
    #allocation4 [shape = 'u8[131072]{0}', space=vmem, size = 0x20000, scoped, tag = 'input window, operand 0']
    loop: start=0, step=1, limit=6
    $region2: #{srm_fl_forward.10} parent=1 // loop_pre_header
      _
    $region3: #{srm_fl_forward.10} parent=1 // loop_header
      %s9 = sphi 0, %s13
      %p10 = scmp.ge.s32.totalorder %s9, 6
      %s16 = sphi 0, %s35
      %s17 = sphi 0, %s31
      %s18 = sphi 0, %s27
      %s19 = sphi 0, %s16
      %s20 = sphi 0, %s17
      %s21 = sphi 0, %s18
      %s22 = sphi 0, %s19
      %s23 = sphi 0, %s20
      %s24 = sphi 0, %s21
      %s42 = sphi 0, %s44
      %s45 = sphi 0, %s42
      %s46 = sphi 0, %s45
      %s62 = sphi 0, %s46
      %s70 = sphi 0, %s72
      %s73 = sphi 0, %s70
      %s74 = sphi 0, %s73
      %s90 = sphi 0, %s74
      %s98 = sphi 0, %s100
      %s101 = sphi 0, %s98
      %s102 = sphi 0, %s101
      %s118 = sphi 0, %s102
    $region4: #{srm_fl_forward.10} parent=1 // loop_header_branch
      %12 = sbr.rel (%p10) target = $region8
    $region5: #{srm_fl_forward.10} parent=1 // loop_body
      %s14 = ssub.s32 %s9, 1
      %s15 = ssub.s32 %s9, 2
      %s25 = sadd.s32 1, %s18
      %p26 = scmp.ge.s32.totalorder %s25, 2
      %s27 = scalar_select %p26, 0, %s25
      %s28 = sadd.s32 1, %s17
      %s29 = scalar_select %p26, %s28, %s17
      %p30 = scmp.ge.s32.totalorder %s29, 1
      %s31 = scalar_select %p30, 0, %s29
      %s32 = sadd.s32 1, %s16
      %s33 = scalar_select %p30, %s32, %s16
      %p34 = scmp.ge.s32.totalorder %s33, 2
      %s35 = scalar_select %p34, 0, %s33
      %s36 = ssub.s32 %s16, %s35
      %s37 = ssub.s32 %s17, %s31
      %s38 = sor.u32 %s36, %s37
      %s39 = ssub.s32 %s18, %s27
      %s40 = sor.u32 %s38, %s39
      %p41 = scmp.eq.s32.totalorder %s40, 0
      %s43 = sadd.s32 %s42, 1
      %s44 = scalar_select %p41, %s42, %s43
      %p47 = pneg %p41
      %p48 = scmp.eq.s32.totalorder %s9, 3
      %p49 = por %p47, %p48
      %p50 = scmp.ne.s32.totalorder %s42, %s45
      %p51 = scmp.eq.s32.totalorder %s9, 0
      %p52 = por %p50, %p51
      %p53 = scmp.ne.s32.totalorder %s42, %s45
      %p54 = scmp.eq.s32.totalorder %s14, 3
      %p55 = por %p53, %p54
      %p56 = scmp.ne.s32.totalorder %s45, %s46
      %p57 = scmp.eq.s32.totalorder %s14, 0
      %p58 = por %p56, %p57
      %p59 = scmp.ne.s32.totalorder %s45, %s46
      %p60 = scmp.eq.s32.totalorder %s15, 3
      %p61 = por %p59, %p60
      %p63 = scmp.ne.s32.totalorder %s46, %s62
      %p64 = scmp.eq.s32.totalorder %s15, 0
      %p65 = por %p63, %p64
      %s66 = ssub.s32 %s16, %s35
      %s67 = ssub.s32 %s17, %s31
      %s68 = sor.u32 %s66, %s67
      %p69 = scmp.eq.s32.totalorder %s68, 0
      %s71 = sadd.s32 %s70, 1
      %s72 = scalar_select %p69, %s70, %s71
      %p75 = pneg %p69
      %p76 = scmp.eq.s32.totalorder %s9, 3
      %p77 = por %p75, %p76
      %p78 = scmp.ne.s32.totalorder %s70, %s73
      %p79 = scmp.eq.s32.totalorder %s9, 0
      %p80 = por %p78, %p79
      %p81 = scmp.ne.s32.totalorder %s70, %s73
      %p82 = scmp.eq.s32.totalorder %s14, 3
      %p83 = por %p81, %p82
      %p84 = scmp.ne.s32.totalorder %s73, %s74
      %p85 = scmp.eq.s32.totalorder %s14, 0
      %p86 = por %p84, %p85
      %p87 = scmp.ne.s32.totalorder %s73, %s74
      %p88 = scmp.eq.s32.totalorder %s15, 3
      %p89 = por %p87, %p88
      %p91 = scmp.ne.s32.totalorder %s74, %s90
      %p92 = scmp.eq.s32.totalorder %s15, 0
      %p93 = por %p91, %p92
      %s94 = ssub.s32 %s16, %s35
      %s95 = ssub.s32 %s17, %s31
      %s96 = sor.u32 %s94, %s95
      %p97 = scmp.eq.s32.totalorder %s96, 0
      %s99 = sadd.s32 %s98, 1
      %s100 = scalar_select %p97, %s98, %s99
      %p103 = pneg %p97
      %p104 = scmp.eq.s32.totalorder %s9, 3
      %p105 = por %p103, %p104
      %p106 = scmp.ne.s32.totalorder %s98, %s101
      %p107 = scmp.eq.s32.totalorder %s9, 0
      %p108 = por %p106, %p107
      %p109 = scmp.ne.s32.totalorder %s98, %s101
      %p110 = scmp.eq.s32.totalorder %s14, 3
      %p111 = por %p109, %p110
      %p112 = scmp.ne.s32.totalorder %s101, %s102
      %p113 = scmp.eq.s32.totalorder %s14, 0
      %p114 = por %p112, %p113
      %p115 = scmp.ne.s32.totalorder %s101, %s102
      %p116 = scmp.eq.s32.totalorder %s15, 3
      %p117 = por %p115, %p116
      %p119 = scmp.ne.s32.totalorder %s102, %s118
      %p120 = scmp.eq.s32.totalorder %s15, 0
      %p121 = por %p119, %p120
      %p122 = scmp.le.s32.totalorder 1, %s9
      %p123 = scmp.lt.s32.totalorder %s9, 5
      %p124 = pnand %p122, %p123
      %p125 = pneg %p124
      // Predicated region
      $region9: #{srm_fl_forward.10} parent=5 // pred_check
        _
      $region10: #{srm_fl_forward.10} parent=5 // pred_check_branch
        %127 = sbr.rel (%p124) target = $region12
      $region11: #{srm_fl_forward.10} parent=5 // pred_region
        %s128 = ssub.s32 %s9, 1
      $region12: #{srm_fl_forward.10} parent=5 // pred_fallthru
        _
      %p129 = scmp.lt.s32.totalorder %s9, 4
      // Predicated region
      $region13: #{srm_fl_forward.10} parent=5 // pred_check
        %p130 = pneg %p129
      $region14: #{srm_fl_forward.10} parent=5 // pred_check_branch
        %132 = sbr.rel (%p130) target = $region16
      $region15: #{srm_fl_forward.10} parent=5 // pred_region
        // Predicated region
        $region17: #{srm_fl_forward.10} parent=15 // pred_check
          %p133 = pneg %p52
        $region18: #{srm_fl_forward.10} parent=15 // pred_check_branch
          %135 = sbr.rel (%p133) target = $region20
        $region19: #{srm_fl_forward.10} parent=15 // pred_region
          %s136 = sand.u32 %s42, 1
          %s137 = sand.u32 %s42, 1
          %s138 = smul.addr %s137, 128
          %s139 = scalar_lea.vmem [#allocation4], %s138
          %s140 = smul.u32 16, %s17
          %s141 = smul.addr %s140, 2
          %s142 = sadd.s32 %s18, %s141
          %s143 = smul.addr %s16, 32
          %s144 = sadd.s32 %s142, %s143
          %s145 = smul.addr %s144, 8
          %s146 = scalar_lea.vmem %s0, %s145
          // Predicated region
          $region21: #{srm_fl_forward.10} parent=19 // pred_check
            _
          $region22: #{srm_fl_forward.10} parent=19 // pred_check_branch
            %148 = sbr.rel (0) target = $region24
          $region23: #{srm_fl_forward.10} parent=19 // pred_region
            // Predicated region
            $region25: #{srm_fl_forward.10} parent=23 // pred_check
              _
            $region26: #{srm_fl_forward.10} parent=23 // pred_check_branch
              %150 = sbr.rel (0) target = $region28
            $region27: #{srm_fl_forward.10} parent=23 // pred_region
              // Predicated region
              $region40: #{srm_fl_forward.10} parent=27 // pred_check
                _
              $region41: #{srm_fl_forward.10} parent=27 // pred_check_branch
                %195 = sbr.rel (0) target = $region43
              $region42: #{srm_fl_forward.10} parent=27 // pred_region
                loop: start=0, step=1, limit=1
                $region44: #{srm_fl_forward.10} parent=42 // loop_pre_header
                  _
                $region45: #{srm_fl_forward.10} parent=42 // loop_header
                  %s197 = sphi 0, %s201
                  %p198 = scmp.ge.s32.totalorder %s197, 1
                  %s202 = sphi %s146, %s146
                  %s203 = sphi %s139, %s139
                $region46: #{srm_fl_forward.10} parent=42 // loop_header_branch
                  %200 = sbr.rel (%p198) target = $region50
                $region47: #{srm_fl_forward.10} parent=42 // loop_body
                  %v204 = vld [vmem:[%s202] sm:$0xff]
                  %205 = vst [vmem:[%s203] sm:$0xff] %v204
                  %v206 = vld [vmem:[%s202 + $0x10] sm:$0xff]
                  %207 = vst [vmem:[%s203 + $0x8] sm:$0xff] %v206
                  %v208 = vld [vmem:[%s202 + $0x20] sm:$0xff]
                  %209 = vst [vmem:[%s203 + $0x10] sm:$0xff] %v208
                  %v210 = vld [vmem:[%s202 + $0x30] sm:$0xff]
                  %211 = vst [vmem:[%s203 + $0x18] sm:$0xff] %v210
                  %v212 = vld [vmem:[%s202 + $0x40] sm:$0xff]
                  %213 = vst [vmem:[%s203 + $0x20] sm:$0xff] %v212
                  %v214 = vld [vmem:[%s202 + $0x50] sm:$0xff]
                  %215 = vst [vmem:[%s203 + $0x28] sm:$0xff] %v214
                  %v216 = vld [vmem:[%s202 + $0x60] sm:$0xff]
                  %217 = vst [vmem:[%s203 + $0x30] sm:$0xff] %v216
                  %v218 = vld [vmem:[%s202 + $0x70] sm:$0xff]
                  %219 = vst [vmem:[%s203 + $0x38] sm:$0xff] %v218
                  %v220 = vld [vmem:[%s202 + $0x80] sm:$0xff]
                  %221 = vst [vmem:[%s203 + $0x40] sm:$0xff] %v220
                  %v222 = vld [vmem:[%s202 + $0x90] sm:$0xff]
                  %223 = vst [vmem:[%s203 + $0x48] sm:$0xff] %v222
                  %v224 = vld [vmem:[%s202 + $0xa0] sm:$0xff]
                  %225 = vst [vmem:[%s203 + $0x50] sm:$0xff] %v224
                  %v226 = vld [vmem:[%s202 + $0xb0] sm:$0xff]
                  %227 = vst [vmem:[%s203 + $0x58] sm:$0xff] %v226
                  %v228 = vld [vmem:[%s202 + $0xc0] sm:$0xff]
                  %229 = vst [vmem:[%s203 + $0x60] sm:$0xff] %v228
                  %v230 = vld [vmem:[%s202 + $0xd0] sm:$0xff]
                  %231 = vst [vmem:[%s203 + $0x68] sm:$0xff] %v230
                  %v232 = vld [vmem:[%s202 + $0xe0] sm:$0xff]
                  %233 = vst [vmem:[%s203 + $0x70] sm:$0xff] %v232
                  %v234 = vld [vmem:[%s202 + $0xf0] sm:$0xff]
                  %235 = vst [vmem:[%s203 + $0x78] sm:$0xff] %v234
                $region48: #{srm_fl_forward.10} parent=42 // loop_footer
                  %s201 = sadd.s32 1, %s197
                $region49: #{srm_fl_forward.10} parent=42 // loop_footer_branch
                  %196 = sbr.rel target = $region45
                $region50: #{srm_fl_forward.10} parent=42 // loop_exit
                  _
              $region43: #{srm_fl_forward.10} parent=27 // pred_fallthru
                _
              // Predicated region
              $region51: #{srm_fl_forward.10} parent=27 // pred_check
                _
              $region52: #{srm_fl_forward.10} parent=27 // pred_check_branch
                %237 = sbr.rel target = $region54
              $region53: #{srm_fl_forward.10} parent=27 // pred_region
                _
              $region54: #{srm_fl_forward.10} parent=27 // pred_fallthru
                _
            $region28: #{srm_fl_forward.10} parent=23 // pred_fallthru
              _
            // Predicated region
            $region29: #{srm_fl_forward.10} parent=23 // pred_check
              _
            $region30: #{srm_fl_forward.10} parent=23 // pred_check_branch
              %152 = sbr.rel target = $region32
            $region31: #{srm_fl_forward.10} parent=23 // pred_region
              loop: start=0, step=1, limit=1
              $region33: #{srm_fl_forward.10} parent=31 // loop_pre_header
                _
              $region34: #{srm_fl_forward.10} parent=31 // loop_header
                %s155 = sphi 0, %s159
                %p156 = scmp.ge.s32.totalorder %s155, 1
                %s160 = sphi %s146, %s146
                %s161 = sphi %s139, %s139
              $region35: #{srm_fl_forward.10} parent=31 // loop_header_branch
                %158 = sbr.rel (%p156) target = $region39
              $region36: #{srm_fl_forward.10} parent=31 // loop_body
                %v162 = vld [vmem:[%s160] sm:$0xff]
                %163 = vst [vmem:[%s161] sm:$0xff] %v162
                %v164 = vld [vmem:[%s160 + $0x10] sm:$0xff]
                %165 = vst [vmem:[%s161 + $0x8] sm:$0xff] %v164
                %v166 = vld [vmem:[%s160 + $0x20] sm:$0xff]
                %167 = vst [vmem:[%s161 + $0x10] sm:$0xff] %v166
                %v168 = vld [vmem:[%s160 + $0x30] sm:$0xff]
                %169 = vst [vmem:[%s161 + $0x18] sm:$0xff] %v168
                %v170 = vld [vmem:[%s160 + $0x40] sm:$0xff]
                %171 = vst [vmem:[%s161 + $0x20] sm:$0xff] %v170
                %v172 = vld [vmem:[%s160 + $0x50] sm:$0xff]
                %173 = vst [vmem:[%s161 + $0x28] sm:$0xff] %v172
                %v174 = vld [vmem:[%s160 + $0x60] sm:$0xff]
                %175 = vst [vmem:[%s161 + $0x30] sm:$0xff] %v174
                %v176 = vld [vmem:[%s160 + $0x70] sm:$0xff]
                %177 = vst [vmem:[%s161 + $0x38] sm:$0xff] %v176
                %v178 = vld [vmem:[%s160 + $0x80] sm:$0xff]
                %179 = vst [vmem:[%s161 + $0x40] sm:$0xff] %v178
                %v180 = vld [vmem:[%s160 + $0x90] sm:$0xff]
                %181 = vst [vmem:[%s161 + $0x48] sm:$0xff] %v180
                %v182 = vld [vmem:[%s160 + $0xa0] sm:$0xff]
                %183 = vst [vmem:[%s161 + $0x50] sm:$0xff] %v182
                %v184 = vld [vmem:[%s160 + $0xb0] sm:$0xff]
                %185 = vst [vmem:[%s161 + $0x58] sm:$0xff] %v184
                %v186 = vld [vmem:[%s160 + $0xc0] sm:$0xff]
                %187 = vst [vmem:[%s161 + $0x60] sm:$0xff] %v186
                %v188 = vld [vmem:[%s160 + $0xd0] sm:$0xff]
                %189 = vst [vmem:[%s161 + $0x68] sm:$0xff] %v188
                %v190 = vld [vmem:[%s160 + $0xe0] sm:$0xff]
                %191 = vst [vmem:[%s161 + $0x70] sm:$0xff] %v190
                %v192 = vld [vmem:[%s160 + $0xf0] sm:$0xff]
                %193 = vst [vmem:[%s161 + $0x78] sm:$0xff] %v192
              $region37: #{srm_fl_forward.10} parent=31 // loop_footer
                %s159 = sadd.s32 1, %s155
              $region38: #{srm_fl_forward.10} parent=31 // loop_footer_branch
                %154 = sbr.rel target = $region34
              $region39: #{srm_fl_forward.10} parent=31 // loop_exit
                _
            $region32: #{srm_fl_forward.10} parent=23 // pred_fallthru
              _
          $region24: #{srm_fl_forward.10} parent=19 // pred_fallthru
            _
          %238 = vnop
        $region20: #{srm_fl_forward.10} parent=15 // pred_fallthru
          _
      $region16: #{srm_fl_forward.10} parent=5 // pred_fallthru
        _
      %p239 = scmp.le.s32.totalorder 1, %s9
      %p240 = scmp.lt.s32.totalorder %s9, 5
      %p241 = pnand %p239, %p240
      %p242 = pneg %p241
      // Predicated region
      $region55: #{srm_fl_forward.10} parent=5 // pred_check
        _
      $region56: #{srm_fl_forward.10} parent=5 // pred_check_branch
        %244 = sbr.rel (%p241) target = $region58
      $region57: #{srm_fl_forward.10} parent=5 // pred_region
        %s245 = ssub.s32 %s9, 1
        %s246 = sand.u32 %s45, 1
        %s247 = sand.u32 %s45, 1
        %s248 = smul.addr %s247, 128
        %s249 = scalar_lea.vmem [#allocation4], %s248
        // Predicated region
        $region59: #{srm_fl_forward.10} parent=57 // pred_check
          %p250 = pneg %p58
        $region60: #{srm_fl_forward.10} parent=57 // pred_check_branch
          %252 = sbr.rel (%p250) target = $region62
        $region61: #{srm_fl_forward.10} parent=57 // pred_region
          _
        $region62: #{srm_fl_forward.10} parent=57 // pred_fallthru
          _
        %s253 = sand.u32 %s45, 1
        %s254 = sand.u32 %s45, 1
        %s255 = smul.addr %s254, 128
        %s256 = scalar_lea.vmem [#allocation4], %s255
        %p257 = pneg %p58
        %p258 = pneg %p55
        %p259 = pneg %p86
        %p260 = pneg %p83
        %s261 = smul.u32 16, %s20
        %p262 = scmp.lt.s32.totalorder %s19, 1
        %s263 = scalar_select %p262, %s19, 1
        %p264 = scmp.lt.s32.totalorder %s261, 15
        %s265 = scalar_select %p264, %s261, 15
        %s266 = smul.addr %s263, 16
        %s267 = sadd.s32 %s265, %s266
        %s268 = smul.addr %s267, 8
        %s269 = scalar_lea.vmem %s1, %s268
        %p270 = pneg %p114
        %p271 = pneg %p111
        %s272 = smul.u32 16, %s20
        %p273 = scmp.lt.s32.totalorder %s19, 1
        %s274 = scalar_select %p273, %s19, 1
        %p275 = scmp.lt.s32.totalorder %s272, 15
        %s276 = scalar_select %p275, %s272, 15
        %s277 = smul.addr %s274, 16
        %s278 = sadd.s32 %s276, %s277
        %s279 = smul.addr %s278, 8
        %s280 = scalar_lea.vmem %s2, %s279
        %s281 = smul.u32 16, %s20
        %s282 = smul.u32 16, %s20
        %p283 = scmp.lt.s32.totalorder %s19, 1
        %s284 = scalar_select %p283, %s19, 1
        %p285 = scmp.lt.s32.totalorder %s282, 15
        %s286 = scalar_select %p285, %s282, 15
        %s287 = smul.addr %s284, 16
        %s288 = sadd.s32 %s286, %s287
        %s289 = smul.addr %s288, 8
        %s290 = scalar_lea.vmem %s1, %s289
        %s291 = smul.u32 16, %s20
        %s292 = smul.u32 16, %s20
        %p293 = scmp.lt.s32.totalorder %s19, 1
        %s294 = scalar_select %p293, %s19, 1
        %p295 = scmp.lt.s32.totalorder %s292, 15
        %s296 = scalar_select %p295, %s292, 15
        %s297 = smul.addr %s294, 16
        %s298 = sadd.s32 %s296, %s297
        %s299 = smul.addr %s298, 8
        %s300 = scalar_lea.vmem %s2, %s299
        %s301 = smul.u32 16, %s20
        %v302 = vld [vmem:[%s249] sm:$0xff]
        %v303 = vld [vmem:[%s249 + $0x8] sm:$0xff]
        %v304 = vld [vmem:[%s249 + $0x10] sm:$0xff]
        %v305 = vld [vmem:[%s249 + $0x18] sm:$0xff]
        %v306 = vld [vmem:[%s249 + $0x20] sm:$0xff]
        %v307 = vld [vmem:[%s249 + $0x28] sm:$0xff]
        %v308 = vld [vmem:[%s249 + $0x30] sm:$0xff]
        %v309 = vld [vmem:[%s249 + $0x38] sm:$0xff]
        %v310 = vld [vmem:[%s249 + $0x40] sm:$0xff]
        %v311 = vld [vmem:[%s249 + $0x48] sm:$0xff]
        %v312 = vld [vmem:[%s249 + $0x50] sm:$0xff]
        %v313 = vld [vmem:[%s249 + $0x58] sm:$0xff]
        %v314 = vld [vmem:[%s249 + $0x60] sm:$0xff]
        %v315 = vld [vmem:[%s249 + $0x68] sm:$0xff]
        %v316 = vld [vmem:[%s249 + $0x70] sm:$0xff]
        %v317 = vld [vmem:[%s249 + $0x78] sm:$0xff]
        %318 = vadd.xlane.f32.xlu0 %v302
        %v319 = vpop.xlane.xlu0 %318
        %320 = vadd.xlane.f32.xlu0 %v303
        %v321 = vpop.xlane.xlu0 %320
        %322 = vadd.xlane.f32.xlu0 %v304
        %v323 = vpop.xlane.xlu0 %322
        %324 = vadd.xlane.f32.xlu0 %v305
        %v325 = vpop.xlane.xlu0 %324
        %326 = vadd.xlane.f32.xlu0 %v306
        %v327 = vpop.xlane.xlu0 %326
        %328 = vadd.xlane.f32.xlu0 %v307
        %v329 = vpop.xlane.xlu0 %328
        %330 = vadd.xlane.f32.xlu0 %v308
        %v331 = vpop.xlane.xlu0 %330
        %332 = vadd.xlane.f32.xlu0 %v309
        %v333 = vpop.xlane.xlu0 %332
        %334 = vadd.xlane.f32.xlu0 %v310
        %v335 = vpop.xlane.xlu0 %334
        %336 = vadd.xlane.f32.xlu0 %v311
        %v337 = vpop.xlane.xlu0 %336
        %338 = vadd.xlane.f32.xlu0 %v312
        %v339 = vpop.xlane.xlu0 %338
        %340 = vadd.xlane.f32.xlu0 %v313
        %v341 = vpop.xlane.xlu0 %340
        %342 = vadd.xlane.f32.xlu0 %v314
        %v343 = vpop.xlane.xlu0 %342
        %344 = vadd.xlane.f32.xlu0 %v315
        %v345 = vpop.xlane.xlu0 %344
        %346 = vadd.xlane.f32.xlu0 %v316
        %v347 = vpop.xlane.xlu0 %346
        %348 = vadd.xlane.f32.xlu0 %v317
        %v349 = vpop.xlane.xlu0 %348
        %v350 = vmul.f32 %v302, %v302
        %v351 = vmul.f32 %v303, %v303
        %v352 = vmul.f32 %v304, %v304
        %v353 = vmul.f32 %v305, %v305
        %v354 = vmul.f32 %v306, %v306
        %v355 = vmul.f32 %v307, %v307
        %v356 = vmul.f32 %v308, %v308
        %v357 = vmul.f32 %v309, %v309
        %v358 = vmul.f32 %v310, %v310
        %v359 = vmul.f32 %v311, %v311
        %v360 = vmul.f32 %v312, %v312
        %v361 = vmul.f32 %v313, %v313
        %v362 = vmul.f32 %v314, %v314
        %v363 = vmul.f32 %v315, %v315
        %v364 = vmul.f32 %v316, %v316
        %v365 = vmul.f32 %v317, %v317
        %366 = vadd.xlane.f32.xlu0 %v350
        %v367 = vpop.xlane.xlu0 %366
        %368 = vadd.xlane.f32.xlu0 %v351
        %v369 = vpop.xlane.xlu0 %368
        %370 = vadd.xlane.f32.xlu0 %v352
        %v371 = vpop.xlane.xlu0 %370
        %372 = vadd.xlane.f32.xlu0 %v353
        %v373 = vpop.xlane.xlu0 %372
        %374 = vadd.xlane.f32.xlu0 %v354
        %v375 = vpop.xlane.xlu0 %374
        %376 = vadd.xlane.f32.xlu0 %v355
        %v377 = vpop.xlane.xlu0 %376
        %378 = vadd.xlane.f32.xlu0 %v356
        %v379 = vpop.xlane.xlu0 %378
        %380 = vadd.xlane.f32.xlu0 %v357
        %v381 = vpop.xlane.xlu0 %380
        %382 = vadd.xlane.f32.xlu0 %v358
        %v383 = vpop.xlane.xlu0 %382
        %384 = vadd.xlane.f32.xlu0 %v359
        %v385 = vpop.xlane.xlu0 %384
        %386 = vadd.xlane.f32.xlu0 %v360
        %v387 = vpop.xlane.xlu0 %386
        %388 = vadd.xlane.f32.xlu0 %v361
        %v389 = vpop.xlane.xlu0 %388
        %390 = vadd.xlane.f32.xlu0 %v362
        %v391 = vpop.xlane.xlu0 %390
        %392 = vadd.xlane.f32.xlu0 %v363
        %v393 = vpop.xlane.xlu0 %392
        %394 = vadd.xlane.f32.xlu0 %v364
        %v395 = vpop.xlane.xlu0 %394
        %396 = vadd.xlane.f32.xlu0 %v365
        %v397 = vpop.xlane.xlu0 %396
        %p398 = scmp.eq.s32.totalorder %s21, 0
        // Predicated region
        $region63: #{srm_fl_forward.10} parent=57 // pred_check
          %p399 = pneg %p398
        $region64: #{srm_fl_forward.10} parent=57 // pred_check_branch
          %401 = sbr.rel (%p399) target = $region66
        $region65: #{srm_fl_forward.10} parent=57 // pred_region
          %vm402 = vcmask 7168
          %403 = vst.msk [vmem:[#allocation2] sm:$0xff] %vm402, %v319
          %404 = vst.msk [vmem:[#allocation2 + $0x8] sm:$0xff] %vm402, %v321
          %405 = vst.msk [vmem:[#allocation2 + $0x10] sm:$0xff] %vm402, %v323
          %406 = vst.msk [vmem:[#allocation2 + $0x18] sm:$0xff] %vm402, %v325
          %407 = vst.msk [vmem:[#allocation2 + $0x20] sm:$0xff] %vm402, %v327
          %408 = vst.msk [vmem:[#allocation2 + $0x28] sm:$0xff] %vm402, %v329
          %409 = vst.msk [vmem:[#allocation2 + $0x30] sm:$0xff] %vm402, %v331
          %410 = vst.msk [vmem:[#allocation2 + $0x38] sm:$0xff] %vm402, %v333
          %411 = vst.msk [vmem:[#allocation2 + $0x40] sm:$0xff] %vm402, %v335
          %412 = vst.msk [vmem:[#allocation2 + $0x48] sm:$0xff] %vm402, %v337
          %413 = vst.msk [vmem:[#allocation2 + $0x50] sm:$0xff] %vm402, %v339
          %414 = vst.msk [vmem:[#allocation2 + $0x58] sm:$0xff] %vm402, %v341
          %415 = vst.msk [vmem:[#allocation2 + $0x60] sm:$0xff] %vm402, %v343
          %416 = vst.msk [vmem:[#allocation2 + $0x68] sm:$0xff] %vm402, %v345
          %417 = vst.msk [vmem:[#allocation2 + $0x70] sm:$0xff] %vm402, %v347
          %418 = vst.msk [vmem:[#allocation2 + $0x78] sm:$0xff] %vm402, %v349
          %419 = vst.msk [vmem:[#allocation3] sm:$0xff] %vm402, %v367
          %420 = vst.msk [vmem:[#allocation3 + $0x8] sm:$0xff] %vm402, %v369
          %421 = vst.msk [vmem:[#allocation3 + $0x10] sm:$0xff] %vm402, %v371
          %422 = vst.msk [vmem:[#allocation3 + $0x18] sm:$0xff] %vm402, %v373
          %423 = vst.msk [vmem:[#allocation3 + $0x20] sm:$0xff] %vm402, %v375
          %424 = vst.msk [vmem:[#allocation3 + $0x28] sm:$0xff] %vm402, %v377
          %425 = vst.msk [vmem:[#allocation3 + $0x30] sm:$0xff] %vm402, %v379
          %426 = vst.msk [vmem:[#allocation3 + $0x38] sm:$0xff] %vm402, %v381
          %427 = vst.msk [vmem:[#allocation3 + $0x40] sm:$0xff] %vm402, %v383
          %428 = vst.msk [vmem:[#allocation3 + $0x48] sm:$0xff] %vm402, %v385
          %429 = vst.msk [vmem:[#allocation3 + $0x50] sm:$0xff] %vm402, %v387
          %430 = vst.msk [vmem:[#allocation3 + $0x58] sm:$0xff] %vm402, %v389
          %431 = vst.msk [vmem:[#allocation3 + $0x60] sm:$0xff] %vm402, %v391
          %432 = vst.msk [vmem:[#allocation3 + $0x68] sm:$0xff] %vm402, %v393
          %433 = vst.msk [vmem:[#allocation3 + $0x70] sm:$0xff] %vm402, %v395
          %434 = vst.msk [vmem:[#allocation3 + $0x78] sm:$0xff] %vm402, %v397
        $region66: #{srm_fl_forward.10} parent=57 // pred_fallthru
          _
        %p435 = scmp.gt.s32.totalorder %s21, 0
        // Predicated region
        $region67: #{srm_fl_forward.10} parent=57 // pred_check
          %p436 = pneg %p435
        $region68: #{srm_fl_forward.10} parent=57 // pred_check_branch
          %438 = sbr.rel (%p436) target = $region70
        $region69: #{srm_fl_forward.10} parent=57 // pred_region
          %v439 = vld [vmem:[#allocation2] sm:$0xff]
          %v440 = vld [vmem:[#allocation2 + $0x8] sm:$0xff]
          %v441 = vld [vmem:[#allocation2 + $0x10] sm:$0xff]
          %v442 = vld [vmem:[#allocation2 + $0x18] sm:$0xff]
          %v443 = vld [vmem:[#allocation2 + $0x20] sm:$0xff]
          %v444 = vld [vmem:[#allocation2 + $0x28] sm:$0xff]
          %v445 = vld [vmem:[#allocation2 + $0x30] sm:$0xff]
          %v446 = vld [vmem:[#allocation2 + $0x38] sm:$0xff]
          %v447 = vld [vmem:[#allocation2 + $0x40] sm:$0xff]
          %v448 = vld [vmem:[#allocation2 + $0x48] sm:$0xff]
          %v449 = vld [vmem:[#allocation2 + $0x50] sm:$0xff]
          %v450 = vld [vmem:[#allocation2 + $0x58] sm:$0xff]
          %v451 = vld [vmem:[#allocation2 + $0x60] sm:$0xff]
          %v452 = vld [vmem:[#allocation2 + $0x68] sm:$0xff]
          %v453 = vld [vmem:[#allocation2 + $0x70] sm:$0xff]
          %v454 = vld [vmem:[#allocation2 + $0x78] sm:$0xff]
          %v455 = vadd.f32 %v439, %v319
          %v456 = vadd.f32 %v440, %v321
          %v457 = vadd.f32 %v441, %v323
          %v458 = vadd.f32 %v442, %v325
          %v459 = vadd.f32 %v443, %v327
          %v460 = vadd.f32 %v444, %v329
          %v461 = vadd.f32 %v445, %v331
          %v462 = vadd.f32 %v446, %v333
          %v463 = vadd.f32 %v447, %v335
          %v464 = vadd.f32 %v448, %v337
          %v465 = vadd.f32 %v449, %v339
          %v466 = vadd.f32 %v450, %v341
          %v467 = vadd.f32 %v451, %v343
          %v468 = vadd.f32 %v452, %v345
          %v469 = vadd.f32 %v453, %v347
          %v470 = vadd.f32 %v454, %v349
          %vm471 = vcmask 7168
          %472 = vst.msk [vmem:[#allocation2] sm:$0xff] %vm471, %v455
          %473 = vst.msk [vmem:[#allocation2 + $0x8] sm:$0xff] %vm471, %v456
          %474 = vst.msk [vmem:[#allocation2 + $0x10] sm:$0xff] %vm471, %v457
          %475 = vst.msk [vmem:[#allocation2 + $0x18] sm:$0xff] %vm471, %v458
          %476 = vst.msk [vmem:[#allocation2 + $0x20] sm:$0xff] %vm471, %v459
          %477 = vst.msk [vmem:[#allocation2 + $0x28] sm:$0xff] %vm471, %v460
          %478 = vst.msk [vmem:[#allocation2 + $0x30] sm:$0xff] %vm471, %v461
          %479 = vst.msk [vmem:[#allocation2 + $0x38] sm:$0xff] %vm471, %v462
          %480 = vst.msk [vmem:[#allocation2 + $0x40] sm:$0xff] %vm471, %v463
          %481 = vst.msk [vmem:[#allocation2 + $0x48] sm:$0xff] %vm471, %v464
          %482 = vst.msk [vmem:[#allocation2 + $0x50] sm:$0xff] %vm471, %v465
          %483 = vst.msk [vmem:[#allocation2 + $0x58] sm:$0xff] %vm471, %v466
          %484 = vst.msk [vmem:[#allocation2 + $0x60] sm:$0xff] %vm471, %v467
          %485 = vst.msk [vmem:[#allocation2 + $0x68] sm:$0xff] %vm471, %v468
          %486 = vst.msk [vmem:[#allocation2 + $0x70] sm:$0xff] %vm471, %v469
          %487 = vst.msk [vmem:[#allocation2 + $0x78] sm:$0xff] %vm471, %v470
          %v488 = vld [vmem:[#allocation3] sm:$0xff]
          %v489 = vld [vmem:[#allocation3 + $0x8] sm:$0xff]
          %v490 = vld [vmem:[#allocation3 + $0x10] sm:$0xff]
          %v491 = vld [vmem:[#allocation3 + $0x18] sm:$0xff]
          %v492 = vld [vmem:[#allocation3 + $0x20] sm:$0xff]
          %v493 = vld [vmem:[#allocation3 + $0x28] sm:$0xff]
          %v494 = vld [vmem:[#allocation3 + $0x30] sm:$0xff]
          %v495 = vld [vmem:[#allocation3 + $0x38] sm:$0xff]
          %v496 = vld [vmem:[#allocation3 + $0x40] sm:$0xff]
          %v497 = vld [vmem:[#allocation3 + $0x48] sm:$0xff]
          %v498 = vld [vmem:[#allocation3 + $0x50] sm:$0xff]
          %v499 = vld [vmem:[#allocation3 + $0x58] sm:$0xff]
          %v500 = vld [vmem:[#allocation3 + $0x60] sm:$0xff]
          %v501 = vld [vmem:[#allocation3 + $0x68] sm:$0xff]
          %v502 = vld [vmem:[#allocation3 + $0x70] sm:$0xff]
          %v503 = vld [vmem:[#allocation3 + $0x78] sm:$0xff]
          %v504 = vadd.f32 %v488, %v367
          %v505 = vadd.f32 %v489, %v369
          %v506 = vadd.f32 %v490, %v371
          %v507 = vadd.f32 %v491, %v373
          %v508 = vadd.f32 %v492, %v375
          %v509 = vadd.f32 %v493, %v377
          %v510 = vadd.f32 %v494, %v379
          %v511 = vadd.f32 %v495, %v381
          %v512 = vadd.f32 %v496, %v383
          %v513 = vadd.f32 %v497, %v385
          %v514 = vadd.f32 %v498, %v387
          %v515 = vadd.f32 %v499, %v389
          %v516 = vadd.f32 %v500, %v391
          %v517 = vadd.f32 %v501, %v393
          %v518 = vadd.f32 %v502, %v395
          %v519 = vadd.f32 %v503, %v397
          %520 = vst.msk [vmem:[#allocation3] sm:$0xff] %vm471, %v504
          %521 = vst.msk [vmem:[#allocation3 + $0x8] sm:$0xff] %vm471, %v505
          %522 = vst.msk [vmem:[#allocation3 + $0x10] sm:$0xff] %vm471, %v506
          %523 = vst.msk [vmem:[#allocation3 + $0x18] sm:$0xff] %vm471, %v507
          %524 = vst.msk [vmem:[#allocation3 + $0x20] sm:$0xff] %vm471, %v508
          %525 = vst.msk [vmem:[#allocation3 + $0x28] sm:$0xff] %vm471, %v509
          %526 = vst.msk [vmem:[#allocation3 + $0x30] sm:$0xff] %vm471, %v510
          %527 = vst.msk [vmem:[#allocation3 + $0x38] sm:$0xff] %vm471, %v511
          %528 = vst.msk [vmem:[#allocation3 + $0x40] sm:$0xff] %vm471, %v512
          %529 = vst.msk [vmem:[#allocation3 + $0x48] sm:$0xff] %vm471, %v513
          %530 = vst.msk [vmem:[#allocation3 + $0x50] sm:$0xff] %vm471, %v514
          %531 = vst.msk [vmem:[#allocation3 + $0x58] sm:$0xff] %vm471, %v515
          %532 = vst.msk [vmem:[#allocation3 + $0x60] sm:$0xff] %vm471, %v516
          %533 = vst.msk [vmem:[#allocation3 + $0x68] sm:$0xff] %vm471, %v517
          %534 = vst.msk [vmem:[#allocation3 + $0x70] sm:$0xff] %vm471, %v518
          %535 = vst.msk [vmem:[#allocation3 + $0x78] sm:$0xff] %vm471, %v519
        $region70: #{srm_fl_forward.10} parent=57 // pred_fallthru
          _
        %p536 = scmp.eq.s32.totalorder %s21, 1
        // Predicated region
        $region71: #{srm_fl_forward.10} parent=57 // pred_check
          %p537 = pneg %p536
        $region72: #{srm_fl_forward.10} parent=57 // pred_check_branch
          %539 = sbr.rel (%p537) target = $region74
        $region73: #{srm_fl_forward.10} parent=57 // pred_region
          %v540 = vld [vmem:[#allocation2] sm:$0xff]
          %v541 = vld [vmem:[#allocation2 + $0x8] sm:$0xff]
          %v542 = vld [vmem:[#allocation2 + $0x10] sm:$0xff]
          %v543 = vld [vmem:[#allocation2 + $0x18] sm:$0xff]
          %v544 = vld [vmem:[#allocation2 + $0x20] sm:$0xff]
          %v545 = vld [vmem:[#allocation2 + $0x28] sm:$0xff]
          %v546 = vld [vmem:[#allocation2 + $0x30] sm:$0xff]
          %v547 = vld [vmem:[#allocation2 + $0x38] sm:$0xff]
          %v548 = vld [vmem:[#allocation2 + $0x40] sm:$0xff]
          %v549 = vld [vmem:[#allocation2 + $0x48] sm:$0xff]
          %v550 = vld [vmem:[#allocation2 + $0x50] sm:$0xff]
          %v551 = vld [vmem:[#allocation2 + $0x58] sm:$0xff]
          %v552 = vld [vmem:[#allocation2 + $0x60] sm:$0xff]
          %v553 = vld [vmem:[#allocation2 + $0x68] sm:$0xff]
          %v554 = vld [vmem:[#allocation2 + $0x70] sm:$0xff]
          %v555 = vld [vmem:[#allocation2 + $0x78] sm:$0xff]
          %v556 = vmul.f32 %v540, 0.00390625
          %v557 = vmul.f32 %v541, 0.00390625
          %v558 = vmul.f32 %v542, 0.00390625
          %v559 = vmul.f32 %v543, 0.00390625
          %v560 = vmul.f32 %v544, 0.00390625
          %v561 = vmul.f32 %v545, 0.00390625
          %v562 = vmul.f32 %v546, 0.00390625
          %v563 = vmul.f32 %v547, 0.00390625
          %v564 = vmul.f32 %v548, 0.00390625
          %v565 = vmul.f32 %v549, 0.00390625
          %v566 = vmul.f32 %v550, 0.00390625
          %v567 = vmul.f32 %v551, 0.00390625
          %v568 = vmul.f32 %v552, 0.00390625
          %v569 = vmul.f32 %v553, 0.00390625
          %v570 = vmul.f32 %v554, 0.00390625
          %v571 = vmul.f32 %v555, 0.00390625
          %v572 = vld [vmem:[#allocation3] sm:$0xff]
          %v573 = vld [vmem:[#allocation3 + $0x8] sm:$0xff]
          %v574 = vld [vmem:[#allocation3 + $0x10] sm:$0xff]
          %v575 = vld [vmem:[#allocation3 + $0x18] sm:$0xff]
          %v576 = vld [vmem:[#allocation3 + $0x20] sm:$0xff]
          %v577 = vld [vmem:[#allocation3 + $0x28] sm:$0xff]
          %v578 = vld [vmem:[#allocation3 + $0x30] sm:$0xff]
          %v579 = vld [vmem:[#allocation3 + $0x38] sm:$0xff]
          %v580 = vld [vmem:[#allocation3 + $0x40] sm:$0xff]
          %v581 = vld [vmem:[#allocation3 + $0x48] sm:$0xff]
          %v582 = vld [vmem:[#allocation3 + $0x50] sm:$0xff]
          %v583 = vld [vmem:[#allocation3 + $0x58] sm:$0xff]
          %v584 = vld [vmem:[#allocation3 + $0x60] sm:$0xff]
          %v585 = vld [vmem:[#allocation3 + $0x68] sm:$0xff]
          %v586 = vld [vmem:[#allocation3 + $0x70] sm:$0xff]
          %v587 = vld [vmem:[#allocation3 + $0x78] sm:$0xff]
          %v588 = vmul.f32 %v540, %v556
          %v589 = vmul.f32 %v541, %v557
          %v590 = vmul.f32 %v542, %v558
          %v591 = vmul.f32 %v543, %v559
          %v592 = vmul.f32 %v544, %v560
          %v593 = vmul.f32 %v545, %v561
          %v594 = vmul.f32 %v546, %v562
          %v595 = vmul.f32 %v547, %v563
          %v596 = vmul.f32 %v548, %v564
          %v597 = vmul.f32 %v549, %v565
          %v598 = vmul.f32 %v550, %v566
          %v599 = vmul.f32 %v551, %v567
          %v600 = vmul.f32 %v552, %v568
          %v601 = vmul.f32 %v553, %v569
          %v602 = vmul.f32 %v554, %v570
          %v603 = vmul.f32 %v555, %v571
          %v604 = vsub.f32 %v572, %v588
          %v605 = vsub.f32 %v573, %v589
          %v606 = vsub.f32 %v574, %v590
          %v607 = vsub.f32 %v575, %v591
          %v608 = vsub.f32 %v576, %v592
          %v609 = vsub.f32 %v577, %v593
          %v610 = vsub.f32 %v578, %v594
          %v611 = vsub.f32 %v579, %v595
          %v612 = vsub.f32 %v580, %v596
          %v613 = vsub.f32 %v581, %v597
          %v614 = vsub.f32 %v582, %v598
          %v615 = vsub.f32 %v583, %v599
          %v616 = vsub.f32 %v584, %v600
          %v617 = vsub.f32 %v585, %v601
          %v618 = vsub.f32 %v586, %v602
          %v619 = vsub.f32 %v587, %v603
          %v620 = vmul.f32 %v604, 0.003921569
          %v621 = vmul.f32 %v605, 0.003921569
          %v622 = vmul.f32 %v606, 0.003921569
          %v623 = vmul.f32 %v607, 0.003921569
          %v624 = vmul.f32 %v608, 0.003921569
          %v625 = vmul.f32 %v609, 0.003921569
          %v626 = vmul.f32 %v610, 0.003921569
          %v627 = vmul.f32 %v611, 0.003921569
          %v628 = vmul.f32 %v612, 0.003921569
          %v629 = vmul.f32 %v613, 0.003921569
          %v630 = vmul.f32 %v614, 0.003921569
          %v631 = vmul.f32 %v615, 0.003921569
          %v632 = vmul.f32 %v616, 0.003921569
          %v633 = vmul.f32 %v617, 0.003921569
          %v634 = vmul.f32 %v618, 0.003921569
          %v635 = vmul.f32 %v619, 0.003921569
          %vm636 = vcmask 7168
          %637 = vst.msk [vmem:[%s290] sm:$0xff] %vm636, %v556
          %638 = vst.msk [vmem:[%s290 + $0x8] sm:$0xff] %vm636, %v557
          %639 = vst.msk [vmem:[%s290 + $0x10] sm:$0xff] %vm636, %v558
          %640 = vst.msk [vmem:[%s290 + $0x18] sm:$0xff] %vm636, %v559
          %641 = vst.msk [vmem:[%s290 + $0x20] sm:$0xff] %vm636, %v560
          %642 = vst.msk [vmem:[%s290 + $0x28] sm:$0xff] %vm636, %v561
          %643 = vst.msk [vmem:[%s290 + $0x30] sm:$0xff] %vm636, %v562
          %644 = vst.msk [vmem:[%s290 + $0x38] sm:$0xff] %vm636, %v563
          %645 = vst.msk [vmem:[%s290 + $0x40] sm:$0xff] %vm636, %v564
          %646 = vst.msk [vmem:[%s290 + $0x48] sm:$0xff] %vm636, %v565
          %647 = vst.msk [vmem:[%s290 + $0x50] sm:$0xff] %vm636, %v566
          %648 = vst.msk [vmem:[%s290 + $0x58] sm:$0xff] %vm636, %v567
          %649 = vst.msk [vmem:[%s290 + $0x60] sm:$0xff] %vm636, %v568
          %650 = vst.msk [vmem:[%s290 + $0x68] sm:$0xff] %vm636, %v569
          %651 = vst.msk [vmem:[%s290 + $0x70] sm:$0xff] %vm636, %v570
          %652 = vst.msk [vmem:[%s290 + $0x78] sm:$0xff] %vm636, %v571
          %v653 = vadd.f32 %v620, 1e-07
          %v654 = vadd.f32 %v621, 1e-07
          %v655 = vadd.f32 %v622, 1e-07
          %v656 = vadd.f32 %v623, 1e-07
          %v657 = vadd.f32 %v624, 1e-07
          %v658 = vadd.f32 %v625, 1e-07
          %v659 = vadd.f32 %v626, 1e-07
          %v660 = vadd.f32 %v627, 1e-07
          %v661 = vadd.f32 %v628, 1e-07
          %v662 = vadd.f32 %v629, 1e-07
          %v663 = vadd.f32 %v630, 1e-07
          %v664 = vadd.f32 %v631, 1e-07
          %v665 = vadd.f32 %v632, 1e-07
          %v666 = vadd.f32 %v633, 1e-07
          %v667 = vadd.f32 %v634, 1e-07
          %v668 = vadd.f32 %v635, 1e-07
          %v669 = vrsqrt.pop %v653
          %v670 = vrsqrt.pop %v654
          %v671 = vrsqrt.pop %v655
          %v672 = vrsqrt.pop %v656
          %v673 = vrsqrt.pop %v657
          %v674 = vrsqrt.pop %v658
          %v675 = vrsqrt.pop %v659
          %v676 = vrsqrt.pop %v660
          %v677 = vrsqrt.pop %v661
          %v678 = vrsqrt.pop %v662
          %v679 = vrsqrt.pop %v663
          %v680 = vrsqrt.pop %v664
          %v681 = vrsqrt.pop %v665
          %v682 = vrsqrt.pop %v666
          %v683 = vrsqrt.pop %v667
          %v684 = vrsqrt.pop %v668
          %685 = vst.msk [vmem:[%s300] sm:$0xff] %vm636, %v669
          %686 = vst.msk [vmem:[%s300 + $0x8] sm:$0xff] %vm636, %v670
          %687 = vst.msk [vmem:[%s300 + $0x10] sm:$0xff] %vm636, %v671
          %688 = vst.msk [vmem:[%s300 + $0x18] sm:$0xff] %vm636, %v672
          %689 = vst.msk [vmem:[%s300 + $0x20] sm:$0xff] %vm636, %v673
          %690 = vst.msk [vmem:[%s300 + $0x28] sm:$0xff] %vm636, %v674
          %691 = vst.msk [vmem:[%s300 + $0x30] sm:$0xff] %vm636, %v675
          %692 = vst.msk [vmem:[%s300 + $0x38] sm:$0xff] %vm636, %v676
          %693 = vst.msk [vmem:[%s300 + $0x40] sm:$0xff] %vm636, %v677
          %694 = vst.msk [vmem:[%s300 + $0x48] sm:$0xff] %vm636, %v678
          %695 = vst.msk [vmem:[%s300 + $0x50] sm:$0xff] %vm636, %v679
          %696 = vst.msk [vmem:[%s300 + $0x58] sm:$0xff] %vm636, %v680
          %697 = vst.msk [vmem:[%s300 + $0x60] sm:$0xff] %vm636, %v681
          %698 = vst.msk [vmem:[%s300 + $0x68] sm:$0xff] %vm636, %v682
          %699 = vst.msk [vmem:[%s300 + $0x70] sm:$0xff] %vm636, %v683
          %700 = vst.msk [vmem:[%s300 + $0x78] sm:$0xff] %vm636, %v684
        $region74: #{srm_fl_forward.10} parent=57 // pred_fallthru
          _
        %s701 = smul.u32 16, %s20
        %p702 = scmp.lt.s32.totalorder %s19, 1
        %s703 = scalar_select %p702, %s19, 1
        %p704 = scmp.lt.s32.totalorder %s701, 15
        %s705 = scalar_select %p704, %s701, 15
        %s706 = smul.addr %s703, 16
        %s707 = sadd.s32 %s705, %s706
        %s708 = smul.addr %s707, 8
        %s709 = scalar_lea.vmem %s1, %s708
        %s710 = smul.u32 16, %s20
        %p711 = scmp.lt.s32.totalorder %s19, 1
        %s712 = scalar_select %p711, %s19, 1
        %p713 = scmp.lt.s32.totalorder %s710, 15
        %s714 = scalar_select %p713, %s710, 15
        %s715 = smul.addr %s712, 16
        %s716 = sadd.s32 %s714, %s715
        %s717 = smul.addr %s716, 8
        %s718 = scalar_lea.vmem %s2, %s717
        // Predicated region
        $region75: #{srm_fl_forward.10} parent=57 // pred_check
          %p719 = pneg %p83
        $region76: #{srm_fl_forward.10} parent=57 // pred_check_branch
          %721 = sbr.rel (%p719) target = $region78
        $region77: #{srm_fl_forward.10} parent=57 // pred_region
          %s722 = smul.u32 16, %s20
        $region78: #{srm_fl_forward.10} parent=57 // pred_fallthru
          _
        // Predicated region
        $region79: #{srm_fl_forward.10} parent=57 // pred_check
          %p723 = pneg %p111
        $region80: #{srm_fl_forward.10} parent=57 // pred_check_branch
          %725 = sbr.rel (%p723) target = $region82
        $region81: #{srm_fl_forward.10} parent=57 // pred_region
          %s726 = smul.u32 16, %s20
        $region82: #{srm_fl_forward.10} parent=57 // pred_fallthru
          _
      $region58: #{srm_fl_forward.10} parent=5 // pred_fallthru
        _
      %p727 = scmp.le.s32.totalorder 2, %s9
      // Predicated region
      $region83: #{srm_fl_forward.10} parent=5 // pred_check
        %p728 = pneg %p727
      $region84: #{srm_fl_forward.10} parent=5 // pred_check_branch
        %730 = sbr.rel (%p728) target = $region86
      $region85: #{srm_fl_forward.10} parent=5 // pred_region
        %s731 = ssub.s32 %s9, 2
        // Predicated region
        $region87: #{srm_fl_forward.10} parent=85 // pred_check
          %p732 = pneg %p89
        $region88: #{srm_fl_forward.10} parent=85 // pred_check_branch
          %734 = sbr.rel (%p732) target = $region90
        $region89: #{srm_fl_forward.10} parent=85 // pred_region
          %s735 = smul.u32 16, %s23
          %p736 = scmp.lt.s32.totalorder %s22, 1
          %s737 = scalar_select %p736, %s22, 1
          %p738 = scmp.lt.s32.totalorder %s735, 15
          %s739 = scalar_select %p738, %s735, 15
          %s740 = smul.addr %s737, 16
          %s741 = sadd.s32 %s739, %s740
          %s742 = smul.addr %s741, 8
          %s743 = scalar_lea.vmem %s1, %s742
        $region90: #{srm_fl_forward.10} parent=85 // pred_fallthru
          _
        // Predicated region
        $region91: #{srm_fl_forward.10} parent=85 // pred_check
          %p744 = pneg %p117
        $region92: #{srm_fl_forward.10} parent=85 // pred_check_branch
          %746 = sbr.rel (%p744) target = $region94
        $region93: #{srm_fl_forward.10} parent=85 // pred_region
          %s747 = smul.u32 16, %s23
          %p748 = scmp.lt.s32.totalorder %s22, 1
          %s749 = scalar_select %p748, %s22, 1
          %p750 = scmp.lt.s32.totalorder %s747, 15
          %s751 = scalar_select %p750, %s747, 15
          %s752 = smul.addr %s749, 16
          %s753 = sadd.s32 %s751, %s752
          %s754 = smul.addr %s753, 8
          %s755 = scalar_lea.vmem %s2, %s754
        $region94: #{srm_fl_forward.10} parent=85 // pred_fallthru
          _
      $region86: #{srm_fl_forward.10} parent=5 // pred_fallthru
        _
    $region6: #{srm_fl_forward.10} parent=1 // loop_footer
      %s13 = sadd.s32 1, %s9
    $region7: #{srm_fl_forward.10} parent=1 // loop_footer_branch
      %8 = sbr.rel target = $region3
    $region8: #{srm_fl_forward.10} parent=1 // loop_exit
      _

</llo_original>
